<compile_context>
chip_gen: v6e
topology: v6e:2x2x1
jax: 0.10.0
libtpu: 0.0.40
codegen_flags: <defaults>
</compile_context>

<pallas_src>
import functools

import numpy as np
import jax
import jax.numpy as jnp
from jax.experimental import pallas as pl
from jax.experimental.pallas import tpu as pltpu


def _round_up(x, m):
    return ((x + m - 1) // m) * m


def _gat_attn_kernel(ad_ref, as_ref, xs_ref, adj_ref, hmask_ref, b_ref,
                     o_ref, m_sc, l_sc, acc_sc, *, heads):
    """Masked edge-softmax + aggregation for one (dst-tile, src-block) grid point.

    Grid = (dst tiles ["parallel"], src blocks ["arbitrary"]).  Online softmax over
    the src axis: running max / sum / accumulator live in VMEM scratch; the output
    tile is written once on the last src block.

    ad_ref:    [Tnd, H]    f32  per-dst, per-head attention term (hoisted XLA)
    as_ref:    [H, Tns]    f32  per-src, per-head attention term (hoisted XLA)
    xs_ref:    [Tns, HCp]  bf16 projected source features (lane-padded)
    adj_ref:   [Tnd, Tns]  int8 {0,1} adjacency tile
    hmask_ref: [H, HCp]    f32  one-hot head-block lane masks (resident)
    b_ref:     [1, HCp]    f32  bias, zero-padded (resident)
    o_ref:     [Tnd, HCp]  f32  output tile (heads concatenated, lane-dense)
    """
    j = pl.program_id(1)

    @pl.when(j == 0)
    def _():
        m_sc[...] = jnp.full(m_sc.shape, -1e30, m_sc.dtype)
        l_sc[...] = jnp.zeros(l_sc.shape, l_sc.dtype)
        acc_sc[...] = jnp.zeros(acc_sc.shape, acc_sc.dtype)

    edge = adj_ref[...] != 0                      # bool mask, int8-sized in VMEM
    xs_t = xs_ref[...]                            # [Tns, HCp] bf16
    neg = jnp.float32(-1e30)

    scale = jnp.zeros(acc_sc.shape, jnp.float32)  # per-lane online-softmax rescale
    delta = jnp.zeros(acc_sc.shape, jnp.float32)  # per-lane new contribution
    for h in range(heads):                        # tiny static head loop
        hmask = hmask_ref[h:h + 1, :]                                  # [1, HCp]
        logits = ad_ref[:, h:h + 1] + as_ref[h:h + 1, :]               # [Tnd, Tns]
        logits = jnp.where(logits >= 0.0, logits, 0.2 * logits)        # leaky_relu(0.2)
        z = jnp.where(edge, logits, neg)                               # mask applied in f32
        m_prev = m_sc[:, h:h + 1]
        m_new = jnp.maximum(m_prev, jnp.max(z, axis=-1, keepdims=True))
        alpha = jnp.exp(m_prev - m_new)                                # [Tnd, 1]
        # Explicit off-edge zero keeps the all-masked-row corner exact even while
        # m_new is still the -1e30 init (exp(0) would otherwise leak 1s in).
        p = jnp.where(edge, jnp.exp(z - m_new), 0.0)                   # [Tnd, Tns]
        l_sc[:, h:h + 1] = alpha * l_sc[:, h:h + 1] + jnp.sum(p, axis=-1, keepdims=True)
        m_sc[:, h:h + 1] = m_new
        # bf16 MXU aggregation, f32 accumulation; head mask on the OUTPUT tile
        # ([Tnd, HCp]) instead of the [Tns, HCp] RHS.
        part = jnp.dot(p.astype(jnp.bfloat16), xs_t,
                       preferred_element_type=jnp.float32)             # [Tnd, HCp]
        scale = scale + alpha * hmask
        delta = delta + part * hmask
    acc_sc[...] = acc_sc[...] * scale + delta

    @pl.when(j == pl.num_programs(1) - 1)
    def _():
        l = l_sc[...]                                                  # [Tnd, H]
        inv = jnp.where(l > 0.0, 1.0 / l, 0.0)                         # isolated rows -> 0 (bias only)
        inv_full = jnp.zeros(o_ref.shape, jnp.float32)
        for h in range(heads):
            inv_full = inv_full + inv[:, h:h + 1] * hmask_ref[h:h + 1, :]
        o_ref[...] = acc_sc[...] * inv_full + b_ref[...]


def gat_attention(a_d, a_s, xs_t, adj, hmask, bias, *, heads, hc_pad, tile_nd, tile_ns):
    """pallas_call wrapper: one GATConv direction (all inputs already padded)."""
    n_dst_p = a_d.shape[0]
    n_src_p = xs_t.shape[0]
    grid = (n_dst_p // tile_nd, n_src_p // tile_ns)
    kernel = functools.partial(_gat_attn_kernel, heads=heads)
    return pl.pallas_call(
        kernel,
        out_shape=jax.ShapeDtypeStruct((n_dst_p, hc_pad), jnp.float32),
        grid=grid,
        in_specs=[
            pl.BlockSpec((tile_nd, heads), lambda i, j: (i, 0)),    # a_dst tile
            pl.BlockSpec((heads, tile_ns), lambda i, j: (0, j)),    # a_src block
            pl.BlockSpec((tile_ns, hc_pad), lambda i, j: (j, 0)),   # xs_t block (bf16)
            # TODO(synk): pipeline_mode=pl.Buffered(3) on the adjacency if its DMA
            # shows up exposed on large graphs.
            pl.BlockSpec((tile_nd, tile_ns), lambda i, j: (i, j)),  # int8 adjacency tile
            pl.BlockSpec((heads, hc_pad), lambda i, j: (0, 0)),     # head masks (resident)
            pl.BlockSpec((1, hc_pad), lambda i, j: (0, 0)),         # bias (resident)
        ],
        out_specs=pl.BlockSpec((tile_nd, hc_pad), lambda i, j: (i, 0)),
        scratch_shapes=[
            pltpu.VMEM((tile_nd, heads), jnp.float32),   # running max
            pltpu.VMEM((tile_nd, heads), jnp.float32),   # running sum
            pltpu.VMEM((tile_nd, hc_pad), jnp.float32),  # running accumulator
        ],
        compiler_params=pltpu.CompilerParams(
            dimension_semantics=("parallel", "arbitrary"),  # dst tiles shard across TCs
            vmem_limit_bytes=32 * 1024 * 1024,              # safe on v5e/v6e/v7x at these tiles
        ),
    )(a_d, a_s, xs_t, adj, hmask, bias)


def build_dense_adj(edge_index, n_src, n_dst):
    """Dense int8 adjacency with PyG GATConv's add_self_loops=True semantics:
    remove existing self-loops, then add (i,i) for i < min(n_src, n_dst)."""
    src = np.asarray(edge_index[0])
    dst = np.asarray(edge_index[1])
    keep = src != dst
    A = np.zeros((n_dst, n_src), dtype=np.int8)
    A[dst[keep], src[keep]] = 1
    m = min(n_src, n_dst)
    A[np.arange(m), np.arange(m)] = 1
    # TODO(synk): a dense {0,1} mask collapses duplicate (multi-)edges; PyG counts each.
    return jnp.asarray(A)


class InterGraphAttentionPallas:
    """Parameter container mirroring InterGraphAttention(input_dim, dp, head, head_out_feats)."""

    # Tile knobs (multiples of 128). 256x512 keeps per-step VMEM well under 1 MiB,
    # safe on v7x's 64 MiB; on v5e/v6e (128 MiB physical) MAX_TILE_ND=512,
    # MAX_TILE_NS=1024 plus a higher vmem_limit_bytes shrink grid-step overhead further.
    MAX_TILE_ND = 256
    MAX_TILE_NS = 512

    def __init__(self, input_dim, dp, head, head_out_feats, key):
        del dp  # TODO(synk): attention dropout is training-only; inference path only.
        self.heads = head
        self.out_ch = head_out_feats // 2
        self.hc = head * self.out_ch
        self.hc_pad = _round_up(max(self.hc, 128), 128)    # lane-dense output width
        k = jax.random.split(key, 5)
        scale = 1.0 / np.sqrt(input_dim)
        # GATConv params: lin_src / lin_dst (bias=False), att_src / att_dst, bias.
        self.w_src = jax.random.normal(k[0], (input_dim, self.hc), jnp.float32) * scale
        self.w_dst = jax.random.normal(k[1], (input_dim, self.hc), jnp.float32) * scale
        self.att_src = jax.random.normal(k[2], (head, self.out_ch), jnp.float32) * 0.1
        self.att_dst = jax.random.normal(k[3], (head, self.out_ch), jnp.float32) * 0.1
        self.bias = jax.random.normal(k[4], (self.hc,), jnp.float32) * 0.01

        pad = ((0, 0), (0, self.hc_pad - self.hc))
        eye = jnp.eye(head, dtype=jnp.float32)
        self.hmask_p = jnp.pad(jnp.repeat(eye, self.out_ch, axis=1), pad)   # [H, HCp]
        self.bias_p = jnp.pad(self.bias.reshape(1, self.hc), pad)           # [1, HCp]

    def _direction(self, x_src, x_dst, adj):
        """One GATConv direction; adj is the dense {0,1} mask [n_dst, n_src]."""
        n_src, n_dst = x_src.shape[0], x_dst.shape[0]
        h, c = self.heads, self.out_ch
        # Projections + attention scalars hoisted OUT of the grid (computed once per
        # direction in plain XLA, per perf review): the kernel never redoes the
        # O(N*D*HC) work per tile and w_src/w_dst never occupy VMEM.
        xs_t = jnp.maximum(x_src, 0.0) @ self.w_src                         # [Ns, HC] f32
        xd_t = jnp.maximum(x_dst, 0.0) @ self.w_dst                         # [Nd, HC] f32
        a_s = (xs_t.reshape(n_src, h, c) * self.att_src[None]).sum(-1).T    # [H, Ns]
        a_d = (xd_t.reshape(n_dst, h, c) * self.att_dst[None]).sum(-1)      # [Nd, H]

        tile_nd = min(self.MAX_TILE_ND, _round_up(n_dst, 128))
        tile_ns = min(self.MAX_TILE_NS, _round_up(n_src, 128))
        n_dst_p = _round_up(n_dst, tile_nd)
        n_src_p = _round_up(n_src, tile_ns)

        xs_t_p = jnp.pad(xs_t, ((0, n_src_p - n_src), (0, self.hc_pad - self.hc)))
        xs_t_p = xs_t_p.astype(jnp.bfloat16)            # bf16 MXU aggregation input
        a_s_p = jnp.pad(a_s, ((0, 0), (0, n_src_p - n_src)))
        a_d_p = jnp.pad(a_d, ((0, n_dst_p - n_dst), (0, 0)))
        adj_p = jnp.pad(adj.astype(jnp.int8), ((0, n_dst_p - n_dst), (0, n_src_p - n_src)))

        out_p = gat_attention(a_d_p, a_s_p, xs_t_p, adj_p, self.hmask_p, self.bias_p,
                              heads=self.heads, hc_pad=self.hc_pad,
                              tile_nd=tile_nd, tile_ns=tile_ns)
        return out_p[:n_dst, :self.hc]

    def __call__(self, h_data, t_data, adj_t):
        # adj_t[t, h] = 1 iff edge h -> t (with PyG add_self_loops semantics).
        # Reverse direction: adj.T is materialized ONCE in HBM by XLA so the kernel
        # reads contiguous rows (no per-tile XLU transpose, no strided column DMA).
        adj_rev = adj_t.T
        # TODO(synk): fuse both directions into one pallas_call grid=(2, ...) so v7x's
        # two TensorCores are both fed on tiny graphs; kept as two calls for clarity.
        t_rep = self._direction(h_data, t_data, adj_t)      # messages h -> t
        h_rep = self._direction(t_data, h_data, adj_rev)    # messages t -> h
        return h_rep, t_rep


def reference_gat(x_src, x_dst, adj, w_src, w_dst, att_src, att_dst, bias, heads, out_ch):
    """Pure-JAX dense reference (same math, independent formulation, all f32)."""
    adj = adj.astype(jnp.float32)
    xs = jnp.maximum(x_src, 0.0)
    xd = jnp.maximum(x_dst, 0.0)
    xs_t = (xs @ w_src).reshape(-1, heads, out_ch)
    xd_t = (xd @ w_dst).reshape(-1, heads, out_ch)
    a_s = (xs_t * att_src[None]).sum(-1)                       # [Ns, H]
    a_d = (xd_t * att_dst[None]).sum(-1)                       # [Nd, H]
    logits = a_d[:, None, :] + a_s[None, :, :]                 # [Nd, Ns, H]
    logits = jnp.where(logits >= 0, logits, 0.2 * logits)
    masked = jnp.where(adj[..., None] > 0, logits, -1e30)
    m = masked.max(axis=1, keepdims=True)
    p = jnp.exp(masked - m) * adj[..., None]
    denom = p.sum(axis=1, keepdims=True)
    attn = p / jnp.where(denom > 0, denom, 1.0)
    out = jnp.einsum("dsh,shc->dhc", attn, xs_t).reshape(-1, heads * out_ch) + bias
    return out


if __name__ == "__main__":
    key = jax.random.PRNGKey(0)
    k_param, k_h, k_t, k_src, k_dst = jax.random.split(key, 5)

    input_dim, dp, head, head_out_feats = 32, 0.0, 2, 16   # out per head = 8, concat dim = 16
    # Sizes chosen so both directions exercise multi-tile dst grids and the forward
    # direction exercises a 2-block src axis (online-softmax accumulation path).
    n_h, n_t, n_edges = 640, 272, 2048

    h_data = jax.random.normal(k_h, (n_h, input_dim), jnp.float32)
    t_data = jax.random.normal(k_t, (n_t, input_dim), jnp.float32)
    src = jax.random.randint(k_src, (n_edges,), 0, n_h)
    dst = jax.random.randint(k_dst, (n_edges,), 0, n_t)
    edge_index = jnp.stack([src, dst])                     # [2, E], bipartite h -> t

    adj_t = build_dense_adj(edge_index, n_h, n_t)          # int8 [n_t, n_h]

    module = InterGraphAttentionPallas(input_dim, dp, head, head_out_feats, k_param)
    h_rep, t_rep = module(h_data, t_data, adj_t)
    jax.block_until_ready((h_rep, t_rep))

    # Correctness check against the f32 pure-JAX reference (bf16 aggregation in the
    # kernel -> relaxed tolerance, per review).
    out_ch = head_out_feats // 2
    t_ref = reference_gat(h_data, t_data, adj_t, module.w_src, module.w_dst,
                          module.att_src, module.att_dst, module.bias, head, out_ch)
    h_ref = reference_gat(t_data, h_data, adj_t.T, module.w_src, module.w_dst,
                          module.att_src, module.att_dst, module.bias, head, out_ch)
    assert t_rep.shape == (n_t, head * out_ch) and h_rep.shape == (n_h, head * out_ch)
    np.testing.assert_allclose(np.asarray(t_rep), np.asarray(t_ref), rtol=2e-2, atol=2e-2)
    np.testing.assert_allclose(np.asarray(h_rep), np.asarray(h_ref), rtol=2e-2, atol=2e-2)

    print("KERNEL_OK")
</pallas_src>

<mosaic_0001>
module attributes {stable_mosaic.version = 11 : i64} {
  func.func @_gat_attn_kernel(%arg0: i32, %arg1: i32, %arg2: memref<256x2xf32, #tpu.memory_space<vmem>>, %arg3: memref<2x512xf32, #tpu.memory_space<vmem>>, %arg4: memref<512x128xbf16, #tpu.memory_space<vmem>>, %arg5: memref<256x512xi8, #tpu.memory_space<vmem>>, %arg6: memref<2x128xf32, #tpu.memory_space<vmem>>, %arg7: memref<1x128xf32, #tpu.memory_space<vmem>>, %arg8: memref<256x128xf32, #tpu.memory_space<vmem>>, %arg9: memref<256x2xf32, #tpu.memory_space<vmem>>, %arg10: memref<256x2xf32, #tpu.memory_space<vmem>>, %arg11: memref<256x128xf32, #tpu.memory_space<vmem>>) attributes {dimension_semantics = [#tpu.dimension_semantics<parallel>, #tpu.dimension_semantics<arbitrary>], iteration_bounds = array<i64: 2, 2>, scalar_prefetch = 0 : i64, scratch_operands = 3 : i64, tpu.core_type = #tpu.core_type<tc>, window_params = [{transform_indices = @transform_0, window_bounds = array<i64: 256, 2>}, {transform_indices = @transform_1, window_bounds = array<i64: 2, 512>}, {transform_indices = @transform_2, window_bounds = array<i64: 512, 128>}, {transform_indices = @transform_3, window_bounds = array<i64: 256, 512>}, {pipeline_mode = #tpu.pipeline_mode<synchronous>, transform_indices = @transform_4, window_bounds = array<i64: 2, 128>}, {pipeline_mode = #tpu.pipeline_mode<synchronous>, transform_indices = @transform_5, window_bounds = array<i64: 1, 128>}, {transform_indices = @transform_6, window_bounds = array<i64: 256, 128>}]} {
    %c0_i32 = arith.constant 0 : i32
    %0 = arith.cmpi eq, %arg1, %c0_i32 : i32
    %1 = arith.extui %0 : i1 to i32
    %c0_i32_0 = arith.constant 0 : i32
    %2 = arith.cmpi ne, %1, %c0_i32_0 : i32
    scf.if %2 {
      %cst_51 = arith.constant -1.000000e+30 : f32
      %96 = vector.broadcast %cst_51 : f32 to vector<256x2xf32>
      %c0_52 = arith.constant 0 : index
      %c0_53 = arith.constant 0 : index
      %97 = vector.load %arg9[%c0_52, %c0_53] : memref<256x2xf32, #tpu.memory_space<vmem>>, vector<256x2xf32>
      tpu.vector_store %arg9[%c0_52, %c0_53], %96 {strides = array<i32>} : memref<256x2xf32, #tpu.memory_space<vmem>>, vector<256x2xf32>,
      %cst_54 = arith.constant 0.000000e+00 : f32
      %98 = vector.broadcast %cst_54 : f32 to vector<256x2xf32>
      %c0_55 = arith.constant 0 : index
      %c0_56 = arith.constant 0 : index
      %99 = vector.load %arg10[%c0_55, %c0_56] : memref<256x2xf32, #tpu.memory_space<vmem>>, vector<256x2xf32>
      tpu.vector_store %arg10[%c0_55, %c0_56], %98 {strides = array<i32>} : memref<256x2xf32, #tpu.memory_space<vmem>>, vector<256x2xf32>,
      %cst_57 = arith.constant 0.000000e+00 : f32
      %100 = vector.broadcast %cst_57 : f32 to vector<256x128xf32>
      %c0_58 = arith.constant 0 : index
      %c0_59 = arith.constant 0 : index
      %101 = vector.load %arg11[%c0_58, %c0_59] : memref<256x128xf32, #tpu.memory_space<vmem>>, vector<256x128xf32>
      tpu.vector_store %arg11[%c0_58, %c0_59], %100 {strides = array<i32>} : memref<256x128xf32, #tpu.memory_space<vmem>>, vector<256x128xf32>,
    } else {
    }
    %c0 = arith.constant 0 : index
    %c0_1 = arith.constant 0 : index
    %3 = vector.load %arg5[%c0, %c0_1] : memref<256x512xi8, #tpu.memory_space<vmem>>, vector<256x512xi8>
    %c0_i8 = arith.constant 0 : i8
    %4 = vector.broadcast %c0_i8 : i8 to vector<256x512xi8>
    %5 = arith.cmpi ne, %3, %4 : vector<256x512xi8>
    %c0_2 = arith.constant 0 : index
    %c0_3 = arith.constant 0 : index
    %6 = vector.load %arg4[%c0_2, %c0_3] : memref<512x128xbf16, #tpu.memory_space<vmem>>, vector<512x128xbf16>
    %cst = arith.constant 0.000000e+00 : f32
    %7 = vector.broadcast %cst : f32 to vector<256x128xf32>
    %cst_4 = arith.constant 0.000000e+00 : f32
    %8 = vector.broadcast %cst_4 : f32 to vector<256x128xf32>
    %c0_5 = arith.constant 0 : index
    %c0_6 = arith.constant 0 : index
    %9 = vector.load %arg6[%c0_5, %c0_6] : memref<2x128xf32, #tpu.memory_space<vmem>>, vector<1x128xf32>
    %c0_7 = arith.constant 0 : index
    %c0_8 = arith.constant 0 : index
    %10 = vector.load %arg2[%c0_7, %c0_8] : memref<256x2xf32, #tpu.memory_space<vmem>>, vector<256x1xf32>
    %c0_9 = arith.constant 0 : index
    %c0_10 = arith.constant 0 : index
    %11 = vector.load %arg3[%c0_9, %c0_10] : memref<2x512xf32, #tpu.memory_space<vmem>>, vector<1x512xf32>
    %12 = vector.broadcast %10 : vector<256x1xf32> to vector<256x512xf32>
    %13 = vector.broadcast %11 : vector<1x512xf32> to vector<256x512xf32>
    %14 = arith.addf %12, %13 : vector<256x512xf32>
    %cst_11 = arith.constant 0.000000e+00 : f32
    %15 = vector.broadcast %cst_11 : f32 to vector<256x512xf32>
    %16 = arith.cmpf oge, %14, %15 : vector<256x512xf32>
    %cst_12 = arith.constant 2.000000e-01 : f32
    %17 = vector.broadcast %cst_12 : f32 to vector<256x512xf32>
    %18 = arith.mulf %17, %14 : vector<256x512xf32>
    %19 = arith.select %16, %14, %18 : vector<256x512xi1>, vector<256x512xf32>
    %cst_13 = arith.constant -1.000000e+30 : f32
    %20 = vector.broadcast %cst_13 : f32 to vector<256x512xf32>
    %21 = arith.select %5, %19, %20 : vector<256x512xi1>, vector<256x512xf32>
    %c0_14 = arith.constant 0 : index
    %c0_15 = arith.constant 0 : index
    %22 = vector.load %arg9[%c0_14, %c0_15] : memref<256x2xf32, #tpu.memory_space<vmem>>, vector<256x1xf32>
    %cst_16 = arith.constant dense<0xFF800000> : vector<256xf32>
    %23 = vector.multi_reduction <maximumf>, %21, %cst_16 [1] : vector<256x512xf32> to vector<256xf32>
    %24 = vector.shape_cast %23 : vector<256xf32> to vector<256x1xf32>
    %25 = arith.maximumf %22, %24 : vector<256x1xf32>
    %26 = arith.subf %22, %25 : vector<256x1xf32>
    %27 = math.exp %26 : vector<256x1xf32>
    %28 = vector.broadcast %25 : vector<256x1xf32> to vector<256x512xf32>
    %29 = arith.subf %21, %28 : vector<256x512xf32>
    %30 = math.exp %29 : vector<256x512xf32>
    %cst_17 = arith.constant 0.000000e+00 : f32
    %31 = vector.broadcast %cst_17 : f32 to vector<256x512xf32>
    %32 = arith.select %5, %30, %31 : vector<256x512xi1>, vector<256x512xf32>
    %c0_18 = arith.constant 0 : index
    %c0_19 = arith.constant 0 : index
    %33 = vector.load %arg10[%c0_18, %c0_19] : memref<256x2xf32, #tpu.memory_space<vmem>>, vector<256x1xf32>
    %34 = arith.mulf %27, %33 : vector<256x1xf32>
    %cst_20 = arith.constant dense<0.000000e+00> : vector<256xf32>
    %35 = vector.multi_reduction <add>, %32, %cst_20 [1] : vector<256x512xf32> to vector<256xf32>
    %36 = vector.shape_cast %35 : vector<256xf32> to vector<256x1xf32>
    %37 = arith.addf %34, %36 : vector<256x1xf32>
    %c0_21 = arith.constant 0 : index
    %c0_22 = arith.constant 0 : index
    %38 = vector.load %arg10[%c0_21, %c0_22] : memref<256x2xf32, #tpu.memory_space<vmem>>, vector<256x1xf32>
    tpu.vector_store %arg10[%c0_21, %c0_22], %37 {strides = array<i32>} : memref<256x2xf32, #tpu.memory_space<vmem>>, vector<256x1xf32>,
    %c0_23 = arith.constant 0 : index
    %c0_24 = arith.constant 0 : index
    %39 = vector.load %arg9[%c0_23, %c0_24] : memref<256x2xf32, #tpu.memory_space<vmem>>, vector<256x1xf32>
    tpu.vector_store %arg9[%c0_23, %c0_24], %25 {strides = array<i32>} : memref<256x2xf32, #tpu.memory_space<vmem>>, vector<256x1xf32>,
    %40 = arith.truncf %32 : vector<256x512xf32> to vector<256x512xbf16>
    %cst_25 = arith.constant dense<0.000000e+00> : vector<256x128xf32>
    %41 = tpu.matmul %40, %6, %cst_25 {dimension_numbers = #tpu.dot_dimension_numbers<[1], [0], [0], [1], [0, 0, 1, 1], [], []>} : vector<256x512xbf16>, vector<512x128xbf16>, vector<256x128xf32> -> vector<256x128xf32>
    %42 = vector.broadcast %27 : vector<256x1xf32> to vector<256x128xf32>
    %43 = vector.broadcast %9 : vector<1x128xf32> to vector<256x128xf32>
    %44 = arith.mulf %42, %43 : vector<256x128xf32>
    %45 = arith.addf %7, %44 : vector<256x128xf32>
    %46 = vector.broadcast %9 : vector<1x128xf32> to vector<256x128xf32>
    %47 = arith.mulf %41, %46 : vector<256x128xf32>
    %48 = arith.addf %8, %47 : vector<256x128xf32>
    %c1 = arith.constant 1 : index
    %c0_26 = arith.constant 0 : index
    %49 = vector.load %arg6[%c1, %c0_26] : memref<2x128xf32, #tpu.memory_space<vmem>>, vector<1x128xf32>
    %c0_27 = arith.constant 0 : index
    %c1_28 = arith.constant 1 : index
    %50 = vector.load %arg2[%c0_27, %c1_28] : memref<256x2xf32, #tpu.memory_space<vmem>>, vector<256x1xf32>
    %c1_29 = arith.constant 1 : index
    %c0_30 = arith.constant 0 : index
    %51 = vector.load %arg3[%c1_29, %c0_30] : memref<2x512xf32, #tpu.memory_space<vmem>>, vector<1x512xf32>
    %52 = vector.broadcast %50 : vector<256x1xf32> to vector<256x512xf32>
    %53 = vector.broadcast %51 : vector<1x512xf32> to vector<256x512xf32>
    %54 = arith.addf %52, %53 : vector<256x512xf32>
    %cst_31 = arith.constant 0.000000e+00 : f32
    %55 = vector.broadcast %cst_31 : f32 to vector<256x512xf32>
    %56 = arith.cmpf oge, %54, %55 : vector<256x512xf32>
    %cst_32 = arith.constant 2.000000e-01 : f32
    %57 = vector.broadcast %cst_32 : f32 to vector<256x512xf32>
    %58 = arith.mulf %57, %54 : vector<256x512xf32>
    %59 = arith.select %56, %54, %58 : vector<256x512xi1>, vector<256x512xf32>
    %cst_33 = arith.constant -1.000000e+30 : f32
    %60 = vector.broadcast %cst_33 : f32 to vector<256x512xf32>
    %61 = arith.select %5, %59, %60 : vector<256x512xi1>, vector<256x512xf32>
    %c0_34 = arith.constant 0 : index
    %c1_35 = arith.constant 1 : index
    %62 = vector.load %arg9[%c0_34, %c1_35] : memref<256x2xf32, #tpu.memory_space<vmem>>, vector<256x1xf32>
    %cst_36 = arith.constant dense<0xFF800000> : vector<256xf32>
    %63 = vector.multi_reduction <maximumf>, %61, %cst_36 [1] : vector<256x512xf32> to vector<256xf32>
    %64 = vector.shape_cast %63 : vector<256xf32> to vector<256x1xf32>
    %65 = arith.maximumf %62, %64 : vector<256x1xf32>
    %66 = arith.subf %62, %65 : vector<256x1xf32>
    %67 = math.exp %66 : vector<256x1xf32>
    %68 = vector.broadcast %65 : vector<256x1xf32> to vector<256x512xf32>
    %69 = arith.subf %61, %68 : vector<256x512xf32>
    %70 = math.exp %69 : vector<256x512xf32>
    %cst_37 = arith.constant 0.000000e+00 : f32
    %71 = vector.broadcast %cst_37 : f32 to vector<256x512xf32>
    %72 = arith.select %5, %70, %71 : vector<256x512xi1>, vector<256x512xf32>
    %c0_38 = arith.constant 0 : index
    %c1_39 = arith.constant 1 : index
    %73 = vector.load %arg10[%c0_38, %c1_39] : memref<256x2xf32, #tpu.memory_space<vmem>>, vector<256x1xf32>
    %74 = arith.mulf %67, %73 : vector<256x1xf32>
    %cst_40 = arith.constant dense<0.000000e+00> : vector<256xf32>
    %75 = vector.multi_reduction <add>, %72, %cst_40 [1] : vector<256x512xf32> to vector<256xf32>
    %76 = vector.shape_cast %75 : vector<256xf32> to vector<256x1xf32>
    %77 = arith.addf %74, %76 : vector<256x1xf32>
    %c0_41 = arith.constant 0 : index
    %c1_42 = arith.constant 1 : index
    %78 = vector.load %arg10[%c0_41, %c1_42] : memref<256x2xf32, #tpu.memory_space<vmem>>, vector<256x1xf32>
    tpu.vector_store %arg10[%c0_41, %c1_42], %77 {strides = array<i32>} : memref<256x2xf32, #tpu.memory_space<vmem>>, vector<256x1xf32>,
    %c0_43 = arith.constant 0 : index
    %c1_44 = arith.constant 1 : index
    %79 = vector.load %arg9[%c0_43, %c1_44] : memref<256x2xf32, #tpu.memory_space<vmem>>, vector<256x1xf32>
    tpu.vector_store %arg9[%c0_43, %c1_44], %65 {strides = array<i32>} : memref<256x2xf32, #tpu.memory_space<vmem>>, vector<256x1xf32>,
    %80 = arith.truncf %72 : vector<256x512xf32> to vector<256x512xbf16>
    %cst_45 = arith.constant dense<0.000000e+00> : vector<256x128xf32>
    %81 = tpu.matmul %80, %6, %cst_45 {dimension_numbers = #tpu.dot_dimension_numbers<[1], [0], [0], [1], [0, 0, 1, 1], [], []>} : vector<256x512xbf16>, vector<512x128xbf16>, vector<256x128xf32> -> vector<256x128xf32>
    %82 = vector.broadcast %67 : vector<256x1xf32> to vector<256x128xf32>
    %83 = vector.broadcast %49 : vector<1x128xf32> to vector<256x128xf32>
    %84 = arith.mulf %82, %83 : vector<256x128xf32>
    %85 = arith.addf %45, %84 : vector<256x128xf32>
    %86 = vector.broadcast %49 : vector<1x128xf32> to vector<256x128xf32>
    %87 = arith.mulf %81, %86 : vector<256x128xf32>
    %88 = arith.addf %48, %87 : vector<256x128xf32>
    %c0_46 = arith.constant 0 : index
    %c0_47 = arith.constant 0 : index
    %89 = vector.load %arg11[%c0_46, %c0_47] : memref<256x128xf32, #tpu.memory_space<vmem>>, vector<256x128xf32>
    %90 = arith.mulf %89, %85 : vector<256x128xf32>
    %91 = arith.addf %90, %88 : vector<256x128xf32>
    %c0_48 = arith.constant 0 : index
    %c0_49 = arith.constant 0 : index
    %92 = vector.load %arg11[%c0_48, %c0_49] : memref<256x128xf32, #tpu.memory_space<vmem>>, vector<256x128xf32>
    tpu.vector_store %arg11[%c0_48, %c0_49], %91 {strides = array<i32>} : memref<256x128xf32, #tpu.memory_space<vmem>>, vector<256x128xf32>,
    %c1_i32 = arith.constant 1 : i32
    %93 = arith.cmpi eq, %arg1, %c1_i32 : i32
    %94 = arith.extui %93 : i1 to i32
    %c0_i32_50 = arith.constant 0 : i32
    %95 = arith.cmpi ne, %94, %c0_i32_50 : i32
    scf.if %95 {
      %c0_51 = arith.constant 0 : index
      %c0_52 = arith.constant 0 : index
      %96 = vector.load %arg10[%c0_51, %c0_52] : memref<256x2xf32, #tpu.memory_space<vmem>>, vector<256x2xf32>
      %cst_53 = arith.constant 0.000000e+00 : f32
      %97 = vector.broadcast %cst_53 : f32 to vector<256x2xf32>
      %98 = arith.cmpf ogt, %96, %97 : vector<256x2xf32>
      %cst_54 = arith.constant 1.000000e+00 : f32
      %99 = vector.broadcast %cst_54 : f32 to vector<256x2xf32>
      %100 = arith.divf %99, %96 : vector<256x2xf32>
      %cst_55 = arith.constant 0.000000e+00 : f32
      %101 = vector.broadcast %cst_55 : f32 to vector<256x2xf32>
      %102 = arith.select %98, %100, %101 : vector<256x2xi1>, vector<256x2xf32>
      %cst_56 = arith.constant 0.000000e+00 : f32
      %103 = vector.broadcast %cst_56 : f32 to vector<256x128xf32>
      %104 = vector.extract_strided_slice %102 {offsets = [0, 0], sizes = [256, 1], strides = [1, 1]} : vector<256x2xf32> to vector<256x1xf32>
      %c0_57 = arith.constant 0 : index
      %c0_58 = arith.constant 0 : index
      %105 = vector.load %arg6[%c0_57, %c0_58] : memref<2x128xf32, #tpu.memory_space<vmem>>, vector<1x128xf32>
      %106 = vector.broadcast %104 : vector<256x1xf32> to vector<256x128xf32>
      %107 = vector.broadcast %105 : vector<1x128xf32> to vector<256x128xf32>
      %108 = arith.mulf %106, %107 : vector<256x128xf32>
      %109 = arith.addf %103, %108 : vector<256x128xf32>
      %110 = vector.extract_strided_slice %102 {offsets = [0, 1], sizes = [256, 1], strides = [1, 1]} : vector<256x2xf32> to vector<256x1xf32>
      %c1_59 = arith.constant 1 : index
      %c0_60 = arith.constant 0 : index
      %111 = vector.load %arg6[%c1_59, %c0_60] : memref<2x128xf32, #tpu.memory_space<vmem>>, vector<1x128xf32>
      %112 = vector.broadcast %110 : vector<256x1xf32> to vector<256x128xf32>
      %113 = vector.broadcast %111 : vector<1x128xf32> to vector<256x128xf32>
      %114 = arith.mulf %112, %113 : vector<256x128xf32>
      %115 = arith.addf %109, %114 : vector<256x128xf32>
      %c0_61 = arith.constant 0 : index
      %c0_62 = arith.constant 0 : index
      %116 = vector.load %arg11[%c0_61, %c0_62] : memref<256x128xf32, #tpu.memory_space<vmem>>, vector<256x128xf32>
      %117 = arith.mulf %116, %115 : vector<256x128xf32>
      %c0_63 = arith.constant 0 : index
      %c0_64 = arith.constant 0 : index
      %118 = vector.load %arg7[%c0_63, %c0_64] : memref<1x128xf32, #tpu.memory_space<vmem>>, vector<1x128xf32>
      %119 = vector.broadcast %118 : vector<1x128xf32> to vector<256x128xf32>
      %120 = arith.addf %117, %119 : vector<256x128xf32>
      %c0_65 = arith.constant 0 : index
      %c0_66 = arith.constant 0 : index
      %121 = vector.load %arg8[%c0_65, %c0_66] : memref<256x128xf32, #tpu.memory_space<vmem>>, vector<256x128xf32>
      tpu.vector_store %arg8[%c0_65, %c0_66], %120 {strides = array<i32>} : memref<256x128xf32, #tpu.memory_space<vmem>>, vector<256x128xf32>,
    } else {
    }
    return
  }
  func.func @transform_0(%arg0: i32, %arg1: i32) -> (i32, i32) {
    %c0_i32 = arith.constant 0 : i32
    %c0_i32_0 = arith.constant 0 : i32
    return %arg0, %c0_i32 : i32, i32
  }
  func.func @transform_1(%arg0: i32, %arg1: i32) -> (i32, i32) {
    %c0_i32 = arith.constant 0 : i32
    %c0_i32_0 = arith.constant 0 : i32
    return %c0_i32, %arg1 : i32, i32
  }
  func.func @transform_2(%arg0: i32, %arg1: i32) -> (i32, i32) {
    %c0_i32 = arith.constant 0 : i32
    %c0_i32_0 = arith.constant 0 : i32
    return %arg1, %c0_i32 : i32, i32
  }
  func.func @transform_3(%arg0: i32, %arg1: i32) -> (i32, i32) {
    %c0_i32 = arith.constant 0 : i32
    return %arg0, %arg1 : i32, i32
  }
  func.func @transform_4(%arg0: i32, %arg1: i32) -> (i32, i32) {
    %c0_i32 = arith.constant 0 : i32
    %c0_i32_0 = arith.constant 0 : i32
    %c0_i32_1 = arith.constant 0 : i32
    return %c0_i32, %c0_i32_0 : i32, i32
  }
  func.func @transform_5(%arg0: i32, %arg1: i32) -> (i32, i32) {
    %c0_i32 = arith.constant 0 : i32
    %c0_i32_0 = arith.constant 0 : i32
    %c0_i32_1 = arith.constant 0 : i32
    return %c0_i32, %c0_i32_0 : i32, i32
  }
  func.func @transform_6(%arg0: i32, %arg1: i32) -> (i32, i32) {
    %c0_i32 = arith.constant 0 : i32
    %c0_i32_0 = arith.constant 0 : i32
    return %arg0, %c0_i32 : i32, i32
  }
}

</mosaic_0001>

<llo_original>
// kernel: tpu_custom_call.1
$region0: #{tpu_custom_call.1}
  #allocation0 [shape = 'u32[]', space=smem, size = 0x4, offset = 0x4, fixed_abs, tag = 'smem constant byte address 0x4 - core index']
  #allocation1 [shape = 'u32[144,128]{1,0:T(1,128)}', space=vmem, size = 0x12000, scoped, tag = 'internal scratch']
  #allocation2 [shape = 'f32[256,2]{1,0:T(8,128)}', space=vmem, size = 0x20000, scoped, tag = 'scratch operand']
  #allocation3 [shape = 'f32[256,2]{1,0:T(8,128)}', space=vmem, size = 0x20000, scoped, tag = 'scratch operand']
  #allocation4 [shape = 'f32[256,128]{1,0:T(8,128)}', space=vmem, size = 0x20000, scoped, tag = 'scratch operand']
  %s0 = inlined_call_operand.vmem [shape: f32[512,2], index: 0, kind: input, shape index: {}]
  %s1 = inlined_call_operand.hbm [shape: f32[2,1024], index: 1, kind: input, shape index: {}]
  %s2 = inlined_call_operand.vmem [shape: bf16[1024,128], index: 2, kind: input, shape index: {}]
  %s3 = inlined_call_operand.hbm [shape: s8[512,1024], index: 3, kind: input, shape index: {}]
  %s4 = inlined_call_operand.vmem [shape: f32[2,128], index: 4, kind: input, shape index: {}]
  %s5 = inlined_call_operand.vmem [shape: f32[1,128], index: 5, kind: input, shape index: {}]
  %s6 = inlined_call_operand.hbm [shape: f32[512,128], index: 6, kind: output, shape index: {}]
  %s7 = sld [smem:[#allocation0]]
  $region73: #{tpu_custom_call.1} parent=0
    _
  %s9 = ssub.s32 1, %s7
  %s10 = scalar_select 0, %s9, %s7
  $region1: #{tpu_custom_call.1} parent=0
    #allocation5 [shape = 'u8[8192]{0}', space=vmem, size = 0x2000, scoped, tag = 'input window, operand 1']
    #allocation6 [shape = 's32[2]{0}', space=sflag, size = 0x8, scoped, tag = 'scoped memory for tpu_custom_call.1']
    #allocation7 [shape = 's32[2]{0}', space=sflag, size = 0x8, scoped, tag = 'scoped memory for tpu_custom_call.1']
    #allocation8 [shape = 'u8[262144]{0}', space=vmem, size = 0x40000, scoped, tag = 'input window, operand 3']
    #allocation9 [shape = 's32[2]{0}', space=sflag, size = 0x8, scoped, tag = 'scoped memory for tpu_custom_call.1']
    #allocation10 [shape = 'u8[262144]{0}', space=vmem, size = 0x40000, scoped, tag = 'output window, operand 0']
    %11 = vsyncpa [#allocation6], 0
    %s12 = scalar_lea.sflag [#allocation6], 1
    %13 = vsyncpa %s12, 0
    %14 = vsyncpa [#allocation9], 0
    %s15 = scalar_lea.sflag [#allocation9], 1
    %16 = vsyncpa %s15, 0
    %17 = vsyncpa [#allocation7], 0
    %s18 = scalar_lea.sflag [#allocation7], 1
    %19 = vsyncpa %s18, 0
    loop: start=0, step=1, limit=6
    $region2: #{tpu_custom_call.1} parent=1 // loop_pre_header
      _
    $region3: #{tpu_custom_call.1} parent=1 // loop_header
      %s21 = sphi 0, %s25
      %p22 = scmp.ge.s32.totalorder %s21, 6
      %s28 = sphi 0, %s40
      %s29 = sphi 0, %s36
      %s30 = sphi 0, %s28
      %s31 = sphi 0, %s29
      %s32 = sphi 0, %s30
      %s33 = sphi 0, %s31
      %s43 = sphi 0, %s45
      %s46 = sphi 0, %s43
      %s47 = sphi 0, %s46
      %s63 = sphi 0, %s47
      %s69 = sphi 0, %s71
      %s72 = sphi 0, %s69
      %s73 = sphi 0, %s72
      %s89 = sphi 0, %s73
      %s95 = sphi 0, %s97
      %s98 = sphi 0, %s95
      %s99 = sphi 0, %s98
      %s115 = sphi 0, %s99
      %s123 = sphi 0, %s125
      %s126 = sphi 0, %s123
      %s127 = sphi 0, %s126
      %s143 = sphi 0, %s127
      %s147 = sphi 0, %s147
      %s149 = sphi 0, %s147
      %s150 = sphi 0, %s149
      %s164 = sphi 0, %s150
      %s168 = sphi 0, %s168
      %s170 = sphi 0, %s168
      %s171 = sphi 0, %s170
      %s185 = sphi 0, %s171
      %s191 = sphi 0, %s193
      %s194 = sphi 0, %s191
      %s195 = sphi 0, %s194
      %s211 = sphi 0, %s195
    $region4: #{tpu_custom_call.1} parent=1 // loop_header_branch
      %24 = sbr.rel (%p22) target = $region8
    $region5: #{tpu_custom_call.1} parent=1 // loop_body
      %s26 = ssub.s32 %s21, 1
      %s27 = ssub.s32 %s21, 2
      %s34 = sadd.s32 1, %s29
      %p35 = scmp.ge.s32.totalorder %s34, 2
      %s36 = scalar_select %p35, 0, %s34
      %s37 = sadd.s32 1, %s28
      %s38 = scalar_select %p35, %s37, %s28
      %p39 = scmp.ge.s32.totalorder %s38, 2
      %s40 = scalar_select %p39, 0, %s38
      %s41 = ssub.s32 %s28, %s40
      %p42 = scmp.eq.s32.totalorder %s41, 0
      %s44 = sadd.s32 %s43, 1
      %s45 = scalar_select %p42, %s43, %s44
      %p48 = pneg %p42
      %p49 = scmp.eq.s32.totalorder %s21, 3
      %p50 = por %p48, %p49
      %p51 = scmp.ne.s32.totalorder %s43, %s46
      %p52 = scmp.eq.s32.totalorder %s21, 0
      %p53 = por %p51, %p52
      %p54 = scmp.ne.s32.totalorder %s43, %s46
      %p55 = scmp.eq.s32.totalorder %s26, 3
      %p56 = por %p54, %p55
      %p57 = scmp.ne.s32.totalorder %s46, %s47
      %p58 = scmp.eq.s32.totalorder %s26, 0
      %p59 = por %p57, %p58
      %p60 = scmp.ne.s32.totalorder %s46, %s47
      %p61 = scmp.eq.s32.totalorder %s27, 3
      %p62 = por %p60, %p61
      %p64 = scmp.ne.s32.totalorder %s47, %s63
      %p65 = scmp.eq.s32.totalorder %s27, 0
      %p66 = por %p64, %p65
      %s67 = ssub.s32 %s29, %s36
      %p68 = scmp.eq.s32.totalorder %s67, 0
      %s70 = sadd.s32 %s69, 1
      %s71 = scalar_select %p68, %s69, %s70
      %p74 = pneg %p68
      %p75 = scmp.eq.s32.totalorder %s21, 3
      %p76 = por %p74, %p75
      %p77 = scmp.ne.s32.totalorder %s69, %s72
      %p78 = scmp.eq.s32.totalorder %s21, 0
      %p79 = por %p77, %p78
      %p80 = scmp.ne.s32.totalorder %s69, %s72
      %p81 = scmp.eq.s32.totalorder %s26, 3
      %p82 = por %p80, %p81
      %p83 = scmp.ne.s32.totalorder %s72, %s73
      %p84 = scmp.eq.s32.totalorder %s26, 0
      %p85 = por %p83, %p84
      %p86 = scmp.ne.s32.totalorder %s72, %s73
      %p87 = scmp.eq.s32.totalorder %s27, 3
      %p88 = por %p86, %p87
      %p90 = scmp.ne.s32.totalorder %s73, %s89
      %p91 = scmp.eq.s32.totalorder %s27, 0
      %p92 = por %p90, %p91
      %s93 = ssub.s32 %s29, %s36
      %p94 = scmp.eq.s32.totalorder %s93, 0
      %s96 = sadd.s32 %s95, 1
      %s97 = scalar_select %p94, %s95, %s96
      %p100 = pneg %p94
      %p101 = scmp.eq.s32.totalorder %s21, 3
      %p102 = por %p100, %p101
      %p103 = scmp.ne.s32.totalorder %s95, %s98
      %p104 = scmp.eq.s32.totalorder %s21, 0
      %p105 = por %p103, %p104
      %p106 = scmp.ne.s32.totalorder %s95, %s98
      %p107 = scmp.eq.s32.totalorder %s26, 3
      %p108 = por %p106, %p107
      %p109 = scmp.ne.s32.totalorder %s98, %s99
      %p110 = scmp.eq.s32.totalorder %s26, 0
      %p111 = por %p109, %p110
      %p112 = scmp.ne.s32.totalorder %s98, %s99
      %p113 = scmp.eq.s32.totalorder %s27, 3
      %p114 = por %p112, %p113
      %p116 = scmp.ne.s32.totalorder %s99, %s115
      %p117 = scmp.eq.s32.totalorder %s27, 0
      %p118 = por %p116, %p117
      %s119 = ssub.s32 %s28, %s40
      %s120 = ssub.s32 %s29, %s36
      %s121 = sor.u32 %s119, %s120
      %p122 = scmp.eq.s32.totalorder %s121, 0
      %s124 = sadd.s32 %s123, 1
      %s125 = scalar_select %p122, %s123, %s124
      %p128 = pneg %p122
      %p129 = scmp.eq.s32.totalorder %s21, 3
      %p130 = por %p128, %p129
      %p131 = scmp.ne.s32.totalorder %s123, %s126
      %p132 = scmp.eq.s32.totalorder %s21, 0
      %p133 = por %p131, %p132
      %p134 = scmp.ne.s32.totalorder %s123, %s126
      %p135 = scmp.eq.s32.totalorder %s26, 3
      %p136 = por %p134, %p135
      %p137 = scmp.ne.s32.totalorder %s126, %s127
      %p138 = scmp.eq.s32.totalorder %s26, 0
      %p139 = por %p137, %p138
      %p140 = scmp.ne.s32.totalorder %s126, %s127
      %p141 = scmp.eq.s32.totalorder %s27, 3
      %p142 = por %p140, %p141
      %p144 = scmp.ne.s32.totalorder %s127, %s143
      %p145 = scmp.eq.s32.totalorder %s27, 0
      %p146 = por %p144, %p145
      %s148 = sadd.s32 %s147, 1
      %p151 = scmp.eq.s32.totalorder %s21, 3
      %p152 = scmp.ne.s32.totalorder %s147, %s149
      %p153 = scmp.eq.s32.totalorder %s21, 0
      %p154 = por %p152, %p153
      %p155 = scmp.ne.s32.totalorder %s147, %s149
      %p156 = scmp.eq.s32.totalorder %s26, 3
      %p157 = por %p155, %p156
      %p158 = scmp.ne.s32.totalorder %s149, %s150
      %p159 = scmp.eq.s32.totalorder %s26, 0
      %p160 = por %p158, %p159
      %p161 = scmp.ne.s32.totalorder %s149, %s150
      %p162 = scmp.eq.s32.totalorder %s27, 3
      %p163 = por %p161, %p162
      %p165 = scmp.ne.s32.totalorder %s150, %s164
      %p166 = scmp.eq.s32.totalorder %s27, 0
      %p167 = por %p165, %p166
      %s169 = sadd.s32 %s168, 1
      %p172 = scmp.eq.s32.totalorder %s21, 3
      %p173 = scmp.ne.s32.totalorder %s168, %s170
      %p174 = scmp.eq.s32.totalorder %s21, 0
      %p175 = por %p173, %p174
      %p176 = scmp.ne.s32.totalorder %s168, %s170
      %p177 = scmp.eq.s32.totalorder %s26, 3
      %p178 = por %p176, %p177
      %p179 = scmp.ne.s32.totalorder %s170, %s171
      %p180 = scmp.eq.s32.totalorder %s26, 0
      %p181 = por %p179, %p180
      %p182 = scmp.ne.s32.totalorder %s170, %s171
      %p183 = scmp.eq.s32.totalorder %s27, 3
      %p184 = por %p182, %p183
      %p186 = scmp.ne.s32.totalorder %s171, %s185
      %p187 = scmp.eq.s32.totalorder %s27, 0
      %p188 = por %p186, %p187
      %s189 = ssub.s32 %s28, %s40
      %p190 = scmp.eq.s32.totalorder %s189, 0
      %s192 = sadd.s32 %s191, 1
      %s193 = scalar_select %p190, %s191, %s192
      %p196 = pneg %p190
      %p197 = scmp.eq.s32.totalorder %s21, 3
      %p198 = por %p196, %p197
      %p199 = scmp.ne.s32.totalorder %s191, %s194
      %p200 = scmp.eq.s32.totalorder %s21, 0
      %p201 = por %p199, %p200
      %p202 = scmp.ne.s32.totalorder %s191, %s194
      %p203 = scmp.eq.s32.totalorder %s26, 3
      %p204 = por %p202, %p203
      %p205 = scmp.ne.s32.totalorder %s194, %s195
      %p206 = scmp.eq.s32.totalorder %s26, 0
      %p207 = por %p205, %p206
      %p208 = scmp.ne.s32.totalorder %s194, %s195
      %p209 = scmp.eq.s32.totalorder %s27, 3
      %p210 = por %p208, %p209
      %p212 = scmp.ne.s32.totalorder %s195, %s211
      %p213 = scmp.eq.s32.totalorder %s27, 0
      %p214 = por %p212, %p213
      %p215 = scmp.le.s32.totalorder 1, %s21
      %p216 = scmp.lt.s32.totalorder %s21, 5
      %p217 = pnand %p215, %p216
      %p218 = pneg %p217
      // Predicated region
      $region9: #{tpu_custom_call.1} parent=5 // pred_check
        _
      $region10: #{tpu_custom_call.1} parent=5 // pred_check_branch
        %220 = sbr.rel (%p217) target = $region12
      $region11: #{tpu_custom_call.1} parent=5 // pred_region
        %s221 = ssub.s32 %s21, 1
        // Predicated region
        $region13: #{tpu_custom_call.1} parent=11 // pred_check
          %p222 = pneg %p160
        $region14: #{tpu_custom_call.1} parent=11 // pred_check_branch
          %224 = sbr.rel (%p222) target = $region16
        $region15: #{tpu_custom_call.1} parent=11 // pred_region
          _
        $region16: #{tpu_custom_call.1} parent=11 // pred_fallthru
          _
        // Predicated region
        $region17: #{tpu_custom_call.1} parent=11 // pred_check
          %p225 = pneg %p181
        $region18: #{tpu_custom_call.1} parent=11 // pred_check_branch
          %227 = sbr.rel (%p225) target = $region20
        $region19: #{tpu_custom_call.1} parent=11 // pred_region
          _
        $region20: #{tpu_custom_call.1} parent=11 // pred_fallthru
          _
      $region12: #{tpu_custom_call.1} parent=5 // pred_fallthru
        _
      %p228 = scmp.lt.s32.totalorder %s21, 4
      // Predicated region
      $region21: #{tpu_custom_call.1} parent=5 // pred_check
        %p229 = pneg %p228
      $region22: #{tpu_custom_call.1} parent=5 // pred_check_branch
        %231 = sbr.rel (%p229) target = $region24
      $region23: #{tpu_custom_call.1} parent=5 // pred_region
        // Predicated region
        $region25: #{tpu_custom_call.1} parent=23 // pred_check
          %p232 = pneg %p53
        $region26: #{tpu_custom_call.1} parent=23 // pred_check_branch
          %234 = sbr.rel (%p232) target = $region28
        $region27: #{tpu_custom_call.1} parent=23 // pred_region
          %s235 = smul.u32 32, %s28
          %p236 = scmp.lt.s32.totalorder %s235, 63
          %s237 = scalar_select %p236, %s235, 63
          %s238 = smul.addr %s237, 8
          %s239 = scalar_lea.vmem %s0, %s238
          %s240 = smul.u32 32, %s28
        $region28: #{tpu_custom_call.1} parent=23 // pred_fallthru
          _
        // Predicated region
        $region29: #{tpu_custom_call.1} parent=23 // pred_check
          %p241 = pneg %p79
        $region30: #{tpu_custom_call.1} parent=23 // pred_check_branch
          %243 = sbr.rel (%p241) target = $region32
        $region31: #{tpu_custom_call.1} parent=23 // pred_region
          %s244 = sand.u32 %s69, 1
          %s245 = scalar_lea.sflag [#allocation6], %s244
          %s246 = sand.u32 %s69, 1
          %s247 = smul.addr %s246, 8
          %s248 = scalar_lea.vmem [#allocation5], %s247
          %s249 = smul.u32 4, %s29
          %s251 = ssub.s32 128, 128
          %252 = vsyncadd %s245, %s251
          %s253 = smul.addr %s249, 32
          %s254 = scalar_lea.hbm %s1, %s253
          %s256 = sshll.u32 %s248, 4
          %s257 = int_to_ptr.vmem [resolvable:$true] %s256
          %259 = dma.hbm_to_vmem [thread:$0]  %s254, 128, %s257, %s245
        $region32: #{tpu_custom_call.1} parent=23 // pred_fallthru
          _
        // Predicated region
        $region33: #{tpu_custom_call.1} parent=23 // pred_check
          %p260 = pneg %p105
        $region34: #{tpu_custom_call.1} parent=23 // pred_check_branch
          %262 = sbr.rel (%p260) target = $region36
        $region35: #{tpu_custom_call.1} parent=23 // pred_region
          %s263 = smul.u32 64, %s29
          %p264 = scmp.lt.s32.totalorder %s263, 127
          %s265 = scalar_select %p264, %s263, 127
          %s266 = smul.addr %s265, 4
          %s267 = scalar_lea.vmem %s2, %s266
          %s268 = smul.u32 64, %s29
        $region36: #{tpu_custom_call.1} parent=23 // pred_fallthru
          _
        // Predicated region
        $region37: #{tpu_custom_call.1} parent=23 // pred_check
          %p269 = pneg %p133
        $region38: #{tpu_custom_call.1} parent=23 // pred_check_branch
          %271 = sbr.rel (%p269) target = $region40
        $region39: #{tpu_custom_call.1} parent=23 // pred_region
          %s272 = sand.u32 %s123, 1
          %s273 = scalar_lea.sflag [#allocation9], %s272
          %s274 = sand.u32 %s123, 1
          %s275 = smul.addr %s274, 256
          %s276 = scalar_lea.vmem [#allocation8], %s275
          %s277 = smul.u32 8, %s28
          %s278 = smul.u32 4, %s29
          %s280 = ssub.s32 4096, 4096
          %281 = vsyncadd %s273, %s280
          %s282 = smul.addr %s277, 8
          %s283 = sadd.s32 %s278, %s282
          %s284 = smul.addr %s283, 128
          %s285 = scalar_lea.hbm %s3, %s284
          %s286 = sshll.u32 %s276, 4
          %s287 = int_to_ptr.vmem [resolvable:$true] %s286
          %292 = dma.hbm_to_vmem [thread:$0]  %s285, 4096, %s287, %s273, 1024, 512, 32
        $region40: #{tpu_custom_call.1} parent=23 // pred_fallthru
          _
      $region24: #{tpu_custom_call.1} parent=5 // pred_fallthru
        _
      %p293 = scmp.le.s32.totalorder 1, %s21
      %p294 = scmp.lt.s32.totalorder %s21, 5
      %p295 = pnand %p293, %p294
      %p296 = pneg %p295
      // Predicated region
      $region41: #{tpu_custom_call.1} parent=5 // pred_check
        _
      $region42: #{tpu_custom_call.1} parent=5 // pred_check_branch
        %298 = sbr.rel (%p295) target = $region44
      $region43: #{tpu_custom_call.1} parent=5 // pred_region
        %s299 = ssub.s32 %s21, 1
        %s300 = sand.u32 %s72, 1
        %s301 = scalar_lea.sflag [#allocation6], %s300
        %s302 = sand.u32 %s72, 1
        %s303 = smul.addr %s302, 8
        %s304 = scalar_lea.vmem [#allocation5], %s303
        // Predicated region
        $region45: #{tpu_custom_call.1} parent=43 // pred_check
          %p305 = pneg %p85
        $region46: #{tpu_custom_call.1} parent=43 // pred_check_branch
          %307 = sbr.rel (%p305) target = $region48
        $region47: #{tpu_custom_call.1} parent=43 // pred_region
          %308 = dma.done %s301, 128
        $region48: #{tpu_custom_call.1} parent=43 // pred_fallthru
          _
        %s309 = sand.u32 %s126, 1
        %s310 = scalar_lea.sflag [#allocation9], %s309
        %s311 = sand.u32 %s126, 1
        %s312 = smul.addr %s311, 256
        %s313 = scalar_lea.vmem [#allocation8], %s312
        // Predicated region
        $region49: #{tpu_custom_call.1} parent=43 // pred_check
          %p314 = pneg %p139
        $region50: #{tpu_custom_call.1} parent=43 // pred_check_branch
          %316 = sbr.rel (%p314) target = $region52
        $region51: #{tpu_custom_call.1} parent=43 // pred_region
          %317 = dma.done %s310, 4096
        $region52: #{tpu_custom_call.1} parent=43 // pred_fallthru
          _
        %s318 = smul.u32 32, %s30
        %p319 = scmp.lt.s32.totalorder %s318, 63
        %s320 = scalar_select %p319, %s318, 63
        %s321 = smul.addr %s320, 8
        %s322 = scalar_lea.vmem %s0, %s321
        %p323 = pneg %p59
        %p324 = pneg %p56
        %s325 = sand.u32 %s72, 1
        %s326 = scalar_lea.sflag [#allocation6], %s325
        %s327 = sand.u32 %s72, 1
        %s328 = smul.addr %s327, 8
        %s329 = scalar_lea.vmem [#allocation5], %s328
        %p330 = pneg %p85
        %p331 = pneg %p82
        %s332 = smul.u32 64, %s31
        %p333 = scmp.lt.s32.totalorder %s332, 127
        %s334 = scalar_select %p333, %s332, 127
        %s335 = smul.addr %s334, 4
        %s336 = scalar_lea.vmem %s2, %s335
        %p337 = pneg %p111
        %p338 = pneg %p108
        %s339 = sand.u32 %s126, 1
        %s340 = scalar_lea.sflag [#allocation9], %s339
        %s341 = sand.u32 %s126, 1
        %s342 = smul.addr %s341, 256
        %s343 = scalar_lea.vmem [#allocation8], %s342
        %p344 = pneg %p139
        %p345 = pneg %p136
        %p346 = pneg %p160
        %p347 = pneg %p157
        %p348 = pneg %p181
        %p349 = pneg %p178
        %p350 = pneg %p207
        %p351 = pneg %p204
        %s352 = sand.u32 %s194, 1
        %s353 = scalar_lea.sflag [#allocation7], %s352
        %s354 = sand.u32 %s194, 1
        %s355 = smul.addr %s354, 256
        %s356 = scalar_lea.vmem [#allocation10], %s355
        %s357 = smul.u32 32, %s30
        %p358 = scmp.lt.s32.totalorder %s357, 63
        %s359 = scalar_select %p358, %s357, 63
        %s360 = smul.addr %s359, 8
        %s361 = scalar_lea.vmem %s0, %s360
        %s362 = smul.u32 32, %s30
        %s363 = smul.u32 4, %s31
        %s364 = smul.u32 64, %s31
        %p365 = scmp.lt.s32.totalorder %s364, 127
        %s366 = scalar_select %p365, %s364, 127
        %s367 = smul.addr %s366, 4
        %s368 = scalar_lea.vmem %s2, %s367
        %s369 = smul.u32 64, %s31
        %s370 = smul.u32 8, %s30
        %s371 = smul.u32 4, %s31
        %s372 = smul.u32 32, %s30
        %p376 = scmp.eq.s32.totalorder %s31, 0
        // Predicated region
        $region53: #{tpu_custom_call.1} parent=43 // pred_check
          %p377 = pneg %p376
        $region54: #{tpu_custom_call.1} parent=43 // pred_check_branch
          %379 = sbr.rel (%p377) target = $region56
        $region55: #{tpu_custom_call.1} parent=43 // pred_region
          %vm380 = vcmask 15360
          %381 = vst.msk [vmem:[#allocation2] sm:$0xff] %vm380, -1e+30
          %382 = vst.msk [vmem:[#allocation2 + $0x8] sm:$0xff] %vm380, -1e+30
          %383 = vst.msk [vmem:[#allocation2 + $0x10] sm:$0xff] %vm380, -1e+30
          %384 = vst.msk [vmem:[#allocation2 + $0x18] sm:$0xff] %vm380, -1e+30
          %385 = vst.msk [vmem:[#allocation2 + $0x20] sm:$0xff] %vm380, -1e+30
          %386 = vst.msk [vmem:[#allocation2 + $0x28] sm:$0xff] %vm380, -1e+30
          %387 = vst.msk [vmem:[#allocation2 + $0x30] sm:$0xff] %vm380, -1e+30
          %388 = vst.msk [vmem:[#allocation2 + $0x38] sm:$0xff] %vm380, -1e+30
          %389 = vst.msk [vmem:[#allocation2 + $0x40] sm:$0xff] %vm380, -1e+30
          %390 = vst.msk [vmem:[#allocation2 + $0x48] sm:$0xff] %vm380, -1e+30
          %391 = vst.msk [vmem:[#allocation2 + $0x50] sm:$0xff] %vm380, -1e+30
          %392 = vst.msk [vmem:[#allocation2 + $0x58] sm:$0xff] %vm380, -1e+30
          %393 = vst.msk [vmem:[#allocation2 + $0x60] sm:$0xff] %vm380, -1e+30
          %394 = vst.msk [vmem:[#allocation2 + $0x68] sm:$0xff] %vm380, -1e+30
          %395 = vst.msk [vmem:[#allocation2 + $0x70] sm:$0xff] %vm380, -1e+30
          %396 = vst.msk [vmem:[#allocation2 + $0x78] sm:$0xff] %vm380, -1e+30
          %397 = vst.msk [vmem:[#allocation2 + $0x80] sm:$0xff] %vm380, -1e+30
          %398 = vst.msk [vmem:[#allocation2 + $0x88] sm:$0xff] %vm380, -1e+30
          %399 = vst.msk [vmem:[#allocation2 + $0x90] sm:$0xff] %vm380, -1e+30
          %400 = vst.msk [vmem:[#allocation2 + $0x98] sm:$0xff] %vm380, -1e+30
          %401 = vst.msk [vmem:[#allocation2 + $0xa0] sm:$0xff] %vm380, -1e+30
          %402 = vst.msk [vmem:[#allocation2 + $0xa8] sm:$0xff] %vm380, -1e+30
          %403 = vst.msk [vmem:[#allocation2 + $0xb0] sm:$0xff] %vm380, -1e+30
          %404 = vst.msk [vmem:[#allocation2 + $0xb8] sm:$0xff] %vm380, -1e+30
          %405 = vst.msk [vmem:[#allocation2 + $0xc0] sm:$0xff] %vm380, -1e+30
          %406 = vst.msk [vmem:[#allocation2 + $0xc8] sm:$0xff] %vm380, -1e+30
          %407 = vst.msk [vmem:[#allocation2 + $0xd0] sm:$0xff] %vm380, -1e+30
          %408 = vst.msk [vmem:[#allocation2 + $0xd8] sm:$0xff] %vm380, -1e+30
          %409 = vst.msk [vmem:[#allocation2 + $0xe0] sm:$0xff] %vm380, -1e+30
          %410 = vst.msk [vmem:[#allocation2 + $0xe8] sm:$0xff] %vm380, -1e+30
          %411 = vst.msk [vmem:[#allocation2 + $0xf0] sm:$0xff] %vm380, -1e+30
          %412 = vst.msk [vmem:[#allocation2 + $0xf8] sm:$0xff] %vm380, -1e+30
          %413 = vst.msk [vmem:[#allocation3] sm:$0xff] %vm380, 0.0
          %414 = vst.msk [vmem:[#allocation3 + $0x8] sm:$0xff] %vm380, 0.0
          %415 = vst.msk [vmem:[#allocation3 + $0x10] sm:$0xff] %vm380, 0.0
          %416 = vst.msk [vmem:[#allocation3 + $0x18] sm:$0xff] %vm380, 0.0
          %417 = vst.msk [vmem:[#allocation3 + $0x20] sm:$0xff] %vm380, 0.0
          %418 = vst.msk [vmem:[#allocation3 + $0x28] sm:$0xff] %vm380, 0.0
          %419 = vst.msk [vmem:[#allocation3 + $0x30] sm:$0xff] %vm380, 0.0
          %420 = vst.msk [vmem:[#allocation3 + $0x38] sm:$0xff] %vm380, 0.0
          %421 = vst.msk [vmem:[#allocation3 + $0x40] sm:$0xff] %vm380, 0.0
          %422 = vst.msk [vmem:[#allocation3 + $0x48] sm:$0xff] %vm380, 0.0
          %423 = vst.msk [vmem:[#allocation3 + $0x50] sm:$0xff] %vm380, 0.0
          %424 = vst.msk [vmem:[#allocation3 + $0x58] sm:$0xff] %vm380, 0.0
          %425 = vst.msk [vmem:[#allocation3 + $0x60] sm:$0xff] %vm380, 0.0
          %426 = vst.msk [vmem:[#allocation3 + $0x68] sm:$0xff] %vm380, 0.0
          %427 = vst.msk [vmem:[#allocation3 + $0x70] sm:$0xff] %vm380, 0.0
          %428 = vst.msk [vmem:[#allocation3 + $0x78] sm:$0xff] %vm380, 0.0
          %429 = vst.msk [vmem:[#allocation3 + $0x80] sm:$0xff] %vm380, 0.0
          %430 = vst.msk [vmem:[#allocation3 + $0x88] sm:$0xff] %vm380, 0.0
          %431 = vst.msk [vmem:[#allocation3 + $0x90] sm:$0xff] %vm380, 0.0
          %432 = vst.msk [vmem:[#allocation3 + $0x98] sm:$0xff] %vm380, 0.0
          %433 = vst.msk [vmem:[#allocation3 + $0xa0] sm:$0xff] %vm380, 0.0
          %434 = vst.msk [vmem:[#allocation3 + $0xa8] sm:$0xff] %vm380, 0.0
          %435 = vst.msk [vmem:[#allocation3 + $0xb0] sm:$0xff] %vm380, 0.0
          %436 = vst.msk [vmem:[#allocation3 + $0xb8] sm:$0xff] %vm380, 0.0
          %437 = vst.msk [vmem:[#allocation3 + $0xc0] sm:$0xff] %vm380, 0.0
          %438 = vst.msk [vmem:[#allocation3 + $0xc8] sm:$0xff] %vm380, 0.0
          %439 = vst.msk [vmem:[#allocation3 + $0xd0] sm:$0xff] %vm380, 0.0
          %440 = vst.msk [vmem:[#allocation3 + $0xd8] sm:$0xff] %vm380, 0.0
          %441 = vst.msk [vmem:[#allocation3 + $0xe0] sm:$0xff] %vm380, 0.0
          %442 = vst.msk [vmem:[#allocation3 + $0xe8] sm:$0xff] %vm380, 0.0
          %443 = vst.msk [vmem:[#allocation3 + $0xf0] sm:$0xff] %vm380, 0.0
          %444 = vst.msk [vmem:[#allocation3 + $0xf8] sm:$0xff] %vm380, 0.0
          %445 = vst [vmem:[#allocation4] sm:$0xff] 0.0
          %446 = vst [vmem:[#allocation4 + $0x8] sm:$0xff] 0.0
          %447 = vst [vmem:[#allocation4 + $0x10] sm:$0xff] 0.0
          %448 = vst [vmem:[#allocation4 + $0x18] sm:$0xff] 0.0
          %449 = vst [vmem:[#allocation4 + $0x20] sm:$0xff] 0.0
          %450 = vst [vmem:[#allocation4 + $0x28] sm:$0xff] 0.0
          %451 = vst [vmem:[#allocation4 + $0x30] sm:$0xff] 0.0
          %452 = vst [vmem:[#allocation4 + $0x38] sm:$0xff] 0.0
          %453 = vst [vmem:[#allocation4 + $0x40] sm:$0xff] 0.0
          %454 = vst [vmem:[#allocation4 + $0x48] sm:$0xff] 0.0
          %455 = vst [vmem:[#allocation4 + $0x50] sm:$0xff] 0.0
          %456 = vst [vmem:[#allocation4 + $0x58] sm:$0xff] 0.0
          %457 = vst [vmem:[#allocation4 + $0x60] sm:$0xff] 0.0
          %458 = vst [vmem:[#allocation4 + $0x68] sm:$0xff] 0.0
          %459 = vst [vmem:[#allocation4 + $0x70] sm:$0xff] 0.0
          %460 = vst [vmem:[#allocation4 + $0x78] sm:$0xff] 0.0
          %461 = vst [vmem:[#allocation4 + $0x80] sm:$0xff] 0.0
          %462 = vst [vmem:[#allocation4 + $0x88] sm:$0xff] 0.0
          %463 = vst [vmem:[#allocation4 + $0x90] sm:$0xff] 0.0
          %464 = vst [vmem:[#allocation4 + $0x98] sm:$0xff] 0.0
          %465 = vst [vmem:[#allocation4 + $0xa0] sm:$0xff] 0.0
          %466 = vst [vmem:[#allocation4 + $0xa8] sm:$0xff] 0.0
          %467 = vst [vmem:[#allocation4 + $0xb0] sm:$0xff] 0.0
          %468 = vst [vmem:[#allocation4 + $0xb8] sm:$0xff] 0.0
          %469 = vst [vmem:[#allocation4 + $0xc0] sm:$0xff] 0.0
          %470 = vst [vmem:[#allocation4 + $0xc8] sm:$0xff] 0.0
          %471 = vst [vmem:[#allocation4 + $0xd0] sm:$0xff] 0.0
          %472 = vst [vmem:[#allocation4 + $0xd8] sm:$0xff] 0.0
          %473 = vst [vmem:[#allocation4 + $0xe0] sm:$0xff] 0.0
          %474 = vst [vmem:[#allocation4 + $0xe8] sm:$0xff] 0.0
          %475 = vst [vmem:[#allocation4 + $0xf0] sm:$0xff] 0.0
          %476 = vst [vmem:[#allocation4 + $0xf8] sm:$0xff] 0.0
        $region56: #{tpu_custom_call.1} parent=43 // pred_fallthru
          _
        %v477 = vld [vmem:[%s313] sm:$0xff]
        %v478 = vld [vmem:[%s313 + $0x8] sm:$0xff]
        %v479 = vld [vmem:[%s313 + $0x10] sm:$0xff]
        %v480 = vld [vmem:[%s313 + $0x18] sm:$0xff]
        %v481 = vld [vmem:[%s313 + $0x20] sm:$0xff]
        %v482 = vld [vmem:[%s313 + $0x28] sm:$0xff]
        %v483 = vld [vmem:[%s313 + $0x30] sm:$0xff]
        %v484 = vld [vmem:[%s313 + $0x38] sm:$0xff]
        %v485 = vld [vmem:[%s313 + $0x40] sm:$0xff]
        %v486 = vld [vmem:[%s313 + $0x48] sm:$0xff]
        %v487 = vld [vmem:[%s313 + $0x50] sm:$0xff]
        %v488 = vld [vmem:[%s313 + $0x58] sm:$0xff]
        %v489 = vld [vmem:[%s313 + $0x60] sm:$0xff]
        %v490 = vld [vmem:[%s313 + $0x68] sm:$0xff]
        %v491 = vld [vmem:[%s313 + $0x70] sm:$0xff]
        %v492 = vld [vmem:[%s313 + $0x78] sm:$0xff]
        %v493 = vld [vmem:[%s313 + $0x80] sm:$0xff]
        %v494 = vld [vmem:[%s313 + $0x88] sm:$0xff]
        %v495 = vld [vmem:[%s313 + $0x90] sm:$0xff]
        %v496 = vld [vmem:[%s313 + $0x98] sm:$0xff]
        %v497 = vld [vmem:[%s313 + $0xa0] sm:$0xff]
        %v498 = vld [vmem:[%s313 + $0xa8] sm:$0xff]
        %v499 = vld [vmem:[%s313 + $0xb0] sm:$0xff]
        %v500 = vld [vmem:[%s313 + $0xb8] sm:$0xff]
        %v501 = vld [vmem:[%s313 + $0xc0] sm:$0xff]
        %v502 = vld [vmem:[%s313 + $0xc8] sm:$0xff]
        %v503 = vld [vmem:[%s313 + $0xd0] sm:$0xff]
        %v504 = vld [vmem:[%s313 + $0xd8] sm:$0xff]
        %v505 = vld [vmem:[%s313 + $0xe0] sm:$0xff]
        %v506 = vld [vmem:[%s313 + $0xe8] sm:$0xff]
        %v507 = vld [vmem:[%s313 + $0xf0] sm:$0xff]
        %v508 = vld [vmem:[%s313 + $0xf8] sm:$0xff]
        %vm509 = vnez %v477
        %vm510 = vnez %v478
        %vm511 = vnez %v479
        %vm512 = vnez %v480
        %vm513 = vnez %v481
        %vm514 = vnez %v482
        %vm515 = vnez %v483
        %vm516 = vnez %v484
        %vm517 = vnez %v485
        %vm518 = vnez %v486
        %vm519 = vnez %v487
        %vm520 = vnez %v488
        %vm521 = vnez %v489
        %vm522 = vnez %v490
        %vm523 = vnez %v491
        %vm524 = vnez %v492
        %vm525 = vnez %v493
        %vm526 = vnez %v494
        %vm527 = vnez %v495
        %vm528 = vnez %v496
        %vm529 = vnez %v497
        %vm530 = vnez %v498
        %vm531 = vnez %v499
        %vm532 = vnez %v500
        %vm533 = vnez %v501
        %vm534 = vnez %v502
        %vm535 = vnez %v503
        %vm536 = vnez %v504
        %vm537 = vnez %v505
        %vm538 = vnez %v506
        %vm539 = vnez %v507
        %vm540 = vnez %v508
        %v541 = vld [vmem:[%s368] sm:$0xf]
        %v542 = vld [vmem:[%s368 + $0x4] sm:$0xf]
        %v543 = vld [vmem:[%s368 + $0x8] sm:$0xf]
        %v544 = vld [vmem:[%s368 + $0xc] sm:$0xf]
        %v545 = vld [vmem:[%s368 + $0x10] sm:$0xf]
        %v546 = vld [vmem:[%s368 + $0x14] sm:$0xf]
        %v547 = vld [vmem:[%s368 + $0x18] sm:$0xf]
        %v548 = vld [vmem:[%s368 + $0x1c] sm:$0xf]
        %v549 = vld [vmem:[%s368 + $0x20] sm:$0xf]
        %v550 = vld [vmem:[%s368 + $0x24] sm:$0xf]
        %v551 = vld [vmem:[%s368 + $0x28] sm:$0xf]
        %v552 = vld [vmem:[%s368 + $0x2c] sm:$0xf]
        %v553 = vld [vmem:[%s368 + $0x30] sm:$0xf]
        %v554 = vld [vmem:[%s368 + $0x34] sm:$0xf]
        %v555 = vld [vmem:[%s368 + $0x38] sm:$0xf]
        %v556 = vld [vmem:[%s368 + $0x3c] sm:$0xf]
        %v557 = vld [vmem:[%s368 + $0x40] sm:$0xf]
        %v558 = vld [vmem:[%s368 + $0x44] sm:$0xf]
        %v559 = vld [vmem:[%s368 + $0x48] sm:$0xf]
        %v560 = vld [vmem:[%s368 + $0x4c] sm:$0xf]
        %v561 = vld [vmem:[%s368 + $0x50] sm:$0xf]
        %v562 = vld [vmem:[%s368 + $0x54] sm:$0xf]
        %v563 = vld [vmem:[%s368 + $0x58] sm:$0xf]
        %v564 = vld [vmem:[%s368 + $0x5c] sm:$0xf]
        %v565 = vld [vmem:[%s368 + $0x60] sm:$0xf]
        %v566 = vld [vmem:[%s368 + $0x64] sm:$0xf]
        %v567 = vld [vmem:[%s368 + $0x68] sm:$0xf]
        %v568 = vld [vmem:[%s368 + $0x6c] sm:$0xf]
        %v569 = vld [vmem:[%s368 + $0x70] sm:$0xf]
        %v570 = vld [vmem:[%s368 + $0x74] sm:$0xf]
        %v571 = vld [vmem:[%s368 + $0x78] sm:$0xf]
        %v572 = vld [vmem:[%s368 + $0x7c] sm:$0xf]
        %v573 = vld [vmem:[%s368 + $0x80] sm:$0xf]
        %v574 = vld [vmem:[%s368 + $0x84] sm:$0xf]
        %v575 = vld [vmem:[%s368 + $0x88] sm:$0xf]
        %v576 = vld [vmem:[%s368 + $0x8c] sm:$0xf]
        %v577 = vld [vmem:[%s368 + $0x90] sm:$0xf]
        %v578 = vld [vmem:[%s368 + $0x94] sm:$0xf]
        %v579 = vld [vmem:[%s368 + $0x98] sm:$0xf]
        %v580 = vld [vmem:[%s368 + $0x9c] sm:$0xf]
        %v581 = vld [vmem:[%s368 + $0xa0] sm:$0xf]
        %v582 = vld [vmem:[%s368 + $0xa4] sm:$0xf]
        %v583 = vld [vmem:[%s368 + $0xa8] sm:$0xf]
        %v584 = vld [vmem:[%s368 + $0xac] sm:$0xf]
        %v585 = vld [vmem:[%s368 + $0xb0] sm:$0xf]
        %v586 = vld [vmem:[%s368 + $0xb4] sm:$0xf]
        %v587 = vld [vmem:[%s368 + $0xb8] sm:$0xf]
        %v588 = vld [vmem:[%s368 + $0xbc] sm:$0xf]
        %v589 = vld [vmem:[%s368 + $0xc0] sm:$0xf]
        %v590 = vld [vmem:[%s368 + $0xc4] sm:$0xf]
        %v591 = vld [vmem:[%s368 + $0xc8] sm:$0xf]
        %v592 = vld [vmem:[%s368 + $0xcc] sm:$0xf]
        %v593 = vld [vmem:[%s368 + $0xd0] sm:$0xf]
        %v594 = vld [vmem:[%s368 + $0xd4] sm:$0xf]
        %v595 = vld [vmem:[%s368 + $0xd8] sm:$0xf]
        %v596 = vld [vmem:[%s368 + $0xdc] sm:$0xf]
        %v597 = vld [vmem:[%s368 + $0xe0] sm:$0xf]
        %v598 = vld [vmem:[%s368 + $0xe4] sm:$0xf]
        %v599 = vld [vmem:[%s368 + $0xe8] sm:$0xf]
        %v600 = vld [vmem:[%s368 + $0xec] sm:$0xf]
        %v601 = vld [vmem:[%s368 + $0xf0] sm:$0xf]
        %v602 = vld [vmem:[%s368 + $0xf4] sm:$0xf]
        %v603 = vld [vmem:[%s368 + $0xf8] sm:$0xf]
        %v604 = vld [vmem:[%s368 + $0xfc] sm:$0xf]
        %v605 = vld [vmem:[%s4] sm:$0x1]
        %v606 = vld [vmem:[%s361] sm:$0xff]
        %v607 = vld [vmem:[%s361 + $0x8] sm:$0xff]
        %v608 = vld [vmem:[%s361 + $0x10] sm:$0xff]
        %v609 = vld [vmem:[%s361 + $0x18] sm:$0xff]
        %v610 = vld [vmem:[%s361 + $0x20] sm:$0xff]
        %v611 = vld [vmem:[%s361 + $0x28] sm:$0xff]
        %v612 = vld [vmem:[%s361 + $0x30] sm:$0xff]
        %v613 = vld [vmem:[%s361 + $0x38] sm:$0xff]
        %v614 = vld [vmem:[%s361 + $0x40] sm:$0xff]
        %v615 = vld [vmem:[%s361 + $0x48] sm:$0xff]
        %v616 = vld [vmem:[%s361 + $0x50] sm:$0xff]
        %v617 = vld [vmem:[%s361 + $0x58] sm:$0xff]
        %v618 = vld [vmem:[%s361 + $0x60] sm:$0xff]
        %v619 = vld [vmem:[%s361 + $0x68] sm:$0xff]
        %v620 = vld [vmem:[%s361 + $0x70] sm:$0xff]
        %v621 = vld [vmem:[%s361 + $0x78] sm:$0xff]
        %v622 = vld [vmem:[%s361 + $0x80] sm:$0xff]
        %v623 = vld [vmem:[%s361 + $0x88] sm:$0xff]
        %v624 = vld [vmem:[%s361 + $0x90] sm:$0xff]
        %v625 = vld [vmem:[%s361 + $0x98] sm:$0xff]
        %v626 = vld [vmem:[%s361 + $0xa0] sm:$0xff]
        %v627 = vld [vmem:[%s361 + $0xa8] sm:$0xff]
        %v628 = vld [vmem:[%s361 + $0xb0] sm:$0xff]
        %v629 = vld [vmem:[%s361 + $0xb8] sm:$0xff]
        %v630 = vld [vmem:[%s361 + $0xc0] sm:$0xff]
        %v631 = vld [vmem:[%s361 + $0xc8] sm:$0xff]
        %v632 = vld [vmem:[%s361 + $0xd0] sm:$0xff]
        %v633 = vld [vmem:[%s361 + $0xd8] sm:$0xff]
        %v634 = vld [vmem:[%s361 + $0xe0] sm:$0xff]
        %v635 = vld [vmem:[%s361 + $0xe8] sm:$0xff]
        %v636 = vld [vmem:[%s361 + $0xf0] sm:$0xff]
        %v637 = vld [vmem:[%s361 + $0xf8] sm:$0xff]
        %v638 = vld [vmem:[%s304] ss:$2 sm:$0xf]
        %640 = vset.pattern.permute.xlu0 0
        %641 = vperm.xlu0 %640, %v606
        %v642 = vpop.permute.xlu0 %641
        %645 = vset.pattern.permute.xlu0 0
        %646 = vperm.xlu0 %645, %v607
        %v647 = vpop.permute.xlu0 %646
        %650 = vset.pattern.permute.xlu0 0
        %651 = vperm.xlu0 %650, %v608
        %v652 = vpop.permute.xlu0 %651
        %655 = vset.pattern.permute.xlu0 0
        %656 = vperm.xlu0 %655, %v609
        %v657 = vpop.permute.xlu0 %656
        %660 = vset.pattern.permute.xlu0 0
        %661 = vperm.xlu0 %660, %v610
        %v662 = vpop.permute.xlu0 %661
        %665 = vset.pattern.permute.xlu0 0
        %666 = vperm.xlu0 %665, %v611
        %v667 = vpop.permute.xlu0 %666
        %670 = vset.pattern.permute.xlu0 0
        %671 = vperm.xlu0 %670, %v612
        %v672 = vpop.permute.xlu0 %671
        %675 = vset.pattern.permute.xlu0 0
        %676 = vperm.xlu0 %675, %v613
        %v677 = vpop.permute.xlu0 %676
        %680 = vset.pattern.permute.xlu0 0
        %681 = vperm.xlu0 %680, %v614
        %v682 = vpop.permute.xlu0 %681
        %685 = vset.pattern.permute.xlu0 0
        %686 = vperm.xlu0 %685, %v615
        %v687 = vpop.permute.xlu0 %686
        %690 = vset.pattern.permute.xlu0 0
        %691 = vperm.xlu0 %690, %v616
        %v692 = vpop.permute.xlu0 %691
        %695 = vset.pattern.permute.xlu0 0
        %696 = vperm.xlu0 %695, %v617
        %v697 = vpop.permute.xlu0 %696
        %700 = vset.pattern.permute.xlu0 0
        %701 = vperm.xlu0 %700, %v618
        %v702 = vpop.permute.xlu0 %701
        %705 = vset.pattern.permute.xlu0 0
        %706 = vperm.xlu0 %705, %v619
        %v707 = vpop.permute.xlu0 %706
        %710 = vset.pattern.permute.xlu0 0
        %711 = vperm.xlu0 %710, %v620
        %v712 = vpop.permute.xlu0 %711
        %715 = vset.pattern.permute.xlu0 0
        %716 = vperm.xlu0 %715, %v621
        %v717 = vpop.permute.xlu0 %716
        %720 = vset.pattern.permute.xlu0 0
        %721 = vperm.xlu0 %720, %v622
        %v722 = vpop.permute.xlu0 %721
        %725 = vset.pattern.permute.xlu0 0
        %726 = vperm.xlu0 %725, %v623
        %v727 = vpop.permute.xlu0 %726
        %730 = vset.pattern.permute.xlu0 0
        %731 = vperm.xlu0 %730, %v624
        %v732 = vpop.permute.xlu0 %731
        %735 = vset.pattern.permute.xlu0 0
        %736 = vperm.xlu0 %735, %v625
        %v737 = vpop.permute.xlu0 %736
        %740 = vset.pattern.permute.xlu0 0
        %741 = vperm.xlu0 %740, %v626
        %v742 = vpop.permute.xlu0 %741
        %745 = vset.pattern.permute.xlu0 0
        %746 = vperm.xlu0 %745, %v627
        %v747 = vpop.permute.xlu0 %746
        %750 = vset.pattern.permute.xlu0 0
        %751 = vperm.xlu0 %750, %v628
        %v752 = vpop.permute.xlu0 %751
        %755 = vset.pattern.permute.xlu0 0
        %756 = vperm.xlu0 %755, %v629
        %v757 = vpop.permute.xlu0 %756
        %760 = vset.pattern.permute.xlu0 0
        %761 = vperm.xlu0 %760, %v630
        %v762 = vpop.permute.xlu0 %761
        %765 = vset.pattern.permute.xlu0 0
        %766 = vperm.xlu0 %765, %v631
        %v767 = vpop.permute.xlu0 %766
        %770 = vset.pattern.permute.xlu0 0
        %771 = vperm.xlu0 %770, %v632
        %v772 = vpop.permute.xlu0 %771
        %775 = vset.pattern.permute.xlu0 0
        %776 = vperm.xlu0 %775, %v633
        %v777 = vpop.permute.xlu0 %776
        %780 = vset.pattern.permute.xlu0 0
        %781 = vperm.xlu0 %780, %v634
        %v782 = vpop.permute.xlu0 %781
        %785 = vset.pattern.permute.xlu0 0
        %786 = vperm.xlu0 %785, %v635
        %v787 = vpop.permute.xlu0 %786
        %790 = vset.pattern.permute.xlu0 0
        %791 = vperm.xlu0 %790, %v636
        %v792 = vpop.permute.xlu0 %791
        %795 = vset.pattern.permute.xlu0 0
        %796 = vperm.xlu0 %795, %v637
        %v797 = vpop.permute.xlu0 %796
        %v800 = vlaneseq
        %v801 = vshrl.u32 %v800, 7
        %v802 = vsub.s32 0, %v801
        %v803 = vrot.slane %v638, %v802
        %v804 = vlaneseq
        %v805 = vshrl.u32 %v804, 7
        %v806 = vsub.s32 1, %v805
        %v807 = vrot.slane %v638, %v806
        %v808 = vlaneseq
        %v809 = vshrl.u32 %v808, 7
        %v810 = vsub.s32 2, %v809
        %v811 = vrot.slane %v638, %v810
        %v812 = vlaneseq
        %v813 = vshrl.u32 %v812, 7
        %v814 = vsub.s32 3, %v813
        %v815 = vrot.slane %v638, %v814
        %v820 = vadd.f32 %v642, %v803
        %v821 = vadd.f32 %v642, %v807
        %v822 = vadd.f32 %v642, %v811
        %v823 = vadd.f32 %v642, %v815
        %v824 = vadd.f32 %v647, %v803
        %v825 = vadd.f32 %v647, %v807
        %v826 = vadd.f32 %v647, %v811
        %v827 = vadd.f32 %v647, %v815
        %v828 = vadd.f32 %v652, %v803
        %v829 = vadd.f32 %v652, %v807
        %v830 = vadd.f32 %v652, %v811
        %v831 = vadd.f32 %v652, %v815
        %v832 = vadd.f32 %v657, %v803
        %v833 = vadd.f32 %v657, %v807
        %v834 = vadd.f32 %v657, %v811
        %v835 = vadd.f32 %v657, %v815
        %v836 = vadd.f32 %v662, %v803
        %v837 = vadd.f32 %v662, %v807
        %v838 = vadd.f32 %v662, %v811
        %v839 = vadd.f32 %v662, %v815
        %v840 = vadd.f32 %v667, %v803
        %v841 = vadd.f32 %v667, %v807
        %v842 = vadd.f32 %v667, %v811
        %v843 = vadd.f32 %v667, %v815
        %v844 = vadd.f32 %v672, %v803
        %v845 = vadd.f32 %v672, %v807
        %v846 = vadd.f32 %v672, %v811
        %v847 = vadd.f32 %v672, %v815
        %v848 = vadd.f32 %v677, %v803
        %v849 = vadd.f32 %v677, %v807
        %v850 = vadd.f32 %v677, %v811
        %v851 = vadd.f32 %v677, %v815
        %v852 = vadd.f32 %v682, %v803
        %v853 = vadd.f32 %v682, %v807
        %v854 = vadd.f32 %v682, %v811
        %v855 = vadd.f32 %v682, %v815
        %v856 = vadd.f32 %v687, %v803
        %v857 = vadd.f32 %v687, %v807
        %v858 = vadd.f32 %v687, %v811
        %v859 = vadd.f32 %v687, %v815
        %v860 = vadd.f32 %v692, %v803
        %v861 = vadd.f32 %v692, %v807
        %v862 = vadd.f32 %v692, %v811
        %v863 = vadd.f32 %v692, %v815
        %v864 = vadd.f32 %v697, %v803
        %v865 = vadd.f32 %v697, %v807
        %v866 = vadd.f32 %v697, %v811
        %v867 = vadd.f32 %v697, %v815
        %v868 = vadd.f32 %v702, %v803
        %v869 = vadd.f32 %v702, %v807
        %v870 = vadd.f32 %v702, %v811
        %v871 = vadd.f32 %v702, %v815
        %v872 = vadd.f32 %v707, %v803
        %v873 = vadd.f32 %v707, %v807
        %v874 = vadd.f32 %v707, %v811
        %v875 = vadd.f32 %v707, %v815
        %v876 = vadd.f32 %v712, %v803
        %v877 = vadd.f32 %v712, %v807
        %v878 = vadd.f32 %v712, %v811
        %v879 = vadd.f32 %v712, %v815
        %v880 = vadd.f32 %v717, %v803
        %v881 = vadd.f32 %v717, %v807
        %v882 = vadd.f32 %v717, %v811
        %v883 = vadd.f32 %v717, %v815
        %v884 = vadd.f32 %v722, %v803
        %v885 = vadd.f32 %v722, %v807
        %v886 = vadd.f32 %v722, %v811
        %v887 = vadd.f32 %v722, %v815
        %v888 = vadd.f32 %v727, %v803
        %v889 = vadd.f32 %v727, %v807
        %v890 = vadd.f32 %v727, %v811
        %v891 = vadd.f32 %v727, %v815
        %v892 = vadd.f32 %v732, %v803
        %v893 = vadd.f32 %v732, %v807
        %v894 = vadd.f32 %v732, %v811
        %v895 = vadd.f32 %v732, %v815
        %v896 = vadd.f32 %v737, %v803
        %v897 = vadd.f32 %v737, %v807
        %v898 = vadd.f32 %v737, %v811
        %v899 = vadd.f32 %v737, %v815
        %v900 = vadd.f32 %v742, %v803
        %v901 = vadd.f32 %v742, %v807
        %v902 = vadd.f32 %v742, %v811
        %v903 = vadd.f32 %v742, %v815
        %v904 = vadd.f32 %v747, %v803
        %v905 = vadd.f32 %v747, %v807
        %v906 = vadd.f32 %v747, %v811
        %v907 = vadd.f32 %v747, %v815
        %v908 = vadd.f32 %v752, %v803
        %v909 = vadd.f32 %v752, %v807
        %v910 = vadd.f32 %v752, %v811
        %v911 = vadd.f32 %v752, %v815
        %v912 = vadd.f32 %v757, %v803
        %v913 = vadd.f32 %v757, %v807
        %v914 = vadd.f32 %v757, %v811
        %v915 = vadd.f32 %v757, %v815
        %v916 = vadd.f32 %v762, %v803
        %v917 = vadd.f32 %v762, %v807
        %v918 = vadd.f32 %v762, %v811
        %v919 = vadd.f32 %v762, %v815
        %v920 = vadd.f32 %v767, %v803
        %v921 = vadd.f32 %v767, %v807
        %v922 = vadd.f32 %v767, %v811
        %v923 = vadd.f32 %v767, %v815
        %v924 = vadd.f32 %v772, %v803
        %v925 = vadd.f32 %v772, %v807
        %v926 = vadd.f32 %v772, %v811
        %v927 = vadd.f32 %v772, %v815
        %v928 = vadd.f32 %v777, %v803
        %v929 = vadd.f32 %v777, %v807
        %v930 = vadd.f32 %v777, %v811
        %v931 = vadd.f32 %v777, %v815
        %v932 = vadd.f32 %v782, %v803
        %v933 = vadd.f32 %v782, %v807
        %v934 = vadd.f32 %v782, %v811
        %v935 = vadd.f32 %v782, %v815
        %v936 = vadd.f32 %v787, %v803
        %v937 = vadd.f32 %v787, %v807
        %v938 = vadd.f32 %v787, %v811
        %v939 = vadd.f32 %v787, %v815
        %v940 = vadd.f32 %v792, %v803
        %v941 = vadd.f32 %v792, %v807
        %v942 = vadd.f32 %v792, %v811
        %v943 = vadd.f32 %v792, %v815
        %v944 = vadd.f32 %v797, %v803
        %v945 = vadd.f32 %v797, %v807
        %v946 = vadd.f32 %v797, %v811
        %v947 = vadd.f32 %v797, %v815
        %vm948 = vcmp.ge.f32.partialorder %v820, 0.0
        %vm949 = vcmp.ge.f32.partialorder %v821, 0.0
        %vm950 = vcmp.ge.f32.partialorder %v822, 0.0
        %vm951 = vcmp.ge.f32.partialorder %v823, 0.0
        %vm952 = vcmp.ge.f32.partialorder %v824, 0.0
        %vm953 = vcmp.ge.f32.partialorder %v825, 0.0
        %vm954 = vcmp.ge.f32.partialorder %v826, 0.0
        %vm955 = vcmp.ge.f32.partialorder %v827, 0.0
        %vm956 = vcmp.ge.f32.partialorder %v828, 0.0
        %vm957 = vcmp.ge.f32.partialorder %v829, 0.0
        %vm958 = vcmp.ge.f32.partialorder %v830, 0.0
        %vm959 = vcmp.ge.f32.partialorder %v831, 0.0
        %vm960 = vcmp.ge.f32.partialorder %v832, 0.0
        %vm961 = vcmp.ge.f32.partialorder %v833, 0.0
        %vm962 = vcmp.ge.f32.partialorder %v834, 0.0
        %vm963 = vcmp.ge.f32.partialorder %v835, 0.0
        %vm964 = vcmp.ge.f32.partialorder %v836, 0.0
        %vm965 = vcmp.ge.f32.partialorder %v837, 0.0
        %vm966 = vcmp.ge.f32.partialorder %v838, 0.0
        %vm967 = vcmp.ge.f32.partialorder %v839, 0.0
        %vm968 = vcmp.ge.f32.partialorder %v840, 0.0
        %vm969 = vcmp.ge.f32.partialorder %v841, 0.0
        %vm970 = vcmp.ge.f32.partialorder %v842, 0.0
        %vm971 = vcmp.ge.f32.partialorder %v843, 0.0
        %vm972 = vcmp.ge.f32.partialorder %v844, 0.0
        %vm973 = vcmp.ge.f32.partialorder %v845, 0.0
        %vm974 = vcmp.ge.f32.partialorder %v846, 0.0
        %vm975 = vcmp.ge.f32.partialorder %v847, 0.0
        %vm976 = vcmp.ge.f32.partialorder %v848, 0.0
        %vm977 = vcmp.ge.f32.partialorder %v849, 0.0
        %vm978 = vcmp.ge.f32.partialorder %v850, 0.0
        %vm979 = vcmp.ge.f32.partialorder %v851, 0.0
        %vm980 = vcmp.ge.f32.partialorder %v852, 0.0
        %vm981 = vcmp.ge.f32.partialorder %v853, 0.0
        %vm982 = vcmp.ge.f32.partialorder %v854, 0.0
        %vm983 = vcmp.ge.f32.partialorder %v855, 0.0
        %vm984 = vcmp.ge.f32.partialorder %v856, 0.0
        %vm985 = vcmp.ge.f32.partialorder %v857, 0.0
        %vm986 = vcmp.ge.f32.partialorder %v858, 0.0
        %vm987 = vcmp.ge.f32.partialorder %v859, 0.0
        %vm988 = vcmp.ge.f32.partialorder %v860, 0.0
        %vm989 = vcmp.ge.f32.partialorder %v861, 0.0
        %vm990 = vcmp.ge.f32.partialorder %v862, 0.0
        %vm991 = vcmp.ge.f32.partialorder %v863, 0.0
        %vm992 = vcmp.ge.f32.partialorder %v864, 0.0
        %vm993 = vcmp.ge.f32.partialorder %v865, 0.0
        %vm994 = vcmp.ge.f32.partialorder %v866, 0.0
        %vm995 = vcmp.ge.f32.partialorder %v867, 0.0
        %vm996 = vcmp.ge.f32.partialorder %v868, 0.0
        %vm997 = vcmp.ge.f32.partialorder %v869, 0.0
        %vm998 = vcmp.ge.f32.partialorder %v870, 0.0
        %vm999 = vcmp.ge.f32.partialorder %v871, 0.0
        %vm1000 = vcmp.ge.f32.partialorder %v872, 0.0
        %vm1001 = vcmp.ge.f32.partialorder %v873, 0.0
        %vm1002 = vcmp.ge.f32.partialorder %v874, 0.0
        %vm1003 = vcmp.ge.f32.partialorder %v875, 0.0
        %vm1004 = vcmp.ge.f32.partialorder %v876, 0.0
        %vm1005 = vcmp.ge.f32.partialorder %v877, 0.0
        %vm1006 = vcmp.ge.f32.partialorder %v878, 0.0
        %vm1007 = vcmp.ge.f32.partialorder %v879, 0.0
        %vm1008 = vcmp.ge.f32.partialorder %v880, 0.0
        %vm1009 = vcmp.ge.f32.partialorder %v881, 0.0
        %vm1010 = vcmp.ge.f32.partialorder %v882, 0.0
        %vm1011 = vcmp.ge.f32.partialorder %v883, 0.0
        %vm1012 = vcmp.ge.f32.partialorder %v884, 0.0
        %vm1013 = vcmp.ge.f32.partialorder %v885, 0.0
        %vm1014 = vcmp.ge.f32.partialorder %v886, 0.0
        %vm1015 = vcmp.ge.f32.partialorder %v887, 0.0
        %vm1016 = vcmp.ge.f32.partialorder %v888, 0.0
        %vm1017 = vcmp.ge.f32.partialorder %v889, 0.0
        %vm1018 = vcmp.ge.f32.partialorder %v890, 0.0
        %vm1019 = vcmp.ge.f32.partialorder %v891, 0.0
        %vm1020 = vcmp.ge.f32.partialorder %v892, 0.0
        %vm1021 = vcmp.ge.f32.partialorder %v893, 0.0
        %vm1022 = vcmp.ge.f32.partialorder %v894, 0.0
        %vm1023 = vcmp.ge.f32.partialorder %v895, 0.0
        %vm1024 = vcmp.ge.f32.partialorder %v896, 0.0
        %vm1025 = vcmp.ge.f32.partialorder %v897, 0.0
        %vm1026 = vcmp.ge.f32.partialorder %v898, 0.0
        %vm1027 = vcmp.ge.f32.partialorder %v899, 0.0
        %vm1028 = vcmp.ge.f32.partialorder %v900, 0.0
        %vm1029 = vcmp.ge.f32.partialorder %v901, 0.0
        %vm1030 = vcmp.ge.f32.partialorder %v902, 0.0
        %vm1031 = vcmp.ge.f32.partialorder %v903, 0.0
        %vm1032 = vcmp.ge.f32.partialorder %v904, 0.0
        %vm1033 = vcmp.ge.f32.partialorder %v905, 0.0
        %vm1034 = vcmp.ge.f32.partialorder %v906, 0.0
        %vm1035 = vcmp.ge.f32.partialorder %v907, 0.0
        %vm1036 = vcmp.ge.f32.partialorder %v908, 0.0
        %vm1037 = vcmp.ge.f32.partialorder %v909, 0.0
        %vm1038 = vcmp.ge.f32.partialorder %v910, 0.0
        %vm1039 = vcmp.ge.f32.partialorder %v911, 0.0
        %vm1040 = vcmp.ge.f32.partialorder %v912, 0.0
        %vm1041 = vcmp.ge.f32.partialorder %v913, 0.0
        %vm1042 = vcmp.ge.f32.partialorder %v914, 0.0
        %vm1043 = vcmp.ge.f32.partialorder %v915, 0.0
        %vm1044 = vcmp.ge.f32.partialorder %v916, 0.0
        %vm1045 = vcmp.ge.f32.partialorder %v917, 0.0
        %vm1046 = vcmp.ge.f32.partialorder %v918, 0.0
        %vm1047 = vcmp.ge.f32.partialorder %v919, 0.0
        %vm1048 = vcmp.ge.f32.partialorder %v920, 0.0
        %vm1049 = vcmp.ge.f32.partialorder %v921, 0.0
        %vm1050 = vcmp.ge.f32.partialorder %v922, 0.0
        %vm1051 = vcmp.ge.f32.partialorder %v923, 0.0
        %vm1052 = vcmp.ge.f32.partialorder %v924, 0.0
        %vm1053 = vcmp.ge.f32.partialorder %v925, 0.0
        %vm1054 = vcmp.ge.f32.partialorder %v926, 0.0
        %vm1055 = vcmp.ge.f32.partialorder %v927, 0.0
        %vm1056 = vcmp.ge.f32.partialorder %v928, 0.0
        %vm1057 = vcmp.ge.f32.partialorder %v929, 0.0
        %vm1058 = vcmp.ge.f32.partialorder %v930, 0.0
        %vm1059 = vcmp.ge.f32.partialorder %v931, 0.0
        %vm1060 = vcmp.ge.f32.partialorder %v932, 0.0
        %vm1061 = vcmp.ge.f32.partialorder %v933, 0.0
        %vm1062 = vcmp.ge.f32.partialorder %v934, 0.0
        %vm1063 = vcmp.ge.f32.partialorder %v935, 0.0
        %vm1064 = vcmp.ge.f32.partialorder %v936, 0.0
        %vm1065 = vcmp.ge.f32.partialorder %v937, 0.0
        %vm1066 = vcmp.ge.f32.partialorder %v938, 0.0
        %vm1067 = vcmp.ge.f32.partialorder %v939, 0.0
        %vm1068 = vcmp.ge.f32.partialorder %v940, 0.0
        %vm1069 = vcmp.ge.f32.partialorder %v941, 0.0
        %vm1070 = vcmp.ge.f32.partialorder %v942, 0.0
        %vm1071 = vcmp.ge.f32.partialorder %v943, 0.0
        %vm1072 = vcmp.ge.f32.partialorder %v944, 0.0
        %vm1073 = vcmp.ge.f32.partialorder %v945, 0.0
        %vm1074 = vcmp.ge.f32.partialorder %v946, 0.0
        %vm1075 = vcmp.ge.f32.partialorder %v947, 0.0
        %v1076 = vmul.f32 %v820, 0.2
        %v1077 = vmul.f32 %v821, 0.2
        %v1078 = vmul.f32 %v822, 0.2
        %v1079 = vmul.f32 %v823, 0.2
        %v1080 = vmul.f32 %v824, 0.2
        %v1081 = vmul.f32 %v825, 0.2
        %v1082 = vmul.f32 %v826, 0.2
        %v1083 = vmul.f32 %v827, 0.2
        %v1084 = vmul.f32 %v828, 0.2
        %v1085 = vmul.f32 %v829, 0.2
        %v1086 = vmul.f32 %v830, 0.2
        %v1087 = vmul.f32 %v831, 0.2
        %v1088 = vmul.f32 %v832, 0.2
        %v1089 = vmul.f32 %v833, 0.2
        %v1090 = vmul.f32 %v834, 0.2
        %v1091 = vmul.f32 %v835, 0.2
        %v1092 = vmul.f32 %v836, 0.2
        %v1093 = vmul.f32 %v837, 0.2
        %v1094 = vmul.f32 %v838, 0.2
        %v1095 = vmul.f32 %v839, 0.2
        %v1096 = vmul.f32 %v840, 0.2
        %v1097 = vmul.f32 %v841, 0.2
        %v1098 = vmul.f32 %v842, 0.2
        %v1099 = vmul.f32 %v843, 0.2
        %v1100 = vmul.f32 %v844, 0.2
        %v1101 = vmul.f32 %v845, 0.2
        %v1102 = vmul.f32 %v846, 0.2
        %v1103 = vmul.f32 %v847, 0.2
        %v1104 = vmul.f32 %v848, 0.2
        %v1105 = vmul.f32 %v849, 0.2
        %v1106 = vmul.f32 %v850, 0.2
        %v1107 = vmul.f32 %v851, 0.2
        %v1108 = vmul.f32 %v852, 0.2
        %v1109 = vmul.f32 %v853, 0.2
        %v1110 = vmul.f32 %v854, 0.2
        %v1111 = vmul.f32 %v855, 0.2
        %v1112 = vmul.f32 %v856, 0.2
        %v1113 = vmul.f32 %v857, 0.2
        %v1114 = vmul.f32 %v858, 0.2
        %v1115 = vmul.f32 %v859, 0.2
        %v1116 = vmul.f32 %v860, 0.2
        %v1117 = vmul.f32 %v861, 0.2
        %v1118 = vmul.f32 %v862, 0.2
        %v1119 = vmul.f32 %v863, 0.2
        %v1120 = vmul.f32 %v864, 0.2
        %v1121 = vmul.f32 %v865, 0.2
        %v1122 = vmul.f32 %v866, 0.2
        %v1123 = vmul.f32 %v867, 0.2
        %v1124 = vmul.f32 %v868, 0.2
        %v1125 = vmul.f32 %v869, 0.2
        %v1126 = vmul.f32 %v870, 0.2
        %v1127 = vmul.f32 %v871, 0.2
        %v1128 = vmul.f32 %v872, 0.2
        %v1129 = vmul.f32 %v873, 0.2
        %v1130 = vmul.f32 %v874, 0.2
        %v1131 = vmul.f32 %v875, 0.2
        %v1132 = vmul.f32 %v876, 0.2
        %v1133 = vmul.f32 %v877, 0.2
        %v1134 = vmul.f32 %v878, 0.2
        %v1135 = vmul.f32 %v879, 0.2
        %v1136 = vmul.f32 %v880, 0.2
        %v1137 = vmul.f32 %v881, 0.2
        %v1138 = vmul.f32 %v882, 0.2
        %v1139 = vmul.f32 %v883, 0.2
        %v1140 = vmul.f32 %v884, 0.2
        %v1141 = vmul.f32 %v885, 0.2
        %v1142 = vmul.f32 %v886, 0.2
        %v1143 = vmul.f32 %v887, 0.2
        %v1144 = vmul.f32 %v888, 0.2
        %v1145 = vmul.f32 %v889, 0.2
        %v1146 = vmul.f32 %v890, 0.2
        %v1147 = vmul.f32 %v891, 0.2
        %v1148 = vmul.f32 %v892, 0.2
        %v1149 = vmul.f32 %v893, 0.2
        %v1150 = vmul.f32 %v894, 0.2
        %v1151 = vmul.f32 %v895, 0.2
        %v1152 = vmul.f32 %v896, 0.2
        %v1153 = vmul.f32 %v897, 0.2
        %v1154 = vmul.f32 %v898, 0.2
        %v1155 = vmul.f32 %v899, 0.2
        %v1156 = vmul.f32 %v900, 0.2
        %v1157 = vmul.f32 %v901, 0.2
        %v1158 = vmul.f32 %v902, 0.2
        %v1159 = vmul.f32 %v903, 0.2
        %v1160 = vmul.f32 %v904, 0.2
        %v1161 = vmul.f32 %v905, 0.2
        %v1162 = vmul.f32 %v906, 0.2
        %v1163 = vmul.f32 %v907, 0.2
        %v1164 = vmul.f32 %v908, 0.2
        %v1165 = vmul.f32 %v909, 0.2
        %v1166 = vmul.f32 %v910, 0.2
        %v1167 = vmul.f32 %v911, 0.2
        %v1168 = vmul.f32 %v912, 0.2
        %v1169 = vmul.f32 %v913, 0.2
        %v1170 = vmul.f32 %v914, 0.2
        %v1171 = vmul.f32 %v915, 0.2
        %v1172 = vmul.f32 %v916, 0.2
        %v1173 = vmul.f32 %v917, 0.2
        %v1174 = vmul.f32 %v918, 0.2
        %v1175 = vmul.f32 %v919, 0.2
        %v1176 = vmul.f32 %v920, 0.2
        %v1177 = vmul.f32 %v921, 0.2
        %v1178 = vmul.f32 %v922, 0.2
        %v1179 = vmul.f32 %v923, 0.2
        %v1180 = vmul.f32 %v924, 0.2
        %v1181 = vmul.f32 %v925, 0.2
        %v1182 = vmul.f32 %v926, 0.2
        %v1183 = vmul.f32 %v927, 0.2
        %v1184 = vmul.f32 %v928, 0.2
        %v1185 = vmul.f32 %v929, 0.2
        %v1186 = vmul.f32 %v930, 0.2
        %v1187 = vmul.f32 %v931, 0.2
        %v1188 = vmul.f32 %v932, 0.2
        %v1189 = vmul.f32 %v933, 0.2
        %v1190 = vmul.f32 %v934, 0.2
        %v1191 = vmul.f32 %v935, 0.2
        %v1192 = vmul.f32 %v936, 0.2
        %v1193 = vmul.f32 %v937, 0.2
        %v1194 = vmul.f32 %v938, 0.2
        %v1195 = vmul.f32 %v939, 0.2
        %v1196 = vmul.f32 %v940, 0.2
        %v1197 = vmul.f32 %v941, 0.2
        %v1198 = vmul.f32 %v942, 0.2
        %v1199 = vmul.f32 %v943, 0.2
        %v1200 = vmul.f32 %v944, 0.2
        %v1201 = vmul.f32 %v945, 0.2
        %v1202 = vmul.f32 %v946, 0.2
        %v1203 = vmul.f32 %v947, 0.2
        %v1204 = vsel %vm948, %v820, %v1076
        %v1205 = vsel %vm949, %v821, %v1077
        %v1206 = vsel %vm950, %v822, %v1078
        %v1207 = vsel %vm951, %v823, %v1079
        %v1208 = vsel %vm952, %v824, %v1080
        %v1209 = vsel %vm953, %v825, %v1081
        %v1210 = vsel %vm954, %v826, %v1082
        %v1211 = vsel %vm955, %v827, %v1083
        %v1212 = vsel %vm956, %v828, %v1084
        %v1213 = vsel %vm957, %v829, %v1085
        %v1214 = vsel %vm958, %v830, %v1086
        %v1215 = vsel %vm959, %v831, %v1087
        %v1216 = vsel %vm960, %v832, %v1088
        %v1217 = vsel %vm961, %v833, %v1089
        %v1218 = vsel %vm962, %v834, %v1090
        %v1219 = vsel %vm963, %v835, %v1091
        %v1220 = vsel %vm964, %v836, %v1092
        %v1221 = vsel %vm965, %v837, %v1093
        %v1222 = vsel %vm966, %v838, %v1094
        %v1223 = vsel %vm967, %v839, %v1095
        %v1224 = vsel %vm968, %v840, %v1096
        %v1225 = vsel %vm969, %v841, %v1097
        %v1226 = vsel %vm970, %v842, %v1098
        %v1227 = vsel %vm971, %v843, %v1099
        %v1228 = vsel %vm972, %v844, %v1100
        %v1229 = vsel %vm973, %v845, %v1101
        %v1230 = vsel %vm974, %v846, %v1102
        %v1231 = vsel %vm975, %v847, %v1103
        %v1232 = vsel %vm976, %v848, %v1104
        %v1233 = vsel %vm977, %v849, %v1105
        %v1234 = vsel %vm978, %v850, %v1106
        %v1235 = vsel %vm979, %v851, %v1107
        %v1236 = vsel %vm980, %v852, %v1108
        %v1237 = vsel %vm981, %v853, %v1109
        %v1238 = vsel %vm982, %v854, %v1110
        %v1239 = vsel %vm983, %v855, %v1111
        %v1240 = vsel %vm984, %v856, %v1112
        %v1241 = vsel %vm985, %v857, %v1113
        %v1242 = vsel %vm986, %v858, %v1114
        %v1243 = vsel %vm987, %v859, %v1115
        %v1244 = vsel %vm988, %v860, %v1116
        %v1245 = vsel %vm989, %v861, %v1117
        %v1246 = vsel %vm990, %v862, %v1118
        %v1247 = vsel %vm991, %v863, %v1119
        %v1248 = vsel %vm992, %v864, %v1120
        %v1249 = vsel %vm993, %v865, %v1121
        %v1250 = vsel %vm994, %v866, %v1122
        %v1251 = vsel %vm995, %v867, %v1123
        %v1252 = vsel %vm996, %v868, %v1124
        %v1253 = vsel %vm997, %v869, %v1125
        %v1254 = vsel %vm998, %v870, %v1126
        %v1255 = vsel %vm999, %v871, %v1127
        %v1256 = vsel %vm1000, %v872, %v1128
        %v1257 = vsel %vm1001, %v873, %v1129
        %v1258 = vsel %vm1002, %v874, %v1130
        %v1259 = vsel %vm1003, %v875, %v1131
        %v1260 = vsel %vm1004, %v876, %v1132
        %v1261 = vsel %vm1005, %v877, %v1133
        %v1262 = vsel %vm1006, %v878, %v1134
        %v1263 = vsel %vm1007, %v879, %v1135
        %v1264 = vsel %vm1008, %v880, %v1136
        %v1265 = vsel %vm1009, %v881, %v1137
        %v1266 = vsel %vm1010, %v882, %v1138
        %v1267 = vsel %vm1011, %v883, %v1139
        %v1268 = vsel %vm1012, %v884, %v1140
        %v1269 = vsel %vm1013, %v885, %v1141
        %v1270 = vsel %vm1014, %v886, %v1142
        %v1271 = vsel %vm1015, %v887, %v1143
        %v1272 = vsel %vm1016, %v888, %v1144
        %v1273 = vsel %vm1017, %v889, %v1145
        %v1274 = vsel %vm1018, %v890, %v1146
        %v1275 = vsel %vm1019, %v891, %v1147
        %v1276 = vsel %vm1020, %v892, %v1148
        %v1277 = vsel %vm1021, %v893, %v1149
        %v1278 = vsel %vm1022, %v894, %v1150
        %v1279 = vsel %vm1023, %v895, %v1151
        %v1280 = vsel %vm1024, %v896, %v1152
        %v1281 = vsel %vm1025, %v897, %v1153
        %v1282 = vsel %vm1026, %v898, %v1154
        %v1283 = vsel %vm1027, %v899, %v1155
        %v1284 = vsel %vm1028, %v900, %v1156
        %v1285 = vsel %vm1029, %v901, %v1157
        %v1286 = vsel %vm1030, %v902, %v1158
        %v1287 = vsel %vm1031, %v903, %v1159
        %v1288 = vsel %vm1032, %v904, %v1160
        %v1289 = vsel %vm1033, %v905, %v1161
        %v1290 = vsel %vm1034, %v906, %v1162
        %v1291 = vsel %vm1035, %v907, %v1163
        %v1292 = vsel %vm1036, %v908, %v1164
        %v1293 = vsel %vm1037, %v909, %v1165
        %v1294 = vsel %vm1038, %v910, %v1166
        %v1295 = vsel %vm1039, %v911, %v1167
        %v1296 = vsel %vm1040, %v912, %v1168
        %v1297 = vsel %vm1041, %v913, %v1169
        %v1298 = vsel %vm1042, %v914, %v1170
        %v1299 = vsel %vm1043, %v915, %v1171
        %v1300 = vsel %vm1044, %v916, %v1172
        %v1301 = vsel %vm1045, %v917, %v1173
        %v1302 = vsel %vm1046, %v918, %v1174
        %v1303 = vsel %vm1047, %v919, %v1175
        %v1304 = vsel %vm1048, %v920, %v1176
        %v1305 = vsel %vm1049, %v921, %v1177
        %v1306 = vsel %vm1050, %v922, %v1178
        %v1307 = vsel %vm1051, %v923, %v1179
        %v1308 = vsel %vm1052, %v924, %v1180
        %v1309 = vsel %vm1053, %v925, %v1181
        %v1310 = vsel %vm1054, %v926, %v1182
        %v1311 = vsel %vm1055, %v927, %v1183
        %v1312 = vsel %vm1056, %v928, %v1184
        %v1313 = vsel %vm1057, %v929, %v1185
        %v1314 = vsel %vm1058, %v930, %v1186
        %v1315 = vsel %vm1059, %v931, %v1187
        %v1316 = vsel %vm1060, %v932, %v1188
        %v1317 = vsel %vm1061, %v933, %v1189
        %v1318 = vsel %vm1062, %v934, %v1190
        %v1319 = vsel %vm1063, %v935, %v1191
        %v1320 = vsel %vm1064, %v936, %v1192
        %v1321 = vsel %vm1065, %v937, %v1193
        %v1322 = vsel %vm1066, %v938, %v1194
        %v1323 = vsel %vm1067, %v939, %v1195
        %v1324 = vsel %vm1068, %v940, %v1196
        %v1325 = vsel %vm1069, %v941, %v1197
        %v1326 = vsel %vm1070, %v942, %v1198
        %v1327 = vsel %vm1071, %v943, %v1199
        %v1328 = vsel %vm1072, %v944, %v1200
        %v1329 = vsel %vm1073, %v945, %v1201
        %v1330 = vsel %vm1074, %v946, %v1202
        %v1331 = vsel %vm1075, %v947, %v1203
        %v1332 = vsel %vm509, 16843009, 0
        %v1333 = vsel %vm510, 16843009, 0
        %v1334 = vsel %vm511, 16843009, 0
        %v1335 = vsel %vm512, 16843009, 0
        %v1336 = vsel %vm513, 16843009, 0
        %v1337 = vsel %vm514, 16843009, 0
        %v1338 = vsel %vm515, 16843009, 0
        %v1339 = vsel %vm516, 16843009, 0
        %v1340 = vsel %vm517, 16843009, 0
        %v1341 = vsel %vm518, 16843009, 0
        %v1342 = vsel %vm519, 16843009, 0
        %v1343 = vsel %vm520, 16843009, 0
        %v1344 = vsel %vm521, 16843009, 0
        %v1345 = vsel %vm522, 16843009, 0
        %v1346 = vsel %vm523, 16843009, 0
        %v1347 = vsel %vm524, 16843009, 0
        %v1348 = vsel %vm525, 16843009, 0
        %v1349 = vsel %vm526, 16843009, 0
        %v1350 = vsel %vm527, 16843009, 0
        %v1351 = vsel %vm528, 16843009, 0
        %v1352 = vsel %vm529, 16843009, 0
        %v1353 = vsel %vm530, 16843009, 0
        %v1354 = vsel %vm531, 16843009, 0
        %v1355 = vsel %vm532, 16843009, 0
        %v1356 = vsel %vm533, 16843009, 0
        %v1357 = vsel %vm534, 16843009, 0
        %v1358 = vsel %vm535, 16843009, 0
        %v1359 = vsel %vm536, 16843009, 0
        %v1360 = vsel %vm537, 16843009, 0
        %v1361 = vsel %vm538, 16843009, 0
        %v1362 = vsel %vm539, 16843009, 0
        %v1363 = vsel %vm540, 16843009, 0
        %v1364 = vunpack.c.0.s8 %v1332
        %v1365 = vunpack.c.0.s8 %v1333
        %v1366 = vunpack.c.0.s8 %v1334
        %v1367 = vunpack.c.0.s8 %v1335
        %v1368 = vunpack.c.1.s8 %v1332
        %v1369 = vunpack.c.1.s8 %v1333
        %v1370 = vunpack.c.1.s8 %v1334
        %v1371 = vunpack.c.1.s8 %v1335
        %v1372 = vunpack.c.2.s8 %v1332
        %v1373 = vunpack.c.2.s8 %v1333
        %v1374 = vunpack.c.2.s8 %v1334
        %v1375 = vunpack.c.2.s8 %v1335
        %v1376 = vunpack.c.3.s8 %v1332
        %v1377 = vunpack.c.3.s8 %v1333
        %v1378 = vunpack.c.3.s8 %v1334
        %v1379 = vunpack.c.3.s8 %v1335
        %v1380 = vunpack.c.0.s8 %v1336
        %v1381 = vunpack.c.0.s8 %v1337
        %v1382 = vunpack.c.0.s8 %v1338
        %v1383 = vunpack.c.0.s8 %v1339
        %v1384 = vunpack.c.1.s8 %v1336
        %v1385 = vunpack.c.1.s8 %v1337
        %v1386 = vunpack.c.1.s8 %v1338
        %v1387 = vunpack.c.1.s8 %v1339
        %v1388 = vunpack.c.2.s8 %v1336
        %v1389 = vunpack.c.2.s8 %v1337
        %v1390 = vunpack.c.2.s8 %v1338
        %v1391 = vunpack.c.2.s8 %v1339
        %v1392 = vunpack.c.3.s8 %v1336
        %v1393 = vunpack.c.3.s8 %v1337
        %v1394 = vunpack.c.3.s8 %v1338
        %v1395 = vunpack.c.3.s8 %v1339
        %v1396 = vunpack.c.0.s8 %v1340
        %v1397 = vunpack.c.0.s8 %v1341
        %v1398 = vunpack.c.0.s8 %v1342
        %v1399 = vunpack.c.0.s8 %v1343
        %v1400 = vunpack.c.1.s8 %v1340
        %v1401 = vunpack.c.1.s8 %v1341
        %v1402 = vunpack.c.1.s8 %v1342
        %v1403 = vunpack.c.1.s8 %v1343
        %v1404 = vunpack.c.2.s8 %v1340
        %v1405 = vunpack.c.2.s8 %v1341
        %v1406 = vunpack.c.2.s8 %v1342
        %v1407 = vunpack.c.2.s8 %v1343
        %v1408 = vunpack.c.3.s8 %v1340
        %v1409 = vunpack.c.3.s8 %v1341
        %v1410 = vunpack.c.3.s8 %v1342
        %v1411 = vunpack.c.3.s8 %v1343
        %v1412 = vunpack.c.0.s8 %v1344
        %v1413 = vunpack.c.0.s8 %v1345
        %v1414 = vunpack.c.0.s8 %v1346
        %v1415 = vunpack.c.0.s8 %v1347
        %v1416 = vunpack.c.1.s8 %v1344
        %v1417 = vunpack.c.1.s8 %v1345
        %v1418 = vunpack.c.1.s8 %v1346
        %v1419 = vunpack.c.1.s8 %v1347
        %v1420 = vunpack.c.2.s8 %v1344
        %v1421 = vunpack.c.2.s8 %v1345
        %v1422 = vunpack.c.2.s8 %v1346
        %v1423 = vunpack.c.2.s8 %v1347
        %v1424 = vunpack.c.3.s8 %v1344
        %v1425 = vunpack.c.3.s8 %v1345
        %v1426 = vunpack.c.3.s8 %v1346
        %v1427 = vunpack.c.3.s8 %v1347
        %v1428 = vunpack.c.0.s8 %v1348
        %v1429 = vunpack.c.0.s8 %v1349
        %v1430 = vunpack.c.0.s8 %v1350
        %v1431 = vunpack.c.0.s8 %v1351
        %v1432 = vunpack.c.1.s8 %v1348
        %v1433 = vunpack.c.1.s8 %v1349
        %v1434 = vunpack.c.1.s8 %v1350
        %v1435 = vunpack.c.1.s8 %v1351
        %v1436 = vunpack.c.2.s8 %v1348
        %v1437 = vunpack.c.2.s8 %v1349
        %v1438 = vunpack.c.2.s8 %v1350
        %v1439 = vunpack.c.2.s8 %v1351
        %v1440 = vunpack.c.3.s8 %v1348
        %v1441 = vunpack.c.3.s8 %v1349
        %v1442 = vunpack.c.3.s8 %v1350
        %v1443 = vunpack.c.3.s8 %v1351
        %v1444 = vunpack.c.0.s8 %v1352
        %v1445 = vunpack.c.0.s8 %v1353
        %v1446 = vunpack.c.0.s8 %v1354
        %v1447 = vunpack.c.0.s8 %v1355
        %v1448 = vunpack.c.1.s8 %v1352
        %v1449 = vunpack.c.1.s8 %v1353
        %v1450 = vunpack.c.1.s8 %v1354
        %v1451 = vunpack.c.1.s8 %v1355
        %v1452 = vunpack.c.2.s8 %v1352
        %v1453 = vunpack.c.2.s8 %v1353
        %v1454 = vunpack.c.2.s8 %v1354
        %v1455 = vunpack.c.2.s8 %v1355
        %v1456 = vunpack.c.3.s8 %v1352
        %v1457 = vunpack.c.3.s8 %v1353
        %v1458 = vunpack.c.3.s8 %v1354
        %v1459 = vunpack.c.3.s8 %v1355
        %v1460 = vunpack.c.0.s8 %v1356
        %v1461 = vunpack.c.0.s8 %v1357
        %v1462 = vunpack.c.0.s8 %v1358
        %v1463 = vunpack.c.0.s8 %v1359
        %v1464 = vunpack.c.1.s8 %v1356
        %v1465 = vunpack.c.1.s8 %v1357
        %v1466 = vunpack.c.1.s8 %v1358
        %v1467 = vunpack.c.1.s8 %v1359
        %v1468 = vunpack.c.2.s8 %v1356
        %v1469 = vunpack.c.2.s8 %v1357
        %v1470 = vunpack.c.2.s8 %v1358
        %v1471 = vunpack.c.2.s8 %v1359
        %v1472 = vunpack.c.3.s8 %v1356
        %v1473 = vunpack.c.3.s8 %v1357
        %v1474 = vunpack.c.3.s8 %v1358
        %v1475 = vunpack.c.3.s8 %v1359
        %v1476 = vunpack.c.0.s8 %v1360
        %v1477 = vunpack.c.0.s8 %v1361
        %v1478 = vunpack.c.0.s8 %v1362
        %v1479 = vunpack.c.0.s8 %v1363
        %v1480 = vunpack.c.1.s8 %v1360
        %v1481 = vunpack.c.1.s8 %v1361
        %v1482 = vunpack.c.1.s8 %v1362
        %v1483 = vunpack.c.1.s8 %v1363
        %v1484 = vunpack.c.2.s8 %v1360
        %v1485 = vunpack.c.2.s8 %v1361
        %v1486 = vunpack.c.2.s8 %v1362
        %v1487 = vunpack.c.2.s8 %v1363
        %v1488 = vunpack.c.3.s8 %v1360
        %v1489 = vunpack.c.3.s8 %v1361
        %v1490 = vunpack.c.3.s8 %v1362
        %v1491 = vunpack.c.3.s8 %v1363
        %v1492 = vpack.c.b16 %v1365, %v1364
        %v1493 = vpack.c.b16 %v1367, %v1366
        %v1494 = vpack.c.b8 %v1493, %v1492
        %v1495 = vpack.c.b16 %v1369, %v1368
        %v1496 = vpack.c.b16 %v1371, %v1370
        %v1497 = vpack.c.b8 %v1496, %v1495
        %v1498 = vpack.c.b16 %v1373, %v1372
        %v1499 = vpack.c.b16 %v1375, %v1374
        %v1500 = vpack.c.b8 %v1499, %v1498
        %v1501 = vpack.c.b16 %v1377, %v1376
        %v1502 = vpack.c.b16 %v1379, %v1378
        %v1503 = vpack.c.b8 %v1502, %v1501
        %v1504 = vpack.c.b16 %v1381, %v1380
        %v1505 = vpack.c.b16 %v1383, %v1382
        %v1506 = vpack.c.b8 %v1505, %v1504
        %v1507 = vpack.c.b16 %v1385, %v1384
        %v1508 = vpack.c.b16 %v1387, %v1386
        %v1509 = vpack.c.b8 %v1508, %v1507
        %v1510 = vpack.c.b16 %v1389, %v1388
        %v1511 = vpack.c.b16 %v1391, %v1390
        %v1512 = vpack.c.b8 %v1511, %v1510
        %v1513 = vpack.c.b16 %v1393, %v1392
        %v1514 = vpack.c.b16 %v1395, %v1394
        %v1515 = vpack.c.b8 %v1514, %v1513
        %v1516 = vpack.c.b16 %v1397, %v1396
        %v1517 = vpack.c.b16 %v1399, %v1398
        %v1518 = vpack.c.b8 %v1517, %v1516
        %v1519 = vpack.c.b16 %v1401, %v1400
        %v1520 = vpack.c.b16 %v1403, %v1402
        %v1521 = vpack.c.b8 %v1520, %v1519
        %v1522 = vpack.c.b16 %v1405, %v1404
        %v1523 = vpack.c.b16 %v1407, %v1406
        %v1524 = vpack.c.b8 %v1523, %v1522
        %v1525 = vpack.c.b16 %v1409, %v1408
        %v1526 = vpack.c.b16 %v1411, %v1410
        %v1527 = vpack.c.b8 %v1526, %v1525
        %v1528 = vpack.c.b16 %v1413, %v1412
        %v1529 = vpack.c.b16 %v1415, %v1414
        %v1530 = vpack.c.b8 %v1529, %v1528
        %v1531 = vpack.c.b16 %v1417, %v1416
        %v1532 = vpack.c.b16 %v1419, %v1418
        %v1533 = vpack.c.b8 %v1532, %v1531
        %v1534 = vpack.c.b16 %v1421, %v1420
        %v1535 = vpack.c.b16 %v1423, %v1422
        %v1536 = vpack.c.b8 %v1535, %v1534
        %v1537 = vpack.c.b16 %v1425, %v1424
        %v1538 = vpack.c.b16 %v1427, %v1426
        %v1539 = vpack.c.b8 %v1538, %v1537
        %v1540 = vpack.c.b16 %v1429, %v1428
        %v1541 = vpack.c.b16 %v1431, %v1430
        %v1542 = vpack.c.b8 %v1541, %v1540
        %v1543 = vpack.c.b16 %v1433, %v1432
        %v1544 = vpack.c.b16 %v1435, %v1434
        %v1545 = vpack.c.b8 %v1544, %v1543
        %v1546 = vpack.c.b16 %v1437, %v1436
        %v1547 = vpack.c.b16 %v1439, %v1438
        %v1548 = vpack.c.b8 %v1547, %v1546
        %v1549 = vpack.c.b16 %v1441, %v1440
        %v1550 = vpack.c.b16 %v1443, %v1442
        %v1551 = vpack.c.b8 %v1550, %v1549
        %v1552 = vpack.c.b16 %v1445, %v1444
        %v1553 = vpack.c.b16 %v1447, %v1446
        %v1554 = vpack.c.b8 %v1553, %v1552
        %v1555 = vpack.c.b16 %v1449, %v1448
        %v1556 = vpack.c.b16 %v1451, %v1450
        %v1557 = vpack.c.b8 %v1556, %v1555
        %v1558 = vpack.c.b16 %v1453, %v1452
        %v1559 = vpack.c.b16 %v1455, %v1454
        %v1560 = vpack.c.b8 %v1559, %v1558
        %v1561 = vpack.c.b16 %v1457, %v1456
        %v1562 = vpack.c.b16 %v1459, %v1458
        %v1563 = vpack.c.b8 %v1562, %v1561
        %v1564 = vpack.c.b16 %v1461, %v1460
        %v1565 = vpack.c.b16 %v1463, %v1462
        %v1566 = vpack.c.b8 %v1565, %v1564
        %v1567 = vpack.c.b16 %v1465, %v1464
        %v1568 = vpack.c.b16 %v1467, %v1466
        %v1569 = vpack.c.b8 %v1568, %v1567
        %v1570 = vpack.c.b16 %v1469, %v1468
        %v1571 = vpack.c.b16 %v1471, %v1470
        %v1572 = vpack.c.b8 %v1571, %v1570
        %v1573 = vpack.c.b16 %v1473, %v1472
        %v1574 = vpack.c.b16 %v1475, %v1474
        %v1575 = vpack.c.b8 %v1574, %v1573
        %v1576 = vpack.c.b16 %v1477, %v1476
        %v1577 = vpack.c.b16 %v1479, %v1478
        %v1578 = vpack.c.b8 %v1577, %v1576
        %v1579 = vpack.c.b16 %v1481, %v1480
        %v1580 = vpack.c.b16 %v1483, %v1482
        %v1581 = vpack.c.b8 %v1580, %v1579
        %v1582 = vpack.c.b16 %v1485, %v1484
        %v1583 = vpack.c.b16 %v1487, %v1486
        %v1584 = vpack.c.b8 %v1583, %v1582
        %v1585 = vpack.c.b16 %v1489, %v1488
        %v1586 = vpack.c.b16 %v1491, %v1490
        %v1587 = vpack.c.b8 %v1586, %v1585
        %vm1588 = vnez %v1494
        %vm1589 = vnez %v1497
        %vm1590 = vnez %v1500
        %vm1591 = vnez %v1503
        %vm1592 = vnez %v1506
        %vm1593 = vnez %v1509
        %vm1594 = vnez %v1512
        %vm1595 = vnez %v1515
        %vm1596 = vnez %v1518
        %vm1597 = vnez %v1521
        %vm1598 = vnez %v1524
        %vm1599 = vnez %v1527
        %vm1600 = vnez %v1530
        %vm1601 = vnez %v1533
        %vm1602 = vnez %v1536
        %vm1603 = vnez %v1539
        %vm1604 = vnez %v1542
        %vm1605 = vnez %v1545
        %vm1606 = vnez %v1548
        %vm1607 = vnez %v1551
        %vm1608 = vnez %v1554
        %vm1609 = vnez %v1557
        %vm1610 = vnez %v1560
        %vm1611 = vnez %v1563
        %vm1612 = vnez %v1566
        %vm1613 = vnez %v1569
        %vm1614 = vnez %v1572
        %vm1615 = vnez %v1575
        %vm1616 = vnez %v1578
        %vm1617 = vnez %v1581
        %vm1618 = vnez %v1584
        %vm1619 = vnez %v1587
        %v1620 = vsel %vm1588, 16843009, 0
        %v1621 = vsel %vm1589, 16843009, 0
        %v1622 = vsel %vm1590, 16843009, 0
        %v1623 = vsel %vm1591, 16843009, 0
        %v1624 = vsel %vm1592, 16843009, 0
        %v1625 = vsel %vm1593, 16843009, 0
        %v1626 = vsel %vm1594, 16843009, 0
        %v1627 = vsel %vm1595, 16843009, 0
        %v1628 = vsel %vm1596, 16843009, 0
        %v1629 = vsel %vm1597, 16843009, 0
        %v1630 = vsel %vm1598, 16843009, 0
        %v1631 = vsel %vm1599, 16843009, 0
        %v1632 = vsel %vm1600, 16843009, 0
        %v1633 = vsel %vm1601, 16843009, 0
        %v1634 = vsel %vm1602, 16843009, 0
        %v1635 = vsel %vm1603, 16843009, 0
        %v1636 = vsel %vm1604, 16843009, 0
        %v1637 = vsel %vm1605, 16843009, 0
        %v1638 = vsel %vm1606, 16843009, 0
        %v1639 = vsel %vm1607, 16843009, 0
        %v1640 = vsel %vm1608, 16843009, 0
        %v1641 = vsel %vm1609, 16843009, 0
        %v1642 = vsel %vm1610, 16843009, 0
        %v1643 = vsel %vm1611, 16843009, 0
        %v1644 = vsel %vm1612, 16843009, 0
        %v1645 = vsel %vm1613, 16843009, 0
        %v1646 = vsel %vm1614, 16843009, 0
        %v1647 = vsel %vm1615, 16843009, 0
        %v1648 = vsel %vm1616, 16843009, 0
        %v1649 = vsel %vm1617, 16843009, 0
        %v1650 = vsel %vm1618, 16843009, 0
        %v1651 = vsel %vm1619, 16843009, 0
        %v1652 = vunpack.c.0.s8 %v1620
        %v1653 = vunpack.c.1.s8 %v1620
        %v1654 = vunpack.c.2.s8 %v1620
        %v1655 = vunpack.c.3.s8 %v1620
        %v1656 = vunpack.c.0.s8 %v1621
        %v1657 = vunpack.c.1.s8 %v1621
        %v1658 = vunpack.c.2.s8 %v1621
        %v1659 = vunpack.c.3.s8 %v1621
        %v1660 = vunpack.c.0.s8 %v1622
        %v1661 = vunpack.c.1.s8 %v1622
        %v1662 = vunpack.c.2.s8 %v1622
        %v1663 = vunpack.c.3.s8 %v1622
        %v1664 = vunpack.c.0.s8 %v1623
        %v1665 = vunpack.c.1.s8 %v1623
        %v1666 = vunpack.c.2.s8 %v1623
        %v1667 = vunpack.c.3.s8 %v1623
        %v1668 = vunpack.c.0.s8 %v1624
        %v1669 = vunpack.c.1.s8 %v1624
        %v1670 = vunpack.c.2.s8 %v1624
        %v1671 = vunpack.c.3.s8 %v1624
        %v1672 = vunpack.c.0.s8 %v1625
        %v1673 = vunpack.c.1.s8 %v1625
        %v1674 = vunpack.c.2.s8 %v1625
        %v1675 = vunpack.c.3.s8 %v1625
        %v1676 = vunpack.c.0.s8 %v1626
        %v1677 = vunpack.c.1.s8 %v1626
        %v1678 = vunpack.c.2.s8 %v1626
        %v1679 = vunpack.c.3.s8 %v1626
        %v1680 = vunpack.c.0.s8 %v1627
        %v1681 = vunpack.c.1.s8 %v1627
        %v1682 = vunpack.c.2.s8 %v1627
        %v1683 = vunpack.c.3.s8 %v1627
        %v1684 = vunpack.c.0.s8 %v1628
        %v1685 = vunpack.c.1.s8 %v1628
        %v1686 = vunpack.c.2.s8 %v1628
        %v1687 = vunpack.c.3.s8 %v1628
        %v1688 = vunpack.c.0.s8 %v1629
        %v1689 = vunpack.c.1.s8 %v1629
        %v1690 = vunpack.c.2.s8 %v1629
        %v1691 = vunpack.c.3.s8 %v1629
        %v1692 = vunpack.c.0.s8 %v1630
        %v1693 = vunpack.c.1.s8 %v1630
        %v1694 = vunpack.c.2.s8 %v1630
        %v1695 = vunpack.c.3.s8 %v1630
        %v1696 = vunpack.c.0.s8 %v1631
        %v1697 = vunpack.c.1.s8 %v1631
        %v1698 = vunpack.c.2.s8 %v1631
        %v1699 = vunpack.c.3.s8 %v1631
        %v1700 = vunpack.c.0.s8 %v1632
        %v1701 = vunpack.c.1.s8 %v1632
        %v1702 = vunpack.c.2.s8 %v1632
        %v1703 = vunpack.c.3.s8 %v1632
        %v1704 = vunpack.c.0.s8 %v1633
        %v1705 = vunpack.c.1.s8 %v1633
        %v1706 = vunpack.c.2.s8 %v1633
        %v1707 = vunpack.c.3.s8 %v1633
        %v1708 = vunpack.c.0.s8 %v1634
        %v1709 = vunpack.c.1.s8 %v1634
        %v1710 = vunpack.c.2.s8 %v1634
        %v1711 = vunpack.c.3.s8 %v1634
        %v1712 = vunpack.c.0.s8 %v1635
        %v1713 = vunpack.c.1.s8 %v1635
        %v1714 = vunpack.c.2.s8 %v1635
        %v1715 = vunpack.c.3.s8 %v1635
        %v1716 = vunpack.c.0.s8 %v1636
        %v1717 = vunpack.c.1.s8 %v1636
        %v1718 = vunpack.c.2.s8 %v1636
        %v1719 = vunpack.c.3.s8 %v1636
        %v1720 = vunpack.c.0.s8 %v1637
        %v1721 = vunpack.c.1.s8 %v1637
        %v1722 = vunpack.c.2.s8 %v1637
        %v1723 = vunpack.c.3.s8 %v1637
        %v1724 = vunpack.c.0.s8 %v1638
        %v1725 = vunpack.c.1.s8 %v1638
        %v1726 = vunpack.c.2.s8 %v1638
        %v1727 = vunpack.c.3.s8 %v1638
        %v1728 = vunpack.c.0.s8 %v1639
        %v1729 = vunpack.c.1.s8 %v1639
        %v1730 = vunpack.c.2.s8 %v1639
        %v1731 = vunpack.c.3.s8 %v1639
        %v1732 = vunpack.c.0.s8 %v1640
        %v1733 = vunpack.c.1.s8 %v1640
        %v1734 = vunpack.c.2.s8 %v1640
        %v1735 = vunpack.c.3.s8 %v1640
        %v1736 = vunpack.c.0.s8 %v1641
        %v1737 = vunpack.c.1.s8 %v1641
        %v1738 = vunpack.c.2.s8 %v1641
        %v1739 = vunpack.c.3.s8 %v1641
        %v1740 = vunpack.c.0.s8 %v1642
        %v1741 = vunpack.c.1.s8 %v1642
        %v1742 = vunpack.c.2.s8 %v1642
        %v1743 = vunpack.c.3.s8 %v1642
        %v1744 = vunpack.c.0.s8 %v1643
        %v1745 = vunpack.c.1.s8 %v1643
        %v1746 = vunpack.c.2.s8 %v1643
        %v1747 = vunpack.c.3.s8 %v1643
        %v1748 = vunpack.c.0.s8 %v1644
        %v1749 = vunpack.c.1.s8 %v1644
        %v1750 = vunpack.c.2.s8 %v1644
        %v1751 = vunpack.c.3.s8 %v1644
        %v1752 = vunpack.c.0.s8 %v1645
        %v1753 = vunpack.c.1.s8 %v1645
        %v1754 = vunpack.c.2.s8 %v1645
        %v1755 = vunpack.c.3.s8 %v1645
        %v1756 = vunpack.c.0.s8 %v1646
        %v1757 = vunpack.c.1.s8 %v1646
        %v1758 = vunpack.c.2.s8 %v1646
        %v1759 = vunpack.c.3.s8 %v1646
        %v1760 = vunpack.c.0.s8 %v1647
        %v1761 = vunpack.c.1.s8 %v1647
        %v1762 = vunpack.c.2.s8 %v1647
        %v1763 = vunpack.c.3.s8 %v1647
        %v1764 = vunpack.c.0.s8 %v1648
        %v1765 = vunpack.c.1.s8 %v1648
        %v1766 = vunpack.c.2.s8 %v1648
        %v1767 = vunpack.c.3.s8 %v1648
        %v1768 = vunpack.c.0.s8 %v1649
        %v1769 = vunpack.c.1.s8 %v1649
        %v1770 = vunpack.c.2.s8 %v1649
        %v1771 = vunpack.c.3.s8 %v1649
        %v1772 = vunpack.c.0.s8 %v1650
        %v1773 = vunpack.c.1.s8 %v1650
        %v1774 = vunpack.c.2.s8 %v1650
        %v1775 = vunpack.c.3.s8 %v1650
        %v1776 = vunpack.c.0.s8 %v1651
        %v1777 = vunpack.c.1.s8 %v1651
        %v1778 = vunpack.c.2.s8 %v1651
        %v1779 = vunpack.c.3.s8 %v1651
        %vm1780 = vcmp.ne.s32.totalorder %v1652, 0
        %vm1781 = vcmp.ne.s32.totalorder %v1653, 0
        %vm1782 = vcmp.ne.s32.totalorder %v1654, 0
        %vm1783 = vcmp.ne.s32.totalorder %v1655, 0
        %vm1784 = vcmp.ne.s32.totalorder %v1656, 0
        %vm1785 = vcmp.ne.s32.totalorder %v1657, 0
        %vm1786 = vcmp.ne.s32.totalorder %v1658, 0
        %vm1787 = vcmp.ne.s32.totalorder %v1659, 0
        %vm1788 = vcmp.ne.s32.totalorder %v1660, 0
        %vm1789 = vcmp.ne.s32.totalorder %v1661, 0
        %vm1790 = vcmp.ne.s32.totalorder %v1662, 0
        %vm1791 = vcmp.ne.s32.totalorder %v1663, 0
        %vm1792 = vcmp.ne.s32.totalorder %v1664, 0
        %vm1793 = vcmp.ne.s32.totalorder %v1665, 0
        %vm1794 = vcmp.ne.s32.totalorder %v1666, 0
        %vm1795 = vcmp.ne.s32.totalorder %v1667, 0
        %vm1796 = vcmp.ne.s32.totalorder %v1668, 0
        %vm1797 = vcmp.ne.s32.totalorder %v1669, 0
        %vm1798 = vcmp.ne.s32.totalorder %v1670, 0
        %vm1799 = vcmp.ne.s32.totalorder %v1671, 0
        %vm1800 = vcmp.ne.s32.totalorder %v1672, 0
        %vm1801 = vcmp.ne.s32.totalorder %v1673, 0
        %vm1802 = vcmp.ne.s32.totalorder %v1674, 0
        %vm1803 = vcmp.ne.s32.totalorder %v1675, 0
        %vm1804 = vcmp.ne.s32.totalorder %v1676, 0
        %vm1805 = vcmp.ne.s32.totalorder %v1677, 0
        %vm1806 = vcmp.ne.s32.totalorder %v1678, 0
        %vm1807 = vcmp.ne.s32.totalorder %v1679, 0
        %vm1808 = vcmp.ne.s32.totalorder %v1680, 0
        %vm1809 = vcmp.ne.s32.totalorder %v1681, 0
        %vm1810 = vcmp.ne.s32.totalorder %v1682, 0
        %vm1811 = vcmp.ne.s32.totalorder %v1683, 0
        %vm1812 = vcmp.ne.s32.totalorder %v1684, 0
        %vm1813 = vcmp.ne.s32.totalorder %v1685, 0
        %vm1814 = vcmp.ne.s32.totalorder %v1686, 0
        %vm1815 = vcmp.ne.s32.totalorder %v1687, 0
        %vm1816 = vcmp.ne.s32.totalorder %v1688, 0
        %vm1817 = vcmp.ne.s32.totalorder %v1689, 0
        %vm1818 = vcmp.ne.s32.totalorder %v1690, 0
        %vm1819 = vcmp.ne.s32.totalorder %v1691, 0
        %vm1820 = vcmp.ne.s32.totalorder %v1692, 0
        %vm1821 = vcmp.ne.s32.totalorder %v1693, 0
        %vm1822 = vcmp.ne.s32.totalorder %v1694, 0
        %vm1823 = vcmp.ne.s32.totalorder %v1695, 0
        %vm1824 = vcmp.ne.s32.totalorder %v1696, 0
        %vm1825 = vcmp.ne.s32.totalorder %v1697, 0
        %vm1826 = vcmp.ne.s32.totalorder %v1698, 0
        %vm1827 = vcmp.ne.s32.totalorder %v1699, 0
        %vm1828 = vcmp.ne.s32.totalorder %v1700, 0
        %vm1829 = vcmp.ne.s32.totalorder %v1701, 0
        %vm1830 = vcmp.ne.s32.totalorder %v1702, 0
        %vm1831 = vcmp.ne.s32.totalorder %v1703, 0
        %vm1832 = vcmp.ne.s32.totalorder %v1704, 0
        %vm1833 = vcmp.ne.s32.totalorder %v1705, 0
        %vm1834 = vcmp.ne.s32.totalorder %v1706, 0
        %vm1835 = vcmp.ne.s32.totalorder %v1707, 0
        %vm1836 = vcmp.ne.s32.totalorder %v1708, 0
        %vm1837 = vcmp.ne.s32.totalorder %v1709, 0
        %vm1838 = vcmp.ne.s32.totalorder %v1710, 0
        %vm1839 = vcmp.ne.s32.totalorder %v1711, 0
        %vm1840 = vcmp.ne.s32.totalorder %v1712, 0
        %vm1841 = vcmp.ne.s32.totalorder %v1713, 0
        %vm1842 = vcmp.ne.s32.totalorder %v1714, 0
        %vm1843 = vcmp.ne.s32.totalorder %v1715, 0
        %vm1844 = vcmp.ne.s32.totalorder %v1716, 0
        %vm1845 = vcmp.ne.s32.totalorder %v1717, 0
        %vm1846 = vcmp.ne.s32.totalorder %v1718, 0
        %vm1847 = vcmp.ne.s32.totalorder %v1719, 0
        %vm1848 = vcmp.ne.s32.totalorder %v1720, 0
        %vm1849 = vcmp.ne.s32.totalorder %v1721, 0
        %vm1850 = vcmp.ne.s32.totalorder %v1722, 0
        %vm1851 = vcmp.ne.s32.totalorder %v1723, 0
        %vm1852 = vcmp.ne.s32.totalorder %v1724, 0
        %vm1853 = vcmp.ne.s32.totalorder %v1725, 0
        %vm1854 = vcmp.ne.s32.totalorder %v1726, 0
        %vm1855 = vcmp.ne.s32.totalorder %v1727, 0
        %vm1856 = vcmp.ne.s32.totalorder %v1728, 0
        %vm1857 = vcmp.ne.s32.totalorder %v1729, 0
        %vm1858 = vcmp.ne.s32.totalorder %v1730, 0
        %vm1859 = vcmp.ne.s32.totalorder %v1731, 0
        %vm1860 = vcmp.ne.s32.totalorder %v1732, 0
        %vm1861 = vcmp.ne.s32.totalorder %v1733, 0
        %vm1862 = vcmp.ne.s32.totalorder %v1734, 0
        %vm1863 = vcmp.ne.s32.totalorder %v1735, 0
        %vm1864 = vcmp.ne.s32.totalorder %v1736, 0
        %vm1865 = vcmp.ne.s32.totalorder %v1737, 0
        %vm1866 = vcmp.ne.s32.totalorder %v1738, 0
        %vm1867 = vcmp.ne.s32.totalorder %v1739, 0
        %vm1868 = vcmp.ne.s32.totalorder %v1740, 0
        %vm1869 = vcmp.ne.s32.totalorder %v1741, 0
        %vm1870 = vcmp.ne.s32.totalorder %v1742, 0
        %vm1871 = vcmp.ne.s32.totalorder %v1743, 0
        %vm1872 = vcmp.ne.s32.totalorder %v1744, 0
        %vm1873 = vcmp.ne.s32.totalorder %v1745, 0
        %vm1874 = vcmp.ne.s32.totalorder %v1746, 0
        %vm1875 = vcmp.ne.s32.totalorder %v1747, 0
        %vm1876 = vcmp.ne.s32.totalorder %v1748, 0
        %vm1877 = vcmp.ne.s32.totalorder %v1749, 0
        %vm1878 = vcmp.ne.s32.totalorder %v1750, 0
        %vm1879 = vcmp.ne.s32.totalorder %v1751, 0
        %vm1880 = vcmp.ne.s32.totalorder %v1752, 0
        %vm1881 = vcmp.ne.s32.totalorder %v1753, 0
        %vm1882 = vcmp.ne.s32.totalorder %v1754, 0
        %vm1883 = vcmp.ne.s32.totalorder %v1755, 0
        %vm1884 = vcmp.ne.s32.totalorder %v1756, 0
        %vm1885 = vcmp.ne.s32.totalorder %v1757, 0
        %vm1886 = vcmp.ne.s32.totalorder %v1758, 0
        %vm1887 = vcmp.ne.s32.totalorder %v1759, 0
        %vm1888 = vcmp.ne.s32.totalorder %v1760, 0
        %vm1889 = vcmp.ne.s32.totalorder %v1761, 0
        %vm1890 = vcmp.ne.s32.totalorder %v1762, 0
        %vm1891 = vcmp.ne.s32.totalorder %v1763, 0
        %vm1892 = vcmp.ne.s32.totalorder %v1764, 0
        %vm1893 = vcmp.ne.s32.totalorder %v1765, 0
        %vm1894 = vcmp.ne.s32.totalorder %v1766, 0
        %vm1895 = vcmp.ne.s32.totalorder %v1767, 0
        %vm1896 = vcmp.ne.s32.totalorder %v1768, 0
        %vm1897 = vcmp.ne.s32.totalorder %v1769, 0
        %vm1898 = vcmp.ne.s32.totalorder %v1770, 0
        %vm1899 = vcmp.ne.s32.totalorder %v1771, 0
        %vm1900 = vcmp.ne.s32.totalorder %v1772, 0
        %vm1901 = vcmp.ne.s32.totalorder %v1773, 0
        %vm1902 = vcmp.ne.s32.totalorder %v1774, 0
        %vm1903 = vcmp.ne.s32.totalorder %v1775, 0
        %vm1904 = vcmp.ne.s32.totalorder %v1776, 0
        %vm1905 = vcmp.ne.s32.totalorder %v1777, 0
        %vm1906 = vcmp.ne.s32.totalorder %v1778, 0
        %vm1907 = vcmp.ne.s32.totalorder %v1779, 0
        %v1908 = vsel %vm1780, %v1204, -1e+30
        %v1909 = vsel %vm1781, %v1205, -1e+30
        %v1910 = vsel %vm1782, %v1206, -1e+30
        %v1911 = vsel %vm1783, %v1207, -1e+30
        %v1912 = vsel %vm1784, %v1208, -1e+30
        %v1913 = vsel %vm1785, %v1209, -1e+30
        %v1914 = vsel %vm1786, %v1210, -1e+30
        %v1915 = vsel %vm1787, %v1211, -1e+30
        %v1916 = vsel %vm1788, %v1212, -1e+30
        %v1917 = vsel %vm1789, %v1213, -1e+30
        %v1918 = vsel %vm1790, %v1214, -1e+30
        %v1919 = vsel %vm1791, %v1215, -1e+30
        %v1920 = vsel %vm1792, %v1216, -1e+30
        %v1921 = vsel %vm1793, %v1217, -1e+30
        %v1922 = vsel %vm1794, %v1218, -1e+30
        %v1923 = vsel %vm1795, %v1219, -1e+30
        %v1924 = vsel %vm1796, %v1220, -1e+30
        %v1925 = vsel %vm1797, %v1221, -1e+30
        %v1926 = vsel %vm1798, %v1222, -1e+30
        %v1927 = vsel %vm1799, %v1223, -1e+30
        %v1928 = vsel %vm1800, %v1224, -1e+30
        %v1929 = vsel %vm1801, %v1225, -1e+30
        %v1930 = vsel %vm1802, %v1226, -1e+30
        %v1931 = vsel %vm1803, %v1227, -1e+30
        %v1932 = vsel %vm1804, %v1228, -1e+30
        %v1933 = vsel %vm1805, %v1229, -1e+30
        %v1934 = vsel %vm1806, %v1230, -1e+30
        %v1935 = vsel %vm1807, %v1231, -1e+30
        %v1936 = vsel %vm1808, %v1232, -1e+30
        %v1937 = vsel %vm1809, %v1233, -1e+30
        %v1938 = vsel %vm1810, %v1234, -1e+30
        %v1939 = vsel %vm1811, %v1235, -1e+30
        %v1940 = vsel %vm1812, %v1236, -1e+30
        %v1941 = vsel %vm1813, %v1237, -1e+30
        %v1942 = vsel %vm1814, %v1238, -1e+30
        %v1943 = vsel %vm1815, %v1239, -1e+30
        %v1944 = vsel %vm1816, %v1240, -1e+30
        %v1945 = vsel %vm1817, %v1241, -1e+30
        %v1946 = vsel %vm1818, %v1242, -1e+30
        %v1947 = vsel %vm1819, %v1243, -1e+30
        %v1948 = vsel %vm1820, %v1244, -1e+30
        %v1949 = vsel %vm1821, %v1245, -1e+30
        %v1950 = vsel %vm1822, %v1246, -1e+30
        %v1951 = vsel %vm1823, %v1247, -1e+30
        %v1952 = vsel %vm1824, %v1248, -1e+30
        %v1953 = vsel %vm1825, %v1249, -1e+30
        %v1954 = vsel %vm1826, %v1250, -1e+30
        %v1955 = vsel %vm1827, %v1251, -1e+30
        %v1956 = vsel %vm1828, %v1252, -1e+30
        %v1957 = vsel %vm1829, %v1253, -1e+30
        %v1958 = vsel %vm1830, %v1254, -1e+30
        %v1959 = vsel %vm1831, %v1255, -1e+30
        %v1960 = vsel %vm1832, %v1256, -1e+30
        %v1961 = vsel %vm1833, %v1257, -1e+30
        %v1962 = vsel %vm1834, %v1258, -1e+30
        %v1963 = vsel %vm1835, %v1259, -1e+30
        %v1964 = vsel %vm1836, %v1260, -1e+30
        %v1965 = vsel %vm1837, %v1261, -1e+30
        %v1966 = vsel %vm1838, %v1262, -1e+30
        %v1967 = vsel %vm1839, %v1263, -1e+30
        %v1968 = vsel %vm1840, %v1264, -1e+30
        %v1969 = vsel %vm1841, %v1265, -1e+30
        %v1970 = vsel %vm1842, %v1266, -1e+30
        %v1971 = vsel %vm1843, %v1267, -1e+30
        %v1972 = vsel %vm1844, %v1268, -1e+30
        %v1973 = vsel %vm1845, %v1269, -1e+30
        %v1974 = vsel %vm1846, %v1270, -1e+30
        %v1975 = vsel %vm1847, %v1271, -1e+30
        %v1976 = vsel %vm1848, %v1272, -1e+30
        %v1977 = vsel %vm1849, %v1273, -1e+30
        %v1978 = vsel %vm1850, %v1274, -1e+30
        %v1979 = vsel %vm1851, %v1275, -1e+30
        %v1980 = vsel %vm1852, %v1276, -1e+30
        %v1981 = vsel %vm1853, %v1277, -1e+30
        %v1982 = vsel %vm1854, %v1278, -1e+30
        %v1983 = vsel %vm1855, %v1279, -1e+30
        %v1984 = vsel %vm1856, %v1280, -1e+30
        %v1985 = vsel %vm1857, %v1281, -1e+30
        %v1986 = vsel %vm1858, %v1282, -1e+30
        %v1987 = vsel %vm1859, %v1283, -1e+30
        %v1988 = vsel %vm1860, %v1284, -1e+30
        %v1989 = vsel %vm1861, %v1285, -1e+30
        %v1990 = vsel %vm1862, %v1286, -1e+30
        %v1991 = vsel %vm1863, %v1287, -1e+30
        %v1992 = vsel %vm1864, %v1288, -1e+30
        %v1993 = vsel %vm1865, %v1289, -1e+30
        %v1994 = vsel %vm1866, %v1290, -1e+30
        %v1995 = vsel %vm1867, %v1291, -1e+30
        %v1996 = vsel %vm1868, %v1292, -1e+30
        %v1997 = vsel %vm1869, %v1293, -1e+30
        %v1998 = vsel %vm1870, %v1294, -1e+30
        %v1999 = vsel %vm1871, %v1295, -1e+30
        %v2000 = vsel %vm1872, %v1296, -1e+30
        %v2001 = vsel %vm1873, %v1297, -1e+30
        %v2002 = vsel %vm1874, %v1298, -1e+30
        %v2003 = vsel %vm1875, %v1299, -1e+30
        %v2004 = vsel %vm1876, %v1300, -1e+30
        %v2005 = vsel %vm1877, %v1301, -1e+30
        %v2006 = vsel %vm1878, %v1302, -1e+30
        %v2007 = vsel %vm1879, %v1303, -1e+30
        %v2008 = vsel %vm1880, %v1304, -1e+30
        %v2009 = vsel %vm1881, %v1305, -1e+30
        %v2010 = vsel %vm1882, %v1306, -1e+30
        %v2011 = vsel %vm1883, %v1307, -1e+30
        %v2012 = vsel %vm1884, %v1308, -1e+30
        %v2013 = vsel %vm1885, %v1309, -1e+30
        %v2014 = vsel %vm1886, %v1310, -1e+30
        %v2015 = vsel %vm1887, %v1311, -1e+30
        %v2016 = vsel %vm1888, %v1312, -1e+30
        %v2017 = vsel %vm1889, %v1313, -1e+30
        %v2018 = vsel %vm1890, %v1314, -1e+30
        %v2019 = vsel %vm1891, %v1315, -1e+30
        %v2020 = vsel %vm1892, %v1316, -1e+30
        %v2021 = vsel %vm1893, %v1317, -1e+30
        %v2022 = vsel %vm1894, %v1318, -1e+30
        %v2023 = vsel %vm1895, %v1319, -1e+30
        %v2024 = vsel %vm1896, %v1320, -1e+30
        %v2025 = vsel %vm1897, %v1321, -1e+30
        %v2026 = vsel %vm1898, %v1322, -1e+30
        %v2027 = vsel %vm1899, %v1323, -1e+30
        %v2028 = vsel %vm1900, %v1324, -1e+30
        %v2029 = vsel %vm1901, %v1325, -1e+30
        %v2030 = vsel %vm1902, %v1326, -1e+30
        %v2031 = vsel %vm1903, %v1327, -1e+30
        %v2032 = vsel %vm1904, %v1328, -1e+30
        %v2033 = vsel %vm1905, %v1329, -1e+30
        %v2034 = vsel %vm1906, %v1330, -1e+30
        %v2035 = vsel %vm1907, %v1331, -1e+30
        %v2036 = vld [vmem:[#allocation2] sm:$0xff]
        %v2037 = vld [vmem:[#allocation2 + $0x8] sm:$0xff]
        %v2038 = vld [vmem:[#allocation2 + $0x10] sm:$0xff]
        %v2039 = vld [vmem:[#allocation2 + $0x18] sm:$0xff]
        %v2040 = vld [vmem:[#allocation2 + $0x20] sm:$0xff]
        %v2041 = vld [vmem:[#allocation2 + $0x28] sm:$0xff]
        %v2042 = vld [vmem:[#allocation2 + $0x30] sm:$0xff]
        %v2043 = vld [vmem:[#allocation2 + $0x38] sm:$0xff]
        %v2044 = vld [vmem:[#allocation2 + $0x40] sm:$0xff]
        %v2045 = vld [vmem:[#allocation2 + $0x48] sm:$0xff]
        %v2046 = vld [vmem:[#allocation2 + $0x50] sm:$0xff]
        %v2047 = vld [vmem:[#allocation2 + $0x58] sm:$0xff]
        %v2048 = vld [vmem:[#allocation2 + $0x60] sm:$0xff]
        %v2049 = vld [vmem:[#allocation2 + $0x68] sm:$0xff]
        %v2050 = vld [vmem:[#allocation2 + $0x70] sm:$0xff]
        %v2051 = vld [vmem:[#allocation2 + $0x78] sm:$0xff]
        %v2052 = vld [vmem:[#allocation2 + $0x80] sm:$0xff]
        %v2053 = vld [vmem:[#allocation2 + $0x88] sm:$0xff]
        %v2054 = vld [vmem:[#allocation2 + $0x90] sm:$0xff]
        %v2055 = vld [vmem:[#allocation2 + $0x98] sm:$0xff]
        %v2056 = vld [vmem:[#allocation2 + $0xa0] sm:$0xff]
        %v2057 = vld [vmem:[#allocation2 + $0xa8] sm:$0xff]
        %v2058 = vld [vmem:[#allocation2 + $0xb0] sm:$0xff]
        %v2059 = vld [vmem:[#allocation2 + $0xb8] sm:$0xff]
        %v2060 = vld [vmem:[#allocation2 + $0xc0] sm:$0xff]
        %v2061 = vld [vmem:[#allocation2 + $0xc8] sm:$0xff]
        %v2062 = vld [vmem:[#allocation2 + $0xd0] sm:$0xff]
        %v2063 = vld [vmem:[#allocation2 + $0xd8] sm:$0xff]
        %v2064 = vld [vmem:[#allocation2 + $0xe0] sm:$0xff]
        %v2065 = vld [vmem:[#allocation2 + $0xe8] sm:$0xff]
        %v2066 = vld [vmem:[#allocation2 + $0xf0] sm:$0xff]
        %v2067 = vld [vmem:[#allocation2 + $0xf8] sm:$0xff]
        %v2068 = vmax.f32 %v1908, %v1909
        %v2069 = vmax.f32 %v2068, %v1910
        %v2070 = vmax.f32 %v2069, %v1911
        %2071 = vmax.xlane.f32.xlu0 %v2070
        %v2072 = vpop.xlane.xlu0 %2071
        %v2073 = vmax.f32 %v1912, %v1913
        %v2074 = vmax.f32 %v2073, %v1914
        %v2075 = vmax.f32 %v2074, %v1915
        %2076 = vmax.xlane.f32.xlu0 %v2075
        %v2077 = vpop.xlane.xlu0 %2076
        %v2078 = vmax.f32 %v1916, %v1917
        %v2079 = vmax.f32 %v2078, %v1918
        %v2080 = vmax.f32 %v2079, %v1919
        %2081 = vmax.xlane.f32.xlu0 %v2080
        %v2082 = vpop.xlane.xlu0 %2081
        %v2083 = vmax.f32 %v1920, %v1921
        %v2084 = vmax.f32 %v2083, %v1922
        %v2085 = vmax.f32 %v2084, %v1923
        %2086 = vmax.xlane.f32.xlu0 %v2085
        %v2087 = vpop.xlane.xlu0 %2086
        %v2088 = vmax.f32 %v1924, %v1925
        %v2089 = vmax.f32 %v2088, %v1926
        %v2090 = vmax.f32 %v2089, %v1927
        %2091 = vmax.xlane.f32.xlu0 %v2090
        %v2092 = vpop.xlane.xlu0 %2091
        %v2093 = vmax.f32 %v1928, %v1929
        %v2094 = vmax.f32 %v2093, %v1930
        %v2095 = vmax.f32 %v2094, %v1931
        %2096 = vmax.xlane.f32.xlu0 %v2095
        %v2097 = vpop.xlane.xlu0 %2096
        %v2098 = vmax.f32 %v1932, %v1933
        %v2099 = vmax.f32 %v2098, %v1934
        %v2100 = vmax.f32 %v2099, %v1935
        %2101 = vmax.xlane.f32.xlu0 %v2100
        %v2102 = vpop.xlane.xlu0 %2101
        %v2103 = vmax.f32 %v1936, %v1937
        %v2104 = vmax.f32 %v2103, %v1938
        %v2105 = vmax.f32 %v2104, %v1939
        %2106 = vmax.xlane.f32.xlu0 %v2105
        %v2107 = vpop.xlane.xlu0 %2106
        %v2108 = vmax.f32 %v1940, %v1941
        %v2109 = vmax.f32 %v2108, %v1942
        %v2110 = vmax.f32 %v2109, %v1943
        %2111 = vmax.xlane.f32.xlu0 %v2110
        %v2112 = vpop.xlane.xlu0 %2111
        %v2113 = vmax.f32 %v1944, %v1945
        %v2114 = vmax.f32 %v2113, %v1946
        %v2115 = vmax.f32 %v2114, %v1947
        %2116 = vmax.xlane.f32.xlu0 %v2115
        %v2117 = vpop.xlane.xlu0 %2116
        %v2118 = vmax.f32 %v1948, %v1949
        %v2119 = vmax.f32 %v2118, %v1950
        %v2120 = vmax.f32 %v2119, %v1951
        %2121 = vmax.xlane.f32.xlu0 %v2120
        %v2122 = vpop.xlane.xlu0 %2121
        %v2123 = vmax.f32 %v1952, %v1953
        %v2124 = vmax.f32 %v2123, %v1954
        %v2125 = vmax.f32 %v2124, %v1955
        %2126 = vmax.xlane.f32.xlu0 %v2125
        %v2127 = vpop.xlane.xlu0 %2126
        %v2128 = vmax.f32 %v1956, %v1957
        %v2129 = vmax.f32 %v2128, %v1958
        %v2130 = vmax.f32 %v2129, %v1959
        %2131 = vmax.xlane.f32.xlu0 %v2130
        %v2132 = vpop.xlane.xlu0 %2131
        %v2133 = vmax.f32 %v1960, %v1961
        %v2134 = vmax.f32 %v2133, %v1962
        %v2135 = vmax.f32 %v2134, %v1963
        %2136 = vmax.xlane.f32.xlu0 %v2135
        %v2137 = vpop.xlane.xlu0 %2136
        %v2138 = vmax.f32 %v1964, %v1965
        %v2139 = vmax.f32 %v2138, %v1966
        %v2140 = vmax.f32 %v2139, %v1967
        %2141 = vmax.xlane.f32.xlu0 %v2140
        %v2142 = vpop.xlane.xlu0 %2141
        %v2143 = vmax.f32 %v1968, %v1969
        %v2144 = vmax.f32 %v2143, %v1970
        %v2145 = vmax.f32 %v2144, %v1971
        %2146 = vmax.xlane.f32.xlu0 %v2145
        %v2147 = vpop.xlane.xlu0 %2146
        %v2148 = vmax.f32 %v1972, %v1973
        %v2149 = vmax.f32 %v2148, %v1974
        %v2150 = vmax.f32 %v2149, %v1975
        %2151 = vmax.xlane.f32.xlu0 %v2150
        %v2152 = vpop.xlane.xlu0 %2151
        %v2153 = vmax.f32 %v1976, %v1977
        %v2154 = vmax.f32 %v2153, %v1978
        %v2155 = vmax.f32 %v2154, %v1979
        %2156 = vmax.xlane.f32.xlu0 %v2155
        %v2157 = vpop.xlane.xlu0 %2156
        %v2158 = vmax.f32 %v1980, %v1981
        %v2159 = vmax.f32 %v2158, %v1982
        %v2160 = vmax.f32 %v2159, %v1983
        %2161 = vmax.xlane.f32.xlu0 %v2160
        %v2162 = vpop.xlane.xlu0 %2161
        %v2163 = vmax.f32 %v1984, %v1985
        %v2164 = vmax.f32 %v2163, %v1986
        %v2165 = vmax.f32 %v2164, %v1987
        %2166 = vmax.xlane.f32.xlu0 %v2165
        %v2167 = vpop.xlane.xlu0 %2166
        %v2168 = vmax.f32 %v1988, %v1989
        %v2169 = vmax.f32 %v2168, %v1990
        %v2170 = vmax.f32 %v2169, %v1991
        %2171 = vmax.xlane.f32.xlu0 %v2170
        %v2172 = vpop.xlane.xlu0 %2171
        %v2173 = vmax.f32 %v1992, %v1993
        %v2174 = vmax.f32 %v2173, %v1994
        %v2175 = vmax.f32 %v2174, %v1995
        %2176 = vmax.xlane.f32.xlu0 %v2175
        %v2177 = vpop.xlane.xlu0 %2176
        %v2178 = vmax.f32 %v1996, %v1997
        %v2179 = vmax.f32 %v2178, %v1998
        %v2180 = vmax.f32 %v2179, %v1999
        %2181 = vmax.xlane.f32.xlu0 %v2180
        %v2182 = vpop.xlane.xlu0 %2181
        %v2183 = vmax.f32 %v2000, %v2001
        %v2184 = vmax.f32 %v2183, %v2002
        %v2185 = vmax.f32 %v2184, %v2003
        %2186 = vmax.xlane.f32.xlu0 %v2185
        %v2187 = vpop.xlane.xlu0 %2186
        %v2188 = vmax.f32 %v2004, %v2005
        %v2189 = vmax.f32 %v2188, %v2006
        %v2190 = vmax.f32 %v2189, %v2007
        %2191 = vmax.xlane.f32.xlu0 %v2190
        %v2192 = vpop.xlane.xlu0 %2191
        %v2193 = vmax.f32 %v2008, %v2009
        %v2194 = vmax.f32 %v2193, %v2010
        %v2195 = vmax.f32 %v2194, %v2011
        %2196 = vmax.xlane.f32.xlu0 %v2195
        %v2197 = vpop.xlane.xlu0 %2196
        %v2198 = vmax.f32 %v2012, %v2013
        %v2199 = vmax.f32 %v2198, %v2014
        %v2200 = vmax.f32 %v2199, %v2015
        %2201 = vmax.xlane.f32.xlu0 %v2200
        %v2202 = vpop.xlane.xlu0 %2201
        %v2203 = vmax.f32 %v2016, %v2017
        %v2204 = vmax.f32 %v2203, %v2018
        %v2205 = vmax.f32 %v2204, %v2019
        %2206 = vmax.xlane.f32.xlu0 %v2205
        %v2207 = vpop.xlane.xlu0 %2206
        %v2208 = vmax.f32 %v2020, %v2021
        %v2209 = vmax.f32 %v2208, %v2022
        %v2210 = vmax.f32 %v2209, %v2023
        %2211 = vmax.xlane.f32.xlu0 %v2210
        %v2212 = vpop.xlane.xlu0 %2211
        %v2213 = vmax.f32 %v2024, %v2025
        %v2214 = vmax.f32 %v2213, %v2026
        %v2215 = vmax.f32 %v2214, %v2027
        %2216 = vmax.xlane.f32.xlu0 %v2215
        %v2217 = vpop.xlane.xlu0 %2216
        %v2218 = vmax.f32 %v2028, %v2029
        %v2219 = vmax.f32 %v2218, %v2030
        %v2220 = vmax.f32 %v2219, %v2031
        %2221 = vmax.xlane.f32.xlu0 %v2220
        %v2222 = vpop.xlane.xlu0 %2221
        %v2223 = vmax.f32 %v2032, %v2033
        %v2224 = vmax.f32 %v2223, %v2034
        %v2225 = vmax.f32 %v2224, %v2035
        %2226 = vmax.xlane.f32.xlu0 %v2225
        %v2227 = vpop.xlane.xlu0 %2226
        %v2228 = vmax.f32 %v2036, %v2072
        %v2229 = vmax.f32 %v2037, %v2077
        %v2230 = vmax.f32 %v2038, %v2082
        %v2231 = vmax.f32 %v2039, %v2087
        %v2232 = vmax.f32 %v2040, %v2092
        %v2233 = vmax.f32 %v2041, %v2097
        %v2234 = vmax.f32 %v2042, %v2102
        %v2235 = vmax.f32 %v2043, %v2107
        %v2236 = vmax.f32 %v2044, %v2112
        %v2237 = vmax.f32 %v2045, %v2117
        %v2238 = vmax.f32 %v2046, %v2122
        %v2239 = vmax.f32 %v2047, %v2127
        %v2240 = vmax.f32 %v2048, %v2132
        %v2241 = vmax.f32 %v2049, %v2137
        %v2242 = vmax.f32 %v2050, %v2142
        %v2243 = vmax.f32 %v2051, %v2147
        %v2244 = vmax.f32 %v2052, %v2152
        %v2245 = vmax.f32 %v2053, %v2157
        %v2246 = vmax.f32 %v2054, %v2162
        %v2247 = vmax.f32 %v2055, %v2167
        %v2248 = vmax.f32 %v2056, %v2172
        %v2249 = vmax.f32 %v2057, %v2177
        %v2250 = vmax.f32 %v2058, %v2182
        %v2251 = vmax.f32 %v2059, %v2187
        %v2252 = vmax.f32 %v2060, %v2192
        %v2253 = vmax.f32 %v2061, %v2197
        %v2254 = vmax.f32 %v2062, %v2202
        %v2255 = vmax.f32 %v2063, %v2207
        %v2256 = vmax.f32 %v2064, %v2212
        %v2257 = vmax.f32 %v2065, %v2217
        %v2258 = vmax.f32 %v2066, %v2222
        %v2259 = vmax.f32 %v2067, %v2227
        %v2260 = vsub.f32 %v2036, %v2228
        %v2261 = vsub.f32 %v2037, %v2229
        %v2262 = vsub.f32 %v2038, %v2230
        %v2263 = vsub.f32 %v2039, %v2231
        %v2264 = vsub.f32 %v2040, %v2232
        %v2265 = vsub.f32 %v2041, %v2233
        %v2266 = vsub.f32 %v2042, %v2234
        %v2267 = vsub.f32 %v2043, %v2235
        %v2268 = vsub.f32 %v2044, %v2236
        %v2269 = vsub.f32 %v2045, %v2237
        %v2270 = vsub.f32 %v2046, %v2238
        %v2271 = vsub.f32 %v2047, %v2239
        %v2272 = vsub.f32 %v2048, %v2240
        %v2273 = vsub.f32 %v2049, %v2241
        %v2274 = vsub.f32 %v2050, %v2242
        %v2275 = vsub.f32 %v2051, %v2243
        %v2276 = vsub.f32 %v2052, %v2244
        %v2277 = vsub.f32 %v2053, %v2245
        %v2278 = vsub.f32 %v2054, %v2246
        %v2279 = vsub.f32 %v2055, %v2247
        %v2280 = vsub.f32 %v2056, %v2248
        %v2281 = vsub.f32 %v2057, %v2249
        %v2282 = vsub.f32 %v2058, %v2250
        %v2283 = vsub.f32 %v2059, %v2251
        %v2284 = vsub.f32 %v2060, %v2252
        %v2285 = vsub.f32 %v2061, %v2253
        %v2286 = vsub.f32 %v2062, %v2254
        %v2287 = vsub.f32 %v2063, %v2255
        %v2288 = vsub.f32 %v2064, %v2256
        %v2289 = vsub.f32 %v2065, %v2257
        %v2290 = vsub.f32 %v2066, %v2258
        %v2291 = vsub.f32 %v2067, %v2259
        %v2292 = vmul.f32 %v2260, 1.442695
        %v2293 = vpow.pop %v2292
        %v2294 = vmul.f32 %v2261, 1.442695
        %v2295 = vpow.pop %v2294
        %v2296 = vmul.f32 %v2262, 1.442695
        %v2297 = vpow.pop %v2296
        %v2298 = vmul.f32 %v2263, 1.442695
        %v2299 = vpow.pop %v2298
        %v2300 = vmul.f32 %v2264, 1.442695
        %v2301 = vpow.pop %v2300
        %v2302 = vmul.f32 %v2265, 1.442695
        %v2303 = vpow.pop %v2302
        %v2304 = vmul.f32 %v2266, 1.442695
        %v2305 = vpow.pop %v2304
        %v2306 = vmul.f32 %v2267, 1.442695
        %v2307 = vpow.pop %v2306
        %v2308 = vmul.f32 %v2268, 1.442695
        %v2309 = vpow.pop %v2308
        %v2310 = vmul.f32 %v2269, 1.442695
        %v2311 = vpow.pop %v2310
        %v2312 = vmul.f32 %v2270, 1.442695
        %v2313 = vpow.pop %v2312
        %v2314 = vmul.f32 %v2271, 1.442695
        %v2315 = vpow.pop %v2314
        %v2316 = vmul.f32 %v2272, 1.442695
        %v2317 = vpow.pop %v2316
        %v2318 = vmul.f32 %v2273, 1.442695
        %v2319 = vpow.pop %v2318
        %v2320 = vmul.f32 %v2274, 1.442695
        %v2321 = vpow.pop %v2320
        %v2322 = vmul.f32 %v2275, 1.442695
        %v2323 = vpow.pop %v2322
        %v2324 = vmul.f32 %v2276, 1.442695
        %v2325 = vpow.pop %v2324
        %v2326 = vmul.f32 %v2277, 1.442695
        %v2327 = vpow.pop %v2326
        %v2328 = vmul.f32 %v2278, 1.442695
        %v2329 = vpow.pop %v2328
        %v2330 = vmul.f32 %v2279, 1.442695
        %v2331 = vpow.pop %v2330
        %v2332 = vmul.f32 %v2280, 1.442695
        %v2333 = vpow.pop %v2332
        %v2334 = vmul.f32 %v2281, 1.442695
        %v2335 = vpow.pop %v2334
        %v2336 = vmul.f32 %v2282, 1.442695
        %v2337 = vpow.pop %v2336
        %v2338 = vmul.f32 %v2283, 1.442695
        %v2339 = vpow.pop %v2338
        %v2340 = vmul.f32 %v2284, 1.442695
        %v2341 = vpow.pop %v2340
        %v2342 = vmul.f32 %v2285, 1.442695
        %v2343 = vpow.pop %v2342
        %v2344 = vmul.f32 %v2286, 1.442695
        %v2345 = vpow.pop %v2344
        %v2346 = vmul.f32 %v2287, 1.442695
        %v2347 = vpow.pop %v2346
        %v2348 = vmul.f32 %v2288, 1.442695
        %v2349 = vpow.pop %v2348
        %v2350 = vmul.f32 %v2289, 1.442695
        %v2351 = vpow.pop %v2350
        %v2352 = vmul.f32 %v2290, 1.442695
        %v2353 = vpow.pop %v2352
        %v2354 = vmul.f32 %v2291, 1.442695
        %v2355 = vpow.pop %v2354
        %2357 = vset.pattern.permute.xlu0 0
        %2358 = vperm.xlu0 %2357, %v2228
        %v2359 = vpop.permute.xlu0 %2358
        %2362 = vset.pattern.permute.xlu0 0
        %2363 = vperm.xlu0 %2362, %v2229
        %v2364 = vpop.permute.xlu0 %2363
        %2367 = vset.pattern.permute.xlu0 0
        %2368 = vperm.xlu0 %2367, %v2230
        %v2369 = vpop.permute.xlu0 %2368
        %2372 = vset.pattern.permute.xlu0 0
        %2373 = vperm.xlu0 %2372, %v2231
        %v2374 = vpop.permute.xlu0 %2373
        %2377 = vset.pattern.permute.xlu0 0
        %2378 = vperm.xlu0 %2377, %v2232
        %v2379 = vpop.permute.xlu0 %2378
        %2382 = vset.pattern.permute.xlu0 0
        %2383 = vperm.xlu0 %2382, %v2233
        %v2384 = vpop.permute.xlu0 %2383
        %2387 = vset.pattern.permute.xlu0 0
        %2388 = vperm.xlu0 %2387, %v2234
        %v2389 = vpop.permute.xlu0 %2388
        %2392 = vset.pattern.permute.xlu0 0
        %2393 = vperm.xlu0 %2392, %v2235
        %v2394 = vpop.permute.xlu0 %2393
        %2397 = vset.pattern.permute.xlu0 0
        %2398 = vperm.xlu0 %2397, %v2236
        %v2399 = vpop.permute.xlu0 %2398
        %2402 = vset.pattern.permute.xlu0 0
        %2403 = vperm.xlu0 %2402, %v2237
        %v2404 = vpop.permute.xlu0 %2403
        %2407 = vset.pattern.permute.xlu0 0
        %2408 = vperm.xlu0 %2407, %v2238
        %v2409 = vpop.permute.xlu0 %2408
        %2412 = vset.pattern.permute.xlu0 0
        %2413 = vperm.xlu0 %2412, %v2239
        %v2414 = vpop.permute.xlu0 %2413
        %2417 = vset.pattern.permute.xlu0 0
        %2418 = vperm.xlu0 %2417, %v2240
        %v2419 = vpop.permute.xlu0 %2418
        %2422 = vset.pattern.permute.xlu0 0
        %2423 = vperm.xlu0 %2422, %v2241
        %v2424 = vpop.permute.xlu0 %2423
        %2427 = vset.pattern.permute.xlu0 0
        %2428 = vperm.xlu0 %2427, %v2242
        %v2429 = vpop.permute.xlu0 %2428
        %2432 = vset.pattern.permute.xlu0 0
        %2433 = vperm.xlu0 %2432, %v2243
        %v2434 = vpop.permute.xlu0 %2433
        %2437 = vset.pattern.permute.xlu0 0
        %2438 = vperm.xlu0 %2437, %v2244
        %v2439 = vpop.permute.xlu0 %2438
        %2442 = vset.pattern.permute.xlu0 0
        %2443 = vperm.xlu0 %2442, %v2245
        %v2444 = vpop.permute.xlu0 %2443
        %2447 = vset.pattern.permute.xlu0 0
        %2448 = vperm.xlu0 %2447, %v2246
        %v2449 = vpop.permute.xlu0 %2448
        %2452 = vset.pattern.permute.xlu0 0
        %2453 = vperm.xlu0 %2452, %v2247
        %v2454 = vpop.permute.xlu0 %2453
        %2457 = vset.pattern.permute.xlu0 0
        %2458 = vperm.xlu0 %2457, %v2248
        %v2459 = vpop.permute.xlu0 %2458
        %2462 = vset.pattern.permute.xlu0 0
        %2463 = vperm.xlu0 %2462, %v2249
        %v2464 = vpop.permute.xlu0 %2463
        %2467 = vset.pattern.permute.xlu0 0
        %2468 = vperm.xlu0 %2467, %v2250
        %v2469 = vpop.permute.xlu0 %2468
        %2472 = vset.pattern.permute.xlu0 0
        %2473 = vperm.xlu0 %2472, %v2251
        %v2474 = vpop.permute.xlu0 %2473
        %2477 = vset.pattern.permute.xlu0 0
        %2478 = vperm.xlu0 %2477, %v2252
        %v2479 = vpop.permute.xlu0 %2478
        %2482 = vset.pattern.permute.xlu0 0
        %2483 = vperm.xlu0 %2482, %v2253
        %v2484 = vpop.permute.xlu0 %2483
        %2487 = vset.pattern.permute.xlu0 0
        %2488 = vperm.xlu0 %2487, %v2254
        %v2489 = vpop.permute.xlu0 %2488
        %2492 = vset.pattern.permute.xlu0 0
        %2493 = vperm.xlu0 %2492, %v2255
        %v2494 = vpop.permute.xlu0 %2493
        %2497 = vset.pattern.permute.xlu0 0
        %2498 = vperm.xlu0 %2497, %v2256
        %v2499 = vpop.permute.xlu0 %2498
        %2502 = vset.pattern.permute.xlu0 0
        %2503 = vperm.xlu0 %2502, %v2257
        %v2504 = vpop.permute.xlu0 %2503
        %2507 = vset.pattern.permute.xlu0 0
        %2508 = vperm.xlu0 %2507, %v2258
        %v2509 = vpop.permute.xlu0 %2508
        %2512 = vset.pattern.permute.xlu0 0
        %2513 = vperm.xlu0 %2512, %v2259
        %v2514 = vpop.permute.xlu0 %2513
        %v2516 = vsub.f32 %v1908, %v2359
        %v2517 = vsub.f32 %v1909, %v2359
        %v2518 = vsub.f32 %v1910, %v2359
        %v2519 = vsub.f32 %v1911, %v2359
        %v2520 = vsub.f32 %v1912, %v2364
        %v2521 = vsub.f32 %v1913, %v2364
        %v2522 = vsub.f32 %v1914, %v2364
        %v2523 = vsub.f32 %v1915, %v2364
        %v2524 = vsub.f32 %v1916, %v2369
        %v2525 = vsub.f32 %v1917, %v2369
        %v2526 = vsub.f32 %v1918, %v2369
        %v2527 = vsub.f32 %v1919, %v2369
        %v2528 = vsub.f32 %v1920, %v2374
        %v2529 = vsub.f32 %v1921, %v2374
        %v2530 = vsub.f32 %v1922, %v2374
        %v2531 = vsub.f32 %v1923, %v2374
        %v2532 = vsub.f32 %v1924, %v2379
        %v2533 = vsub.f32 %v1925, %v2379
        %v2534 = vsub.f32 %v1926, %v2379
        %v2535 = vsub.f32 %v1927, %v2379
        %v2536 = vsub.f32 %v1928, %v2384
        %v2537 = vsub.f32 %v1929, %v2384
        %v2538 = vsub.f32 %v1930, %v2384
        %v2539 = vsub.f32 %v1931, %v2384
        %v2540 = vsub.f32 %v1932, %v2389
        %v2541 = vsub.f32 %v1933, %v2389
        %v2542 = vsub.f32 %v1934, %v2389
        %v2543 = vsub.f32 %v1935, %v2389
        %v2544 = vsub.f32 %v1936, %v2394
        %v2545 = vsub.f32 %v1937, %v2394
        %v2546 = vsub.f32 %v1938, %v2394
        %v2547 = vsub.f32 %v1939, %v2394
        %v2548 = vsub.f32 %v1940, %v2399
        %v2549 = vsub.f32 %v1941, %v2399
        %v2550 = vsub.f32 %v1942, %v2399
        %v2551 = vsub.f32 %v1943, %v2399
        %v2552 = vsub.f32 %v1944, %v2404
        %v2553 = vsub.f32 %v1945, %v2404
        %v2554 = vsub.f32 %v1946, %v2404
        %v2555 = vsub.f32 %v1947, %v2404
        %v2556 = vsub.f32 %v1948, %v2409
        %v2557 = vsub.f32 %v1949, %v2409
        %v2558 = vsub.f32 %v1950, %v2409
        %v2559 = vsub.f32 %v1951, %v2409
        %v2560 = vsub.f32 %v1952, %v2414
        %v2561 = vsub.f32 %v1953, %v2414
        %v2562 = vsub.f32 %v1954, %v2414
        %v2563 = vsub.f32 %v1955, %v2414
        %v2564 = vsub.f32 %v1956, %v2419
        %v2565 = vsub.f32 %v1957, %v2419
        %v2566 = vsub.f32 %v1958, %v2419
        %v2567 = vsub.f32 %v1959, %v2419
        %v2568 = vsub.f32 %v1960, %v2424
        %v2569 = vsub.f32 %v1961, %v2424
        %v2570 = vsub.f32 %v1962, %v2424
        %v2571 = vsub.f32 %v1963, %v2424
        %v2572 = vsub.f32 %v1964, %v2429
        %v2573 = vsub.f32 %v1965, %v2429
        %v2574 = vsub.f32 %v1966, %v2429
        %v2575 = vsub.f32 %v1967, %v2429
        %v2576 = vsub.f32 %v1968, %v2434
        %v2577 = vsub.f32 %v1969, %v2434
        %v2578 = vsub.f32 %v1970, %v2434
        %v2579 = vsub.f32 %v1971, %v2434
        %v2580 = vsub.f32 %v1972, %v2439
        %v2581 = vsub.f32 %v1973, %v2439
        %v2582 = vsub.f32 %v1974, %v2439
        %v2583 = vsub.f32 %v1975, %v2439
        %v2584 = vsub.f32 %v1976, %v2444
        %v2585 = vsub.f32 %v1977, %v2444
        %v2586 = vsub.f32 %v1978, %v2444
        %v2587 = vsub.f32 %v1979, %v2444
        %v2588 = vsub.f32 %v1980, %v2449
        %v2589 = vsub.f32 %v1981, %v2449
        %v2590 = vsub.f32 %v1982, %v2449
        %v2591 = vsub.f32 %v1983, %v2449
        %v2592 = vsub.f32 %v1984, %v2454
        %v2593 = vsub.f32 %v1985, %v2454
        %v2594 = vsub.f32 %v1986, %v2454
        %v2595 = vsub.f32 %v1987, %v2454
        %v2596 = vsub.f32 %v1988, %v2459
        %v2597 = vsub.f32 %v1989, %v2459
        %v2598 = vsub.f32 %v1990, %v2459
        %v2599 = vsub.f32 %v1991, %v2459
        %v2600 = vsub.f32 %v1992, %v2464
        %v2601 = vsub.f32 %v1993, %v2464
        %v2602 = vsub.f32 %v1994, %v2464
        %v2603 = vsub.f32 %v1995, %v2464
        %v2604 = vsub.f32 %v1996, %v2469
        %v2605 = vsub.f32 %v1997, %v2469
        %v2606 = vsub.f32 %v1998, %v2469
        %v2607 = vsub.f32 %v1999, %v2469
        %v2608 = vsub.f32 %v2000, %v2474
        %v2609 = vsub.f32 %v2001, %v2474
        %v2610 = vsub.f32 %v2002, %v2474
        %v2611 = vsub.f32 %v2003, %v2474
        %v2612 = vsub.f32 %v2004, %v2479
        %v2613 = vsub.f32 %v2005, %v2479
        %v2614 = vsub.f32 %v2006, %v2479
        %v2615 = vsub.f32 %v2007, %v2479
        %v2616 = vsub.f32 %v2008, %v2484
        %v2617 = vsub.f32 %v2009, %v2484
        %v2618 = vsub.f32 %v2010, %v2484
        %v2619 = vsub.f32 %v2011, %v2484
        %v2620 = vsub.f32 %v2012, %v2489
        %v2621 = vsub.f32 %v2013, %v2489
        %v2622 = vsub.f32 %v2014, %v2489
        %v2623 = vsub.f32 %v2015, %v2489
        %v2624 = vsub.f32 %v2016, %v2494
        %v2625 = vsub.f32 %v2017, %v2494
        %v2626 = vsub.f32 %v2018, %v2494
        %v2627 = vsub.f32 %v2019, %v2494
        %v2628 = vsub.f32 %v2020, %v2499
        %v2629 = vsub.f32 %v2021, %v2499
        %v2630 = vsub.f32 %v2022, %v2499
        %v2631 = vsub.f32 %v2023, %v2499
        %v2632 = vsub.f32 %v2024, %v2504
        %v2633 = vsub.f32 %v2025, %v2504
        %v2634 = vsub.f32 %v2026, %v2504
        %v2635 = vsub.f32 %v2027, %v2504
        %v2636 = vsub.f32 %v2028, %v2509
        %v2637 = vsub.f32 %v2029, %v2509
        %v2638 = vsub.f32 %v2030, %v2509
        %v2639 = vsub.f32 %v2031, %v2509
        %v2640 = vsub.f32 %v2032, %v2514
        %v2641 = vsub.f32 %v2033, %v2514
        %v2642 = vsub.f32 %v2034, %v2514
        %v2643 = vsub.f32 %v2035, %v2514
        %v2644 = vmul.f32 %v2516, 1.442695
        %v2645 = vpow.pop %v2644
        %v2646 = vmul.f32 %v2517, 1.442695
        %v2647 = vpow.pop %v2646
        %v2648 = vmul.f32 %v2518, 1.442695
        %v2649 = vpow.pop %v2648
        %v2650 = vmul.f32 %v2519, 1.442695
        %v2651 = vpow.pop %v2650
        %v2652 = vmul.f32 %v2520, 1.442695
        %v2653 = vpow.pop %v2652
        %v2654 = vmul.f32 %v2521, 1.442695
        %v2655 = vpow.pop %v2654
        %v2656 = vmul.f32 %v2522, 1.442695
        %v2657 = vpow.pop %v2656
        %v2658 = vmul.f32 %v2523, 1.442695
        %v2659 = vpow.pop %v2658
        %v2660 = vmul.f32 %v2524, 1.442695
        %v2661 = vpow.pop %v2660
        %v2662 = vmul.f32 %v2525, 1.442695
        %v2663 = vpow.pop %v2662
        %v2664 = vmul.f32 %v2526, 1.442695
        %v2665 = vpow.pop %v2664
        %v2666 = vmul.f32 %v2527, 1.442695
        %v2667 = vpow.pop %v2666
        %v2668 = vmul.f32 %v2528, 1.442695
        %v2669 = vpow.pop %v2668
        %v2670 = vmul.f32 %v2529, 1.442695
        %v2671 = vpow.pop %v2670
        %v2672 = vmul.f32 %v2530, 1.442695
        %v2673 = vpow.pop %v2672
        %v2674 = vmul.f32 %v2531, 1.442695
        %v2675 = vpow.pop %v2674
        %v2676 = vmul.f32 %v2532, 1.442695
        %v2677 = vpow.pop %v2676
        %v2678 = vmul.f32 %v2533, 1.442695
        %v2679 = vpow.pop %v2678
        %v2680 = vmul.f32 %v2534, 1.442695
        %v2681 = vpow.pop %v2680
        %v2682 = vmul.f32 %v2535, 1.442695
        %v2683 = vpow.pop %v2682
        %v2684 = vmul.f32 %v2536, 1.442695
        %v2685 = vpow.pop %v2684
        %v2686 = vmul.f32 %v2537, 1.442695
        %v2687 = vpow.pop %v2686
        %v2688 = vmul.f32 %v2538, 1.442695
        %v2689 = vpow.pop %v2688
        %v2690 = vmul.f32 %v2539, 1.442695
        %v2691 = vpow.pop %v2690
        %v2692 = vmul.f32 %v2540, 1.442695
        %v2693 = vpow.pop %v2692
        %v2694 = vmul.f32 %v2541, 1.442695
        %v2695 = vpow.pop %v2694
        %v2696 = vmul.f32 %v2542, 1.442695
        %v2697 = vpow.pop %v2696
        %v2698 = vmul.f32 %v2543, 1.442695
        %v2699 = vpow.pop %v2698
        %v2700 = vmul.f32 %v2544, 1.442695
        %v2701 = vpow.pop %v2700
        %v2702 = vmul.f32 %v2545, 1.442695
        %v2703 = vpow.pop %v2702
        %v2704 = vmul.f32 %v2546, 1.442695
        %v2705 = vpow.pop %v2704
        %v2706 = vmul.f32 %v2547, 1.442695
        %v2707 = vpow.pop %v2706
        %v2708 = vmul.f32 %v2548, 1.442695
        %v2709 = vpow.pop %v2708
        %v2710 = vmul.f32 %v2549, 1.442695
        %v2711 = vpow.pop %v2710
        %v2712 = vmul.f32 %v2550, 1.442695
        %v2713 = vpow.pop %v2712
        %v2714 = vmul.f32 %v2551, 1.442695
        %v2715 = vpow.pop %v2714
        %v2716 = vmul.f32 %v2552, 1.442695
        %v2717 = vpow.pop %v2716
        %v2718 = vmul.f32 %v2553, 1.442695
        %v2719 = vpow.pop %v2718
        %v2720 = vmul.f32 %v2554, 1.442695
        %v2721 = vpow.pop %v2720
        %v2722 = vmul.f32 %v2555, 1.442695
        %v2723 = vpow.pop %v2722
        %v2724 = vmul.f32 %v2556, 1.442695
        %v2725 = vpow.pop %v2724
        %v2726 = vmul.f32 %v2557, 1.442695
        %v2727 = vpow.pop %v2726
        %v2728 = vmul.f32 %v2558, 1.442695
        %v2729 = vpow.pop %v2728
        %v2730 = vmul.f32 %v2559, 1.442695
        %v2731 = vpow.pop %v2730
        %v2732 = vmul.f32 %v2560, 1.442695
        %v2733 = vpow.pop %v2732
        %v2734 = vmul.f32 %v2561, 1.442695
        %v2735 = vpow.pop %v2734
        %v2736 = vmul.f32 %v2562, 1.442695
        %v2737 = vpow.pop %v2736
        %v2738 = vmul.f32 %v2563, 1.442695
        %v2739 = vpow.pop %v2738
        %v2740 = vmul.f32 %v2564, 1.442695
        %v2741 = vpow.pop %v2740
        %v2742 = vmul.f32 %v2565, 1.442695
        %v2743 = vpow.pop %v2742
        %v2744 = vmul.f32 %v2566, 1.442695
        %v2745 = vpow.pop %v2744
        %v2746 = vmul.f32 %v2567, 1.442695
        %v2747 = vpow.pop %v2746
        %v2748 = vmul.f32 %v2568, 1.442695
        %v2749 = vpow.pop %v2748
        %v2750 = vmul.f32 %v2569, 1.442695
        %v2751 = vpow.pop %v2750
        %v2752 = vmul.f32 %v2570, 1.442695
        %v2753 = vpow.pop %v2752
        %v2754 = vmul.f32 %v2571, 1.442695
        %v2755 = vpow.pop %v2754
        %v2756 = vmul.f32 %v2572, 1.442695
        %v2757 = vpow.pop %v2756
        %v2758 = vmul.f32 %v2573, 1.442695
        %v2759 = vpow.pop %v2758
        %v2760 = vmul.f32 %v2574, 1.442695
        %v2761 = vpow.pop %v2760
        %v2762 = vmul.f32 %v2575, 1.442695
        %v2763 = vpow.pop %v2762
        %v2764 = vmul.f32 %v2576, 1.442695
        %v2765 = vpow.pop %v2764
        %v2766 = vmul.f32 %v2577, 1.442695
        %v2767 = vpow.pop %v2766
        %v2768 = vmul.f32 %v2578, 1.442695
        %v2769 = vpow.pop %v2768
        %v2770 = vmul.f32 %v2579, 1.442695
        %v2771 = vpow.pop %v2770
        %v2772 = vmul.f32 %v2580, 1.442695
        %v2773 = vpow.pop %v2772
        %v2774 = vmul.f32 %v2581, 1.442695
        %v2775 = vpow.pop %v2774
        %v2776 = vmul.f32 %v2582, 1.442695
        %v2777 = vpow.pop %v2776
        %v2778 = vmul.f32 %v2583, 1.442695
        %v2779 = vpow.pop %v2778
        %v2780 = vmul.f32 %v2584, 1.442695
        %v2781 = vpow.pop %v2780
        %v2782 = vmul.f32 %v2585, 1.442695
        %v2783 = vpow.pop %v2782
        %v2784 = vmul.f32 %v2586, 1.442695
        %v2785 = vpow.pop %v2784
        %v2786 = vmul.f32 %v2587, 1.442695
        %v2787 = vpow.pop %v2786
        %v2788 = vmul.f32 %v2588, 1.442695
        %v2789 = vpow.pop %v2788
        %v2790 = vmul.f32 %v2589, 1.442695
        %v2791 = vpow.pop %v2790
        %v2792 = vmul.f32 %v2590, 1.442695
        %v2793 = vpow.pop %v2792
        %v2794 = vmul.f32 %v2591, 1.442695
        %v2795 = vpow.pop %v2794
        %v2796 = vmul.f32 %v2592, 1.442695
        %v2797 = vpow.pop %v2796
        %v2798 = vmul.f32 %v2593, 1.442695
        %v2799 = vpow.pop %v2798
        %v2800 = vmul.f32 %v2594, 1.442695
        %v2801 = vpow.pop %v2800
        %v2802 = vmul.f32 %v2595, 1.442695
        %v2803 = vpow.pop %v2802
        %v2804 = vmul.f32 %v2596, 1.442695
        %v2805 = vpow.pop %v2804
        %v2806 = vmul.f32 %v2597, 1.442695
        %v2807 = vpow.pop %v2806
        %v2808 = vmul.f32 %v2598, 1.442695
        %v2809 = vpow.pop %v2808
        %v2810 = vmul.f32 %v2599, 1.442695
        %v2811 = vpow.pop %v2810
        %v2812 = vmul.f32 %v2600, 1.442695
        %v2813 = vpow.pop %v2812
        %v2814 = vmul.f32 %v2601, 1.442695
        %v2815 = vpow.pop %v2814
        %v2816 = vmul.f32 %v2602, 1.442695
        %v2817 = vpow.pop %v2816
        %v2818 = vmul.f32 %v2603, 1.442695
        %v2819 = vpow.pop %v2818
        %v2820 = vmul.f32 %v2604, 1.442695
        %v2821 = vpow.pop %v2820
        %v2822 = vmul.f32 %v2605, 1.442695
        %v2823 = vpow.pop %v2822
        %v2824 = vmul.f32 %v2606, 1.442695
        %v2825 = vpow.pop %v2824
        %v2826 = vmul.f32 %v2607, 1.442695
        %v2827 = vpow.pop %v2826
        %v2828 = vmul.f32 %v2608, 1.442695
        %v2829 = vpow.pop %v2828
        %v2830 = vmul.f32 %v2609, 1.442695
        %v2831 = vpow.pop %v2830
        %v2832 = vmul.f32 %v2610, 1.442695
        %v2833 = vpow.pop %v2832
        %v2834 = vmul.f32 %v2611, 1.442695
        %v2835 = vpow.pop %v2834
        %v2836 = vmul.f32 %v2612, 1.442695
        %v2837 = vpow.pop %v2836
        %v2838 = vmul.f32 %v2613, 1.442695
        %v2839 = vpow.pop %v2838
        %v2840 = vmul.f32 %v2614, 1.442695
        %v2841 = vpow.pop %v2840
        %v2842 = vmul.f32 %v2615, 1.442695
        %v2843 = vpow.pop %v2842
        %v2844 = vmul.f32 %v2616, 1.442695
        %v2845 = vpow.pop %v2844
        %v2846 = vmul.f32 %v2617, 1.442695
        %v2847 = vpow.pop %v2846
        %v2848 = vmul.f32 %v2618, 1.442695
        %v2849 = vpow.pop %v2848
        %v2850 = vmul.f32 %v2619, 1.442695
        %v2851 = vpow.pop %v2850
        %v2852 = vmul.f32 %v2620, 1.442695
        %v2853 = vpow.pop %v2852
        %v2854 = vmul.f32 %v2621, 1.442695
        %v2855 = vpow.pop %v2854
        %v2856 = vmul.f32 %v2622, 1.442695
        %v2857 = vpow.pop %v2856
        %v2858 = vmul.f32 %v2623, 1.442695
        %v2859 = vpow.pop %v2858
        %v2860 = vmul.f32 %v2624, 1.442695
        %v2861 = vpow.pop %v2860
        %v2862 = vmul.f32 %v2625, 1.442695
        %v2863 = vpow.pop %v2862
        %v2864 = vmul.f32 %v2626, 1.442695
        %v2865 = vpow.pop %v2864
        %v2866 = vmul.f32 %v2627, 1.442695
        %v2867 = vpow.pop %v2866
        %v2868 = vmul.f32 %v2628, 1.442695
        %v2869 = vpow.pop %v2868
        %v2870 = vmul.f32 %v2629, 1.442695
        %v2871 = vpow.pop %v2870
        %v2872 = vmul.f32 %v2630, 1.442695
        %v2873 = vpow.pop %v2872
        %v2874 = vmul.f32 %v2631, 1.442695
        %v2875 = vpow.pop %v2874
        %v2876 = vmul.f32 %v2632, 1.442695
        %v2877 = vpow.pop %v2876
        %v2878 = vmul.f32 %v2633, 1.442695
        %v2879 = vpow.pop %v2878
        %v2880 = vmul.f32 %v2634, 1.442695
        %v2881 = vpow.pop %v2880
        %v2882 = vmul.f32 %v2635, 1.442695
        %v2883 = vpow.pop %v2882
        %v2884 = vmul.f32 %v2636, 1.442695
        %v2885 = vpow.pop %v2884
        %v2886 = vmul.f32 %v2637, 1.442695
        %v2887 = vpow.pop %v2886
        %v2888 = vmul.f32 %v2638, 1.442695
        %v2889 = vpow.pop %v2888
        %v2890 = vmul.f32 %v2639, 1.442695
        %v2891 = vpow.pop %v2890
        %v2892 = vmul.f32 %v2640, 1.442695
        %v2893 = vpow.pop %v2892
        %v2894 = vmul.f32 %v2641, 1.442695
        %v2895 = vpow.pop %v2894
        %v2896 = vmul.f32 %v2642, 1.442695
        %v2897 = vpow.pop %v2896
        %v2898 = vmul.f32 %v2643, 1.442695
        %v2899 = vpow.pop %v2898
        %v2900 = vsel %vm1780, %v2645, 0.0
        %v2901 = vsel %vm1781, %v2647, 0.0
        %v2902 = vsel %vm1782, %v2649, 0.0
        %v2903 = vsel %vm1783, %v2651, 0.0
        %v2904 = vsel %vm1784, %v2653, 0.0
        %v2905 = vsel %vm1785, %v2655, 0.0
        %v2906 = vsel %vm1786, %v2657, 0.0
        %v2907 = vsel %vm1787, %v2659, 0.0
        %v2908 = vsel %vm1788, %v2661, 0.0
        %v2909 = vsel %vm1789, %v2663, 0.0
        %v2910 = vsel %vm1790, %v2665, 0.0
        %v2911 = vsel %vm1791, %v2667, 0.0
        %v2912 = vsel %vm1792, %v2669, 0.0
        %v2913 = vsel %vm1793, %v2671, 0.0
        %v2914 = vsel %vm1794, %v2673, 0.0
        %v2915 = vsel %vm1795, %v2675, 0.0
        %v2916 = vsel %vm1796, %v2677, 0.0
        %v2917 = vsel %vm1797, %v2679, 0.0
        %v2918 = vsel %vm1798, %v2681, 0.0
        %v2919 = vsel %vm1799, %v2683, 0.0
        %v2920 = vsel %vm1800, %v2685, 0.0
        %v2921 = vsel %vm1801, %v2687, 0.0
        %v2922 = vsel %vm1802, %v2689, 0.0
        %v2923 = vsel %vm1803, %v2691, 0.0
        %v2924 = vsel %vm1804, %v2693, 0.0
        %v2925 = vsel %vm1805, %v2695, 0.0
        %v2926 = vsel %vm1806, %v2697, 0.0
        %v2927 = vsel %vm1807, %v2699, 0.0
        %v2928 = vsel %vm1808, %v2701, 0.0
        %v2929 = vsel %vm1809, %v2703, 0.0
        %v2930 = vsel %vm1810, %v2705, 0.0
        %v2931 = vsel %vm1811, %v2707, 0.0
        %v2932 = vsel %vm1812, %v2709, 0.0
        %v2933 = vsel %vm1813, %v2711, 0.0
        %v2934 = vsel %vm1814, %v2713, 0.0
        %v2935 = vsel %vm1815, %v2715, 0.0
        %v2936 = vsel %vm1816, %v2717, 0.0
        %v2937 = vsel %vm1817, %v2719, 0.0
        %v2938 = vsel %vm1818, %v2721, 0.0
        %v2939 = vsel %vm1819, %v2723, 0.0
        %v2940 = vsel %vm1820, %v2725, 0.0
        %v2941 = vsel %vm1821, %v2727, 0.0
        %v2942 = vsel %vm1822, %v2729, 0.0
        %v2943 = vsel %vm1823, %v2731, 0.0
        %v2944 = vsel %vm1824, %v2733, 0.0
        %v2945 = vsel %vm1825, %v2735, 0.0
        %v2946 = vsel %vm1826, %v2737, 0.0
        %v2947 = vsel %vm1827, %v2739, 0.0
        %v2948 = vsel %vm1828, %v2741, 0.0
        %v2949 = vsel %vm1829, %v2743, 0.0
        %v2950 = vsel %vm1830, %v2745, 0.0
        %v2951 = vsel %vm1831, %v2747, 0.0
        %v2952 = vsel %vm1832, %v2749, 0.0
        %v2953 = vsel %vm1833, %v2751, 0.0
        %v2954 = vsel %vm1834, %v2753, 0.0
        %v2955 = vsel %vm1835, %v2755, 0.0
        %v2956 = vsel %vm1836, %v2757, 0.0
        %v2957 = vsel %vm1837, %v2759, 0.0
        %v2958 = vsel %vm1838, %v2761, 0.0
        %v2959 = vsel %vm1839, %v2763, 0.0
        %v2960 = vsel %vm1840, %v2765, 0.0
        %v2961 = vsel %vm1841, %v2767, 0.0
        %v2962 = vsel %vm1842, %v2769, 0.0
        %v2963 = vsel %vm1843, %v2771, 0.0
        %v2964 = vsel %vm1844, %v2773, 0.0
        %v2965 = vsel %vm1845, %v2775, 0.0
        %v2966 = vsel %vm1846, %v2777, 0.0
        %v2967 = vsel %vm1847, %v2779, 0.0
        %v2968 = vsel %vm1848, %v2781, 0.0
        %v2969 = vsel %vm1849, %v2783, 0.0
        %v2970 = vsel %vm1850, %v2785, 0.0
        %v2971 = vsel %vm1851, %v2787, 0.0
        %v2972 = vsel %vm1852, %v2789, 0.0
        %v2973 = vsel %vm1853, %v2791, 0.0
        %v2974 = vsel %vm1854, %v2793, 0.0
        %v2975 = vsel %vm1855, %v2795, 0.0
        %v2976 = vsel %vm1856, %v2797, 0.0
        %v2977 = vsel %vm1857, %v2799, 0.0
        %v2978 = vsel %vm1858, %v2801, 0.0
        %v2979 = vsel %vm1859, %v2803, 0.0
        %v2980 = vsel %vm1860, %v2805, 0.0
        %v2981 = vsel %vm1861, %v2807, 0.0
        %v2982 = vsel %vm1862, %v2809, 0.0
        %v2983 = vsel %vm1863, %v2811, 0.0
        %v2984 = vsel %vm1864, %v2813, 0.0
        %v2985 = vsel %vm1865, %v2815, 0.0
        %v2986 = vsel %vm1866, %v2817, 0.0
        %v2987 = vsel %vm1867, %v2819, 0.0
        %v2988 = vsel %vm1868, %v2821, 0.0
        %v2989 = vsel %vm1869, %v2823, 0.0
        %v2990 = vsel %vm1870, %v2825, 0.0
        %v2991 = vsel %vm1871, %v2827, 0.0
        %v2992 = vsel %vm1872, %v2829, 0.0
        %v2993 = vsel %vm1873, %v2831, 0.0
        %v2994 = vsel %vm1874, %v2833, 0.0
        %v2995 = vsel %vm1875, %v2835, 0.0
        %v2996 = vsel %vm1876, %v2837, 0.0
        %v2997 = vsel %vm1877, %v2839, 0.0
        %v2998 = vsel %vm1878, %v2841, 0.0
        %v2999 = vsel %vm1879, %v2843, 0.0
        %v3000 = vsel %vm1880, %v2845, 0.0
        %v3001 = vsel %vm1881, %v2847, 0.0
        %v3002 = vsel %vm1882, %v2849, 0.0
        %v3003 = vsel %vm1883, %v2851, 0.0
        %v3004 = vsel %vm1884, %v2853, 0.0
        %v3005 = vsel %vm1885, %v2855, 0.0
        %v3006 = vsel %vm1886, %v2857, 0.0
        %v3007 = vsel %vm1887, %v2859, 0.0
        %v3008 = vsel %vm1888, %v2861, 0.0
        %v3009 = vsel %vm1889, %v2863, 0.0
        %v3010 = vsel %vm1890, %v2865, 0.0
        %v3011 = vsel %vm1891, %v2867, 0.0
        %v3012 = vsel %vm1892, %v2869, 0.0
        %v3013 = vsel %vm1893, %v2871, 0.0
        %v3014 = vsel %vm1894, %v2873, 0.0
        %v3015 = vsel %vm1895, %v2875, 0.0
        %v3016 = vsel %vm1896, %v2877, 0.0
        %v3017 = vsel %vm1897, %v2879, 0.0
        %v3018 = vsel %vm1898, %v2881, 0.0
        %v3019 = vsel %vm1899, %v2883, 0.0
        %v3020 = vsel %vm1900, %v2885, 0.0
        %v3021 = vsel %vm1901, %v2887, 0.0
        %v3022 = vsel %vm1902, %v2889, 0.0
        %v3023 = vsel %vm1903, %v2891, 0.0
        %v3024 = vsel %vm1904, %v2893, 0.0
        %v3025 = vsel %vm1905, %v2895, 0.0
        %v3026 = vsel %vm1906, %v2897, 0.0
        %v3027 = vsel %vm1907, %v2899, 0.0
        %v3028 = vld [vmem:[#allocation3] sm:$0xff]
        %v3029 = vld [vmem:[#allocation3 + $0x8] sm:$0xff]
        %v3030 = vld [vmem:[#allocation3 + $0x10] sm:$0xff]
        %v3031 = vld [vmem:[#allocation3 + $0x18] sm:$0xff]
        %v3032 = vld [vmem:[#allocation3 + $0x20] sm:$0xff]
        %v3033 = vld [vmem:[#allocation3 + $0x28] sm:$0xff]
        %v3034 = vld [vmem:[#allocation3 + $0x30] sm:$0xff]
        %v3035 = vld [vmem:[#allocation3 + $0x38] sm:$0xff]
        %v3036 = vld [vmem:[#allocation3 + $0x40] sm:$0xff]
        %v3037 = vld [vmem:[#allocation3 + $0x48] sm:$0xff]
        %v3038 = vld [vmem:[#allocation3 + $0x50] sm:$0xff]
        %v3039 = vld [vmem:[#allocation3 + $0x58] sm:$0xff]
        %v3040 = vld [vmem:[#allocation3 + $0x60] sm:$0xff]
        %v3041 = vld [vmem:[#allocation3 + $0x68] sm:$0xff]
        %v3042 = vld [vmem:[#allocation3 + $0x70] sm:$0xff]
        %v3043 = vld [vmem:[#allocation3 + $0x78] sm:$0xff]
        %v3044 = vld [vmem:[#allocation3 + $0x80] sm:$0xff]
        %v3045 = vld [vmem:[#allocation3 + $0x88] sm:$0xff]
        %v3046 = vld [vmem:[#allocation3 + $0x90] sm:$0xff]
        %v3047 = vld [vmem:[#allocation3 + $0x98] sm:$0xff]
        %v3048 = vld [vmem:[#allocation3 + $0xa0] sm:$0xff]
        %v3049 = vld [vmem:[#allocation3 + $0xa8] sm:$0xff]
        %v3050 = vld [vmem:[#allocation3 + $0xb0] sm:$0xff]
        %v3051 = vld [vmem:[#allocation3 + $0xb8] sm:$0xff]
        %v3052 = vld [vmem:[#allocation3 + $0xc0] sm:$0xff]
        %v3053 = vld [vmem:[#allocation3 + $0xc8] sm:$0xff]
        %v3054 = vld [vmem:[#allocation3 + $0xd0] sm:$0xff]
        %v3055 = vld [vmem:[#allocation3 + $0xd8] sm:$0xff]
        %v3056 = vld [vmem:[#allocation3 + $0xe0] sm:$0xff]
        %v3057 = vld [vmem:[#allocation3 + $0xe8] sm:$0xff]
        %v3058 = vld [vmem:[#allocation3 + $0xf0] sm:$0xff]
        %v3059 = vld [vmem:[#allocation3 + $0xf8] sm:$0xff]
        %v3060 = vmul.f32 %v2293, %v3028
        %v3061 = vmul.f32 %v2295, %v3029
        %v3062 = vmul.f32 %v2297, %v3030
        %v3063 = vmul.f32 %v2299, %v3031
        %v3064 = vmul.f32 %v2301, %v3032
        %v3065 = vmul.f32 %v2303, %v3033
        %v3066 = vmul.f32 %v2305, %v3034
        %v3067 = vmul.f32 %v2307, %v3035
        %v3068 = vmul.f32 %v2309, %v3036
        %v3069 = vmul.f32 %v2311, %v3037
        %v3070 = vmul.f32 %v2313, %v3038
        %v3071 = vmul.f32 %v2315, %v3039
        %v3072 = vmul.f32 %v2317, %v3040
        %v3073 = vmul.f32 %v2319, %v3041
        %v3074 = vmul.f32 %v2321, %v3042
        %v3075 = vmul.f32 %v2323, %v3043
        %v3076 = vmul.f32 %v2325, %v3044
        %v3077 = vmul.f32 %v2327, %v3045
        %v3078 = vmul.f32 %v2329, %v3046
        %v3079 = vmul.f32 %v2331, %v3047
        %v3080 = vmul.f32 %v2333, %v3048
        %v3081 = vmul.f32 %v2335, %v3049
        %v3082 = vmul.f32 %v2337, %v3050
        %v3083 = vmul.f32 %v2339, %v3051
        %v3084 = vmul.f32 %v2341, %v3052
        %v3085 = vmul.f32 %v2343, %v3053
        %v3086 = vmul.f32 %v2345, %v3054
        %v3087 = vmul.f32 %v2347, %v3055
        %v3088 = vmul.f32 %v2349, %v3056
        %v3089 = vmul.f32 %v2351, %v3057
        %v3090 = vmul.f32 %v2353, %v3058
        %v3091 = vmul.f32 %v2355, %v3059
        %v3092 = vadd.f32 %v2900, %v2901
        %v3093 = vadd.f32 %v3092, %v2902
        %v3094 = vadd.f32 %v3093, %v2903
        %3095 = vadd.xlane.f32.xlu0 %v3094
        %v3096 = vpop.xlane.xlu0 %3095
        %v3097 = vadd.f32 %v2904, %v2905
        %v3098 = vadd.f32 %v3097, %v2906
        %v3099 = vadd.f32 %v3098, %v2907
        %3100 = vadd.xlane.f32.xlu0 %v3099
        %v3101 = vpop.xlane.xlu0 %3100
        %v3102 = vadd.f32 %v2908, %v2909
        %v3103 = vadd.f32 %v3102, %v2910
        %v3104 = vadd.f32 %v3103, %v2911
        %3105 = vadd.xlane.f32.xlu0 %v3104
        %v3106 = vpop.xlane.xlu0 %3105
        %v3107 = vadd.f32 %v2912, %v2913
        %v3108 = vadd.f32 %v3107, %v2914
        %v3109 = vadd.f32 %v3108, %v2915
        %3110 = vadd.xlane.f32.xlu0 %v3109
        %v3111 = vpop.xlane.xlu0 %3110
        %v3112 = vadd.f32 %v2916, %v2917
        %v3113 = vadd.f32 %v3112, %v2918
        %v3114 = vadd.f32 %v3113, %v2919
        %3115 = vadd.xlane.f32.xlu0 %v3114
        %v3116 = vpop.xlane.xlu0 %3115
        %v3117 = vadd.f32 %v2920, %v2921
        %v3118 = vadd.f32 %v3117, %v2922
        %v3119 = vadd.f32 %v3118, %v2923
        %3120 = vadd.xlane.f32.xlu0 %v3119
        %v3121 = vpop.xlane.xlu0 %3120
        %v3122 = vadd.f32 %v2924, %v2925
        %v3123 = vadd.f32 %v3122, %v2926
        %v3124 = vadd.f32 %v3123, %v2927
        %3125 = vadd.xlane.f32.xlu0 %v3124
        %v3126 = vpop.xlane.xlu0 %3125
        %v3127 = vadd.f32 %v2928, %v2929
        %v3128 = vadd.f32 %v3127, %v2930
        %v3129 = vadd.f32 %v3128, %v2931
        %3130 = vadd.xlane.f32.xlu0 %v3129
        %v3131 = vpop.xlane.xlu0 %3130
        %v3132 = vadd.f32 %v2932, %v2933
        %v3133 = vadd.f32 %v3132, %v2934
        %v3134 = vadd.f32 %v3133, %v2935
        %3135 = vadd.xlane.f32.xlu0 %v3134
        %v3136 = vpop.xlane.xlu0 %3135
        %v3137 = vadd.f32 %v2936, %v2937
        %v3138 = vadd.f32 %v3137, %v2938
        %v3139 = vadd.f32 %v3138, %v2939
        %3140 = vadd.xlane.f32.xlu0 %v3139
        %v3141 = vpop.xlane.xlu0 %3140
        %v3142 = vadd.f32 %v2940, %v2941
        %v3143 = vadd.f32 %v3142, %v2942
        %v3144 = vadd.f32 %v3143, %v2943
        %3145 = vadd.xlane.f32.xlu0 %v3144
        %v3146 = vpop.xlane.xlu0 %3145
        %v3147 = vadd.f32 %v2944, %v2945
        %v3148 = vadd.f32 %v3147, %v2946
        %v3149 = vadd.f32 %v3148, %v2947
        %3150 = vadd.xlane.f32.xlu0 %v3149
        %v3151 = vpop.xlane.xlu0 %3150
        %v3152 = vadd.f32 %v2948, %v2949
        %v3153 = vadd.f32 %v3152, %v2950
        %v3154 = vadd.f32 %v3153, %v2951
        %3155 = vadd.xlane.f32.xlu0 %v3154
        %v3156 = vpop.xlane.xlu0 %3155
        %v3157 = vadd.f32 %v2952, %v2953
        %v3158 = vadd.f32 %v3157, %v2954
        %v3159 = vadd.f32 %v3158, %v2955
        %3160 = vadd.xlane.f32.xlu0 %v3159
        %v3161 = vpop.xlane.xlu0 %3160
        %v3162 = vadd.f32 %v2956, %v2957
        %v3163 = vadd.f32 %v3162, %v2958
        %v3164 = vadd.f32 %v3163, %v2959
        %3165 = vadd.xlane.f32.xlu0 %v3164
        %v3166 = vpop.xlane.xlu0 %3165
        %v3167 = vadd.f32 %v2960, %v2961
        %v3168 = vadd.f32 %v3167, %v2962
        %v3169 = vadd.f32 %v3168, %v2963
        %3170 = vadd.xlane.f32.xlu0 %v3169
        %v3171 = vpop.xlane.xlu0 %3170
        %v3172 = vadd.f32 %v2964, %v2965
        %v3173 = vadd.f32 %v3172, %v2966
        %v3174 = vadd.f32 %v3173, %v2967
        %3175 = vadd.xlane.f32.xlu0 %v3174
        %v3176 = vpop.xlane.xlu0 %3175
        %v3177 = vadd.f32 %v2968, %v2969
        %v3178 = vadd.f32 %v3177, %v2970
        %v3179 = vadd.f32 %v3178, %v2971
        %3180 = vadd.xlane.f32.xlu0 %v3179
        %v3181 = vpop.xlane.xlu0 %3180
        %v3182 = vadd.f32 %v2972, %v2973
        %v3183 = vadd.f32 %v3182, %v2974
        %v3184 = vadd.f32 %v3183, %v2975
        %3185 = vadd.xlane.f32.xlu0 %v3184
        %v3186 = vpop.xlane.xlu0 %3185
        %v3187 = vadd.f32 %v2976, %v2977
        %v3188 = vadd.f32 %v3187, %v2978
        %v3189 = vadd.f32 %v3188, %v2979
        %3190 = vadd.xlane.f32.xlu0 %v3189
        %v3191 = vpop.xlane.xlu0 %3190
        %v3192 = vadd.f32 %v2980, %v2981
        %v3193 = vadd.f32 %v3192, %v2982
        %v3194 = vadd.f32 %v3193, %v2983
        %3195 = vadd.xlane.f32.xlu0 %v3194
        %v3196 = vpop.xlane.xlu0 %3195
        %v3197 = vadd.f32 %v2984, %v2985
        %v3198 = vadd.f32 %v3197, %v2986
        %v3199 = vadd.f32 %v3198, %v2987
        %3200 = vadd.xlane.f32.xlu0 %v3199
        %v3201 = vpop.xlane.xlu0 %3200
        %v3202 = vadd.f32 %v2988, %v2989
        %v3203 = vadd.f32 %v3202, %v2990
        %v3204 = vadd.f32 %v3203, %v2991
        %3205 = vadd.xlane.f32.xlu0 %v3204
        %v3206 = vpop.xlane.xlu0 %3205
        %v3207 = vadd.f32 %v2992, %v2993
        %v3208 = vadd.f32 %v3207, %v2994
        %v3209 = vadd.f32 %v3208, %v2995
        %3210 = vadd.xlane.f32.xlu0 %v3209
        %v3211 = vpop.xlane.xlu0 %3210
        %v3212 = vadd.f32 %v2996, %v2997
        %v3213 = vadd.f32 %v3212, %v2998
        %v3214 = vadd.f32 %v3213, %v2999
        %3215 = vadd.xlane.f32.xlu0 %v3214
        %v3216 = vpop.xlane.xlu0 %3215
        %v3217 = vadd.f32 %v3000, %v3001
        %v3218 = vadd.f32 %v3217, %v3002
        %v3219 = vadd.f32 %v3218, %v3003
        %3220 = vadd.xlane.f32.xlu0 %v3219
        %v3221 = vpop.xlane.xlu0 %3220
        %v3222 = vadd.f32 %v3004, %v3005
        %v3223 = vadd.f32 %v3222, %v3006
        %v3224 = vadd.f32 %v3223, %v3007
        %3225 = vadd.xlane.f32.xlu0 %v3224
        %v3226 = vpop.xlane.xlu0 %3225
        %v3227 = vadd.f32 %v3008, %v3009
        %v3228 = vadd.f32 %v3227, %v3010
        %v3229 = vadd.f32 %v3228, %v3011
        %3230 = vadd.xlane.f32.xlu0 %v3229
        %v3231 = vpop.xlane.xlu0 %3230
        %v3232 = vadd.f32 %v3012, %v3013
        %v3233 = vadd.f32 %v3232, %v3014
        %v3234 = vadd.f32 %v3233, %v3015
        %3235 = vadd.xlane.f32.xlu0 %v3234
        %v3236 = vpop.xlane.xlu0 %3235
        %v3237 = vadd.f32 %v3016, %v3017
        %v3238 = vadd.f32 %v3237, %v3018
        %v3239 = vadd.f32 %v3238, %v3019
        %3240 = vadd.xlane.f32.xlu0 %v3239
        %v3241 = vpop.xlane.xlu0 %3240
        %v3242 = vadd.f32 %v3020, %v3021
        %v3243 = vadd.f32 %v3242, %v3022
        %v3244 = vadd.f32 %v3243, %v3023
        %3245 = vadd.xlane.f32.xlu0 %v3244
        %v3246 = vpop.xlane.xlu0 %3245
        %v3247 = vadd.f32 %v3024, %v3025
        %v3248 = vadd.f32 %v3247, %v3026
        %v3249 = vadd.f32 %v3248, %v3027
        %3250 = vadd.xlane.f32.xlu0 %v3249
        %v3251 = vpop.xlane.xlu0 %3250
        %v3252 = vadd.f32 %v3060, %v3096
        %v3253 = vadd.f32 %v3061, %v3101
        %v3254 = vadd.f32 %v3062, %v3106
        %v3255 = vadd.f32 %v3063, %v3111
        %v3256 = vadd.f32 %v3064, %v3116
        %v3257 = vadd.f32 %v3065, %v3121
        %v3258 = vadd.f32 %v3066, %v3126
        %v3259 = vadd.f32 %v3067, %v3131
        %v3260 = vadd.f32 %v3068, %v3136
        %v3261 = vadd.f32 %v3069, %v3141
        %v3262 = vadd.f32 %v3070, %v3146
        %v3263 = vadd.f32 %v3071, %v3151
        %v3264 = vadd.f32 %v3072, %v3156
        %v3265 = vadd.f32 %v3073, %v3161
        %v3266 = vadd.f32 %v3074, %v3166
        %v3267 = vadd.f32 %v3075, %v3171
        %v3268 = vadd.f32 %v3076, %v3176
        %v3269 = vadd.f32 %v3077, %v3181
        %v3270 = vadd.f32 %v3078, %v3186
        %v3271 = vadd.f32 %v3079, %v3191
        %v3272 = vadd.f32 %v3080, %v3196
        %v3273 = vadd.f32 %v3081, %v3201
        %v3274 = vadd.f32 %v3082, %v3206
        %v3275 = vadd.f32 %v3083, %v3211
        %v3276 = vadd.f32 %v3084, %v3216
        %v3277 = vadd.f32 %v3085, %v3221
        %v3278 = vadd.f32 %v3086, %v3226
        %v3279 = vadd.f32 %v3087, %v3231
        %v3280 = vadd.f32 %v3088, %v3236
        %v3281 = vadd.f32 %v3089, %v3241
        %v3282 = vadd.f32 %v3090, %v3246
        %v3283 = vadd.f32 %v3091, %v3251
        %vm3284 = vcmask 7168
        %3285 = vst.msk [vmem:[#allocation3] sm:$0xff] %vm3284, %v3252
        %3286 = vst.msk [vmem:[#allocation3 + $0x8] sm:$0xff] %vm3284, %v3253
        %3287 = vst.msk [vmem:[#allocation3 + $0x10] sm:$0xff] %vm3284, %v3254
        %3288 = vst.msk [vmem:[#allocation3 + $0x18] sm:$0xff] %vm3284, %v3255
        %3289 = vst.msk [vmem:[#allocation3 + $0x20] sm:$0xff] %vm3284, %v3256
        %3290 = vst.msk [vmem:[#allocation3 + $0x28] sm:$0xff] %vm3284, %v3257
        %3291 = vst.msk [vmem:[#allocation3 + $0x30] sm:$0xff] %vm3284, %v3258
        %3292 = vst.msk [vmem:[#allocation3 + $0x38] sm:$0xff] %vm3284, %v3259
        %3293 = vst.msk [vmem:[#allocation3 + $0x40] sm:$0xff] %vm3284, %v3260
        %3294 = vst.msk [vmem:[#allocation3 + $0x48] sm:$0xff] %vm3284, %v3261
        %3295 = vst.msk [vmem:[#allocation3 + $0x50] sm:$0xff] %vm3284, %v3262
        %3296 = vst.msk [vmem:[#allocation3 + $0x58] sm:$0xff] %vm3284, %v3263
        %3297 = vst.msk [vmem:[#allocation3 + $0x60] sm:$0xff] %vm3284, %v3264
        %3298 = vst.msk [vmem:[#allocation3 + $0x68] sm:$0xff] %vm3284, %v3265
        %3299 = vst.msk [vmem:[#allocation3 + $0x70] sm:$0xff] %vm3284, %v3266
        %3300 = vst.msk [vmem:[#allocation3 + $0x78] sm:$0xff] %vm3284, %v3267
        %3301 = vst.msk [vmem:[#allocation3 + $0x80] sm:$0xff] %vm3284, %v3268
        %3302 = vst.msk [vmem:[#allocation3 + $0x88] sm:$0xff] %vm3284, %v3269
        %3303 = vst.msk [vmem:[#allocation3 + $0x90] sm:$0xff] %vm3284, %v3270
        %3304 = vst.msk [vmem:[#allocation3 + $0x98] sm:$0xff] %vm3284, %v3271
        %3305 = vst.msk [vmem:[#allocation3 + $0xa0] sm:$0xff] %vm3284, %v3272
        %3306 = vst.msk [vmem:[#allocation3 + $0xa8] sm:$0xff] %vm3284, %v3273
        %3307 = vst.msk [vmem:[#allocation3 + $0xb0] sm:$0xff] %vm3284, %v3274
        %3308 = vst.msk [vmem:[#allocation3 + $0xb8] sm:$0xff] %vm3284, %v3275
        %3309 = vst.msk [vmem:[#allocation3 + $0xc0] sm:$0xff] %vm3284, %v3276
        %3310 = vst.msk [vmem:[#allocation3 + $0xc8] sm:$0xff] %vm3284, %v3277
        %3311 = vst.msk [vmem:[#allocation3 + $0xd0] sm:$0xff] %vm3284, %v3278
        %3312 = vst.msk [vmem:[#allocation3 + $0xd8] sm:$0xff] %vm3284, %v3279
        %3313 = vst.msk [vmem:[#allocation3 + $0xe0] sm:$0xff] %vm3284, %v3280
        %3314 = vst.msk [vmem:[#allocation3 + $0xe8] sm:$0xff] %vm3284, %v3281
        %3315 = vst.msk [vmem:[#allocation3 + $0xf0] sm:$0xff] %vm3284, %v3282
        %3316 = vst.msk [vmem:[#allocation3 + $0xf8] sm:$0xff] %vm3284, %v3283
        %3317 = vst.msk [vmem:[#allocation2] sm:$0xff] %vm3284, %v2228
        %3318 = vst.msk [vmem:[#allocation2 + $0x8] sm:$0xff] %vm3284, %v2229
        %3319 = vst.msk [vmem:[#allocation2 + $0x10] sm:$0xff] %vm3284, %v2230
        %3320 = vst.msk [vmem:[#allocation2 + $0x18] sm:$0xff] %vm3284, %v2231
        %3321 = vst.msk [vmem:[#allocation2 + $0x20] sm:$0xff] %vm3284, %v2232
        %3322 = vst.msk [vmem:[#allocation2 + $0x28] sm:$0xff] %vm3284, %v2233
        %3323 = vst.msk [vmem:[#allocation2 + $0x30] sm:$0xff] %vm3284, %v2234
        %3324 = vst.msk [vmem:[#allocation2 + $0x38] sm:$0xff] %vm3284, %v2235
        %3325 = vst.msk [vmem:[#allocation2 + $0x40] sm:$0xff] %vm3284, %v2236
        %3326 = vst.msk [vmem:[#allocation2 + $0x48] sm:$0xff] %vm3284, %v2237
        %3327 = vst.msk [vmem:[#allocation2 + $0x50] sm:$0xff] %vm3284, %v2238
        %3328 = vst.msk [vmem:[#allocation2 + $0x58] sm:$0xff] %vm3284, %v2239
        %3329 = vst.msk [vmem:[#allocation2 + $0x60] sm:$0xff] %vm3284, %v2240
        %3330 = vst.msk [vmem:[#allocation2 + $0x68] sm:$0xff] %vm3284, %v2241
        %3331 = vst.msk [vmem:[#allocation2 + $0x70] sm:$0xff] %vm3284, %v2242
        %3332 = vst.msk [vmem:[#allocation2 + $0x78] sm:$0xff] %vm3284, %v2243
        %3333 = vst.msk [vmem:[#allocation2 + $0x80] sm:$0xff] %vm3284, %v2244
        %3334 = vst.msk [vmem:[#allocation2 + $0x88] sm:$0xff] %vm3284, %v2245
        %3335 = vst.msk [vmem:[#allocation2 + $0x90] sm:$0xff] %vm3284, %v2246
        %3336 = vst.msk [vmem:[#allocation2 + $0x98] sm:$0xff] %vm3284, %v2247
        %3337 = vst.msk [vmem:[#allocation2 + $0xa0] sm:$0xff] %vm3284, %v2248
        %3338 = vst.msk [vmem:[#allocation2 + $0xa8] sm:$0xff] %vm3284, %v2249
        %3339 = vst.msk [vmem:[#allocation2 + $0xb0] sm:$0xff] %vm3284, %v2250
        %3340 = vst.msk [vmem:[#allocation2 + $0xb8] sm:$0xff] %vm3284, %v2251
        %3341 = vst.msk [vmem:[#allocation2 + $0xc0] sm:$0xff] %vm3284, %v2252
        %3342 = vst.msk [vmem:[#allocation2 + $0xc8] sm:$0xff] %vm3284, %v2253
        %3343 = vst.msk [vmem:[#allocation2 + $0xd0] sm:$0xff] %vm3284, %v2254
        %3344 = vst.msk [vmem:[#allocation2 + $0xd8] sm:$0xff] %vm3284, %v2255
        %3345 = vst.msk [vmem:[#allocation2 + $0xe0] sm:$0xff] %vm3284, %v2256
        %3346 = vst.msk [vmem:[#allocation2 + $0xe8] sm:$0xff] %vm3284, %v2257
        %3347 = vst.msk [vmem:[#allocation2 + $0xf0] sm:$0xff] %vm3284, %v2258
        %3348 = vst.msk [vmem:[#allocation2 + $0xf8] sm:$0xff] %vm3284, %v2259
        %v3349 = vpack.c.bf16 %v2904, %v2900
        %v3350 = vpack.c.bf16 %v2905, %v2901
        %v3351 = vpack.c.bf16 %v2906, %v2902
        %v3352 = vpack.c.bf16 %v2907, %v2903
        %v3353 = vpack.c.bf16 %v2912, %v2908
        %v3354 = vpack.c.bf16 %v2913, %v2909
        %v3355 = vpack.c.bf16 %v2914, %v2910
        %v3356 = vpack.c.bf16 %v2915, %v2911
        %v3357 = vpack.c.bf16 %v2920, %v2916
        %v3358 = vpack.c.bf16 %v2921, %v2917
        %v3359 = vpack.c.bf16 %v2922, %v2918
        %v3360 = vpack.c.bf16 %v2923, %v2919
        %v3361 = vpack.c.bf16 %v2928, %v2924
        %v3362 = vpack.c.bf16 %v2929, %v2925
        %v3363 = vpack.c.bf16 %v2930, %v2926
        %v3364 = vpack.c.bf16 %v2931, %v2927
        %v3365 = vpack.c.bf16 %v2936, %v2932
        %v3366 = vpack.c.bf16 %v2937, %v2933
        %v3367 = vpack.c.bf16 %v2938, %v2934
        %v3368 = vpack.c.bf16 %v2939, %v2935
        %v3369 = vpack.c.bf16 %v2944, %v2940
        %v3370 = vpack.c.bf16 %v2945, %v2941
        %v3371 = vpack.c.bf16 %v2946, %v2942
        %v3372 = vpack.c.bf16 %v2947, %v2943
        %v3373 = vpack.c.bf16 %v2952, %v2948
        %v3374 = vpack.c.bf16 %v2953, %v2949
        %v3375 = vpack.c.bf16 %v2954, %v2950
        %v3376 = vpack.c.bf16 %v2955, %v2951
        %v3377 = vpack.c.bf16 %v2960, %v2956
        %v3378 = vpack.c.bf16 %v2961, %v2957
        %v3379 = vpack.c.bf16 %v2962, %v2958
        %v3380 = vpack.c.bf16 %v2963, %v2959
        %v3381 = vpack.c.bf16 %v2968, %v2964
        %v3382 = vpack.c.bf16 %v2969, %v2965
        %v3383 = vpack.c.bf16 %v2970, %v2966
        %v3384 = vpack.c.bf16 %v2971, %v2967
        %v3385 = vpack.c.bf16 %v2976, %v2972
        %v3386 = vpack.c.bf16 %v2977, %v2973
        %v3387 = vpack.c.bf16 %v2978, %v2974
        %v3388 = vpack.c.bf16 %v2979, %v2975
        %v3389 = vpack.c.bf16 %v2984, %v2980
        %v3390 = vpack.c.bf16 %v2985, %v2981
        %v3391 = vpack.c.bf16 %v2986, %v2982
        %v3392 = vpack.c.bf16 %v2987, %v2983
        %v3393 = vpack.c.bf16 %v2992, %v2988
        %v3394 = vpack.c.bf16 %v2993, %v2989
        %v3395 = vpack.c.bf16 %v2994, %v2990
        %v3396 = vpack.c.bf16 %v2995, %v2991
        %v3397 = vpack.c.bf16 %v3000, %v2996
        %v3398 = vpack.c.bf16 %v3001, %v2997
        %v3399 = vpack.c.bf16 %v3002, %v2998
        %v3400 = vpack.c.bf16 %v3003, %v2999
        %v3401 = vpack.c.bf16 %v3008, %v3004
        %v3402 = vpack.c.bf16 %v3009, %v3005
        %v3403 = vpack.c.bf16 %v3010, %v3006
        %v3404 = vpack.c.bf16 %v3011, %v3007
        %v3405 = vpack.c.bf16 %v3016, %v3012
        %v3406 = vpack.c.bf16 %v3017, %v3013
        %v3407 = vpack.c.bf16 %v3018, %v3014
        %v3408 = vpack.c.bf16 %v3019, %v3015
        %v3409 = vpack.c.bf16 %v3024, %v3020
        %v3410 = vpack.c.bf16 %v3025, %v3021
        %v3411 = vpack.c.bf16 %v3026, %v3022
        %v3412 = vpack.c.bf16 %v3027, %v3023
        %v3477 = vunpack.c.l.b16 %v541
        %v3478 = vunpack.c.l.b16 %v542
        %v3479 = vunpack.c.l.b16 %v543
        %v3480 = vunpack.c.l.b16 %v544
        %v3481 = vunpack.c.l.b16 %v545
        %v3482 = vunpack.c.l.b16 %v546
        %v3483 = vunpack.c.l.b16 %v547
        %v3484 = vunpack.c.l.b16 %v548
        %v3485 = vunpack.c.l.b16 %v549
        %v3486 = vunpack.c.l.b16 %v550
        %v3487 = vunpack.c.l.b16 %v551
        %v3488 = vunpack.c.l.b16 %v552
        %v3489 = vunpack.c.l.b16 %v553
        %v3490 = vunpack.c.l.b16 %v554
        %v3491 = vunpack.c.l.b16 %v555
        %v3492 = vunpack.c.l.b16 %v556
        %v3493 = vunpack.c.l.b16 %v557
        %v3494 = vunpack.c.l.b16 %v558
        %v3495 = vunpack.c.l.b16 %v559
        %v3496 = vunpack.c.l.b16 %v560
        %v3497 = vunpack.c.l.b16 %v561
        %v3498 = vunpack.c.l.b16 %v562
        %v3499 = vunpack.c.l.b16 %v563
        %v3500 = vunpack.c.l.b16 %v564
        %v3501 = vunpack.c.l.b16 %v565
        %v3502 = vunpack.c.l.b16 %v566
        %v3503 = vunpack.c.l.b16 %v567
        %v3504 = vunpack.c.l.b16 %v568
        %v3505 = vunpack.c.l.b16 %v569
        %v3506 = vunpack.c.l.b16 %v570
        %v3507 = vunpack.c.l.b16 %v571
        %v3508 = vunpack.c.l.b16 %v572
        %v3509 = vunpack.c.l.b16 %v573
        %v3510 = vunpack.c.l.b16 %v574
        %v3511 = vunpack.c.l.b16 %v575
        %v3512 = vunpack.c.l.b16 %v576
        %v3513 = vunpack.c.l.b16 %v577
        %v3514 = vunpack.c.l.b16 %v578
        %v3515 = vunpack.c.l.b16 %v579
        %v3516 = vunpack.c.l.b16 %v580
        %v3517 = vunpack.c.l.b16 %v581
        %v3518 = vunpack.c.l.b16 %v582
        %v3519 = vunpack.c.l.b16 %v583
        %v3520 = vunpack.c.l.b16 %v584
        %v3521 = vunpack.c.l.b16 %v585
        %v3522 = vunpack.c.l.b16 %v586
        %v3523 = vunpack.c.l.b16 %v587
        %v3524 = vunpack.c.l.b16 %v588
        %v3525 = vunpack.c.l.b16 %v589
        %v3526 = vunpack.c.l.b16 %v590
        %v3527 = vunpack.c.l.b16 %v591
        %v3528 = vunpack.c.l.b16 %v592
        %v3529 = vunpack.c.l.b16 %v593
        %v3530 = vunpack.c.l.b16 %v594
        %v3531 = vunpack.c.l.b16 %v595
        %v3532 = vunpack.c.l.b16 %v596
        %v3533 = vunpack.c.l.b16 %v597
        %v3534 = vunpack.c.l.b16 %v598
        %v3535 = vunpack.c.l.b16 %v599
        %v3536 = vunpack.c.l.b16 %v600
        %v3537 = vunpack.c.l.b16 %v601
        %v3538 = vunpack.c.l.b16 %v602
        %v3539 = vunpack.c.l.b16 %v603
        %v3540 = vunpack.c.l.b16 %v604
        %v3541 = vpack.c.b16 %v3478, %v3477
        %v3542 = vpack.c.b16 %v3480, %v3479
        %v3543 = vpack.c.b16 %v3482, %v3481
        %v3544 = vpack.c.b16 %v3484, %v3483
        %v3545 = vpack.c.b16 %v3486, %v3485
        %v3546 = vpack.c.b16 %v3488, %v3487
        %v3547 = vpack.c.b16 %v3490, %v3489
        %v3548 = vpack.c.b16 %v3492, %v3491
        %v3549 = vpack.c.b16 %v3494, %v3493
        %v3550 = vpack.c.b16 %v3496, %v3495
        %v3551 = vpack.c.b16 %v3498, %v3497
        %v3552 = vpack.c.b16 %v3500, %v3499
        %v3553 = vpack.c.b16 %v3502, %v3501
        %v3554 = vpack.c.b16 %v3504, %v3503
        %v3555 = vpack.c.b16 %v3506, %v3505
        %v3556 = vpack.c.b16 %v3508, %v3507
        %v3557 = vpack.c.b16 %v3510, %v3509
        %v3558 = vpack.c.b16 %v3512, %v3511
        %v3559 = vpack.c.b16 %v3514, %v3513
        %v3560 = vpack.c.b16 %v3516, %v3515
        %v3561 = vpack.c.b16 %v3518, %v3517
        %v3562 = vpack.c.b16 %v3520, %v3519
        %v3563 = vpack.c.b16 %v3522, %v3521
        %v3564 = vpack.c.b16 %v3524, %v3523
        %v3565 = vpack.c.b16 %v3526, %v3525
        %v3566 = vpack.c.b16 %v3528, %v3527
        %v3567 = vpack.c.b16 %v3530, %v3529
        %v3568 = vpack.c.b16 %v3532, %v3531
        %v3569 = vpack.c.b16 %v3534, %v3533
        %v3570 = vpack.c.b16 %v3536, %v3535
        %v3571 = vpack.c.b16 %v3538, %v3537
        %v3572 = vpack.c.b16 %v3540, %v3539
        %3605 = vmatprep.subr.bf16.mxu0 0
        %3606 = vmatpush1.bf16.msra.mxu0 %v3548
        %3607 = vmatprep.subr.bf16.mxu0 0
        %3608 = vmatpush1.bf16.msra.mxu0 %v3547
        %3609 = vmatprep.subr.bf16.mxu0 0
        %3610 = vmatpush1.bf16.msra.mxu0 %v3546
        %3611 = vmatprep.subr.bf16.mxu0 0
        %3612 = vmatpush1.bf16.msra.mxu0 %v3545
        %3613 = vmatprep.subr.bf16.mxu0 0
        %3614 = vmatpush1.bf16.msra.mxu0 %v3544
        %3615 = vmatprep.subr.bf16.mxu0 0
        %3616 = vmatpush1.bf16.msra.mxu0 %v3543
        %3617 = vmatprep.subr.bf16.mxu0 0
        %3618 = vmatpush1.bf16.msra.mxu0 %v3542
        %3619 = vmatprep.subr.bf16.mxu0 0
        %3620 = vmatpush1.bf16.msra.mxu0 %v3541
        %3621 = vmatprep.subr.bf16.mxu0 0
        %3622 = vmatpush2.bf16.msra.mxu0 %v3556
        %3623 = vmatprep.subr.bf16.mxu0 0
        %3624 = vmatpush2.bf16.msra.mxu0 %v3555
        %3625 = vmatprep.subr.bf16.mxu0 0
        %3626 = vmatpush2.bf16.msra.mxu0 %v3554
        %3627 = vmatprep.subr.bf16.mxu0 0
        %3628 = vmatpush2.bf16.msra.mxu0 %v3553
        %3629 = vmatprep.subr.bf16.mxu0 0
        %3630 = vmatpush2.bf16.msra.mxu0 %v3552
        %3631 = vmatprep.subr.bf16.mxu0 0
        %3632 = vmatpush2.bf16.msra.mxu0 %v3551
        %3633 = vmatprep.subr.bf16.mxu0 0
        %3634 = vmatpush2.bf16.msra.mxu0 %v3550
        %3635 = vmatprep.subr.bf16.mxu0 0
        %3636 = vmatpush2.bf16.msra.mxu0 %v3549
        %3637 = vmatprep.mubr.bf16.mxu0 %v3350
        %3638 = vmatmul.mubr.bf16.gmra.mxu0 %v3349
        %v3639 = vpop.f32.mrf.mxu0
        %v3640 = vadd.f32 0.0, %v3639
        %v3641 = vpop.f32.mrf.mxu0
        %v3642 = vpop.f32.mrf.mxu0
        %v3643 = vadd.f32 0.0, %v3642
        %v3644 = vpop.f32.mrf.mxu0
        %3645 = vmatprep.mubr.bf16.mxu0 %v3354
        %3646 = vmatmul.mubr.bf16.gmra.mxu0 %v3353
        %v3647 = vpop.f32.mrf.mxu0
        %v3648 = vadd.f32 0.0, %v3647
        %v3649 = vpop.f32.mrf.mxu0
        %v3650 = vpop.f32.mrf.mxu0
        %v3651 = vadd.f32 0.0, %v3650
        %v3652 = vpop.f32.mrf.mxu0
        %3653 = vmatprep.mubr.bf16.mxu0 %v3358
        %3654 = vmatmul.mubr.bf16.gmra.mxu0 %v3357
        %v3655 = vpop.f32.mrf.mxu0
        %v3656 = vadd.f32 0.0, %v3655
        %v3657 = vpop.f32.mrf.mxu0
        %v3658 = vpop.f32.mrf.mxu0
        %v3659 = vadd.f32 0.0, %v3658
        %v3660 = vpop.f32.mrf.mxu0
        %3661 = vmatprep.mubr.bf16.mxu0 %v3362
        %3662 = vmatmul.mubr.bf16.gmra.mxu0 %v3361
        %v3663 = vpop.f32.mrf.mxu0
        %v3664 = vadd.f32 0.0, %v3663
        %v3665 = vpop.f32.mrf.mxu0
        %v3666 = vpop.f32.mrf.mxu0
        %v3667 = vadd.f32 0.0, %v3666
        %v3668 = vpop.f32.mrf.mxu0
        %3669 = vmatprep.mubr.bf16.mxu0 %v3366
        %3670 = vmatmul.mubr.bf16.gmra.mxu0 %v3365
        %v3671 = vpop.f32.mrf.mxu0
        %v3672 = vadd.f32 0.0, %v3671
        %v3673 = vpop.f32.mrf.mxu0
        %v3674 = vpop.f32.mrf.mxu0
        %v3675 = vadd.f32 0.0, %v3674
        %v3676 = vpop.f32.mrf.mxu0
        %3677 = vmatprep.mubr.bf16.mxu0 %v3370
        %3678 = vmatmul.mubr.bf16.gmra.mxu0 %v3369
        %v3679 = vpop.f32.mrf.mxu0
        %v3680 = vadd.f32 0.0, %v3679
        %v3681 = vpop.f32.mrf.mxu0
        %v3682 = vpop.f32.mrf.mxu0
        %v3683 = vadd.f32 0.0, %v3682
        %v3684 = vpop.f32.mrf.mxu0
        %3685 = vmatprep.mubr.bf16.mxu0 %v3374
        %3686 = vmatmul.mubr.bf16.gmra.mxu0 %v3373
        %v3687 = vpop.f32.mrf.mxu0
        %v3688 = vadd.f32 0.0, %v3687
        %v3689 = vpop.f32.mrf.mxu0
        %v3690 = vpop.f32.mrf.mxu0
        %v3691 = vadd.f32 0.0, %v3690
        %v3692 = vpop.f32.mrf.mxu0
        %3693 = vmatprep.mubr.bf16.mxu0 %v3378
        %3694 = vmatmul.mubr.bf16.gmra.mxu0 %v3377
        %v3695 = vpop.f32.mrf.mxu0
        %v3696 = vadd.f32 0.0, %v3695
        %v3697 = vpop.f32.mrf.mxu0
        %v3698 = vpop.f32.mrf.mxu0
        %v3699 = vadd.f32 0.0, %v3698
        %v3700 = vpop.f32.mrf.mxu0
        %3701 = vmatprep.mubr.bf16.mxu0 %v3382
        %3702 = vmatmul.mubr.bf16.gmra.mxu0 %v3381
        %v3703 = vpop.f32.mrf.mxu0
        %v3704 = vadd.f32 0.0, %v3703
        %v3705 = vpop.f32.mrf.mxu0
        %v3706 = vpop.f32.mrf.mxu0
        %v3707 = vadd.f32 0.0, %v3706
        %v3708 = vpop.f32.mrf.mxu0
        %3709 = vmatprep.mubr.bf16.mxu0 %v3386
        %3710 = vmatmul.mubr.bf16.gmra.mxu0 %v3385
        %v3711 = vpop.f32.mrf.mxu0
        %v3712 = vadd.f32 0.0, %v3711
        %v3713 = vpop.f32.mrf.mxu0
        %v3714 = vpop.f32.mrf.mxu0
        %v3715 = vadd.f32 0.0, %v3714
        %v3716 = vpop.f32.mrf.mxu0
        %3717 = vmatprep.mubr.bf16.mxu0 %v3390
        %3718 = vmatmul.mubr.bf16.gmra.mxu0 %v3389
        %v3719 = vpop.f32.mrf.mxu0
        %v3720 = vadd.f32 0.0, %v3719
        %v3721 = vpop.f32.mrf.mxu0
        %v3722 = vpop.f32.mrf.mxu0
        %v3723 = vadd.f32 0.0, %v3722
        %v3724 = vpop.f32.mrf.mxu0
        %3725 = vmatprep.mubr.bf16.mxu0 %v3394
        %3726 = vmatmul.mubr.bf16.gmra.mxu0 %v3393
        %v3727 = vpop.f32.mrf.mxu0
        %v3728 = vadd.f32 0.0, %v3727
        %v3729 = vpop.f32.mrf.mxu0
        %v3730 = vpop.f32.mrf.mxu0
        %v3731 = vadd.f32 0.0, %v3730
        %v3732 = vpop.f32.mrf.mxu0
        %3733 = vmatprep.mubr.bf16.mxu0 %v3398
        %3734 = vmatmul.mubr.bf16.gmra.mxu0 %v3397
        %v3735 = vpop.f32.mrf.mxu0
        %v3736 = vadd.f32 0.0, %v3735
        %v3737 = vpop.f32.mrf.mxu0
        %v3738 = vpop.f32.mrf.mxu0
        %v3739 = vadd.f32 0.0, %v3738
        %v3740 = vpop.f32.mrf.mxu0
        %3741 = vmatprep.mubr.bf16.mxu0 %v3402
        %3742 = vmatmul.mubr.bf16.gmra.mxu0 %v3401
        %v3743 = vpop.f32.mrf.mxu0
        %v3744 = vadd.f32 0.0, %v3743
        %v3745 = vpop.f32.mrf.mxu0
        %v3746 = vpop.f32.mrf.mxu0
        %v3747 = vadd.f32 0.0, %v3746
        %v3748 = vpop.f32.mrf.mxu0
        %3749 = vmatprep.mubr.bf16.mxu0 %v3406
        %3750 = vmatmul.mubr.bf16.gmra.mxu0 %v3405
        %v3751 = vpop.f32.mrf.mxu0
        %v3752 = vadd.f32 0.0, %v3751
        %v3753 = vpop.f32.mrf.mxu0
        %v3754 = vpop.f32.mrf.mxu0
        %v3755 = vadd.f32 0.0, %v3754
        %v3756 = vpop.f32.mrf.mxu0
        %3757 = vmatprep.mubr.bf16.mxu0 %v3410
        %3758 = vmatmul.mubr.bf16.gmra.mxu0 %v3409
        %v3759 = vpop.f32.mrf.mxu0
        %v3760 = vadd.f32 0.0, %v3759
        %v3761 = vpop.f32.mrf.mxu0
        %v3762 = vpop.f32.mrf.mxu0
        %v3763 = vadd.f32 0.0, %v3762
        %v3764 = vpop.f32.mrf.mxu0
        %3765 = vdwg.mxu0
        %3766 = vmatprep.subr.bf16.mxu0 0
        %3767 = vmatpush1.bf16.msra.mxu0 %v3564
        %3768 = vmatprep.subr.bf16.mxu0 0
        %3769 = vmatpush1.bf16.msra.mxu0 %v3563
        %3770 = vmatprep.subr.bf16.mxu0 0
        %3771 = vmatpush1.bf16.msra.mxu0 %v3562
        %3772 = vmatprep.subr.bf16.mxu0 0
        %3773 = vmatpush1.bf16.msra.mxu0 %v3561
        %3774 = vmatprep.subr.bf16.mxu0 0
        %3775 = vmatpush1.bf16.msra.mxu0 %v3560
        %3776 = vmatprep.subr.bf16.mxu0 0
        %3777 = vmatpush1.bf16.msra.mxu0 %v3559
        %3778 = vmatprep.subr.bf16.mxu0 0
        %3779 = vmatpush1.bf16.msra.mxu0 %v3558
        %3780 = vmatprep.subr.bf16.mxu0 0
        %3781 = vmatpush1.bf16.msra.mxu0 %v3557
        %3782 = vmatprep.subr.bf16.mxu0 0
        %3783 = vmatpush2.bf16.msra.mxu0 %v3572
        %3784 = vmatprep.subr.bf16.mxu0 0
        %3785 = vmatpush2.bf16.msra.mxu0 %v3571
        %3786 = vmatprep.subr.bf16.mxu0 0
        %3787 = vmatpush2.bf16.msra.mxu0 %v3570
        %3788 = vmatprep.subr.bf16.mxu0 0
        %3789 = vmatpush2.bf16.msra.mxu0 %v3569
        %3790 = vmatprep.subr.bf16.mxu0 0
        %3791 = vmatpush2.bf16.msra.mxu0 %v3568
        %3792 = vmatprep.subr.bf16.mxu0 0
        %3793 = vmatpush2.bf16.msra.mxu0 %v3567
        %3794 = vmatprep.subr.bf16.mxu0 0
        %3795 = vmatpush2.bf16.msra.mxu0 %v3566
        %3796 = vmatprep.subr.bf16.mxu0 0
        %3797 = vmatpush2.bf16.msra.mxu0 %v3565
        %3798 = vmatprep.mubr.bf16.mxu0 %v3352
        %3799 = vmatmul.mubr.bf16.gmra.mxu0 %v3351
        %v3800 = vpop.f32.mrf.mxu0
        %v3801 = vadd.f32 %v3640, %v3800
        %v3802 = vpop.f32.mrf.mxu0
        %v3803 = vpop.f32.mrf.mxu0
        %v3804 = vadd.f32 %v3643, %v3803
        %v3805 = vpop.f32.mrf.mxu0
        %3806 = vmatprep.mubr.bf16.mxu0 %v3356
        %3807 = vmatmul.mubr.bf16.gmra.mxu0 %v3355
        %v3808 = vpop.f32.mrf.mxu0
        %v3809 = vadd.f32 %v3648, %v3808
        %v3810 = vpop.f32.mrf.mxu0
        %v3811 = vpop.f32.mrf.mxu0
        %v3812 = vadd.f32 %v3651, %v3811
        %v3813 = vpop.f32.mrf.mxu0
        %3814 = vmatprep.mubr.bf16.mxu0 %v3360
        %3815 = vmatmul.mubr.bf16.gmra.mxu0 %v3359
        %v3816 = vpop.f32.mrf.mxu0
        %v3817 = vadd.f32 %v3656, %v3816
        %v3818 = vpop.f32.mrf.mxu0
        %v3819 = vpop.f32.mrf.mxu0
        %v3820 = vadd.f32 %v3659, %v3819
        %v3821 = vpop.f32.mrf.mxu0
        %3822 = vmatprep.mubr.bf16.mxu0 %v3364
        %3823 = vmatmul.mubr.bf16.gmra.mxu0 %v3363
        %v3824 = vpop.f32.mrf.mxu0
        %v3825 = vadd.f32 %v3664, %v3824
        %v3826 = vpop.f32.mrf.mxu0
        %v3827 = vpop.f32.mrf.mxu0
        %v3828 = vadd.f32 %v3667, %v3827
        %v3829 = vpop.f32.mrf.mxu0
        %3830 = vmatprep.mubr.bf16.mxu0 %v3368
        %3831 = vmatmul.mubr.bf16.gmra.mxu0 %v3367
        %v3832 = vpop.f32.mrf.mxu0
        %v3833 = vadd.f32 %v3672, %v3832
        %v3834 = vpop.f32.mrf.mxu0
        %v3835 = vpop.f32.mrf.mxu0
        %v3836 = vadd.f32 %v3675, %v3835
        %v3837 = vpop.f32.mrf.mxu0
        %3838 = vmatprep.mubr.bf16.mxu0 %v3372
        %3839 = vmatmul.mubr.bf16.gmra.mxu0 %v3371
        %v3840 = vpop.f32.mrf.mxu0
        %v3841 = vadd.f32 %v3680, %v3840
        %v3842 = vpop.f32.mrf.mxu0
        %v3843 = vpop.f32.mrf.mxu0
        %v3844 = vadd.f32 %v3683, %v3843
        %v3845 = vpop.f32.mrf.mxu0
        %3846 = vmatprep.mubr.bf16.mxu0 %v3376
        %3847 = vmatmul.mubr.bf16.gmra.mxu0 %v3375
        %v3848 = vpop.f32.mrf.mxu0
        %v3849 = vadd.f32 %v3688, %v3848
        %v3850 = vpop.f32.mrf.mxu0
        %v3851 = vpop.f32.mrf.mxu0
        %v3852 = vadd.f32 %v3691, %v3851
        %v3853 = vpop.f32.mrf.mxu0
        %3854 = vmatprep.mubr.bf16.mxu0 %v3380
        %3855 = vmatmul.mubr.bf16.gmra.mxu0 %v3379
        %v3856 = vpop.f32.mrf.mxu0
        %v3857 = vadd.f32 %v3696, %v3856
        %v3858 = vpop.f32.mrf.mxu0
        %v3859 = vpop.f32.mrf.mxu0
        %v3860 = vadd.f32 %v3699, %v3859
        %v3861 = vpop.f32.mrf.mxu0
        %3862 = vmatprep.mubr.bf16.mxu0 %v3384
        %3863 = vmatmul.mubr.bf16.gmra.mxu0 %v3383
        %v3864 = vpop.f32.mrf.mxu0
        %v3865 = vadd.f32 %v3704, %v3864
        %v3866 = vpop.f32.mrf.mxu0
        %v3867 = vpop.f32.mrf.mxu0
        %v3868 = vadd.f32 %v3707, %v3867
        %v3869 = vpop.f32.mrf.mxu0
        %3870 = vmatprep.mubr.bf16.mxu0 %v3388
        %3871 = vmatmul.mubr.bf16.gmra.mxu0 %v3387
        %v3872 = vpop.f32.mrf.mxu0
        %v3873 = vadd.f32 %v3712, %v3872
        %v3874 = vpop.f32.mrf.mxu0
        %v3875 = vpop.f32.mrf.mxu0
        %v3876 = vadd.f32 %v3715, %v3875
        %v3877 = vpop.f32.mrf.mxu0
        %3878 = vmatprep.mubr.bf16.mxu0 %v3392
        %3879 = vmatmul.mubr.bf16.gmra.mxu0 %v3391
        %v3880 = vpop.f32.mrf.mxu0
        %v3881 = vadd.f32 %v3720, %v3880
        %v3882 = vpop.f32.mrf.mxu0
        %v3883 = vpop.f32.mrf.mxu0
        %v3884 = vadd.f32 %v3723, %v3883
        %v3885 = vpop.f32.mrf.mxu0
        %3886 = vmatprep.mubr.bf16.mxu0 %v3396
        %3887 = vmatmul.mubr.bf16.gmra.mxu0 %v3395
        %v3888 = vpop.f32.mrf.mxu0
        %v3889 = vadd.f32 %v3728, %v3888
        %v3890 = vpop.f32.mrf.mxu0
        %v3891 = vpop.f32.mrf.mxu0
        %v3892 = vadd.f32 %v3731, %v3891
        %v3893 = vpop.f32.mrf.mxu0
        %3894 = vmatprep.mubr.bf16.mxu0 %v3400
        %3895 = vmatmul.mubr.bf16.gmra.mxu0 %v3399
        %v3896 = vpop.f32.mrf.mxu0
        %v3897 = vadd.f32 %v3736, %v3896
        %v3898 = vpop.f32.mrf.mxu0
        %v3899 = vpop.f32.mrf.mxu0
        %v3900 = vadd.f32 %v3739, %v3899
        %v3901 = vpop.f32.mrf.mxu0
        %3902 = vmatprep.mubr.bf16.mxu0 %v3404
        %3903 = vmatmul.mubr.bf16.gmra.mxu0 %v3403
        %v3904 = vpop.f32.mrf.mxu0
        %v3905 = vadd.f32 %v3744, %v3904
        %v3906 = vpop.f32.mrf.mxu0
        %v3907 = vpop.f32.mrf.mxu0
        %v3908 = vadd.f32 %v3747, %v3907
        %v3909 = vpop.f32.mrf.mxu0
        %3910 = vmatprep.mubr.bf16.mxu0 %v3408
        %3911 = vmatmul.mubr.bf16.gmra.mxu0 %v3407
        %v3912 = vpop.f32.mrf.mxu0
        %v3913 = vadd.f32 %v3752, %v3912
        %v3914 = vpop.f32.mrf.mxu0
        %v3915 = vpop.f32.mrf.mxu0
        %v3916 = vadd.f32 %v3755, %v3915
        %v3917 = vpop.f32.mrf.mxu0
        %3918 = vmatprep.mubr.bf16.mxu0 %v3412
        %3919 = vmatmul.mubr.bf16.gmra.mxu0 %v3411
        %v3920 = vpop.f32.mrf.mxu0
        %v3921 = vadd.f32 %v3760, %v3920
        %v3922 = vpop.f32.mrf.mxu0
        %v3923 = vpop.f32.mrf.mxu0
        %v3924 = vadd.f32 %v3763, %v3923
        %v3925 = vpop.f32.mrf.mxu0
        %3926 = vdwg.mxu0
        %3928 = vset.pattern.permute.xlu0 0
        %3929 = vperm.xlu0 %3928, %v2293
        %v3930 = vpop.permute.xlu0 %3929
        %3933 = vset.pattern.permute.xlu0 0
        %3934 = vperm.xlu0 %3933, %v2295
        %v3935 = vpop.permute.xlu0 %3934
        %3938 = vset.pattern.permute.xlu0 0
        %3939 = vperm.xlu0 %3938, %v2297
        %v3940 = vpop.permute.xlu0 %3939
        %3943 = vset.pattern.permute.xlu0 0
        %3944 = vperm.xlu0 %3943, %v2299
        %v3945 = vpop.permute.xlu0 %3944
        %3948 = vset.pattern.permute.xlu0 0
        %3949 = vperm.xlu0 %3948, %v2301
        %v3950 = vpop.permute.xlu0 %3949
        %3953 = vset.pattern.permute.xlu0 0
        %3954 = vperm.xlu0 %3953, %v2303
        %v3955 = vpop.permute.xlu0 %3954
        %3958 = vset.pattern.permute.xlu0 0
        %3959 = vperm.xlu0 %3958, %v2305
        %v3960 = vpop.permute.xlu0 %3959
        %3963 = vset.pattern.permute.xlu0 0
        %3964 = vperm.xlu0 %3963, %v2307
        %v3965 = vpop.permute.xlu0 %3964
        %3968 = vset.pattern.permute.xlu0 0
        %3969 = vperm.xlu0 %3968, %v2309
        %v3970 = vpop.permute.xlu0 %3969
        %3973 = vset.pattern.permute.xlu0 0
        %3974 = vperm.xlu0 %3973, %v2311
        %v3975 = vpop.permute.xlu0 %3974
        %3978 = vset.pattern.permute.xlu0 0
        %3979 = vperm.xlu0 %3978, %v2313
        %v3980 = vpop.permute.xlu0 %3979
        %3983 = vset.pattern.permute.xlu0 0
        %3984 = vperm.xlu0 %3983, %v2315
        %v3985 = vpop.permute.xlu0 %3984
        %3988 = vset.pattern.permute.xlu0 0
        %3989 = vperm.xlu0 %3988, %v2317
        %v3990 = vpop.permute.xlu0 %3989
        %3993 = vset.pattern.permute.xlu0 0
        %3994 = vperm.xlu0 %3993, %v2319
        %v3995 = vpop.permute.xlu0 %3994
        %3998 = vset.pattern.permute.xlu0 0
        %3999 = vperm.xlu0 %3998, %v2321
        %v4000 = vpop.permute.xlu0 %3999
        %4003 = vset.pattern.permute.xlu0 0
        %4004 = vperm.xlu0 %4003, %v2323
        %v4005 = vpop.permute.xlu0 %4004
        %4008 = vset.pattern.permute.xlu0 0
        %4009 = vperm.xlu0 %4008, %v2325
        %v4010 = vpop.permute.xlu0 %4009
        %4013 = vset.pattern.permute.xlu0 0
        %4014 = vperm.xlu0 %4013, %v2327
        %v4015 = vpop.permute.xlu0 %4014
        %4018 = vset.pattern.permute.xlu0 0
        %4019 = vperm.xlu0 %4018, %v2329
        %v4020 = vpop.permute.xlu0 %4019
        %4023 = vset.pattern.permute.xlu0 0
        %4024 = vperm.xlu0 %4023, %v2331
        %v4025 = vpop.permute.xlu0 %4024
        %4028 = vset.pattern.permute.xlu0 0
        %4029 = vperm.xlu0 %4028, %v2333
        %v4030 = vpop.permute.xlu0 %4029
        %4033 = vset.pattern.permute.xlu0 0
        %4034 = vperm.xlu0 %4033, %v2335
        %v4035 = vpop.permute.xlu0 %4034
        %4038 = vset.pattern.permute.xlu0 0
        %4039 = vperm.xlu0 %4038, %v2337
        %v4040 = vpop.permute.xlu0 %4039
        %4043 = vset.pattern.permute.xlu0 0
        %4044 = vperm.xlu0 %4043, %v2339
        %v4045 = vpop.permute.xlu0 %4044
        %4048 = vset.pattern.permute.xlu0 0
        %4049 = vperm.xlu0 %4048, %v2341
        %v4050 = vpop.permute.xlu0 %4049
        %4053 = vset.pattern.permute.xlu0 0
        %4054 = vperm.xlu0 %4053, %v2343
        %v4055 = vpop.permute.xlu0 %4054
        %4058 = vset.pattern.permute.xlu0 0
        %4059 = vperm.xlu0 %4058, %v2345
        %v4060 = vpop.permute.xlu0 %4059
        %4063 = vset.pattern.permute.xlu0 0
        %4064 = vperm.xlu0 %4063, %v2347
        %v4065 = vpop.permute.xlu0 %4064
        %4068 = vset.pattern.permute.xlu0 0
        %4069 = vperm.xlu0 %4068, %v2349
        %v4070 = vpop.permute.xlu0 %4069
        %4073 = vset.pattern.permute.xlu0 0
        %4074 = vperm.xlu0 %4073, %v2351
        %v4075 = vpop.permute.xlu0 %4074
        %4078 = vset.pattern.permute.xlu0 0
        %4079 = vperm.xlu0 %4078, %v2353
        %v4080 = vpop.permute.xlu0 %4079
        %4083 = vset.pattern.permute.xlu0 0
        %4084 = vperm.xlu0 %4083, %v2355
        %v4085 = vpop.permute.xlu0 %4084
        %v4087 = vlaneseq
        %v4088 = vshrl.u32 %v4087, 7
        %v4089 = vsub.s32 0, %v4088
        %v4090 = vrot.slane %v605, %v4089
        %v4091 = vmul.f32 %v3930, %v4090
        %v4092 = vmul.f32 %v3935, %v4090
        %v4093 = vmul.f32 %v3940, %v4090
        %v4094 = vmul.f32 %v3945, %v4090
        %v4095 = vmul.f32 %v3950, %v4090
        %v4096 = vmul.f32 %v3955, %v4090
        %v4097 = vmul.f32 %v3960, %v4090
        %v4098 = vmul.f32 %v3965, %v4090
        %v4099 = vmul.f32 %v3970, %v4090
        %v4100 = vmul.f32 %v3975, %v4090
        %v4101 = vmul.f32 %v3980, %v4090
        %v4102 = vmul.f32 %v3985, %v4090
        %v4103 = vmul.f32 %v3990, %v4090
        %v4104 = vmul.f32 %v3995, %v4090
        %v4105 = vmul.f32 %v4000, %v4090
        %v4106 = vmul.f32 %v4005, %v4090
        %v4107 = vmul.f32 %v4010, %v4090
        %v4108 = vmul.f32 %v4015, %v4090
        %v4109 = vmul.f32 %v4020, %v4090
        %v4110 = vmul.f32 %v4025, %v4090
        %v4111 = vmul.f32 %v4030, %v4090
        %v4112 = vmul.f32 %v4035, %v4090
        %v4113 = vmul.f32 %v4040, %v4090
        %v4114 = vmul.f32 %v4045, %v4090
        %v4115 = vmul.f32 %v4050, %v4090
        %v4116 = vmul.f32 %v4055, %v4090
        %v4117 = vmul.f32 %v4060, %v4090
        %v4118 = vmul.f32 %v4065, %v4090
        %v4119 = vmul.f32 %v4070, %v4090
        %v4120 = vmul.f32 %v4075, %v4090
        %v4121 = vmul.f32 %v4080, %v4090
        %v4122 = vmul.f32 %v4085, %v4090
        %v4123 = vadd.f32 %v4091, 0.0
        %v4124 = vadd.f32 %v4092, 0.0
        %v4125 = vadd.f32 %v4093, 0.0
        %v4126 = vadd.f32 %v4094, 0.0
        %v4127 = vadd.f32 %v4095, 0.0
        %v4128 = vadd.f32 %v4096, 0.0
        %v4129 = vadd.f32 %v4097, 0.0
        %v4130 = vadd.f32 %v4098, 0.0
        %v4131 = vadd.f32 %v4099, 0.0
        %v4132 = vadd.f32 %v4100, 0.0
        %v4133 = vadd.f32 %v4101, 0.0
        %v4134 = vadd.f32 %v4102, 0.0
        %v4135 = vadd.f32 %v4103, 0.0
        %v4136 = vadd.f32 %v4104, 0.0
        %v4137 = vadd.f32 %v4105, 0.0
        %v4138 = vadd.f32 %v4106, 0.0
        %v4139 = vadd.f32 %v4107, 0.0
        %v4140 = vadd.f32 %v4108, 0.0
        %v4141 = vadd.f32 %v4109, 0.0
        %v4142 = vadd.f32 %v4110, 0.0
        %v4143 = vadd.f32 %v4111, 0.0
        %v4144 = vadd.f32 %v4112, 0.0
        %v4145 = vadd.f32 %v4113, 0.0
        %v4146 = vadd.f32 %v4114, 0.0
        %v4147 = vadd.f32 %v4115, 0.0
        %v4148 = vadd.f32 %v4116, 0.0
        %v4149 = vadd.f32 %v4117, 0.0
        %v4150 = vadd.f32 %v4118, 0.0
        %v4151 = vadd.f32 %v4119, 0.0
        %v4152 = vadd.f32 %v4120, 0.0
        %v4153 = vadd.f32 %v4121, 0.0
        %v4154 = vadd.f32 %v4122, 0.0
        %v4155 = vmul.f32 %v3801, %v4090
        %v4156 = vmul.f32 %v3804, %v4090
        %v4157 = vmul.f32 %v3809, %v4090
        %v4158 = vmul.f32 %v3812, %v4090
        %v4159 = vmul.f32 %v3817, %v4090
        %v4160 = vmul.f32 %v3820, %v4090
        %v4161 = vmul.f32 %v3825, %v4090
        %v4162 = vmul.f32 %v3828, %v4090
        %v4163 = vmul.f32 %v3833, %v4090
        %v4164 = vmul.f32 %v3836, %v4090
        %v4165 = vmul.f32 %v3841, %v4090
        %v4166 = vmul.f32 %v3844, %v4090
        %v4167 = vmul.f32 %v3849, %v4090
        %v4168 = vmul.f32 %v3852, %v4090
        %v4169 = vmul.f32 %v3857, %v4090
        %v4170 = vmul.f32 %v3860, %v4090
        %v4171 = vmul.f32 %v3865, %v4090
        %v4172 = vmul.f32 %v3868, %v4090
        %v4173 = vmul.f32 %v3873, %v4090
        %v4174 = vmul.f32 %v3876, %v4090
        %v4175 = vmul.f32 %v3881, %v4090
        %v4176 = vmul.f32 %v3884, %v4090
        %v4177 = vmul.f32 %v3889, %v4090
        %v4178 = vmul.f32 %v3892, %v4090
        %v4179 = vmul.f32 %v3897, %v4090
        %v4180 = vmul.f32 %v3900, %v4090
        %v4181 = vmul.f32 %v3905, %v4090
        %v4182 = vmul.f32 %v3908, %v4090
        %v4183 = vmul.f32 %v3913, %v4090
        %v4184 = vmul.f32 %v3916, %v4090
        %v4185 = vmul.f32 %v3921, %v4090
        %v4186 = vmul.f32 %v3924, %v4090
        %v4187 = vadd.f32 %v4155, 0.0
        %v4188 = vadd.f32 %v4156, 0.0
        %v4189 = vadd.f32 %v4157, 0.0
        %v4190 = vadd.f32 %v4158, 0.0
        %v4191 = vadd.f32 %v4159, 0.0
        %v4192 = vadd.f32 %v4160, 0.0
        %v4193 = vadd.f32 %v4161, 0.0
        %v4194 = vadd.f32 %v4162, 0.0
        %v4195 = vadd.f32 %v4163, 0.0
        %v4196 = vadd.f32 %v4164, 0.0
        %v4197 = vadd.f32 %v4165, 0.0
        %v4198 = vadd.f32 %v4166, 0.0
        %v4199 = vadd.f32 %v4167, 0.0
        %v4200 = vadd.f32 %v4168, 0.0
        %v4201 = vadd.f32 %v4169, 0.0
        %v4202 = vadd.f32 %v4170, 0.0
        %v4203 = vadd.f32 %v4171, 0.0
        %v4204 = vadd.f32 %v4172, 0.0
        %v4205 = vadd.f32 %v4173, 0.0
        %v4206 = vadd.f32 %v4174, 0.0
        %v4207 = vadd.f32 %v4175, 0.0
        %v4208 = vadd.f32 %v4176, 0.0
        %v4209 = vadd.f32 %v4177, 0.0
        %v4210 = vadd.f32 %v4178, 0.0
        %v4211 = vadd.f32 %v4179, 0.0
        %v4212 = vadd.f32 %v4180, 0.0
        %v4213 = vadd.f32 %v4181, 0.0
        %v4214 = vadd.f32 %v4182, 0.0
        %v4215 = vadd.f32 %v4183, 0.0
        %v4216 = vadd.f32 %v4184, 0.0
        %v4217 = vadd.f32 %v4185, 0.0
        %v4218 = vadd.f32 %v4186, 0.0
        %v4219 = vld [vmem:[%s4 + $0x1] sm:$0x1]
        %v4220 = vld [vmem:[%s361] sm:$0xff]
        %v4221 = vld [vmem:[%s361 + $0x8] sm:$0xff]
        %v4222 = vld [vmem:[%s361 + $0x10] sm:$0xff]
        %v4223 = vld [vmem:[%s361 + $0x18] sm:$0xff]
        %v4224 = vld [vmem:[%s361 + $0x20] sm:$0xff]
        %v4225 = vld [vmem:[%s361 + $0x28] sm:$0xff]
        %v4226 = vld [vmem:[%s361 + $0x30] sm:$0xff]
        %v4227 = vld [vmem:[%s361 + $0x38] sm:$0xff]
        %v4228 = vld [vmem:[%s361 + $0x40] sm:$0xff]
        %v4229 = vld [vmem:[%s361 + $0x48] sm:$0xff]
        %v4230 = vld [vmem:[%s361 + $0x50] sm:$0xff]
        %v4231 = vld [vmem:[%s361 + $0x58] sm:$0xff]
        %v4232 = vld [vmem:[%s361 + $0x60] sm:$0xff]
        %v4233 = vld [vmem:[%s361 + $0x68] sm:$0xff]
        %v4234 = vld [vmem:[%s361 + $0x70] sm:$0xff]
        %v4235 = vld [vmem:[%s361 + $0x78] sm:$0xff]
        %v4236 = vld [vmem:[%s361 + $0x80] sm:$0xff]
        %v4237 = vld [vmem:[%s361 + $0x88] sm:$0xff]
        %v4238 = vld [vmem:[%s361 + $0x90] sm:$0xff]
        %v4239 = vld [vmem:[%s361 + $0x98] sm:$0xff]
        %v4240 = vld [vmem:[%s361 + $0xa0] sm:$0xff]
        %v4241 = vld [vmem:[%s361 + $0xa8] sm:$0xff]
        %v4242 = vld [vmem:[%s361 + $0xb0] sm:$0xff]
        %v4243 = vld [vmem:[%s361 + $0xb8] sm:$0xff]
        %v4244 = vld [vmem:[%s361 + $0xc0] sm:$0xff]
        %v4245 = vld [vmem:[%s361 + $0xc8] sm:$0xff]
        %v4246 = vld [vmem:[%s361 + $0xd0] sm:$0xff]
        %v4247 = vld [vmem:[%s361 + $0xd8] sm:$0xff]
        %v4248 = vld [vmem:[%s361 + $0xe0] sm:$0xff]
        %v4249 = vld [vmem:[%s361 + $0xe8] sm:$0xff]
        %v4250 = vld [vmem:[%s361 + $0xf0] sm:$0xff]
        %v4251 = vld [vmem:[%s361 + $0xf8] sm:$0xff]
        %s4252 = scalar_lea.vmem %s304, 1 [#allocation5]
        %v4253 = vld [vmem:[%s4252] ss:$2 sm:$0xf]
        %4255 = vset.pattern.permute.xlu0 1
        %4256 = vperm.xlu0 %4255, %v4220
        %v4257 = vpop.permute.xlu0 %4256
        %4260 = vset.pattern.permute.xlu0 1
        %4261 = vperm.xlu0 %4260, %v4221
        %v4262 = vpop.permute.xlu0 %4261
        %4265 = vset.pattern.permute.xlu0 1
        %4266 = vperm.xlu0 %4265, %v4222
        %v4267 = vpop.permute.xlu0 %4266
        %4270 = vset.pattern.permute.xlu0 1
        %4271 = vperm.xlu0 %4270, %v4223
        %v4272 = vpop.permute.xlu0 %4271
        %4275 = vset.pattern.permute.xlu0 1
        %4276 = vperm.xlu0 %4275, %v4224
        %v4277 = vpop.permute.xlu0 %4276
        %4280 = vset.pattern.permute.xlu0 1
        %4281 = vperm.xlu0 %4280, %v4225
        %v4282 = vpop.permute.xlu0 %4281
        %4285 = vset.pattern.permute.xlu0 1
        %4286 = vperm.xlu0 %4285, %v4226
        %v4287 = vpop.permute.xlu0 %4286
        %4290 = vset.pattern.permute.xlu0 1
        %4291 = vperm.xlu0 %4290, %v4227
        %v4292 = vpop.permute.xlu0 %4291
        %4295 = vset.pattern.permute.xlu0 1
        %4296 = vperm.xlu0 %4295, %v4228
        %v4297 = vpop.permute.xlu0 %4296
        %4300 = vset.pattern.permute.xlu0 1
        %4301 = vperm.xlu0 %4300, %v4229
        %v4302 = vpop.permute.xlu0 %4301
        %4305 = vset.pattern.permute.xlu0 1
        %4306 = vperm.xlu0 %4305, %v4230
        %v4307 = vpop.permute.xlu0 %4306
        %4310 = vset.pattern.permute.xlu0 1
        %4311 = vperm.xlu0 %4310, %v4231
        %v4312 = vpop.permute.xlu0 %4311
        %4315 = vset.pattern.permute.xlu0 1
        %4316 = vperm.xlu0 %4315, %v4232
        %v4317 = vpop.permute.xlu0 %4316
        %4320 = vset.pattern.permute.xlu0 1
        %4321 = vperm.xlu0 %4320, %v4233
        %v4322 = vpop.permute.xlu0 %4321
        %4325 = vset.pattern.permute.xlu0 1
        %4326 = vperm.xlu0 %4325, %v4234
        %v4327 = vpop.permute.xlu0 %4326
        %4330 = vset.pattern.permute.xlu0 1
        %4331 = vperm.xlu0 %4330, %v4235
        %v4332 = vpop.permute.xlu0 %4331
        %4335 = vset.pattern.permute.xlu0 1
        %4336 = vperm.xlu0 %4335, %v4236
        %v4337 = vpop.permute.xlu0 %4336
        %4340 = vset.pattern.permute.xlu0 1
        %4341 = vperm.xlu0 %4340, %v4237
        %v4342 = vpop.permute.xlu0 %4341
        %4345 = vset.pattern.permute.xlu0 1
        %4346 = vperm.xlu0 %4345, %v4238
        %v4347 = vpop.permute.xlu0 %4346
        %4350 = vset.pattern.permute.xlu0 1
        %4351 = vperm.xlu0 %4350, %v4239
        %v4352 = vpop.permute.xlu0 %4351
        %4355 = vset.pattern.permute.xlu0 1
        %4356 = vperm.xlu0 %4355, %v4240
        %v4357 = vpop.permute.xlu0 %4356
        %4360 = vset.pattern.permute.xlu0 1
        %4361 = vperm.xlu0 %4360, %v4241
        %v4362 = vpop.permute.xlu0 %4361
        %4365 = vset.pattern.permute.xlu0 1
        %4366 = vperm.xlu0 %4365, %v4242
        %v4367 = vpop.permute.xlu0 %4366
        %4370 = vset.pattern.permute.xlu0 1
        %4371 = vperm.xlu0 %4370, %v4243
        %v4372 = vpop.permute.xlu0 %4371
        %4375 = vset.pattern.permute.xlu0 1
        %4376 = vperm.xlu0 %4375, %v4244
        %v4377 = vpop.permute.xlu0 %4376
        %4380 = vset.pattern.permute.xlu0 1
        %4381 = vperm.xlu0 %4380, %v4245
        %v4382 = vpop.permute.xlu0 %4381
        %4385 = vset.pattern.permute.xlu0 1
        %4386 = vperm.xlu0 %4385, %v4246
        %v4387 = vpop.permute.xlu0 %4386
        %4390 = vset.pattern.permute.xlu0 1
        %4391 = vperm.xlu0 %4390, %v4247
        %v4392 = vpop.permute.xlu0 %4391
        %4395 = vset.pattern.permute.xlu0 1
        %4396 = vperm.xlu0 %4395, %v4248
        %v4397 = vpop.permute.xlu0 %4396
        %4400 = vset.pattern.permute.xlu0 1
        %4401 = vperm.xlu0 %4400, %v4249
        %v4402 = vpop.permute.xlu0 %4401
        %4405 = vset.pattern.permute.xlu0 1
        %4406 = vperm.xlu0 %4405, %v4250
        %v4407 = vpop.permute.xlu0 %4406
        %4410 = vset.pattern.permute.xlu0 1
        %4411 = vperm.xlu0 %4410, %v4251
        %v4412 = vpop.permute.xlu0 %4411
        %v4415 = vlaneseq
        %v4416 = vshrl.u32 %v4415, 7
        %v4417 = vsub.s32 0, %v4416
        %v4418 = vrot.slane %v4253, %v4417
        %v4419 = vlaneseq
        %v4420 = vshrl.u32 %v4419, 7
        %v4421 = vsub.s32 1, %v4420
        %v4422 = vrot.slane %v4253, %v4421
        %v4423 = vlaneseq
        %v4424 = vshrl.u32 %v4423, 7
        %v4425 = vsub.s32 2, %v4424
        %v4426 = vrot.slane %v4253, %v4425
        %v4427 = vlaneseq
        %v4428 = vshrl.u32 %v4427, 7
        %v4429 = vsub.s32 3, %v4428
        %v4430 = vrot.slane %v4253, %v4429
        %v4435 = vadd.f32 %v4257, %v4418
        %v4436 = vadd.f32 %v4257, %v4422
        %v4437 = vadd.f32 %v4257, %v4426
        %v4438 = vadd.f32 %v4257, %v4430
        %v4439 = vadd.f32 %v4262, %v4418
        %v4440 = vadd.f32 %v4262, %v4422
        %v4441 = vadd.f32 %v4262, %v4426
        %v4442 = vadd.f32 %v4262, %v4430
        %v4443 = vadd.f32 %v4267, %v4418
        %v4444 = vadd.f32 %v4267, %v4422
        %v4445 = vadd.f32 %v4267, %v4426
        %v4446 = vadd.f32 %v4267, %v4430
        %v4447 = vadd.f32 %v4272, %v4418
        %v4448 = vadd.f32 %v4272, %v4422
        %v4449 = vadd.f32 %v4272, %v4426
        %v4450 = vadd.f32 %v4272, %v4430
        %v4451 = vadd.f32 %v4277, %v4418
        %v4452 = vadd.f32 %v4277, %v4422
        %v4453 = vadd.f32 %v4277, %v4426
        %v4454 = vadd.f32 %v4277, %v4430
        %v4455 = vadd.f32 %v4282, %v4418
        %v4456 = vadd.f32 %v4282, %v4422
        %v4457 = vadd.f32 %v4282, %v4426
        %v4458 = vadd.f32 %v4282, %v4430
        %v4459 = vadd.f32 %v4287, %v4418
        %v4460 = vadd.f32 %v4287, %v4422
        %v4461 = vadd.f32 %v4287, %v4426
        %v4462 = vadd.f32 %v4287, %v4430
        %v4463 = vadd.f32 %v4292, %v4418
        %v4464 = vadd.f32 %v4292, %v4422
        %v4465 = vadd.f32 %v4292, %v4426
        %v4466 = vadd.f32 %v4292, %v4430
        %v4467 = vadd.f32 %v4297, %v4418
        %v4468 = vadd.f32 %v4297, %v4422
        %v4469 = vadd.f32 %v4297, %v4426
        %v4470 = vadd.f32 %v4297, %v4430
        %v4471 = vadd.f32 %v4302, %v4418
        %v4472 = vadd.f32 %v4302, %v4422
        %v4473 = vadd.f32 %v4302, %v4426
        %v4474 = vadd.f32 %v4302, %v4430
        %v4475 = vadd.f32 %v4307, %v4418
        %v4476 = vadd.f32 %v4307, %v4422
        %v4477 = vadd.f32 %v4307, %v4426
        %v4478 = vadd.f32 %v4307, %v4430
        %v4479 = vadd.f32 %v4312, %v4418
        %v4480 = vadd.f32 %v4312, %v4422
        %v4481 = vadd.f32 %v4312, %v4426
        %v4482 = vadd.f32 %v4312, %v4430
        %v4483 = vadd.f32 %v4317, %v4418
        %v4484 = vadd.f32 %v4317, %v4422
        %v4485 = vadd.f32 %v4317, %v4426
        %v4486 = vadd.f32 %v4317, %v4430
        %v4487 = vadd.f32 %v4322, %v4418
        %v4488 = vadd.f32 %v4322, %v4422
        %v4489 = vadd.f32 %v4322, %v4426
        %v4490 = vadd.f32 %v4322, %v4430
        %v4491 = vadd.f32 %v4327, %v4418
        %v4492 = vadd.f32 %v4327, %v4422
        %v4493 = vadd.f32 %v4327, %v4426
        %v4494 = vadd.f32 %v4327, %v4430
        %v4495 = vadd.f32 %v4332, %v4418
        %v4496 = vadd.f32 %v4332, %v4422
        %v4497 = vadd.f32 %v4332, %v4426
        %v4498 = vadd.f32 %v4332, %v4430
        %v4499 = vadd.f32 %v4337, %v4418
        %v4500 = vadd.f32 %v4337, %v4422
        %v4501 = vadd.f32 %v4337, %v4426
        %v4502 = vadd.f32 %v4337, %v4430
        %v4503 = vadd.f32 %v4342, %v4418
        %v4504 = vadd.f32 %v4342, %v4422
        %v4505 = vadd.f32 %v4342, %v4426
        %v4506 = vadd.f32 %v4342, %v4430
        %v4507 = vadd.f32 %v4347, %v4418
        %v4508 = vadd.f32 %v4347, %v4422
        %v4509 = vadd.f32 %v4347, %v4426
        %v4510 = vadd.f32 %v4347, %v4430
        %v4511 = vadd.f32 %v4352, %v4418
        %v4512 = vadd.f32 %v4352, %v4422
        %v4513 = vadd.f32 %v4352, %v4426
        %v4514 = vadd.f32 %v4352, %v4430
        %v4515 = vadd.f32 %v4357, %v4418
        %v4516 = vadd.f32 %v4357, %v4422
        %v4517 = vadd.f32 %v4357, %v4426
        %v4518 = vadd.f32 %v4357, %v4430
        %v4519 = vadd.f32 %v4362, %v4418
        %v4520 = vadd.f32 %v4362, %v4422
        %v4521 = vadd.f32 %v4362, %v4426
        %v4522 = vadd.f32 %v4362, %v4430
        %v4523 = vadd.f32 %v4367, %v4418
        %v4524 = vadd.f32 %v4367, %v4422
        %v4525 = vadd.f32 %v4367, %v4426
        %v4526 = vadd.f32 %v4367, %v4430
        %v4527 = vadd.f32 %v4372, %v4418
        %v4528 = vadd.f32 %v4372, %v4422
        %v4529 = vadd.f32 %v4372, %v4426
        %v4530 = vadd.f32 %v4372, %v4430
        %v4531 = vadd.f32 %v4377, %v4418
        %v4532 = vadd.f32 %v4377, %v4422
        %v4533 = vadd.f32 %v4377, %v4426
        %v4534 = vadd.f32 %v4377, %v4430
        %v4535 = vadd.f32 %v4382, %v4418
        %v4536 = vadd.f32 %v4382, %v4422
        %v4537 = vadd.f32 %v4382, %v4426
        %v4538 = vadd.f32 %v4382, %v4430
        %v4539 = vadd.f32 %v4387, %v4418
        %v4540 = vadd.f32 %v4387, %v4422
        %v4541 = vadd.f32 %v4387, %v4426
        %v4542 = vadd.f32 %v4387, %v4430
        %v4543 = vadd.f32 %v4392, %v4418
        %v4544 = vadd.f32 %v4392, %v4422
        %v4545 = vadd.f32 %v4392, %v4426
        %v4546 = vadd.f32 %v4392, %v4430
        %v4547 = vadd.f32 %v4397, %v4418
        %v4548 = vadd.f32 %v4397, %v4422
        %v4549 = vadd.f32 %v4397, %v4426
        %v4550 = vadd.f32 %v4397, %v4430
        %v4551 = vadd.f32 %v4402, %v4418
        %v4552 = vadd.f32 %v4402, %v4422
        %v4553 = vadd.f32 %v4402, %v4426
        %v4554 = vadd.f32 %v4402, %v4430
        %v4555 = vadd.f32 %v4407, %v4418
        %v4556 = vadd.f32 %v4407, %v4422
        %v4557 = vadd.f32 %v4407, %v4426
        %v4558 = vadd.f32 %v4407, %v4430
        %v4559 = vadd.f32 %v4412, %v4418
        %v4560 = vadd.f32 %v4412, %v4422
        %v4561 = vadd.f32 %v4412, %v4426
        %v4562 = vadd.f32 %v4412, %v4430
        %vm4563 = vcmp.ge.f32.partialorder %v4435, 0.0
        %vm4564 = vcmp.ge.f32.partialorder %v4436, 0.0
        %vm4565 = vcmp.ge.f32.partialorder %v4437, 0.0
        %vm4566 = vcmp.ge.f32.partialorder %v4438, 0.0
        %vm4567 = vcmp.ge.f32.partialorder %v4439, 0.0
        %vm4568 = vcmp.ge.f32.partialorder %v4440, 0.0
        %vm4569 = vcmp.ge.f32.partialorder %v4441, 0.0
        %vm4570 = vcmp.ge.f32.partialorder %v4442, 0.0
        %vm4571 = vcmp.ge.f32.partialorder %v4443, 0.0
        %vm4572 = vcmp.ge.f32.partialorder %v4444, 0.0
        %vm4573 = vcmp.ge.f32.partialorder %v4445, 0.0
        %vm4574 = vcmp.ge.f32.partialorder %v4446, 0.0
        %vm4575 = vcmp.ge.f32.partialorder %v4447, 0.0
        %vm4576 = vcmp.ge.f32.partialorder %v4448, 0.0
        %vm4577 = vcmp.ge.f32.partialorder %v4449, 0.0
        %vm4578 = vcmp.ge.f32.partialorder %v4450, 0.0
        %vm4579 = vcmp.ge.f32.partialorder %v4451, 0.0
        %vm4580 = vcmp.ge.f32.partialorder %v4452, 0.0
        %vm4581 = vcmp.ge.f32.partialorder %v4453, 0.0
        %vm4582 = vcmp.ge.f32.partialorder %v4454, 0.0
        %vm4583 = vcmp.ge.f32.partialorder %v4455, 0.0
        %vm4584 = vcmp.ge.f32.partialorder %v4456, 0.0
        %vm4585 = vcmp.ge.f32.partialorder %v4457, 0.0
        %vm4586 = vcmp.ge.f32.partialorder %v4458, 0.0
        %vm4587 = vcmp.ge.f32.partialorder %v4459, 0.0
        %vm4588 = vcmp.ge.f32.partialorder %v4460, 0.0
        %vm4589 = vcmp.ge.f32.partialorder %v4461, 0.0
        %vm4590 = vcmp.ge.f32.partialorder %v4462, 0.0
        %vm4591 = vcmp.ge.f32.partialorder %v4463, 0.0
        %vm4592 = vcmp.ge.f32.partialorder %v4464, 0.0
        %vm4593 = vcmp.ge.f32.partialorder %v4465, 0.0
        %vm4594 = vcmp.ge.f32.partialorder %v4466, 0.0
        %vm4595 = vcmp.ge.f32.partialorder %v4467, 0.0
        %vm4596 = vcmp.ge.f32.partialorder %v4468, 0.0
        %vm4597 = vcmp.ge.f32.partialorder %v4469, 0.0
        %vm4598 = vcmp.ge.f32.partialorder %v4470, 0.0
        %vm4599 = vcmp.ge.f32.partialorder %v4471, 0.0
        %vm4600 = vcmp.ge.f32.partialorder %v4472, 0.0
        %vm4601 = vcmp.ge.f32.partialorder %v4473, 0.0
        %vm4602 = vcmp.ge.f32.partialorder %v4474, 0.0
        %vm4603 = vcmp.ge.f32.partialorder %v4475, 0.0
        %vm4604 = vcmp.ge.f32.partialorder %v4476, 0.0
        %vm4605 = vcmp.ge.f32.partialorder %v4477, 0.0
        %vm4606 = vcmp.ge.f32.partialorder %v4478, 0.0
        %vm4607 = vcmp.ge.f32.partialorder %v4479, 0.0
        %vm4608 = vcmp.ge.f32.partialorder %v4480, 0.0
        %vm4609 = vcmp.ge.f32.partialorder %v4481, 0.0
        %vm4610 = vcmp.ge.f32.partialorder %v4482, 0.0
        %vm4611 = vcmp.ge.f32.partialorder %v4483, 0.0
        %vm4612 = vcmp.ge.f32.partialorder %v4484, 0.0
        %vm4613 = vcmp.ge.f32.partialorder %v4485, 0.0
        %vm4614 = vcmp.ge.f32.partialorder %v4486, 0.0
        %vm4615 = vcmp.ge.f32.partialorder %v4487, 0.0
        %vm4616 = vcmp.ge.f32.partialorder %v4488, 0.0
        %vm4617 = vcmp.ge.f32.partialorder %v4489, 0.0
        %vm4618 = vcmp.ge.f32.partialorder %v4490, 0.0
        %vm4619 = vcmp.ge.f32.partialorder %v4491, 0.0
        %vm4620 = vcmp.ge.f32.partialorder %v4492, 0.0
        %vm4621 = vcmp.ge.f32.partialorder %v4493, 0.0
        %vm4622 = vcmp.ge.f32.partialorder %v4494, 0.0
        %vm4623 = vcmp.ge.f32.partialorder %v4495, 0.0
        %vm4624 = vcmp.ge.f32.partialorder %v4496, 0.0
        %vm4625 = vcmp.ge.f32.partialorder %v4497, 0.0
        %vm4626 = vcmp.ge.f32.partialorder %v4498, 0.0
        %vm4627 = vcmp.ge.f32.partialorder %v4499, 0.0
        %vm4628 = vcmp.ge.f32.partialorder %v4500, 0.0
        %vm4629 = vcmp.ge.f32.partialorder %v4501, 0.0
        %vm4630 = vcmp.ge.f32.partialorder %v4502, 0.0
        %vm4631 = vcmp.ge.f32.partialorder %v4503, 0.0
        %vm4632 = vcmp.ge.f32.partialorder %v4504, 0.0
        %vm4633 = vcmp.ge.f32.partialorder %v4505, 0.0
        %vm4634 = vcmp.ge.f32.partialorder %v4506, 0.0
        %vm4635 = vcmp.ge.f32.partialorder %v4507, 0.0
        %vm4636 = vcmp.ge.f32.partialorder %v4508, 0.0
        %vm4637 = vcmp.ge.f32.partialorder %v4509, 0.0
        %vm4638 = vcmp.ge.f32.partialorder %v4510, 0.0
        %vm4639 = vcmp.ge.f32.partialorder %v4511, 0.0
        %vm4640 = vcmp.ge.f32.partialorder %v4512, 0.0
        %vm4641 = vcmp.ge.f32.partialorder %v4513, 0.0
        %vm4642 = vcmp.ge.f32.partialorder %v4514, 0.0
        %vm4643 = vcmp.ge.f32.partialorder %v4515, 0.0
        %vm4644 = vcmp.ge.f32.partialorder %v4516, 0.0
        %vm4645 = vcmp.ge.f32.partialorder %v4517, 0.0
        %vm4646 = vcmp.ge.f32.partialorder %v4518, 0.0
        %vm4647 = vcmp.ge.f32.partialorder %v4519, 0.0
        %vm4648 = vcmp.ge.f32.partialorder %v4520, 0.0
        %vm4649 = vcmp.ge.f32.partialorder %v4521, 0.0
        %vm4650 = vcmp.ge.f32.partialorder %v4522, 0.0
        %vm4651 = vcmp.ge.f32.partialorder %v4523, 0.0
        %vm4652 = vcmp.ge.f32.partialorder %v4524, 0.0
        %vm4653 = vcmp.ge.f32.partialorder %v4525, 0.0
        %vm4654 = vcmp.ge.f32.partialorder %v4526, 0.0
        %vm4655 = vcmp.ge.f32.partialorder %v4527, 0.0
        %vm4656 = vcmp.ge.f32.partialorder %v4528, 0.0
        %vm4657 = vcmp.ge.f32.partialorder %v4529, 0.0
        %vm4658 = vcmp.ge.f32.partialorder %v4530, 0.0
        %vm4659 = vcmp.ge.f32.partialorder %v4531, 0.0
        %vm4660 = vcmp.ge.f32.partialorder %v4532, 0.0
        %vm4661 = vcmp.ge.f32.partialorder %v4533, 0.0
        %vm4662 = vcmp.ge.f32.partialorder %v4534, 0.0
        %vm4663 = vcmp.ge.f32.partialorder %v4535, 0.0
        %vm4664 = vcmp.ge.f32.partialorder %v4536, 0.0
        %vm4665 = vcmp.ge.f32.partialorder %v4537, 0.0
        %vm4666 = vcmp.ge.f32.partialorder %v4538, 0.0
        %vm4667 = vcmp.ge.f32.partialorder %v4539, 0.0
        %vm4668 = vcmp.ge.f32.partialorder %v4540, 0.0
        %vm4669 = vcmp.ge.f32.partialorder %v4541, 0.0
        %vm4670 = vcmp.ge.f32.partialorder %v4542, 0.0
        %vm4671 = vcmp.ge.f32.partialorder %v4543, 0.0
        %vm4672 = vcmp.ge.f32.partialorder %v4544, 0.0
        %vm4673 = vcmp.ge.f32.partialorder %v4545, 0.0
        %vm4674 = vcmp.ge.f32.partialorder %v4546, 0.0
        %vm4675 = vcmp.ge.f32.partialorder %v4547, 0.0
        %vm4676 = vcmp.ge.f32.partialorder %v4548, 0.0
        %vm4677 = vcmp.ge.f32.partialorder %v4549, 0.0
        %vm4678 = vcmp.ge.f32.partialorder %v4550, 0.0
        %vm4679 = vcmp.ge.f32.partialorder %v4551, 0.0
        %vm4680 = vcmp.ge.f32.partialorder %v4552, 0.0
        %vm4681 = vcmp.ge.f32.partialorder %v4553, 0.0
        %vm4682 = vcmp.ge.f32.partialorder %v4554, 0.0
        %vm4683 = vcmp.ge.f32.partialorder %v4555, 0.0
        %vm4684 = vcmp.ge.f32.partialorder %v4556, 0.0
        %vm4685 = vcmp.ge.f32.partialorder %v4557, 0.0
        %vm4686 = vcmp.ge.f32.partialorder %v4558, 0.0
        %vm4687 = vcmp.ge.f32.partialorder %v4559, 0.0
        %vm4688 = vcmp.ge.f32.partialorder %v4560, 0.0
        %vm4689 = vcmp.ge.f32.partialorder %v4561, 0.0
        %vm4690 = vcmp.ge.f32.partialorder %v4562, 0.0
        %v4691 = vmul.f32 %v4435, 0.2
        %v4692 = vmul.f32 %v4436, 0.2
        %v4693 = vmul.f32 %v4437, 0.2
        %v4694 = vmul.f32 %v4438, 0.2
        %v4695 = vmul.f32 %v4439, 0.2
        %v4696 = vmul.f32 %v4440, 0.2
        %v4697 = vmul.f32 %v4441, 0.2
        %v4698 = vmul.f32 %v4442, 0.2
        %v4699 = vmul.f32 %v4443, 0.2
        %v4700 = vmul.f32 %v4444, 0.2
        %v4701 = vmul.f32 %v4445, 0.2
        %v4702 = vmul.f32 %v4446, 0.2
        %v4703 = vmul.f32 %v4447, 0.2
        %v4704 = vmul.f32 %v4448, 0.2
        %v4705 = vmul.f32 %v4449, 0.2
        %v4706 = vmul.f32 %v4450, 0.2
        %v4707 = vmul.f32 %v4451, 0.2
        %v4708 = vmul.f32 %v4452, 0.2
        %v4709 = vmul.f32 %v4453, 0.2
        %v4710 = vmul.f32 %v4454, 0.2
        %v4711 = vmul.f32 %v4455, 0.2
        %v4712 = vmul.f32 %v4456, 0.2
        %v4713 = vmul.f32 %v4457, 0.2
        %v4714 = vmul.f32 %v4458, 0.2
        %v4715 = vmul.f32 %v4459, 0.2
        %v4716 = vmul.f32 %v4460, 0.2
        %v4717 = vmul.f32 %v4461, 0.2
        %v4718 = vmul.f32 %v4462, 0.2
        %v4719 = vmul.f32 %v4463, 0.2
        %v4720 = vmul.f32 %v4464, 0.2
        %v4721 = vmul.f32 %v4465, 0.2
        %v4722 = vmul.f32 %v4466, 0.2
        %v4723 = vmul.f32 %v4467, 0.2
        %v4724 = vmul.f32 %v4468, 0.2
        %v4725 = vmul.f32 %v4469, 0.2
        %v4726 = vmul.f32 %v4470, 0.2
        %v4727 = vmul.f32 %v4471, 0.2
        %v4728 = vmul.f32 %v4472, 0.2
        %v4729 = vmul.f32 %v4473, 0.2
        %v4730 = vmul.f32 %v4474, 0.2
        %v4731 = vmul.f32 %v4475, 0.2
        %v4732 = vmul.f32 %v4476, 0.2
        %v4733 = vmul.f32 %v4477, 0.2
        %v4734 = vmul.f32 %v4478, 0.2
        %v4735 = vmul.f32 %v4479, 0.2
        %v4736 = vmul.f32 %v4480, 0.2
        %v4737 = vmul.f32 %v4481, 0.2
        %v4738 = vmul.f32 %v4482, 0.2
        %v4739 = vmul.f32 %v4483, 0.2
        %v4740 = vmul.f32 %v4484, 0.2
        %v4741 = vmul.f32 %v4485, 0.2
        %v4742 = vmul.f32 %v4486, 0.2
        %v4743 = vmul.f32 %v4487, 0.2
        %v4744 = vmul.f32 %v4488, 0.2
        %v4745 = vmul.f32 %v4489, 0.2
        %v4746 = vmul.f32 %v4490, 0.2
        %v4747 = vmul.f32 %v4491, 0.2
        %v4748 = vmul.f32 %v4492, 0.2
        %v4749 = vmul.f32 %v4493, 0.2
        %v4750 = vmul.f32 %v4494, 0.2
        %v4751 = vmul.f32 %v4495, 0.2
        %v4752 = vmul.f32 %v4496, 0.2
        %v4753 = vmul.f32 %v4497, 0.2
        %v4754 = vmul.f32 %v4498, 0.2
        %v4755 = vmul.f32 %v4499, 0.2
        %v4756 = vmul.f32 %v4500, 0.2
        %v4757 = vmul.f32 %v4501, 0.2
        %v4758 = vmul.f32 %v4502, 0.2
        %v4759 = vmul.f32 %v4503, 0.2
        %v4760 = vmul.f32 %v4504, 0.2
        %v4761 = vmul.f32 %v4505, 0.2
        %v4762 = vmul.f32 %v4506, 0.2
        %v4763 = vmul.f32 %v4507, 0.2
        %v4764 = vmul.f32 %v4508, 0.2
        %v4765 = vmul.f32 %v4509, 0.2
        %v4766 = vmul.f32 %v4510, 0.2
        %v4767 = vmul.f32 %v4511, 0.2
        %v4768 = vmul.f32 %v4512, 0.2
        %v4769 = vmul.f32 %v4513, 0.2
        %v4770 = vmul.f32 %v4514, 0.2
        %v4771 = vmul.f32 %v4515, 0.2
        %v4772 = vmul.f32 %v4516, 0.2
        %v4773 = vmul.f32 %v4517, 0.2
        %v4774 = vmul.f32 %v4518, 0.2
        %v4775 = vmul.f32 %v4519, 0.2
        %v4776 = vmul.f32 %v4520, 0.2
        %v4777 = vmul.f32 %v4521, 0.2
        %v4778 = vmul.f32 %v4522, 0.2
        %v4779 = vmul.f32 %v4523, 0.2
        %v4780 = vmul.f32 %v4524, 0.2
        %v4781 = vmul.f32 %v4525, 0.2
        %v4782 = vmul.f32 %v4526, 0.2
        %v4783 = vmul.f32 %v4527, 0.2
        %v4784 = vmul.f32 %v4528, 0.2
        %v4785 = vmul.f32 %v4529, 0.2
        %v4786 = vmul.f32 %v4530, 0.2
        %v4787 = vmul.f32 %v4531, 0.2
        %v4788 = vmul.f32 %v4532, 0.2
        %v4789 = vmul.f32 %v4533, 0.2
        %v4790 = vmul.f32 %v4534, 0.2
        %v4791 = vmul.f32 %v4535, 0.2
        %v4792 = vmul.f32 %v4536, 0.2
        %v4793 = vmul.f32 %v4537, 0.2
        %v4794 = vmul.f32 %v4538, 0.2
        %v4795 = vmul.f32 %v4539, 0.2
        %v4796 = vmul.f32 %v4540, 0.2
        %v4797 = vmul.f32 %v4541, 0.2
        %v4798 = vmul.f32 %v4542, 0.2
        %v4799 = vmul.f32 %v4543, 0.2
        %v4800 = vmul.f32 %v4544, 0.2
        %v4801 = vmul.f32 %v4545, 0.2
        %v4802 = vmul.f32 %v4546, 0.2
        %v4803 = vmul.f32 %v4547, 0.2
        %v4804 = vmul.f32 %v4548, 0.2
        %v4805 = vmul.f32 %v4549, 0.2
        %v4806 = vmul.f32 %v4550, 0.2
        %v4807 = vmul.f32 %v4551, 0.2
        %v4808 = vmul.f32 %v4552, 0.2
        %v4809 = vmul.f32 %v4553, 0.2
        %v4810 = vmul.f32 %v4554, 0.2
        %v4811 = vmul.f32 %v4555, 0.2
        %v4812 = vmul.f32 %v4556, 0.2
        %v4813 = vmul.f32 %v4557, 0.2
        %v4814 = vmul.f32 %v4558, 0.2
        %v4815 = vmul.f32 %v4559, 0.2
        %v4816 = vmul.f32 %v4560, 0.2
        %v4817 = vmul.f32 %v4561, 0.2
        %v4818 = vmul.f32 %v4562, 0.2
        %v4819 = vsel %vm4563, %v4435, %v4691
        %v4820 = vsel %vm4564, %v4436, %v4692
        %v4821 = vsel %vm4565, %v4437, %v4693
        %v4822 = vsel %vm4566, %v4438, %v4694
        %v4823 = vsel %vm4567, %v4439, %v4695
        %v4824 = vsel %vm4568, %v4440, %v4696
        %v4825 = vsel %vm4569, %v4441, %v4697
        %v4826 = vsel %vm4570, %v4442, %v4698
        %v4827 = vsel %vm4571, %v4443, %v4699
        %v4828 = vsel %vm4572, %v4444, %v4700
        %v4829 = vsel %vm4573, %v4445, %v4701
        %v4830 = vsel %vm4574, %v4446, %v4702
        %v4831 = vsel %vm4575, %v4447, %v4703
        %v4832 = vsel %vm4576, %v4448, %v4704
        %v4833 = vsel %vm4577, %v4449, %v4705
        %v4834 = vsel %vm4578, %v4450, %v4706
        %v4835 = vsel %vm4579, %v4451, %v4707
        %v4836 = vsel %vm4580, %v4452, %v4708
        %v4837 = vsel %vm4581, %v4453, %v4709
        %v4838 = vsel %vm4582, %v4454, %v4710
        %v4839 = vsel %vm4583, %v4455, %v4711
        %v4840 = vsel %vm4584, %v4456, %v4712
        %v4841 = vsel %vm4585, %v4457, %v4713
        %v4842 = vsel %vm4586, %v4458, %v4714
        %v4843 = vsel %vm4587, %v4459, %v4715
        %v4844 = vsel %vm4588, %v4460, %v4716
        %v4845 = vsel %vm4589, %v4461, %v4717
        %v4846 = vsel %vm4590, %v4462, %v4718
        %v4847 = vsel %vm4591, %v4463, %v4719
        %v4848 = vsel %vm4592, %v4464, %v4720
        %v4849 = vsel %vm4593, %v4465, %v4721
        %v4850 = vsel %vm4594, %v4466, %v4722
        %v4851 = vsel %vm4595, %v4467, %v4723
        %v4852 = vsel %vm4596, %v4468, %v4724
        %v4853 = vsel %vm4597, %v4469, %v4725
        %v4854 = vsel %vm4598, %v4470, %v4726
        %v4855 = vsel %vm4599, %v4471, %v4727
        %v4856 = vsel %vm4600, %v4472, %v4728
        %v4857 = vsel %vm4601, %v4473, %v4729
        %v4858 = vsel %vm4602, %v4474, %v4730
        %v4859 = vsel %vm4603, %v4475, %v4731
        %v4860 = vsel %vm4604, %v4476, %v4732
        %v4861 = vsel %vm4605, %v4477, %v4733
        %v4862 = vsel %vm4606, %v4478, %v4734
        %v4863 = vsel %vm4607, %v4479, %v4735
        %v4864 = vsel %vm4608, %v4480, %v4736
        %v4865 = vsel %vm4609, %v4481, %v4737
        %v4866 = vsel %vm4610, %v4482, %v4738
        %v4867 = vsel %vm4611, %v4483, %v4739
        %v4868 = vsel %vm4612, %v4484, %v4740
        %v4869 = vsel %vm4613, %v4485, %v4741
        %v4870 = vsel %vm4614, %v4486, %v4742
        %v4871 = vsel %vm4615, %v4487, %v4743
        %v4872 = vsel %vm4616, %v4488, %v4744
        %v4873 = vsel %vm4617, %v4489, %v4745
        %v4874 = vsel %vm4618, %v4490, %v4746
        %v4875 = vsel %vm4619, %v4491, %v4747
        %v4876 = vsel %vm4620, %v4492, %v4748
        %v4877 = vsel %vm4621, %v4493, %v4749
        %v4878 = vsel %vm4622, %v4494, %v4750
        %v4879 = vsel %vm4623, %v4495, %v4751
        %v4880 = vsel %vm4624, %v4496, %v4752
        %v4881 = vsel %vm4625, %v4497, %v4753
        %v4882 = vsel %vm4626, %v4498, %v4754
        %v4883 = vsel %vm4627, %v4499, %v4755
        %v4884 = vsel %vm4628, %v4500, %v4756
        %v4885 = vsel %vm4629, %v4501, %v4757
        %v4886 = vsel %vm4630, %v4502, %v4758
        %v4887 = vsel %vm4631, %v4503, %v4759
        %v4888 = vsel %vm4632, %v4504, %v4760
        %v4889 = vsel %vm4633, %v4505, %v4761
        %v4890 = vsel %vm4634, %v4506, %v4762
        %v4891 = vsel %vm4635, %v4507, %v4763
        %v4892 = vsel %vm4636, %v4508, %v4764
        %v4893 = vsel %vm4637, %v4509, %v4765
        %v4894 = vsel %vm4638, %v4510, %v4766
        %v4895 = vsel %vm4639, %v4511, %v4767
        %v4896 = vsel %vm4640, %v4512, %v4768
        %v4897 = vsel %vm4641, %v4513, %v4769
        %v4898 = vsel %vm4642, %v4514, %v4770
        %v4899 = vsel %vm4643, %v4515, %v4771
        %v4900 = vsel %vm4644, %v4516, %v4772
        %v4901 = vsel %vm4645, %v4517, %v4773
        %v4902 = vsel %vm4646, %v4518, %v4774
        %v4903 = vsel %vm4647, %v4519, %v4775
        %v4904 = vsel %vm4648, %v4520, %v4776
        %v4905 = vsel %vm4649, %v4521, %v4777
        %v4906 = vsel %vm4650, %v4522, %v4778
        %v4907 = vsel %vm4651, %v4523, %v4779
        %v4908 = vsel %vm4652, %v4524, %v4780
        %v4909 = vsel %vm4653, %v4525, %v4781
        %v4910 = vsel %vm4654, %v4526, %v4782
        %v4911 = vsel %vm4655, %v4527, %v4783
        %v4912 = vsel %vm4656, %v4528, %v4784
        %v4913 = vsel %vm4657, %v4529, %v4785
        %v4914 = vsel %vm4658, %v4530, %v4786
        %v4915 = vsel %vm4659, %v4531, %v4787
        %v4916 = vsel %vm4660, %v4532, %v4788
        %v4917 = vsel %vm4661, %v4533, %v4789
        %v4918 = vsel %vm4662, %v4534, %v4790
        %v4919 = vsel %vm4663, %v4535, %v4791
        %v4920 = vsel %vm4664, %v4536, %v4792
        %v4921 = vsel %vm4665, %v4537, %v4793
        %v4922 = vsel %vm4666, %v4538, %v4794
        %v4923 = vsel %vm4667, %v4539, %v4795
        %v4924 = vsel %vm4668, %v4540, %v4796
        %v4925 = vsel %vm4669, %v4541, %v4797
        %v4926 = vsel %vm4670, %v4542, %v4798
        %v4927 = vsel %vm4671, %v4543, %v4799
        %v4928 = vsel %vm4672, %v4544, %v4800
        %v4929 = vsel %vm4673, %v4545, %v4801
        %v4930 = vsel %vm4674, %v4546, %v4802
        %v4931 = vsel %vm4675, %v4547, %v4803
        %v4932 = vsel %vm4676, %v4548, %v4804
        %v4933 = vsel %vm4677, %v4549, %v4805
        %v4934 = vsel %vm4678, %v4550, %v4806
        %v4935 = vsel %vm4679, %v4551, %v4807
        %v4936 = vsel %vm4680, %v4552, %v4808
        %v4937 = vsel %vm4681, %v4553, %v4809
        %v4938 = vsel %vm4682, %v4554, %v4810
        %v4939 = vsel %vm4683, %v4555, %v4811
        %v4940 = vsel %vm4684, %v4556, %v4812
        %v4941 = vsel %vm4685, %v4557, %v4813
        %v4942 = vsel %vm4686, %v4558, %v4814
        %v4943 = vsel %vm4687, %v4559, %v4815
        %v4944 = vsel %vm4688, %v4560, %v4816
        %v4945 = vsel %vm4689, %v4561, %v4817
        %v4946 = vsel %vm4690, %v4562, %v4818
        %v4947 = vsel %vm1780, %v4819, -1e+30
        %v4948 = vsel %vm1781, %v4820, -1e+30
        %v4949 = vsel %vm1782, %v4821, -1e+30
        %v4950 = vsel %vm1783, %v4822, -1e+30
        %v4951 = vsel %vm1784, %v4823, -1e+30
        %v4952 = vsel %vm1785, %v4824, -1e+30
        %v4953 = vsel %vm1786, %v4825, -1e+30
        %v4954 = vsel %vm1787, %v4826, -1e+30
        %v4955 = vsel %vm1788, %v4827, -1e+30
        %v4956 = vsel %vm1789, %v4828, -1e+30
        %v4957 = vsel %vm1790, %v4829, -1e+30
        %v4958 = vsel %vm1791, %v4830, -1e+30
        %v4959 = vsel %vm1792, %v4831, -1e+30
        %v4960 = vsel %vm1793, %v4832, -1e+30
        %v4961 = vsel %vm1794, %v4833, -1e+30
        %v4962 = vsel %vm1795, %v4834, -1e+30
        %v4963 = vsel %vm1796, %v4835, -1e+30
        %v4964 = vsel %vm1797, %v4836, -1e+30
        %v4965 = vsel %vm1798, %v4837, -1e+30
        %v4966 = vsel %vm1799, %v4838, -1e+30
        %v4967 = vsel %vm1800, %v4839, -1e+30
        %v4968 = vsel %vm1801, %v4840, -1e+30
        %v4969 = vsel %vm1802, %v4841, -1e+30
        %v4970 = vsel %vm1803, %v4842, -1e+30
        %v4971 = vsel %vm1804, %v4843, -1e+30
        %v4972 = vsel %vm1805, %v4844, -1e+30
        %v4973 = vsel %vm1806, %v4845, -1e+30
        %v4974 = vsel %vm1807, %v4846, -1e+30
        %v4975 = vsel %vm1808, %v4847, -1e+30
        %v4976 = vsel %vm1809, %v4848, -1e+30
        %v4977 = vsel %vm1810, %v4849, -1e+30
        %v4978 = vsel %vm1811, %v4850, -1e+30
        %v4979 = vsel %vm1812, %v4851, -1e+30
        %v4980 = vsel %vm1813, %v4852, -1e+30
        %v4981 = vsel %vm1814, %v4853, -1e+30
        %v4982 = vsel %vm1815, %v4854, -1e+30
        %v4983 = vsel %vm1816, %v4855, -1e+30
        %v4984 = vsel %vm1817, %v4856, -1e+30
        %v4985 = vsel %vm1818, %v4857, -1e+30
        %v4986 = vsel %vm1819, %v4858, -1e+30
        %v4987 = vsel %vm1820, %v4859, -1e+30
        %v4988 = vsel %vm1821, %v4860, -1e+30
        %v4989 = vsel %vm1822, %v4861, -1e+30
        %v4990 = vsel %vm1823, %v4862, -1e+30
        %v4991 = vsel %vm1824, %v4863, -1e+30
        %v4992 = vsel %vm1825, %v4864, -1e+30
        %v4993 = vsel %vm1826, %v4865, -1e+30
        %v4994 = vsel %vm1827, %v4866, -1e+30
        %v4995 = vsel %vm1828, %v4867, -1e+30
        %v4996 = vsel %vm1829, %v4868, -1e+30
        %v4997 = vsel %vm1830, %v4869, -1e+30
        %v4998 = vsel %vm1831, %v4870, -1e+30
        %v4999 = vsel %vm1832, %v4871, -1e+30
        %v5000 = vsel %vm1833, %v4872, -1e+30
        %v5001 = vsel %vm1834, %v4873, -1e+30
        %v5002 = vsel %vm1835, %v4874, -1e+30
        %v5003 = vsel %vm1836, %v4875, -1e+30
        %v5004 = vsel %vm1837, %v4876, -1e+30
        %v5005 = vsel %vm1838, %v4877, -1e+30
        %v5006 = vsel %vm1839, %v4878, -1e+30
        %v5007 = vsel %vm1840, %v4879, -1e+30
        %v5008 = vsel %vm1841, %v4880, -1e+30
        %v5009 = vsel %vm1842, %v4881, -1e+30
        %v5010 = vsel %vm1843, %v4882, -1e+30
        %v5011 = vsel %vm1844, %v4883, -1e+30
        %v5012 = vsel %vm1845, %v4884, -1e+30
        %v5013 = vsel %vm1846, %v4885, -1e+30
        %v5014 = vsel %vm1847, %v4886, -1e+30
        %v5015 = vsel %vm1848, %v4887, -1e+30
        %v5016 = vsel %vm1849, %v4888, -1e+30
        %v5017 = vsel %vm1850, %v4889, -1e+30
        %v5018 = vsel %vm1851, %v4890, -1e+30
        %v5019 = vsel %vm1852, %v4891, -1e+30
        %v5020 = vsel %vm1853, %v4892, -1e+30
        %v5021 = vsel %vm1854, %v4893, -1e+30
        %v5022 = vsel %vm1855, %v4894, -1e+30
        %v5023 = vsel %vm1856, %v4895, -1e+30
        %v5024 = vsel %vm1857, %v4896, -1e+30
        %v5025 = vsel %vm1858, %v4897, -1e+30
        %v5026 = vsel %vm1859, %v4898, -1e+30
        %v5027 = vsel %vm1860, %v4899, -1e+30
        %v5028 = vsel %vm1861, %v4900, -1e+30
        %v5029 = vsel %vm1862, %v4901, -1e+30
        %v5030 = vsel %vm1863, %v4902, -1e+30
        %v5031 = vsel %vm1864, %v4903, -1e+30
        %v5032 = vsel %vm1865, %v4904, -1e+30
        %v5033 = vsel %vm1866, %v4905, -1e+30
        %v5034 = vsel %vm1867, %v4906, -1e+30
        %v5035 = vsel %vm1868, %v4907, -1e+30
        %v5036 = vsel %vm1869, %v4908, -1e+30
        %v5037 = vsel %vm1870, %v4909, -1e+30
        %v5038 = vsel %vm1871, %v4910, -1e+30
        %v5039 = vsel %vm1872, %v4911, -1e+30
        %v5040 = vsel %vm1873, %v4912, -1e+30
        %v5041 = vsel %vm1874, %v4913, -1e+30
        %v5042 = vsel %vm1875, %v4914, -1e+30
        %v5043 = vsel %vm1876, %v4915, -1e+30
        %v5044 = vsel %vm1877, %v4916, -1e+30
        %v5045 = vsel %vm1878, %v4917, -1e+30
        %v5046 = vsel %vm1879, %v4918, -1e+30
        %v5047 = vsel %vm1880, %v4919, -1e+30
        %v5048 = vsel %vm1881, %v4920, -1e+30
        %v5049 = vsel %vm1882, %v4921, -1e+30
        %v5050 = vsel %vm1883, %v4922, -1e+30
        %v5051 = vsel %vm1884, %v4923, -1e+30
        %v5052 = vsel %vm1885, %v4924, -1e+30
        %v5053 = vsel %vm1886, %v4925, -1e+30
        %v5054 = vsel %vm1887, %v4926, -1e+30
        %v5055 = vsel %vm1888, %v4927, -1e+30
        %v5056 = vsel %vm1889, %v4928, -1e+30
        %v5057 = vsel %vm1890, %v4929, -1e+30
        %v5058 = vsel %vm1891, %v4930, -1e+30
        %v5059 = vsel %vm1892, %v4931, -1e+30
        %v5060 = vsel %vm1893, %v4932, -1e+30
        %v5061 = vsel %vm1894, %v4933, -1e+30
        %v5062 = vsel %vm1895, %v4934, -1e+30
        %v5063 = vsel %vm1896, %v4935, -1e+30
        %v5064 = vsel %vm1897, %v4936, -1e+30
        %v5065 = vsel %vm1898, %v4937, -1e+30
        %v5066 = vsel %vm1899, %v4938, -1e+30
        %v5067 = vsel %vm1900, %v4939, -1e+30
        %v5068 = vsel %vm1901, %v4940, -1e+30
        %v5069 = vsel %vm1902, %v4941, -1e+30
        %v5070 = vsel %vm1903, %v4942, -1e+30
        %v5071 = vsel %vm1904, %v4943, -1e+30
        %v5072 = vsel %vm1905, %v4944, -1e+30
        %v5073 = vsel %vm1906, %v4945, -1e+30
        %v5074 = vsel %vm1907, %v4946, -1e+30
        %v5075 = vld [vmem:[#allocation2] sm:$0xff]
        %v5076 = vld [vmem:[#allocation2 + $0x8] sm:$0xff]
        %v5077 = vld [vmem:[#allocation2 + $0x10] sm:$0xff]
        %v5078 = vld [vmem:[#allocation2 + $0x18] sm:$0xff]
        %v5079 = vld [vmem:[#allocation2 + $0x20] sm:$0xff]
        %v5080 = vld [vmem:[#allocation2 + $0x28] sm:$0xff]
        %v5081 = vld [vmem:[#allocation2 + $0x30] sm:$0xff]
        %v5082 = vld [vmem:[#allocation2 + $0x38] sm:$0xff]
        %v5083 = vld [vmem:[#allocation2 + $0x40] sm:$0xff]
        %v5084 = vld [vmem:[#allocation2 + $0x48] sm:$0xff]
        %v5085 = vld [vmem:[#allocation2 + $0x50] sm:$0xff]
        %v5086 = vld [vmem:[#allocation2 + $0x58] sm:$0xff]
        %v5087 = vld [vmem:[#allocation2 + $0x60] sm:$0xff]
        %v5088 = vld [vmem:[#allocation2 + $0x68] sm:$0xff]
        %v5089 = vld [vmem:[#allocation2 + $0x70] sm:$0xff]
        %v5090 = vld [vmem:[#allocation2 + $0x78] sm:$0xff]
        %v5091 = vld [vmem:[#allocation2 + $0x80] sm:$0xff]
        %v5092 = vld [vmem:[#allocation2 + $0x88] sm:$0xff]
        %v5093 = vld [vmem:[#allocation2 + $0x90] sm:$0xff]
        %v5094 = vld [vmem:[#allocation2 + $0x98] sm:$0xff]
        %v5095 = vld [vmem:[#allocation2 + $0xa0] sm:$0xff]
        %v5096 = vld [vmem:[#allocation2 + $0xa8] sm:$0xff]
        %v5097 = vld [vmem:[#allocation2 + $0xb0] sm:$0xff]
        %v5098 = vld [vmem:[#allocation2 + $0xb8] sm:$0xff]
        %v5099 = vld [vmem:[#allocation2 + $0xc0] sm:$0xff]
        %v5100 = vld [vmem:[#allocation2 + $0xc8] sm:$0xff]
        %v5101 = vld [vmem:[#allocation2 + $0xd0] sm:$0xff]
        %v5102 = vld [vmem:[#allocation2 + $0xd8] sm:$0xff]
        %v5103 = vld [vmem:[#allocation2 + $0xe0] sm:$0xff]
        %v5104 = vld [vmem:[#allocation2 + $0xe8] sm:$0xff]
        %v5105 = vld [vmem:[#allocation2 + $0xf0] sm:$0xff]
        %v5106 = vld [vmem:[#allocation2 + $0xf8] sm:$0xff]
        %v5107 = vmax.f32 %v4947, %v4948
        %v5108 = vmax.f32 %v5107, %v4949
        %v5109 = vmax.f32 %v5108, %v4950
        %5110 = vmax.xlane.f32.xlu0 %v5109
        %v5111 = vpop.xlane.xlu0 %5110
        %v5112 = vmax.f32 %v4951, %v4952
        %v5113 = vmax.f32 %v5112, %v4953
        %v5114 = vmax.f32 %v5113, %v4954
        %5115 = vmax.xlane.f32.xlu0 %v5114
        %v5116 = vpop.xlane.xlu0 %5115
        %v5117 = vmax.f32 %v4955, %v4956
        %v5118 = vmax.f32 %v5117, %v4957
        %v5119 = vmax.f32 %v5118, %v4958
        %5120 = vmax.xlane.f32.xlu0 %v5119
        %v5121 = vpop.xlane.xlu0 %5120
        %v5122 = vmax.f32 %v4959, %v4960
        %v5123 = vmax.f32 %v5122, %v4961
        %v5124 = vmax.f32 %v5123, %v4962
        %5125 = vmax.xlane.f32.xlu0 %v5124
        %v5126 = vpop.xlane.xlu0 %5125
        %v5127 = vmax.f32 %v4963, %v4964
        %v5128 = vmax.f32 %v5127, %v4965
        %v5129 = vmax.f32 %v5128, %v4966
        %5130 = vmax.xlane.f32.xlu0 %v5129
        %v5131 = vpop.xlane.xlu0 %5130
        %v5132 = vmax.f32 %v4967, %v4968
        %v5133 = vmax.f32 %v5132, %v4969
        %v5134 = vmax.f32 %v5133, %v4970
        %5135 = vmax.xlane.f32.xlu0 %v5134
        %v5136 = vpop.xlane.xlu0 %5135
        %v5137 = vmax.f32 %v4971, %v4972
        %v5138 = vmax.f32 %v5137, %v4973
        %v5139 = vmax.f32 %v5138, %v4974
        %5140 = vmax.xlane.f32.xlu0 %v5139
        %v5141 = vpop.xlane.xlu0 %5140
        %v5142 = vmax.f32 %v4975, %v4976
        %v5143 = vmax.f32 %v5142, %v4977
        %v5144 = vmax.f32 %v5143, %v4978
        %5145 = vmax.xlane.f32.xlu0 %v5144
        %v5146 = vpop.xlane.xlu0 %5145
        %v5147 = vmax.f32 %v4979, %v4980
        %v5148 = vmax.f32 %v5147, %v4981
        %v5149 = vmax.f32 %v5148, %v4982
        %5150 = vmax.xlane.f32.xlu0 %v5149
        %v5151 = vpop.xlane.xlu0 %5150
        %v5152 = vmax.f32 %v4983, %v4984
        %v5153 = vmax.f32 %v5152, %v4985
        %v5154 = vmax.f32 %v5153, %v4986
        %5155 = vmax.xlane.f32.xlu0 %v5154
        %v5156 = vpop.xlane.xlu0 %5155
        %v5157 = vmax.f32 %v4987, %v4988
        %v5158 = vmax.f32 %v5157, %v4989
        %v5159 = vmax.f32 %v5158, %v4990
        %5160 = vmax.xlane.f32.xlu0 %v5159
        %v5161 = vpop.xlane.xlu0 %5160
        %v5162 = vmax.f32 %v4991, %v4992
        %v5163 = vmax.f32 %v5162, %v4993
        %v5164 = vmax.f32 %v5163, %v4994
        %5165 = vmax.xlane.f32.xlu0 %v5164
        %v5166 = vpop.xlane.xlu0 %5165
        %v5167 = vmax.f32 %v4995, %v4996
        %v5168 = vmax.f32 %v5167, %v4997
        %v5169 = vmax.f32 %v5168, %v4998
        %5170 = vmax.xlane.f32.xlu0 %v5169
        %v5171 = vpop.xlane.xlu0 %5170
        %v5172 = vmax.f32 %v4999, %v5000
        %v5173 = vmax.f32 %v5172, %v5001
        %v5174 = vmax.f32 %v5173, %v5002
        %5175 = vmax.xlane.f32.xlu0 %v5174
        %v5176 = vpop.xlane.xlu0 %5175
        %v5177 = vmax.f32 %v5003, %v5004
        %v5178 = vmax.f32 %v5177, %v5005
        %v5179 = vmax.f32 %v5178, %v5006
        %5180 = vmax.xlane.f32.xlu0 %v5179
        %v5181 = vpop.xlane.xlu0 %5180
        %v5182 = vmax.f32 %v5007, %v5008
        %v5183 = vmax.f32 %v5182, %v5009
        %v5184 = vmax.f32 %v5183, %v5010
        %5185 = vmax.xlane.f32.xlu0 %v5184
        %v5186 = vpop.xlane.xlu0 %5185
        %v5187 = vmax.f32 %v5011, %v5012
        %v5188 = vmax.f32 %v5187, %v5013
        %v5189 = vmax.f32 %v5188, %v5014
        %5190 = vmax.xlane.f32.xlu0 %v5189
        %v5191 = vpop.xlane.xlu0 %5190
        %v5192 = vmax.f32 %v5015, %v5016
        %v5193 = vmax.f32 %v5192, %v5017
        %v5194 = vmax.f32 %v5193, %v5018
        %5195 = vmax.xlane.f32.xlu0 %v5194
        %v5196 = vpop.xlane.xlu0 %5195
        %v5197 = vmax.f32 %v5019, %v5020
        %v5198 = vmax.f32 %v5197, %v5021
        %v5199 = vmax.f32 %v5198, %v5022
        %5200 = vmax.xlane.f32.xlu0 %v5199
        %v5201 = vpop.xlane.xlu0 %5200
        %v5202 = vmax.f32 %v5023, %v5024
        %v5203 = vmax.f32 %v5202, %v5025
        %v5204 = vmax.f32 %v5203, %v5026
        %5205 = vmax.xlane.f32.xlu0 %v5204
        %v5206 = vpop.xlane.xlu0 %5205
        %v5207 = vmax.f32 %v5027, %v5028
        %v5208 = vmax.f32 %v5207, %v5029
        %v5209 = vmax.f32 %v5208, %v5030
        %5210 = vmax.xlane.f32.xlu0 %v5209
        %v5211 = vpop.xlane.xlu0 %5210
        %v5212 = vmax.f32 %v5031, %v5032
        %v5213 = vmax.f32 %v5212, %v5033
        %v5214 = vmax.f32 %v5213, %v5034
        %5215 = vmax.xlane.f32.xlu0 %v5214
        %v5216 = vpop.xlane.xlu0 %5215
        %v5217 = vmax.f32 %v5035, %v5036
        %v5218 = vmax.f32 %v5217, %v5037
        %v5219 = vmax.f32 %v5218, %v5038
        %5220 = vmax.xlane.f32.xlu0 %v5219
        %v5221 = vpop.xlane.xlu0 %5220
        %v5222 = vmax.f32 %v5039, %v5040
        %v5223 = vmax.f32 %v5222, %v5041
        %v5224 = vmax.f32 %v5223, %v5042
        %5225 = vmax.xlane.f32.xlu0 %v5224
        %v5226 = vpop.xlane.xlu0 %5225
        %v5227 = vmax.f32 %v5043, %v5044
        %v5228 = vmax.f32 %v5227, %v5045
        %v5229 = vmax.f32 %v5228, %v5046
        %5230 = vmax.xlane.f32.xlu0 %v5229
        %v5231 = vpop.xlane.xlu0 %5230
        %v5232 = vmax.f32 %v5047, %v5048
        %v5233 = vmax.f32 %v5232, %v5049
        %v5234 = vmax.f32 %v5233, %v5050
        %5235 = vmax.xlane.f32.xlu0 %v5234
        %v5236 = vpop.xlane.xlu0 %5235
        %v5237 = vmax.f32 %v5051, %v5052
        %v5238 = vmax.f32 %v5237, %v5053
        %v5239 = vmax.f32 %v5238, %v5054
        %5240 = vmax.xlane.f32.xlu0 %v5239
        %v5241 = vpop.xlane.xlu0 %5240
        %v5242 = vmax.f32 %v5055, %v5056
        %v5243 = vmax.f32 %v5242, %v5057
        %v5244 = vmax.f32 %v5243, %v5058
        %5245 = vmax.xlane.f32.xlu0 %v5244
        %v5246 = vpop.xlane.xlu0 %5245
        %v5247 = vmax.f32 %v5059, %v5060
        %v5248 = vmax.f32 %v5247, %v5061
        %v5249 = vmax.f32 %v5248, %v5062
        %5250 = vmax.xlane.f32.xlu0 %v5249
        %v5251 = vpop.xlane.xlu0 %5250
        %v5252 = vmax.f32 %v5063, %v5064
        %v5253 = vmax.f32 %v5252, %v5065
        %v5254 = vmax.f32 %v5253, %v5066
        %5255 = vmax.xlane.f32.xlu0 %v5254
        %v5256 = vpop.xlane.xlu0 %5255
        %v5257 = vmax.f32 %v5067, %v5068
        %v5258 = vmax.f32 %v5257, %v5069
        %v5259 = vmax.f32 %v5258, %v5070
        %5260 = vmax.xlane.f32.xlu0 %v5259
        %v5261 = vpop.xlane.xlu0 %5260
        %v5262 = vmax.f32 %v5071, %v5072
        %v5263 = vmax.f32 %v5262, %v5073
        %v5264 = vmax.f32 %v5263, %v5074
        %5265 = vmax.xlane.f32.xlu0 %v5264
        %v5266 = vpop.xlane.xlu0 %5265
        %v5267 = vmax.f32 %v5075, %v5111
        %v5268 = vmax.f32 %v5076, %v5116
        %v5269 = vmax.f32 %v5077, %v5121
        %v5270 = vmax.f32 %v5078, %v5126
        %v5271 = vmax.f32 %v5079, %v5131
        %v5272 = vmax.f32 %v5080, %v5136
        %v5273 = vmax.f32 %v5081, %v5141
        %v5274 = vmax.f32 %v5082, %v5146
        %v5275 = vmax.f32 %v5083, %v5151
        %v5276 = vmax.f32 %v5084, %v5156
        %v5277 = vmax.f32 %v5085, %v5161
        %v5278 = vmax.f32 %v5086, %v5166
        %v5279 = vmax.f32 %v5087, %v5171
        %v5280 = vmax.f32 %v5088, %v5176
        %v5281 = vmax.f32 %v5089, %v5181
        %v5282 = vmax.f32 %v5090, %v5186
        %v5283 = vmax.f32 %v5091, %v5191
        %v5284 = vmax.f32 %v5092, %v5196
        %v5285 = vmax.f32 %v5093, %v5201
        %v5286 = vmax.f32 %v5094, %v5206
        %v5287 = vmax.f32 %v5095, %v5211
        %v5288 = vmax.f32 %v5096, %v5216
        %v5289 = vmax.f32 %v5097, %v5221
        %v5290 = vmax.f32 %v5098, %v5226
        %v5291 = vmax.f32 %v5099, %v5231
        %v5292 = vmax.f32 %v5100, %v5236
        %v5293 = vmax.f32 %v5101, %v5241
        %v5294 = vmax.f32 %v5102, %v5246
        %v5295 = vmax.f32 %v5103, %v5251
        %v5296 = vmax.f32 %v5104, %v5256
        %v5297 = vmax.f32 %v5105, %v5261
        %v5298 = vmax.f32 %v5106, %v5266
        %v5299 = vsub.f32 %v5075, %v5267
        %v5300 = vsub.f32 %v5076, %v5268
        %v5301 = vsub.f32 %v5077, %v5269
        %v5302 = vsub.f32 %v5078, %v5270
        %v5303 = vsub.f32 %v5079, %v5271
        %v5304 = vsub.f32 %v5080, %v5272
        %v5305 = vsub.f32 %v5081, %v5273
        %v5306 = vsub.f32 %v5082, %v5274
        %v5307 = vsub.f32 %v5083, %v5275
        %v5308 = vsub.f32 %v5084, %v5276
        %v5309 = vsub.f32 %v5085, %v5277
        %v5310 = vsub.f32 %v5086, %v5278
        %v5311 = vsub.f32 %v5087, %v5279
        %v5312 = vsub.f32 %v5088, %v5280
        %v5313 = vsub.f32 %v5089, %v5281
        %v5314 = vsub.f32 %v5090, %v5282
        %v5315 = vsub.f32 %v5091, %v5283
        %v5316 = vsub.f32 %v5092, %v5284
        %v5317 = vsub.f32 %v5093, %v5285
        %v5318 = vsub.f32 %v5094, %v5286
        %v5319 = vsub.f32 %v5095, %v5287
        %v5320 = vsub.f32 %v5096, %v5288
        %v5321 = vsub.f32 %v5097, %v5289
        %v5322 = vsub.f32 %v5098, %v5290
        %v5323 = vsub.f32 %v5099, %v5291
        %v5324 = vsub.f32 %v5100, %v5292
        %v5325 = vsub.f32 %v5101, %v5293
        %v5326 = vsub.f32 %v5102, %v5294
        %v5327 = vsub.f32 %v5103, %v5295
        %v5328 = vsub.f32 %v5104, %v5296
        %v5329 = vsub.f32 %v5105, %v5297
        %v5330 = vsub.f32 %v5106, %v5298
        %v5331 = vmul.f32 %v5299, 1.442695
        %v5332 = vpow.pop %v5331
        %v5333 = vmul.f32 %v5300, 1.442695
        %v5334 = vpow.pop %v5333
        %v5335 = vmul.f32 %v5301, 1.442695
        %v5336 = vpow.pop %v5335
        %v5337 = vmul.f32 %v5302, 1.442695
        %v5338 = vpow.pop %v5337
        %v5339 = vmul.f32 %v5303, 1.442695
        %v5340 = vpow.pop %v5339
        %v5341 = vmul.f32 %v5304, 1.442695
        %v5342 = vpow.pop %v5341
        %v5343 = vmul.f32 %v5305, 1.442695
        %v5344 = vpow.pop %v5343
        %v5345 = vmul.f32 %v5306, 1.442695
        %v5346 = vpow.pop %v5345
        %v5347 = vmul.f32 %v5307, 1.442695
        %v5348 = vpow.pop %v5347
        %v5349 = vmul.f32 %v5308, 1.442695
        %v5350 = vpow.pop %v5349
        %v5351 = vmul.f32 %v5309, 1.442695
        %v5352 = vpow.pop %v5351
        %v5353 = vmul.f32 %v5310, 1.442695
        %v5354 = vpow.pop %v5353
        %v5355 = vmul.f32 %v5311, 1.442695
        %v5356 = vpow.pop %v5355
        %v5357 = vmul.f32 %v5312, 1.442695
        %v5358 = vpow.pop %v5357
        %v5359 = vmul.f32 %v5313, 1.442695
        %v5360 = vpow.pop %v5359
        %v5361 = vmul.f32 %v5314, 1.442695
        %v5362 = vpow.pop %v5361
        %v5363 = vmul.f32 %v5315, 1.442695
        %v5364 = vpow.pop %v5363
        %v5365 = vmul.f32 %v5316, 1.442695
        %v5366 = vpow.pop %v5365
        %v5367 = vmul.f32 %v5317, 1.442695
        %v5368 = vpow.pop %v5367
        %v5369 = vmul.f32 %v5318, 1.442695
        %v5370 = vpow.pop %v5369
        %v5371 = vmul.f32 %v5319, 1.442695
        %v5372 = vpow.pop %v5371
        %v5373 = vmul.f32 %v5320, 1.442695
        %v5374 = vpow.pop %v5373
        %v5375 = vmul.f32 %v5321, 1.442695
        %v5376 = vpow.pop %v5375
        %v5377 = vmul.f32 %v5322, 1.442695
        %v5378 = vpow.pop %v5377
        %v5379 = vmul.f32 %v5323, 1.442695
        %v5380 = vpow.pop %v5379
        %v5381 = vmul.f32 %v5324, 1.442695
        %v5382 = vpow.pop %v5381
        %v5383 = vmul.f32 %v5325, 1.442695
        %v5384 = vpow.pop %v5383
        %v5385 = vmul.f32 %v5326, 1.442695
        %v5386 = vpow.pop %v5385
        %v5387 = vmul.f32 %v5327, 1.442695
        %v5388 = vpow.pop %v5387
        %v5389 = vmul.f32 %v5328, 1.442695
        %v5390 = vpow.pop %v5389
        %v5391 = vmul.f32 %v5329, 1.442695
        %v5392 = vpow.pop %v5391
        %v5393 = vmul.f32 %v5330, 1.442695
        %v5394 = vpow.pop %v5393
        %5396 = vset.pattern.permute.xlu0 1
        %5397 = vperm.xlu0 %5396, %v5267
        %v5398 = vpop.permute.xlu0 %5397
        %5401 = vset.pattern.permute.xlu0 1
        %5402 = vperm.xlu0 %5401, %v5268
        %v5403 = vpop.permute.xlu0 %5402
        %5406 = vset.pattern.permute.xlu0 1
        %5407 = vperm.xlu0 %5406, %v5269
        %v5408 = vpop.permute.xlu0 %5407
        %5411 = vset.pattern.permute.xlu0 1
        %5412 = vperm.xlu0 %5411, %v5270
        %v5413 = vpop.permute.xlu0 %5412
        %5416 = vset.pattern.permute.xlu0 1
        %5417 = vperm.xlu0 %5416, %v5271
        %v5418 = vpop.permute.xlu0 %5417
        %5421 = vset.pattern.permute.xlu0 1
        %5422 = vperm.xlu0 %5421, %v5272
        %v5423 = vpop.permute.xlu0 %5422
        %5426 = vset.pattern.permute.xlu0 1
        %5427 = vperm.xlu0 %5426, %v5273
        %v5428 = vpop.permute.xlu0 %5427
        %5431 = vset.pattern.permute.xlu0 1
        %5432 = vperm.xlu0 %5431, %v5274
        %v5433 = vpop.permute.xlu0 %5432
        %5436 = vset.pattern.permute.xlu0 1
        %5437 = vperm.xlu0 %5436, %v5275
        %v5438 = vpop.permute.xlu0 %5437
        %5441 = vset.pattern.permute.xlu0 1
        %5442 = vperm.xlu0 %5441, %v5276
        %v5443 = vpop.permute.xlu0 %5442
        %5446 = vset.pattern.permute.xlu0 1
        %5447 = vperm.xlu0 %5446, %v5277
        %v5448 = vpop.permute.xlu0 %5447
        %5451 = vset.pattern.permute.xlu0 1
        %5452 = vperm.xlu0 %5451, %v5278
        %v5453 = vpop.permute.xlu0 %5452
        %5456 = vset.pattern.permute.xlu0 1
        %5457 = vperm.xlu0 %5456, %v5279
        %v5458 = vpop.permute.xlu0 %5457
        %5461 = vset.pattern.permute.xlu0 1
        %5462 = vperm.xlu0 %5461, %v5280
        %v5463 = vpop.permute.xlu0 %5462
        %5466 = vset.pattern.permute.xlu0 1
        %5467 = vperm.xlu0 %5466, %v5281
        %v5468 = vpop.permute.xlu0 %5467
        %5471 = vset.pattern.permute.xlu0 1
        %5472 = vperm.xlu0 %5471, %v5282
        %v5473 = vpop.permute.xlu0 %5472
        %5476 = vset.pattern.permute.xlu0 1
        %5477 = vperm.xlu0 %5476, %v5283
        %v5478 = vpop.permute.xlu0 %5477
        %5481 = vset.pattern.permute.xlu0 1
        %5482 = vperm.xlu0 %5481, %v5284
        %v5483 = vpop.permute.xlu0 %5482
        %5486 = vset.pattern.permute.xlu0 1
        %5487 = vperm.xlu0 %5486, %v5285
        %v5488 = vpop.permute.xlu0 %5487
        %5491 = vset.pattern.permute.xlu0 1
        %5492 = vperm.xlu0 %5491, %v5286
        %v5493 = vpop.permute.xlu0 %5492
        %5496 = vset.pattern.permute.xlu0 1
        %5497 = vperm.xlu0 %5496, %v5287
        %v5498 = vpop.permute.xlu0 %5497
        %5501 = vset.pattern.permute.xlu0 1
        %5502 = vperm.xlu0 %5501, %v5288
        %v5503 = vpop.permute.xlu0 %5502
        %5506 = vset.pattern.permute.xlu0 1
        %5507 = vperm.xlu0 %5506, %v5289
        %v5508 = vpop.permute.xlu0 %5507
        %5511 = vset.pattern.permute.xlu0 1
        %5512 = vperm.xlu0 %5511, %v5290
        %v5513 = vpop.permute.xlu0 %5512
        %5516 = vset.pattern.permute.xlu0 1
        %5517 = vperm.xlu0 %5516, %v5291
        %v5518 = vpop.permute.xlu0 %5517
        %5521 = vset.pattern.permute.xlu0 1
        %5522 = vperm.xlu0 %5521, %v5292
        %v5523 = vpop.permute.xlu0 %5522
        %5526 = vset.pattern.permute.xlu0 1
        %5527 = vperm.xlu0 %5526, %v5293
        %v5528 = vpop.permute.xlu0 %5527
        %5531 = vset.pattern.permute.xlu0 1
        %5532 = vperm.xlu0 %5531, %v5294
        %v5533 = vpop.permute.xlu0 %5532
        %5536 = vset.pattern.permute.xlu0 1
        %5537 = vperm.xlu0 %5536, %v5295
        %v5538 = vpop.permute.xlu0 %5537
        %5541 = vset.pattern.permute.xlu0 1
        %5542 = vperm.xlu0 %5541, %v5296
        %v5543 = vpop.permute.xlu0 %5542
        %5546 = vset.pattern.permute.xlu0 1
        %5547 = vperm.xlu0 %5546, %v5297
        %v5548 = vpop.permute.xlu0 %5547
        %5551 = vset.pattern.permute.xlu0 1
        %5552 = vperm.xlu0 %5551, %v5298
        %v5553 = vpop.permute.xlu0 %5552
        %v5555 = vsub.f32 %v4947, %v5398
        %v5556 = vsub.f32 %v4948, %v5398
        %v5557 = vsub.f32 %v4949, %v5398
        %v5558 = vsub.f32 %v4950, %v5398
        %v5559 = vsub.f32 %v4951, %v5403
        %v5560 = vsub.f32 %v4952, %v5403
        %v5561 = vsub.f32 %v4953, %v5403
        %v5562 = vsub.f32 %v4954, %v5403
        %v5563 = vsub.f32 %v4955, %v5408
        %v5564 = vsub.f32 %v4956, %v5408
        %v5565 = vsub.f32 %v4957, %v5408
        %v5566 = vsub.f32 %v4958, %v5408
        %v5567 = vsub.f32 %v4959, %v5413
        %v5568 = vsub.f32 %v4960, %v5413
        %v5569 = vsub.f32 %v4961, %v5413
        %v5570 = vsub.f32 %v4962, %v5413
        %v5571 = vsub.f32 %v4963, %v5418
        %v5572 = vsub.f32 %v4964, %v5418
        %v5573 = vsub.f32 %v4965, %v5418
        %v5574 = vsub.f32 %v4966, %v5418
        %v5575 = vsub.f32 %v4967, %v5423
        %v5576 = vsub.f32 %v4968, %v5423
        %v5577 = vsub.f32 %v4969, %v5423
        %v5578 = vsub.f32 %v4970, %v5423
        %v5579 = vsub.f32 %v4971, %v5428
        %v5580 = vsub.f32 %v4972, %v5428
        %v5581 = vsub.f32 %v4973, %v5428
        %v5582 = vsub.f32 %v4974, %v5428
        %v5583 = vsub.f32 %v4975, %v5433
        %v5584 = vsub.f32 %v4976, %v5433
        %v5585 = vsub.f32 %v4977, %v5433
        %v5586 = vsub.f32 %v4978, %v5433
        %v5587 = vsub.f32 %v4979, %v5438
        %v5588 = vsub.f32 %v4980, %v5438
        %v5589 = vsub.f32 %v4981, %v5438
        %v5590 = vsub.f32 %v4982, %v5438
        %v5591 = vsub.f32 %v4983, %v5443
        %v5592 = vsub.f32 %v4984, %v5443
        %v5593 = vsub.f32 %v4985, %v5443
        %v5594 = vsub.f32 %v4986, %v5443
        %v5595 = vsub.f32 %v4987, %v5448
        %v5596 = vsub.f32 %v4988, %v5448
        %v5597 = vsub.f32 %v4989, %v5448
        %v5598 = vsub.f32 %v4990, %v5448
        %v5599 = vsub.f32 %v4991, %v5453
        %v5600 = vsub.f32 %v4992, %v5453
        %v5601 = vsub.f32 %v4993, %v5453
        %v5602 = vsub.f32 %v4994, %v5453
        %v5603 = vsub.f32 %v4995, %v5458
        %v5604 = vsub.f32 %v4996, %v5458
        %v5605 = vsub.f32 %v4997, %v5458
        %v5606 = vsub.f32 %v4998, %v5458
        %v5607 = vsub.f32 %v4999, %v5463
        %v5608 = vsub.f32 %v5000, %v5463
        %v5609 = vsub.f32 %v5001, %v5463
        %v5610 = vsub.f32 %v5002, %v5463
        %v5611 = vsub.f32 %v5003, %v5468
        %v5612 = vsub.f32 %v5004, %v5468
        %v5613 = vsub.f32 %v5005, %v5468
        %v5614 = vsub.f32 %v5006, %v5468
        %v5615 = vsub.f32 %v5007, %v5473
        %v5616 = vsub.f32 %v5008, %v5473
        %v5617 = vsub.f32 %v5009, %v5473
        %v5618 = vsub.f32 %v5010, %v5473
        %v5619 = vsub.f32 %v5011, %v5478
        %v5620 = vsub.f32 %v5012, %v5478
        %v5621 = vsub.f32 %v5013, %v5478
        %v5622 = vsub.f32 %v5014, %v5478
        %v5623 = vsub.f32 %v5015, %v5483
        %v5624 = vsub.f32 %v5016, %v5483
        %v5625 = vsub.f32 %v5017, %v5483
        %v5626 = vsub.f32 %v5018, %v5483
        %v5627 = vsub.f32 %v5019, %v5488
        %v5628 = vsub.f32 %v5020, %v5488
        %v5629 = vsub.f32 %v5021, %v5488
        %v5630 = vsub.f32 %v5022, %v5488
        %v5631 = vsub.f32 %v5023, %v5493
        %v5632 = vsub.f32 %v5024, %v5493
        %v5633 = vsub.f32 %v5025, %v5493
        %v5634 = vsub.f32 %v5026, %v5493
        %v5635 = vsub.f32 %v5027, %v5498
        %v5636 = vsub.f32 %v5028, %v5498
        %v5637 = vsub.f32 %v5029, %v5498
        %v5638 = vsub.f32 %v5030, %v5498
        %v5639 = vsub.f32 %v5031, %v5503
        %v5640 = vsub.f32 %v5032, %v5503
        %v5641 = vsub.f32 %v5033, %v5503
        %v5642 = vsub.f32 %v5034, %v5503
        %v5643 = vsub.f32 %v5035, %v5508
        %v5644 = vsub.f32 %v5036, %v5508
        %v5645 = vsub.f32 %v5037, %v5508
        %v5646 = vsub.f32 %v5038, %v5508
        %v5647 = vsub.f32 %v5039, %v5513
        %v5648 = vsub.f32 %v5040, %v5513
        %v5649 = vsub.f32 %v5041, %v5513
        %v5650 = vsub.f32 %v5042, %v5513
        %v5651 = vsub.f32 %v5043, %v5518
        %v5652 = vsub.f32 %v5044, %v5518
        %v5653 = vsub.f32 %v5045, %v5518
        %v5654 = vsub.f32 %v5046, %v5518
        %v5655 = vsub.f32 %v5047, %v5523
        %v5656 = vsub.f32 %v5048, %v5523
        %v5657 = vsub.f32 %v5049, %v5523
        %v5658 = vsub.f32 %v5050, %v5523
        %v5659 = vsub.f32 %v5051, %v5528
        %v5660 = vsub.f32 %v5052, %v5528
        %v5661 = vsub.f32 %v5053, %v5528
        %v5662 = vsub.f32 %v5054, %v5528
        %v5663 = vsub.f32 %v5055, %v5533
        %v5664 = vsub.f32 %v5056, %v5533
        %v5665 = vsub.f32 %v5057, %v5533
        %v5666 = vsub.f32 %v5058, %v5533
        %v5667 = vsub.f32 %v5059, %v5538
        %v5668 = vsub.f32 %v5060, %v5538
        %v5669 = vsub.f32 %v5061, %v5538
        %v5670 = vsub.f32 %v5062, %v5538
        %v5671 = vsub.f32 %v5063, %v5543
        %v5672 = vsub.f32 %v5064, %v5543
        %v5673 = vsub.f32 %v5065, %v5543
        %v5674 = vsub.f32 %v5066, %v5543
        %v5675 = vsub.f32 %v5067, %v5548
        %v5676 = vsub.f32 %v5068, %v5548
        %v5677 = vsub.f32 %v5069, %v5548
        %v5678 = vsub.f32 %v5070, %v5548
        %v5679 = vsub.f32 %v5071, %v5553
        %v5680 = vsub.f32 %v5072, %v5553
        %v5681 = vsub.f32 %v5073, %v5553
        %v5682 = vsub.f32 %v5074, %v5553
        %v5683 = vmul.f32 %v5555, 1.442695
        %v5684 = vpow.pop %v5683
        %v5685 = vmul.f32 %v5556, 1.442695
        %v5686 = vpow.pop %v5685
        %v5687 = vmul.f32 %v5557, 1.442695
        %v5688 = vpow.pop %v5687
        %v5689 = vmul.f32 %v5558, 1.442695
        %v5690 = vpow.pop %v5689
        %v5691 = vmul.f32 %v5559, 1.442695
        %v5692 = vpow.pop %v5691
        %v5693 = vmul.f32 %v5560, 1.442695
        %v5694 = vpow.pop %v5693
        %v5695 = vmul.f32 %v5561, 1.442695
        %v5696 = vpow.pop %v5695
        %v5697 = vmul.f32 %v5562, 1.442695
        %v5698 = vpow.pop %v5697
        %v5699 = vmul.f32 %v5563, 1.442695
        %v5700 = vpow.pop %v5699
        %v5701 = vmul.f32 %v5564, 1.442695
        %v5702 = vpow.pop %v5701
        %v5703 = vmul.f32 %v5565, 1.442695
        %v5704 = vpow.pop %v5703
        %v5705 = vmul.f32 %v5566, 1.442695
        %v5706 = vpow.pop %v5705
        %v5707 = vmul.f32 %v5567, 1.442695
        %v5708 = vpow.pop %v5707
        %v5709 = vmul.f32 %v5568, 1.442695
        %v5710 = vpow.pop %v5709
        %v5711 = vmul.f32 %v5569, 1.442695
        %v5712 = vpow.pop %v5711
        %v5713 = vmul.f32 %v5570, 1.442695
        %v5714 = vpow.pop %v5713
        %v5715 = vmul.f32 %v5571, 1.442695
        %v5716 = vpow.pop %v5715
        %v5717 = vmul.f32 %v5572, 1.442695
        %v5718 = vpow.pop %v5717
        %v5719 = vmul.f32 %v5573, 1.442695
        %v5720 = vpow.pop %v5719
        %v5721 = vmul.f32 %v5574, 1.442695
        %v5722 = vpow.pop %v5721
        %v5723 = vmul.f32 %v5575, 1.442695
        %v5724 = vpow.pop %v5723
        %v5725 = vmul.f32 %v5576, 1.442695
        %v5726 = vpow.pop %v5725
        %v5727 = vmul.f32 %v5577, 1.442695
        %v5728 = vpow.pop %v5727
        %v5729 = vmul.f32 %v5578, 1.442695
        %v5730 = vpow.pop %v5729
        %v5731 = vmul.f32 %v5579, 1.442695
        %v5732 = vpow.pop %v5731
        %v5733 = vmul.f32 %v5580, 1.442695
        %v5734 = vpow.pop %v5733
        %v5735 = vmul.f32 %v5581, 1.442695
        %v5736 = vpow.pop %v5735
        %v5737 = vmul.f32 %v5582, 1.442695
        %v5738 = vpow.pop %v5737
        %v5739 = vmul.f32 %v5583, 1.442695
        %v5740 = vpow.pop %v5739
        %v5741 = vmul.f32 %v5584, 1.442695
        %v5742 = vpow.pop %v5741
        %v5743 = vmul.f32 %v5585, 1.442695
        %v5744 = vpow.pop %v5743
        %v5745 = vmul.f32 %v5586, 1.442695
        %v5746 = vpow.pop %v5745
        %v5747 = vmul.f32 %v5587, 1.442695
        %v5748 = vpow.pop %v5747
        %v5749 = vmul.f32 %v5588, 1.442695
        %v5750 = vpow.pop %v5749
        %v5751 = vmul.f32 %v5589, 1.442695
        %v5752 = vpow.pop %v5751
        %v5753 = vmul.f32 %v5590, 1.442695
        %v5754 = vpow.pop %v5753
        %v5755 = vmul.f32 %v5591, 1.442695
        %v5756 = vpow.pop %v5755
        %v5757 = vmul.f32 %v5592, 1.442695
        %v5758 = vpow.pop %v5757
        %v5759 = vmul.f32 %v5593, 1.442695
        %v5760 = vpow.pop %v5759
        %v5761 = vmul.f32 %v5594, 1.442695
        %v5762 = vpow.pop %v5761
        %v5763 = vmul.f32 %v5595, 1.442695
        %v5764 = vpow.pop %v5763
        %v5765 = vmul.f32 %v5596, 1.442695
        %v5766 = vpow.pop %v5765
        %v5767 = vmul.f32 %v5597, 1.442695
        %v5768 = vpow.pop %v5767
        %v5769 = vmul.f32 %v5598, 1.442695
        %v5770 = vpow.pop %v5769
        %v5771 = vmul.f32 %v5599, 1.442695
        %v5772 = vpow.pop %v5771
        %v5773 = vmul.f32 %v5600, 1.442695
        %v5774 = vpow.pop %v5773
        %v5775 = vmul.f32 %v5601, 1.442695
        %v5776 = vpow.pop %v5775
        %v5777 = vmul.f32 %v5602, 1.442695
        %v5778 = vpow.pop %v5777
        %v5779 = vmul.f32 %v5603, 1.442695
        %v5780 = vpow.pop %v5779
        %v5781 = vmul.f32 %v5604, 1.442695
        %v5782 = vpow.pop %v5781
        %v5783 = vmul.f32 %v5605, 1.442695
        %v5784 = vpow.pop %v5783
        %v5785 = vmul.f32 %v5606, 1.442695
        %v5786 = vpow.pop %v5785
        %v5787 = vmul.f32 %v5607, 1.442695
        %v5788 = vpow.pop %v5787
        %v5789 = vmul.f32 %v5608, 1.442695
        %v5790 = vpow.pop %v5789
        %v5791 = vmul.f32 %v5609, 1.442695
        %v5792 = vpow.pop %v5791
        %v5793 = vmul.f32 %v5610, 1.442695
        %v5794 = vpow.pop %v5793
        %v5795 = vmul.f32 %v5611, 1.442695
        %v5796 = vpow.pop %v5795
        %v5797 = vmul.f32 %v5612, 1.442695
        %v5798 = vpow.pop %v5797
        %v5799 = vmul.f32 %v5613, 1.442695
        %v5800 = vpow.pop %v5799
        %v5801 = vmul.f32 %v5614, 1.442695
        %v5802 = vpow.pop %v5801
        %v5803 = vmul.f32 %v5615, 1.442695
        %v5804 = vpow.pop %v5803
        %v5805 = vmul.f32 %v5616, 1.442695
        %v5806 = vpow.pop %v5805
        %v5807 = vmul.f32 %v5617, 1.442695
        %v5808 = vpow.pop %v5807
        %v5809 = vmul.f32 %v5618, 1.442695
        %v5810 = vpow.pop %v5809
        %v5811 = vmul.f32 %v5619, 1.442695
        %v5812 = vpow.pop %v5811
        %v5813 = vmul.f32 %v5620, 1.442695
        %v5814 = vpow.pop %v5813
        %v5815 = vmul.f32 %v5621, 1.442695
        %v5816 = vpow.pop %v5815
        %v5817 = vmul.f32 %v5622, 1.442695
        %v5818 = vpow.pop %v5817
        %v5819 = vmul.f32 %v5623, 1.442695
        %v5820 = vpow.pop %v5819
        %v5821 = vmul.f32 %v5624, 1.442695
        %v5822 = vpow.pop %v5821
        %v5823 = vmul.f32 %v5625, 1.442695
        %v5824 = vpow.pop %v5823
        %v5825 = vmul.f32 %v5626, 1.442695
        %v5826 = vpow.pop %v5825
        %v5827 = vmul.f32 %v5627, 1.442695
        %v5828 = vpow.pop %v5827
        %v5829 = vmul.f32 %v5628, 1.442695
        %v5830 = vpow.pop %v5829
        %v5831 = vmul.f32 %v5629, 1.442695
        %v5832 = vpow.pop %v5831
        %v5833 = vmul.f32 %v5630, 1.442695
        %v5834 = vpow.pop %v5833
        %v5835 = vmul.f32 %v5631, 1.442695
        %v5836 = vpow.pop %v5835
        %v5837 = vmul.f32 %v5632, 1.442695
        %v5838 = vpow.pop %v5837
        %v5839 = vmul.f32 %v5633, 1.442695
        %v5840 = vpow.pop %v5839
        %v5841 = vmul.f32 %v5634, 1.442695
        %v5842 = vpow.pop %v5841
        %v5843 = vmul.f32 %v5635, 1.442695
        %v5844 = vpow.pop %v5843
        %v5845 = vmul.f32 %v5636, 1.442695
        %v5846 = vpow.pop %v5845
        %v5847 = vmul.f32 %v5637, 1.442695
        %v5848 = vpow.pop %v5847
        %v5849 = vmul.f32 %v5638, 1.442695
        %v5850 = vpow.pop %v5849
        %v5851 = vmul.f32 %v5639, 1.442695
        %v5852 = vpow.pop %v5851
        %v5853 = vmul.f32 %v5640, 1.442695
        %v5854 = vpow.pop %v5853
        %v5855 = vmul.f32 %v5641, 1.442695
        %v5856 = vpow.pop %v5855
        %v5857 = vmul.f32 %v5642, 1.442695
        %v5858 = vpow.pop %v5857
        %v5859 = vmul.f32 %v5643, 1.442695
        %v5860 = vpow.pop %v5859
        %v5861 = vmul.f32 %v5644, 1.442695
        %v5862 = vpow.pop %v5861
        %v5863 = vmul.f32 %v5645, 1.442695
        %v5864 = vpow.pop %v5863
        %v5865 = vmul.f32 %v5646, 1.442695
        %v5866 = vpow.pop %v5865
        %v5867 = vmul.f32 %v5647, 1.442695
        %v5868 = vpow.pop %v5867
        %v5869 = vmul.f32 %v5648, 1.442695
        %v5870 = vpow.pop %v5869
        %v5871 = vmul.f32 %v5649, 1.442695
        %v5872 = vpow.pop %v5871
        %v5873 = vmul.f32 %v5650, 1.442695
        %v5874 = vpow.pop %v5873
        %v5875 = vmul.f32 %v5651, 1.442695
        %v5876 = vpow.pop %v5875
        %v5877 = vmul.f32 %v5652, 1.442695
        %v5878 = vpow.pop %v5877
        %v5879 = vmul.f32 %v5653, 1.442695
        %v5880 = vpow.pop %v5879
        %v5881 = vmul.f32 %v5654, 1.442695
        %v5882 = vpow.pop %v5881
        %v5883 = vmul.f32 %v5655, 1.442695
        %v5884 = vpow.pop %v5883
        %v5885 = vmul.f32 %v5656, 1.442695
        %v5886 = vpow.pop %v5885
        %v5887 = vmul.f32 %v5657, 1.442695
        %v5888 = vpow.pop %v5887
        %v5889 = vmul.f32 %v5658, 1.442695
        %v5890 = vpow.pop %v5889
        %v5891 = vmul.f32 %v5659, 1.442695
        %v5892 = vpow.pop %v5891
        %v5893 = vmul.f32 %v5660, 1.442695
        %v5894 = vpow.pop %v5893
        %v5895 = vmul.f32 %v5661, 1.442695
        %v5896 = vpow.pop %v5895
        %v5897 = vmul.f32 %v5662, 1.442695
        %v5898 = vpow.pop %v5897
        %v5899 = vmul.f32 %v5663, 1.442695
        %v5900 = vpow.pop %v5899
        %v5901 = vmul.f32 %v5664, 1.442695
        %v5902 = vpow.pop %v5901
        %v5903 = vmul.f32 %v5665, 1.442695
        %v5904 = vpow.pop %v5903
        %v5905 = vmul.f32 %v5666, 1.442695
        %v5906 = vpow.pop %v5905
        %v5907 = vmul.f32 %v5667, 1.442695
        %v5908 = vpow.pop %v5907
        %v5909 = vmul.f32 %v5668, 1.442695
        %v5910 = vpow.pop %v5909
        %v5911 = vmul.f32 %v5669, 1.442695
        %v5912 = vpow.pop %v5911
        %v5913 = vmul.f32 %v5670, 1.442695
        %v5914 = vpow.pop %v5913
        %v5915 = vmul.f32 %v5671, 1.442695
        %v5916 = vpow.pop %v5915
        %v5917 = vmul.f32 %v5672, 1.442695
        %v5918 = vpow.pop %v5917
        %v5919 = vmul.f32 %v5673, 1.442695
        %v5920 = vpow.pop %v5919
        %v5921 = vmul.f32 %v5674, 1.442695
        %v5922 = vpow.pop %v5921
        %v5923 = vmul.f32 %v5675, 1.442695
        %v5924 = vpow.pop %v5923
        %v5925 = vmul.f32 %v5676, 1.442695
        %v5926 = vpow.pop %v5925
        %v5927 = vmul.f32 %v5677, 1.442695
        %v5928 = vpow.pop %v5927
        %v5929 = vmul.f32 %v5678, 1.442695
        %v5930 = vpow.pop %v5929
        %v5931 = vmul.f32 %v5679, 1.442695
        %v5932 = vpow.pop %v5931
        %v5933 = vmul.f32 %v5680, 1.442695
        %v5934 = vpow.pop %v5933
        %v5935 = vmul.f32 %v5681, 1.442695
        %v5936 = vpow.pop %v5935
        %v5937 = vmul.f32 %v5682, 1.442695
        %v5938 = vpow.pop %v5937
        %v5939 = vsel %vm1780, %v5684, 0.0
        %v5940 = vsel %vm1781, %v5686, 0.0
        %v5941 = vsel %vm1782, %v5688, 0.0
        %v5942 = vsel %vm1783, %v5690, 0.0
        %v5943 = vsel %vm1784, %v5692, 0.0
        %v5944 = vsel %vm1785, %v5694, 0.0
        %v5945 = vsel %vm1786, %v5696, 0.0
        %v5946 = vsel %vm1787, %v5698, 0.0
        %v5947 = vsel %vm1788, %v5700, 0.0
        %v5948 = vsel %vm1789, %v5702, 0.0
        %v5949 = vsel %vm1790, %v5704, 0.0
        %v5950 = vsel %vm1791, %v5706, 0.0
        %v5951 = vsel %vm1792, %v5708, 0.0
        %v5952 = vsel %vm1793, %v5710, 0.0
        %v5953 = vsel %vm1794, %v5712, 0.0
        %v5954 = vsel %vm1795, %v5714, 0.0
        %v5955 = vsel %vm1796, %v5716, 0.0
        %v5956 = vsel %vm1797, %v5718, 0.0
        %v5957 = vsel %vm1798, %v5720, 0.0
        %v5958 = vsel %vm1799, %v5722, 0.0
        %v5959 = vsel %vm1800, %v5724, 0.0
        %v5960 = vsel %vm1801, %v5726, 0.0
        %v5961 = vsel %vm1802, %v5728, 0.0
        %v5962 = vsel %vm1803, %v5730, 0.0
        %v5963 = vsel %vm1804, %v5732, 0.0
        %v5964 = vsel %vm1805, %v5734, 0.0
        %v5965 = vsel %vm1806, %v5736, 0.0
        %v5966 = vsel %vm1807, %v5738, 0.0
        %v5967 = vsel %vm1808, %v5740, 0.0
        %v5968 = vsel %vm1809, %v5742, 0.0
        %v5969 = vsel %vm1810, %v5744, 0.0
        %v5970 = vsel %vm1811, %v5746, 0.0
        %v5971 = vsel %vm1812, %v5748, 0.0
        %v5972 = vsel %vm1813, %v5750, 0.0
        %v5973 = vsel %vm1814, %v5752, 0.0
        %v5974 = vsel %vm1815, %v5754, 0.0
        %v5975 = vsel %vm1816, %v5756, 0.0
        %v5976 = vsel %vm1817, %v5758, 0.0
        %v5977 = vsel %vm1818, %v5760, 0.0
        %v5978 = vsel %vm1819, %v5762, 0.0
        %v5979 = vsel %vm1820, %v5764, 0.0
        %v5980 = vsel %vm1821, %v5766, 0.0
        %v5981 = vsel %vm1822, %v5768, 0.0
        %v5982 = vsel %vm1823, %v5770, 0.0
        %v5983 = vsel %vm1824, %v5772, 0.0
        %v5984 = vsel %vm1825, %v5774, 0.0
        %v5985 = vsel %vm1826, %v5776, 0.0
        %v5986 = vsel %vm1827, %v5778, 0.0
        %v5987 = vsel %vm1828, %v5780, 0.0
        %v5988 = vsel %vm1829, %v5782, 0.0
        %v5989 = vsel %vm1830, %v5784, 0.0
        %v5990 = vsel %vm1831, %v5786, 0.0
        %v5991 = vsel %vm1832, %v5788, 0.0
        %v5992 = vsel %vm1833, %v5790, 0.0
        %v5993 = vsel %vm1834, %v5792, 0.0
        %v5994 = vsel %vm1835, %v5794, 0.0
        %v5995 = vsel %vm1836, %v5796, 0.0
        %v5996 = vsel %vm1837, %v5798, 0.0
        %v5997 = vsel %vm1838, %v5800, 0.0
        %v5998 = vsel %vm1839, %v5802, 0.0
        %v5999 = vsel %vm1840, %v5804, 0.0
        %v6000 = vsel %vm1841, %v5806, 0.0
        %v6001 = vsel %vm1842, %v5808, 0.0
        %v6002 = vsel %vm1843, %v5810, 0.0
        %v6003 = vsel %vm1844, %v5812, 0.0
        %v6004 = vsel %vm1845, %v5814, 0.0
        %v6005 = vsel %vm1846, %v5816, 0.0
        %v6006 = vsel %vm1847, %v5818, 0.0
        %v6007 = vsel %vm1848, %v5820, 0.0
        %v6008 = vsel %vm1849, %v5822, 0.0
        %v6009 = vsel %vm1850, %v5824, 0.0
        %v6010 = vsel %vm1851, %v5826, 0.0
        %v6011 = vsel %vm1852, %v5828, 0.0
        %v6012 = vsel %vm1853, %v5830, 0.0
        %v6013 = vsel %vm1854, %v5832, 0.0
        %v6014 = vsel %vm1855, %v5834, 0.0
        %v6015 = vsel %vm1856, %v5836, 0.0
        %v6016 = vsel %vm1857, %v5838, 0.0
        %v6017 = vsel %vm1858, %v5840, 0.0
        %v6018 = vsel %vm1859, %v5842, 0.0
        %v6019 = vsel %vm1860, %v5844, 0.0
        %v6020 = vsel %vm1861, %v5846, 0.0
        %v6021 = vsel %vm1862, %v5848, 0.0
        %v6022 = vsel %vm1863, %v5850, 0.0
        %v6023 = vsel %vm1864, %v5852, 0.0
        %v6024 = vsel %vm1865, %v5854, 0.0
        %v6025 = vsel %vm1866, %v5856, 0.0
        %v6026 = vsel %vm1867, %v5858, 0.0
        %v6027 = vsel %vm1868, %v5860, 0.0
        %v6028 = vsel %vm1869, %v5862, 0.0
        %v6029 = vsel %vm1870, %v5864, 0.0
        %v6030 = vsel %vm1871, %v5866, 0.0
        %v6031 = vsel %vm1872, %v5868, 0.0
        %v6032 = vsel %vm1873, %v5870, 0.0
        %v6033 = vsel %vm1874, %v5872, 0.0
        %v6034 = vsel %vm1875, %v5874, 0.0
        %v6035 = vsel %vm1876, %v5876, 0.0
        %v6036 = vsel %vm1877, %v5878, 0.0
        %v6037 = vsel %vm1878, %v5880, 0.0
        %v6038 = vsel %vm1879, %v5882, 0.0
        %v6039 = vsel %vm1880, %v5884, 0.0
        %v6040 = vsel %vm1881, %v5886, 0.0
        %v6041 = vsel %vm1882, %v5888, 0.0
        %v6042 = vsel %vm1883, %v5890, 0.0
        %v6043 = vsel %vm1884, %v5892, 0.0
        %v6044 = vsel %vm1885, %v5894, 0.0
        %v6045 = vsel %vm1886, %v5896, 0.0
        %v6046 = vsel %vm1887, %v5898, 0.0
        %v6047 = vsel %vm1888, %v5900, 0.0
        %v6048 = vsel %vm1889, %v5902, 0.0
        %v6049 = vsel %vm1890, %v5904, 0.0
        %v6050 = vsel %vm1891, %v5906, 0.0
        %v6051 = vsel %vm1892, %v5908, 0.0
        %v6052 = vsel %vm1893, %v5910, 0.0
        %v6053 = vsel %vm1894, %v5912, 0.0
        %v6054 = vsel %vm1895, %v5914, 0.0
        %v6055 = vsel %vm1896, %v5916, 0.0
        %v6056 = vsel %vm1897, %v5918, 0.0
        %v6057 = vsel %vm1898, %v5920, 0.0
        %v6058 = vsel %vm1899, %v5922, 0.0
        %v6059 = vsel %vm1900, %v5924, 0.0
        %v6060 = vsel %vm1901, %v5926, 0.0
        %v6061 = vsel %vm1902, %v5928, 0.0
        %v6062 = vsel %vm1903, %v5930, 0.0
        %v6063 = vsel %vm1904, %v5932, 0.0
        %v6064 = vsel %vm1905, %v5934, 0.0
        %v6065 = vsel %vm1906, %v5936, 0.0
        %v6066 = vsel %vm1907, %v5938, 0.0
        %v6067 = vld [vmem:[#allocation3] sm:$0xff]
        %v6068 = vld [vmem:[#allocation3 + $0x8] sm:$0xff]
        %v6069 = vld [vmem:[#allocation3 + $0x10] sm:$0xff]
        %v6070 = vld [vmem:[#allocation3 + $0x18] sm:$0xff]
        %v6071 = vld [vmem:[#allocation3 + $0x20] sm:$0xff]
        %v6072 = vld [vmem:[#allocation3 + $0x28] sm:$0xff]
        %v6073 = vld [vmem:[#allocation3 + $0x30] sm:$0xff]
        %v6074 = vld [vmem:[#allocation3 + $0x38] sm:$0xff]
        %v6075 = vld [vmem:[#allocation3 + $0x40] sm:$0xff]
        %v6076 = vld [vmem:[#allocation3 + $0x48] sm:$0xff]
        %v6077 = vld [vmem:[#allocation3 + $0x50] sm:$0xff]
        %v6078 = vld [vmem:[#allocation3 + $0x58] sm:$0xff]
        %v6079 = vld [vmem:[#allocation3 + $0x60] sm:$0xff]
        %v6080 = vld [vmem:[#allocation3 + $0x68] sm:$0xff]
        %v6081 = vld [vmem:[#allocation3 + $0x70] sm:$0xff]
        %v6082 = vld [vmem:[#allocation3 + $0x78] sm:$0xff]
        %v6083 = vld [vmem:[#allocation3 + $0x80] sm:$0xff]
        %v6084 = vld [vmem:[#allocation3 + $0x88] sm:$0xff]
        %v6085 = vld [vmem:[#allocation3 + $0x90] sm:$0xff]
        %v6086 = vld [vmem:[#allocation3 + $0x98] sm:$0xff]
        %v6087 = vld [vmem:[#allocation3 + $0xa0] sm:$0xff]
        %v6088 = vld [vmem:[#allocation3 + $0xa8] sm:$0xff]
        %v6089 = vld [vmem:[#allocation3 + $0xb0] sm:$0xff]
        %v6090 = vld [vmem:[#allocation3 + $0xb8] sm:$0xff]
        %v6091 = vld [vmem:[#allocation3 + $0xc0] sm:$0xff]
        %v6092 = vld [vmem:[#allocation3 + $0xc8] sm:$0xff]
        %v6093 = vld [vmem:[#allocation3 + $0xd0] sm:$0xff]
        %v6094 = vld [vmem:[#allocation3 + $0xd8] sm:$0xff]
        %v6095 = vld [vmem:[#allocation3 + $0xe0] sm:$0xff]
        %v6096 = vld [vmem:[#allocation3 + $0xe8] sm:$0xff]
        %v6097 = vld [vmem:[#allocation3 + $0xf0] sm:$0xff]
        %v6098 = vld [vmem:[#allocation3 + $0xf8] sm:$0xff]
        %v6099 = vmul.f32 %v5332, %v6067
        %v6100 = vmul.f32 %v5334, %v6068
        %v6101 = vmul.f32 %v5336, %v6069
        %v6102 = vmul.f32 %v5338, %v6070
        %v6103 = vmul.f32 %v5340, %v6071
        %v6104 = vmul.f32 %v5342, %v6072
        %v6105 = vmul.f32 %v5344, %v6073
        %v6106 = vmul.f32 %v5346, %v6074
        %v6107 = vmul.f32 %v5348, %v6075
        %v6108 = vmul.f32 %v5350, %v6076
        %v6109 = vmul.f32 %v5352, %v6077
        %v6110 = vmul.f32 %v5354, %v6078
        %v6111 = vmul.f32 %v5356, %v6079
        %v6112 = vmul.f32 %v5358, %v6080
        %v6113 = vmul.f32 %v5360, %v6081
        %v6114 = vmul.f32 %v5362, %v6082
        %v6115 = vmul.f32 %v5364, %v6083
        %v6116 = vmul.f32 %v5366, %v6084
        %v6117 = vmul.f32 %v5368, %v6085
        %v6118 = vmul.f32 %v5370, %v6086
        %v6119 = vmul.f32 %v5372, %v6087
        %v6120 = vmul.f32 %v5374, %v6088
        %v6121 = vmul.f32 %v5376, %v6089
        %v6122 = vmul.f32 %v5378, %v6090
        %v6123 = vmul.f32 %v5380, %v6091
        %v6124 = vmul.f32 %v5382, %v6092
        %v6125 = vmul.f32 %v5384, %v6093
        %v6126 = vmul.f32 %v5386, %v6094
        %v6127 = vmul.f32 %v5388, %v6095
        %v6128 = vmul.f32 %v5390, %v6096
        %v6129 = vmul.f32 %v5392, %v6097
        %v6130 = vmul.f32 %v5394, %v6098
        %v6131 = vadd.f32 %v5939, %v5940
        %v6132 = vadd.f32 %v6131, %v5941
        %v6133 = vadd.f32 %v6132, %v5942
        %6134 = vadd.xlane.f32.xlu0 %v6133
        %v6135 = vpop.xlane.xlu0 %6134
        %v6136 = vadd.f32 %v5943, %v5944
        %v6137 = vadd.f32 %v6136, %v5945
        %v6138 = vadd.f32 %v6137, %v5946
        %6139 = vadd.xlane.f32.xlu0 %v6138
        %v6140 = vpop.xlane.xlu0 %6139
        %v6141 = vadd.f32 %v5947, %v5948
        %v6142 = vadd.f32 %v6141, %v5949
        %v6143 = vadd.f32 %v6142, %v5950
        %6144 = vadd.xlane.f32.xlu0 %v6143
        %v6145 = vpop.xlane.xlu0 %6144
        %v6146 = vadd.f32 %v5951, %v5952
        %v6147 = vadd.f32 %v6146, %v5953
        %v6148 = vadd.f32 %v6147, %v5954
        %6149 = vadd.xlane.f32.xlu0 %v6148
        %v6150 = vpop.xlane.xlu0 %6149
        %v6151 = vadd.f32 %v5955, %v5956
        %v6152 = vadd.f32 %v6151, %v5957
        %v6153 = vadd.f32 %v6152, %v5958
        %6154 = vadd.xlane.f32.xlu0 %v6153
        %v6155 = vpop.xlane.xlu0 %6154
        %v6156 = vadd.f32 %v5959, %v5960
        %v6157 = vadd.f32 %v6156, %v5961
        %v6158 = vadd.f32 %v6157, %v5962
        %6159 = vadd.xlane.f32.xlu0 %v6158
        %v6160 = vpop.xlane.xlu0 %6159
        %v6161 = vadd.f32 %v5963, %v5964
        %v6162 = vadd.f32 %v6161, %v5965
        %v6163 = vadd.f32 %v6162, %v5966
        %6164 = vadd.xlane.f32.xlu0 %v6163
        %v6165 = vpop.xlane.xlu0 %6164
        %v6166 = vadd.f32 %v5967, %v5968
        %v6167 = vadd.f32 %v6166, %v5969
        %v6168 = vadd.f32 %v6167, %v5970
        %6169 = vadd.xlane.f32.xlu0 %v6168
        %v6170 = vpop.xlane.xlu0 %6169
        %v6171 = vadd.f32 %v5971, %v5972
        %v6172 = vadd.f32 %v6171, %v5973
        %v6173 = vadd.f32 %v6172, %v5974
        %6174 = vadd.xlane.f32.xlu0 %v6173
        %v6175 = vpop.xlane.xlu0 %6174
        %v6176 = vadd.f32 %v5975, %v5976
        %v6177 = vadd.f32 %v6176, %v5977
        %v6178 = vadd.f32 %v6177, %v5978
        %6179 = vadd.xlane.f32.xlu0 %v6178
        %v6180 = vpop.xlane.xlu0 %6179
        %v6181 = vadd.f32 %v5979, %v5980
        %v6182 = vadd.f32 %v6181, %v5981
        %v6183 = vadd.f32 %v6182, %v5982
        %6184 = vadd.xlane.f32.xlu0 %v6183
        %v6185 = vpop.xlane.xlu0 %6184
        %v6186 = vadd.f32 %v5983, %v5984
        %v6187 = vadd.f32 %v6186, %v5985
        %v6188 = vadd.f32 %v6187, %v5986
        %6189 = vadd.xlane.f32.xlu0 %v6188
        %v6190 = vpop.xlane.xlu0 %6189
        %v6191 = vadd.f32 %v5987, %v5988
        %v6192 = vadd.f32 %v6191, %v5989
        %v6193 = vadd.f32 %v6192, %v5990
        %6194 = vadd.xlane.f32.xlu0 %v6193
        %v6195 = vpop.xlane.xlu0 %6194
        %v6196 = vadd.f32 %v5991, %v5992
        %v6197 = vadd.f32 %v6196, %v5993
        %v6198 = vadd.f32 %v6197, %v5994
        %6199 = vadd.xlane.f32.xlu0 %v6198
        %v6200 = vpop.xlane.xlu0 %6199
        %v6201 = vadd.f32 %v5995, %v5996
        %v6202 = vadd.f32 %v6201, %v5997
        %v6203 = vadd.f32 %v6202, %v5998
        %6204 = vadd.xlane.f32.xlu0 %v6203
        %v6205 = vpop.xlane.xlu0 %6204
        %v6206 = vadd.f32 %v5999, %v6000
        %v6207 = vadd.f32 %v6206, %v6001
        %v6208 = vadd.f32 %v6207, %v6002
        %6209 = vadd.xlane.f32.xlu0 %v6208
        %v6210 = vpop.xlane.xlu0 %6209
        %v6211 = vadd.f32 %v6003, %v6004
        %v6212 = vadd.f32 %v6211, %v6005
        %v6213 = vadd.f32 %v6212, %v6006
        %6214 = vadd.xlane.f32.xlu0 %v6213
        %v6215 = vpop.xlane.xlu0 %6214
        %v6216 = vadd.f32 %v6007, %v6008
        %v6217 = vadd.f32 %v6216, %v6009
        %v6218 = vadd.f32 %v6217, %v6010
        %6219 = vadd.xlane.f32.xlu0 %v6218
        %v6220 = vpop.xlane.xlu0 %6219
        %v6221 = vadd.f32 %v6011, %v6012
        %v6222 = vadd.f32 %v6221, %v6013
        %v6223 = vadd.f32 %v6222, %v6014
        %6224 = vadd.xlane.f32.xlu0 %v6223
        %v6225 = vpop.xlane.xlu0 %6224
        %v6226 = vadd.f32 %v6015, %v6016
        %v6227 = vadd.f32 %v6226, %v6017
        %v6228 = vadd.f32 %v6227, %v6018
        %6229 = vadd.xlane.f32.xlu0 %v6228
        %v6230 = vpop.xlane.xlu0 %6229
        %v6231 = vadd.f32 %v6019, %v6020
        %v6232 = vadd.f32 %v6231, %v6021
        %v6233 = vadd.f32 %v6232, %v6022
        %6234 = vadd.xlane.f32.xlu0 %v6233
        %v6235 = vpop.xlane.xlu0 %6234
        %v6236 = vadd.f32 %v6023, %v6024
        %v6237 = vadd.f32 %v6236, %v6025
        %v6238 = vadd.f32 %v6237, %v6026
        %6239 = vadd.xlane.f32.xlu0 %v6238
        %v6240 = vpop.xlane.xlu0 %6239
        %v6241 = vadd.f32 %v6027, %v6028
        %v6242 = vadd.f32 %v6241, %v6029
        %v6243 = vadd.f32 %v6242, %v6030
        %6244 = vadd.xlane.f32.xlu0 %v6243
        %v6245 = vpop.xlane.xlu0 %6244
        %v6246 = vadd.f32 %v6031, %v6032
        %v6247 = vadd.f32 %v6246, %v6033
        %v6248 = vadd.f32 %v6247, %v6034
        %6249 = vadd.xlane.f32.xlu0 %v6248
        %v6250 = vpop.xlane.xlu0 %6249
        %v6251 = vadd.f32 %v6035, %v6036
        %v6252 = vadd.f32 %v6251, %v6037
        %v6253 = vadd.f32 %v6252, %v6038
        %6254 = vadd.xlane.f32.xlu0 %v6253
        %v6255 = vpop.xlane.xlu0 %6254
        %v6256 = vadd.f32 %v6039, %v6040
        %v6257 = vadd.f32 %v6256, %v6041
        %v6258 = vadd.f32 %v6257, %v6042
        %6259 = vadd.xlane.f32.xlu0 %v6258
        %v6260 = vpop.xlane.xlu0 %6259
        %v6261 = vadd.f32 %v6043, %v6044
        %v6262 = vadd.f32 %v6261, %v6045
        %v6263 = vadd.f32 %v6262, %v6046
        %6264 = vadd.xlane.f32.xlu0 %v6263
        %v6265 = vpop.xlane.xlu0 %6264
        %v6266 = vadd.f32 %v6047, %v6048
        %v6267 = vadd.f32 %v6266, %v6049
        %v6268 = vadd.f32 %v6267, %v6050
        %6269 = vadd.xlane.f32.xlu0 %v6268
        %v6270 = vpop.xlane.xlu0 %6269
        %v6271 = vadd.f32 %v6051, %v6052
        %v6272 = vadd.f32 %v6271, %v6053
        %v6273 = vadd.f32 %v6272, %v6054
        %6274 = vadd.xlane.f32.xlu0 %v6273
        %v6275 = vpop.xlane.xlu0 %6274
        %v6276 = vadd.f32 %v6055, %v6056
        %v6277 = vadd.f32 %v6276, %v6057
        %v6278 = vadd.f32 %v6277, %v6058
        %6279 = vadd.xlane.f32.xlu0 %v6278
        %v6280 = vpop.xlane.xlu0 %6279
        %v6281 = vadd.f32 %v6059, %v6060
        %v6282 = vadd.f32 %v6281, %v6061
        %v6283 = vadd.f32 %v6282, %v6062
        %6284 = vadd.xlane.f32.xlu0 %v6283
        %v6285 = vpop.xlane.xlu0 %6284
        %v6286 = vadd.f32 %v6063, %v6064
        %v6287 = vadd.f32 %v6286, %v6065
        %v6288 = vadd.f32 %v6287, %v6066
        %6289 = vadd.xlane.f32.xlu0 %v6288
        %v6290 = vpop.xlane.xlu0 %6289
        %v6291 = vadd.f32 %v6099, %v6135
        %v6292 = vadd.f32 %v6100, %v6140
        %v6293 = vadd.f32 %v6101, %v6145
        %v6294 = vadd.f32 %v6102, %v6150
        %v6295 = vadd.f32 %v6103, %v6155
        %v6296 = vadd.f32 %v6104, %v6160
        %v6297 = vadd.f32 %v6105, %v6165
        %v6298 = vadd.f32 %v6106, %v6170
        %v6299 = vadd.f32 %v6107, %v6175
        %v6300 = vadd.f32 %v6108, %v6180
        %v6301 = vadd.f32 %v6109, %v6185
        %v6302 = vadd.f32 %v6110, %v6190
        %v6303 = vadd.f32 %v6111, %v6195
        %v6304 = vadd.f32 %v6112, %v6200
        %v6305 = vadd.f32 %v6113, %v6205
        %v6306 = vadd.f32 %v6114, %v6210
        %v6307 = vadd.f32 %v6115, %v6215
        %v6308 = vadd.f32 %v6116, %v6220
        %v6309 = vadd.f32 %v6117, %v6225
        %v6310 = vadd.f32 %v6118, %v6230
        %v6311 = vadd.f32 %v6119, %v6235
        %v6312 = vadd.f32 %v6120, %v6240
        %v6313 = vadd.f32 %v6121, %v6245
        %v6314 = vadd.f32 %v6122, %v6250
        %v6315 = vadd.f32 %v6123, %v6255
        %v6316 = vadd.f32 %v6124, %v6260
        %v6317 = vadd.f32 %v6125, %v6265
        %v6318 = vadd.f32 %v6126, %v6270
        %v6319 = vadd.f32 %v6127, %v6275
        %v6320 = vadd.f32 %v6128, %v6280
        %v6321 = vadd.f32 %v6129, %v6285
        %v6322 = vadd.f32 %v6130, %v6290
        %vm6323 = vcmask 15368
        %6324 = vst.msk [vmem:[#allocation3] sm:$0xff] %vm6323, %v6291
        %6325 = vst.msk [vmem:[#allocation3 + $0x8] sm:$0xff] %vm6323, %v6292
        %6326 = vst.msk [vmem:[#allocation3 + $0x10] sm:$0xff] %vm6323, %v6293
        %6327 = vst.msk [vmem:[#allocation3 + $0x18] sm:$0xff] %vm6323, %v6294
        %6328 = vst.msk [vmem:[#allocation3 + $0x20] sm:$0xff] %vm6323, %v6295
        %6329 = vst.msk [vmem:[#allocation3 + $0x28] sm:$0xff] %vm6323, %v6296
        %6330 = vst.msk [vmem:[#allocation3 + $0x30] sm:$0xff] %vm6323, %v6297
        %6331 = vst.msk [vmem:[#allocation3 + $0x38] sm:$0xff] %vm6323, %v6298
        %6332 = vst.msk [vmem:[#allocation3 + $0x40] sm:$0xff] %vm6323, %v6299
        %6333 = vst.msk [vmem:[#allocation3 + $0x48] sm:$0xff] %vm6323, %v6300
        %6334 = vst.msk [vmem:[#allocation3 + $0x50] sm:$0xff] %vm6323, %v6301
        %6335 = vst.msk [vmem:[#allocation3 + $0x58] sm:$0xff] %vm6323, %v6302
        %6336 = vst.msk [vmem:[#allocation3 + $0x60] sm:$0xff] %vm6323, %v6303
        %6337 = vst.msk [vmem:[#allocation3 + $0x68] sm:$0xff] %vm6323, %v6304
        %6338 = vst.msk [vmem:[#allocation3 + $0x70] sm:$0xff] %vm6323, %v6305
        %6339 = vst.msk [vmem:[#allocation3 + $0x78] sm:$0xff] %vm6323, %v6306
        %6340 = vst.msk [vmem:[#allocation3 + $0x80] sm:$0xff] %vm6323, %v6307
        %6341 = vst.msk [vmem:[#allocation3 + $0x88] sm:$0xff] %vm6323, %v6308
        %6342 = vst.msk [vmem:[#allocation3 + $0x90] sm:$0xff] %vm6323, %v6309
        %6343 = vst.msk [vmem:[#allocation3 + $0x98] sm:$0xff] %vm6323, %v6310
        %6344 = vst.msk [vmem:[#allocation3 + $0xa0] sm:$0xff] %vm6323, %v6311
        %6345 = vst.msk [vmem:[#allocation3 + $0xa8] sm:$0xff] %vm6323, %v6312
        %6346 = vst.msk [vmem:[#allocation3 + $0xb0] sm:$0xff] %vm6323, %v6313
        %6347 = vst.msk [vmem:[#allocation3 + $0xb8] sm:$0xff] %vm6323, %v6314
        %6348 = vst.msk [vmem:[#allocation3 + $0xc0] sm:$0xff] %vm6323, %v6315
        %6349 = vst.msk [vmem:[#allocation3 + $0xc8] sm:$0xff] %vm6323, %v6316
        %6350 = vst.msk [vmem:[#allocation3 + $0xd0] sm:$0xff] %vm6323, %v6317
        %6351 = vst.msk [vmem:[#allocation3 + $0xd8] sm:$0xff] %vm6323, %v6318
        %6352 = vst.msk [vmem:[#allocation3 + $0xe0] sm:$0xff] %vm6323, %v6319
        %6353 = vst.msk [vmem:[#allocation3 + $0xe8] sm:$0xff] %vm6323, %v6320
        %6354 = vst.msk [vmem:[#allocation3 + $0xf0] sm:$0xff] %vm6323, %v6321
        %6355 = vst.msk [vmem:[#allocation3 + $0xf8] sm:$0xff] %vm6323, %v6322
        %6356 = vst.msk [vmem:[#allocation2] sm:$0xff] %vm6323, %v5267
        %6357 = vst.msk [vmem:[#allocation2 + $0x8] sm:$0xff] %vm6323, %v5268
        %6358 = vst.msk [vmem:[#allocation2 + $0x10] sm:$0xff] %vm6323, %v5269
        %6359 = vst.msk [vmem:[#allocation2 + $0x18] sm:$0xff] %vm6323, %v5270
        %6360 = vst.msk [vmem:[#allocation2 + $0x20] sm:$0xff] %vm6323, %v5271
        %6361 = vst.msk [vmem:[#allocation2 + $0x28] sm:$0xff] %vm6323, %v5272
        %6362 = vst.msk [vmem:[#allocation2 + $0x30] sm:$0xff] %vm6323, %v5273
        %6363 = vst.msk [vmem:[#allocation2 + $0x38] sm:$0xff] %vm6323, %v5274
        %6364 = vst.msk [vmem:[#allocation2 + $0x40] sm:$0xff] %vm6323, %v5275
        %6365 = vst.msk [vmem:[#allocation2 + $0x48] sm:$0xff] %vm6323, %v5276
        %6366 = vst.msk [vmem:[#allocation2 + $0x50] sm:$0xff] %vm6323, %v5277
        %6367 = vst.msk [vmem:[#allocation2 + $0x58] sm:$0xff] %vm6323, %v5278
        %6368 = vst.msk [vmem:[#allocation2 + $0x60] sm:$0xff] %vm6323, %v5279
        %6369 = vst.msk [vmem:[#allocation2 + $0x68] sm:$0xff] %vm6323, %v5280
        %6370 = vst.msk [vmem:[#allocation2 + $0x70] sm:$0xff] %vm6323, %v5281
        %6371 = vst.msk [vmem:[#allocation2 + $0x78] sm:$0xff] %vm6323, %v5282
        %6372 = vst.msk [vmem:[#allocation2 + $0x80] sm:$0xff] %vm6323, %v5283
        %6373 = vst.msk [vmem:[#allocation2 + $0x88] sm:$0xff] %vm6323, %v5284
        %6374 = vst.msk [vmem:[#allocation2 + $0x90] sm:$0xff] %vm6323, %v5285
        %6375 = vst.msk [vmem:[#allocation2 + $0x98] sm:$0xff] %vm6323, %v5286
        %6376 = vst.msk [vmem:[#allocation2 + $0xa0] sm:$0xff] %vm6323, %v5287
        %6377 = vst.msk [vmem:[#allocation2 + $0xa8] sm:$0xff] %vm6323, %v5288
        %6378 = vst.msk [vmem:[#allocation2 + $0xb0] sm:$0xff] %vm6323, %v5289
        %6379 = vst.msk [vmem:[#allocation2 + $0xb8] sm:$0xff] %vm6323, %v5290
        %6380 = vst.msk [vmem:[#allocation2 + $0xc0] sm:$0xff] %vm6323, %v5291
        %6381 = vst.msk [vmem:[#allocation2 + $0xc8] sm:$0xff] %vm6323, %v5292
        %6382 = vst.msk [vmem:[#allocation2 + $0xd0] sm:$0xff] %vm6323, %v5293
        %6383 = vst.msk [vmem:[#allocation2 + $0xd8] sm:$0xff] %vm6323, %v5294
        %6384 = vst.msk [vmem:[#allocation2 + $0xe0] sm:$0xff] %vm6323, %v5295
        %6385 = vst.msk [vmem:[#allocation2 + $0xe8] sm:$0xff] %vm6323, %v5296
        %6386 = vst.msk [vmem:[#allocation2 + $0xf0] sm:$0xff] %vm6323, %v5297
        %6387 = vst.msk [vmem:[#allocation2 + $0xf8] sm:$0xff] %vm6323, %v5298
        %v6388 = vpack.c.bf16 %v5943, %v5939
        %v6389 = vpack.c.bf16 %v5944, %v5940
        %v6390 = vpack.c.bf16 %v5945, %v5941
        %v6391 = vpack.c.bf16 %v5946, %v5942
        %v6392 = vpack.c.bf16 %v5951, %v5947
        %v6393 = vpack.c.bf16 %v5952, %v5948
        %v6394 = vpack.c.bf16 %v5953, %v5949
        %v6395 = vpack.c.bf16 %v5954, %v5950
        %v6396 = vpack.c.bf16 %v5959, %v5955
        %v6397 = vpack.c.bf16 %v5960, %v5956
        %v6398 = vpack.c.bf16 %v5961, %v5957
        %v6399 = vpack.c.bf16 %v5962, %v5958
        %v6400 = vpack.c.bf16 %v5967, %v5963
        %v6401 = vpack.c.bf16 %v5968, %v5964
        %v6402 = vpack.c.bf16 %v5969, %v5965
        %v6403 = vpack.c.bf16 %v5970, %v5966
        %v6404 = vpack.c.bf16 %v5975, %v5971
        %v6405 = vpack.c.bf16 %v5976, %v5972
        %v6406 = vpack.c.bf16 %v5977, %v5973
        %v6407 = vpack.c.bf16 %v5978, %v5974
        %v6408 = vpack.c.bf16 %v5983, %v5979
        %v6409 = vpack.c.bf16 %v5984, %v5980
        %v6410 = vpack.c.bf16 %v5985, %v5981
        %v6411 = vpack.c.bf16 %v5986, %v5982
        %v6412 = vpack.c.bf16 %v5991, %v5987
        %v6413 = vpack.c.bf16 %v5992, %v5988
        %v6414 = vpack.c.bf16 %v5993, %v5989
        %v6415 = vpack.c.bf16 %v5994, %v5990
        %v6416 = vpack.c.bf16 %v5999, %v5995
        %v6417 = vpack.c.bf16 %v6000, %v5996
        %v6418 = vpack.c.bf16 %v6001, %v5997
        %v6419 = vpack.c.bf16 %v6002, %v5998
        %v6420 = vpack.c.bf16 %v6007, %v6003
        %v6421 = vpack.c.bf16 %v6008, %v6004
        %v6422 = vpack.c.bf16 %v6009, %v6005
        %v6423 = vpack.c.bf16 %v6010, %v6006
        %v6424 = vpack.c.bf16 %v6015, %v6011
        %v6425 = vpack.c.bf16 %v6016, %v6012
        %v6426 = vpack.c.bf16 %v6017, %v6013
        %v6427 = vpack.c.bf16 %v6018, %v6014
        %v6428 = vpack.c.bf16 %v6023, %v6019
        %v6429 = vpack.c.bf16 %v6024, %v6020
        %v6430 = vpack.c.bf16 %v6025, %v6021
        %v6431 = vpack.c.bf16 %v6026, %v6022
        %v6432 = vpack.c.bf16 %v6031, %v6027
        %v6433 = vpack.c.bf16 %v6032, %v6028
        %v6434 = vpack.c.bf16 %v6033, %v6029
        %v6435 = vpack.c.bf16 %v6034, %v6030
        %v6436 = vpack.c.bf16 %v6039, %v6035
        %v6437 = vpack.c.bf16 %v6040, %v6036
        %v6438 = vpack.c.bf16 %v6041, %v6037
        %v6439 = vpack.c.bf16 %v6042, %v6038
        %v6440 = vpack.c.bf16 %v6047, %v6043
        %v6441 = vpack.c.bf16 %v6048, %v6044
        %v6442 = vpack.c.bf16 %v6049, %v6045
        %v6443 = vpack.c.bf16 %v6050, %v6046
        %v6444 = vpack.c.bf16 %v6055, %v6051
        %v6445 = vpack.c.bf16 %v6056, %v6052
        %v6446 = vpack.c.bf16 %v6057, %v6053
        %v6447 = vpack.c.bf16 %v6058, %v6054
        %v6448 = vpack.c.bf16 %v6063, %v6059
        %v6449 = vpack.c.bf16 %v6064, %v6060
        %v6450 = vpack.c.bf16 %v6065, %v6061
        %v6451 = vpack.c.bf16 %v6066, %v6062
        %6452 = vmatprep.subr.bf16.mxu0 0
        %6453 = vmatpush1.bf16.msra.mxu0 %v3548
        %6454 = vmatprep.subr.bf16.mxu0 0
        %6455 = vmatpush1.bf16.msra.mxu0 %v3547
        %6456 = vmatprep.subr.bf16.mxu0 0
        %6457 = vmatpush1.bf16.msra.mxu0 %v3546
        %6458 = vmatprep.subr.bf16.mxu0 0
        %6459 = vmatpush1.bf16.msra.mxu0 %v3545
        %6460 = vmatprep.subr.bf16.mxu0 0
        %6461 = vmatpush1.bf16.msra.mxu0 %v3544
        %6462 = vmatprep.subr.bf16.mxu0 0
        %6463 = vmatpush1.bf16.msra.mxu0 %v3543
        %6464 = vmatprep.subr.bf16.mxu0 0
        %6465 = vmatpush1.bf16.msra.mxu0 %v3542
        %6466 = vmatprep.subr.bf16.mxu0 0
        %6467 = vmatpush1.bf16.msra.mxu0 %v3541
        %6468 = vmatprep.subr.bf16.mxu0 0
        %6469 = vmatpush2.bf16.msra.mxu0 %v3556
        %6470 = vmatprep.subr.bf16.mxu0 0
        %6471 = vmatpush2.bf16.msra.mxu0 %v3555
        %6472 = vmatprep.subr.bf16.mxu0 0
        %6473 = vmatpush2.bf16.msra.mxu0 %v3554
        %6474 = vmatprep.subr.bf16.mxu0 0
        %6475 = vmatpush2.bf16.msra.mxu0 %v3553
        %6476 = vmatprep.subr.bf16.mxu0 0
        %6477 = vmatpush2.bf16.msra.mxu0 %v3552
        %6478 = vmatprep.subr.bf16.mxu0 0
        %6479 = vmatpush2.bf16.msra.mxu0 %v3551
        %6480 = vmatprep.subr.bf16.mxu0 0
        %6481 = vmatpush2.bf16.msra.mxu0 %v3550
        %6482 = vmatprep.subr.bf16.mxu0 0
        %6483 = vmatpush2.bf16.msra.mxu0 %v3549
        %6484 = vmatprep.mubr.bf16.mxu0 %v6389
        %6485 = vmatmul.mubr.bf16.gmra.mxu0 %v6388
        %v6486 = vpop.f32.mrf.mxu0
        %v6487 = vadd.f32 0.0, %v6486
        %v6488 = vpop.f32.mrf.mxu0
        %v6489 = vpop.f32.mrf.mxu0
        %v6490 = vadd.f32 0.0, %v6489
        %v6491 = vpop.f32.mrf.mxu0
        %6492 = vmatprep.mubr.bf16.mxu0 %v6393
        %6493 = vmatmul.mubr.bf16.gmra.mxu0 %v6392
        %v6494 = vpop.f32.mrf.mxu0
        %v6495 = vadd.f32 0.0, %v6494
        %v6496 = vpop.f32.mrf.mxu0
        %v6497 = vpop.f32.mrf.mxu0
        %v6498 = vadd.f32 0.0, %v6497
        %v6499 = vpop.f32.mrf.mxu0
        %6500 = vmatprep.mubr.bf16.mxu0 %v6397
        %6501 = vmatmul.mubr.bf16.gmra.mxu0 %v6396
        %v6502 = vpop.f32.mrf.mxu0
        %v6503 = vadd.f32 0.0, %v6502
        %v6504 = vpop.f32.mrf.mxu0
        %v6505 = vpop.f32.mrf.mxu0
        %v6506 = vadd.f32 0.0, %v6505
        %v6507 = vpop.f32.mrf.mxu0
        %6508 = vmatprep.mubr.bf16.mxu0 %v6401
        %6509 = vmatmul.mubr.bf16.gmra.mxu0 %v6400
        %v6510 = vpop.f32.mrf.mxu0
        %v6511 = vadd.f32 0.0, %v6510
        %v6512 = vpop.f32.mrf.mxu0
        %v6513 = vpop.f32.mrf.mxu0
        %v6514 = vadd.f32 0.0, %v6513
        %v6515 = vpop.f32.mrf.mxu0
        %6516 = vmatprep.mubr.bf16.mxu0 %v6405
        %6517 = vmatmul.mubr.bf16.gmra.mxu0 %v6404
        %v6518 = vpop.f32.mrf.mxu0
        %v6519 = vadd.f32 0.0, %v6518
        %v6520 = vpop.f32.mrf.mxu0
        %v6521 = vpop.f32.mrf.mxu0
        %v6522 = vadd.f32 0.0, %v6521
        %v6523 = vpop.f32.mrf.mxu0
        %6524 = vmatprep.mubr.bf16.mxu0 %v6409
        %6525 = vmatmul.mubr.bf16.gmra.mxu0 %v6408
        %v6526 = vpop.f32.mrf.mxu0
        %v6527 = vadd.f32 0.0, %v6526
        %v6528 = vpop.f32.mrf.mxu0
        %v6529 = vpop.f32.mrf.mxu0
        %v6530 = vadd.f32 0.0, %v6529
        %v6531 = vpop.f32.mrf.mxu0
        %6532 = vmatprep.mubr.bf16.mxu0 %v6413
        %6533 = vmatmul.mubr.bf16.gmra.mxu0 %v6412
        %v6534 = vpop.f32.mrf.mxu0
        %v6535 = vadd.f32 0.0, %v6534
        %v6536 = vpop.f32.mrf.mxu0
        %v6537 = vpop.f32.mrf.mxu0
        %v6538 = vadd.f32 0.0, %v6537
        %v6539 = vpop.f32.mrf.mxu0
        %6540 = vmatprep.mubr.bf16.mxu0 %v6417
        %6541 = vmatmul.mubr.bf16.gmra.mxu0 %v6416
        %v6542 = vpop.f32.mrf.mxu0
        %v6543 = vadd.f32 0.0, %v6542
        %v6544 = vpop.f32.mrf.mxu0
        %v6545 = vpop.f32.mrf.mxu0
        %v6546 = vadd.f32 0.0, %v6545
        %v6547 = vpop.f32.mrf.mxu0
        %6548 = vmatprep.mubr.bf16.mxu0 %v6421
        %6549 = vmatmul.mubr.bf16.gmra.mxu0 %v6420
        %v6550 = vpop.f32.mrf.mxu0
        %v6551 = vadd.f32 0.0, %v6550
        %v6552 = vpop.f32.mrf.mxu0
        %v6553 = vpop.f32.mrf.mxu0
        %v6554 = vadd.f32 0.0, %v6553
        %v6555 = vpop.f32.mrf.mxu0
        %6556 = vmatprep.mubr.bf16.mxu0 %v6425
        %6557 = vmatmul.mubr.bf16.gmra.mxu0 %v6424
        %v6558 = vpop.f32.mrf.mxu0
        %v6559 = vadd.f32 0.0, %v6558
        %v6560 = vpop.f32.mrf.mxu0
        %v6561 = vpop.f32.mrf.mxu0
        %v6562 = vadd.f32 0.0, %v6561
        %v6563 = vpop.f32.mrf.mxu0
        %6564 = vmatprep.mubr.bf16.mxu0 %v6429
        %6565 = vmatmul.mubr.bf16.gmra.mxu0 %v6428
        %v6566 = vpop.f32.mrf.mxu0
        %v6567 = vadd.f32 0.0, %v6566
        %v6568 = vpop.f32.mrf.mxu0
        %v6569 = vpop.f32.mrf.mxu0
        %v6570 = vadd.f32 0.0, %v6569
        %v6571 = vpop.f32.mrf.mxu0
        %6572 = vmatprep.mubr.bf16.mxu0 %v6433
        %6573 = vmatmul.mubr.bf16.gmra.mxu0 %v6432
        %v6574 = vpop.f32.mrf.mxu0
        %v6575 = vadd.f32 0.0, %v6574
        %v6576 = vpop.f32.mrf.mxu0
        %v6577 = vpop.f32.mrf.mxu0
        %v6578 = vadd.f32 0.0, %v6577
        %v6579 = vpop.f32.mrf.mxu0
        %6580 = vmatprep.mubr.bf16.mxu0 %v6437
        %6581 = vmatmul.mubr.bf16.gmra.mxu0 %v6436
        %v6582 = vpop.f32.mrf.mxu0
        %v6583 = vadd.f32 0.0, %v6582
        %v6584 = vpop.f32.mrf.mxu0
        %v6585 = vpop.f32.mrf.mxu0
        %v6586 = vadd.f32 0.0, %v6585
        %v6587 = vpop.f32.mrf.mxu0
        %6588 = vmatprep.mubr.bf16.mxu0 %v6441
        %6589 = vmatmul.mubr.bf16.gmra.mxu0 %v6440
        %v6590 = vpop.f32.mrf.mxu0
        %v6591 = vadd.f32 0.0, %v6590
        %v6592 = vpop.f32.mrf.mxu0
        %v6593 = vpop.f32.mrf.mxu0
        %v6594 = vadd.f32 0.0, %v6593
        %v6595 = vpop.f32.mrf.mxu0
        %6596 = vmatprep.mubr.bf16.mxu0 %v6445
        %6597 = vmatmul.mubr.bf16.gmra.mxu0 %v6444
        %v6598 = vpop.f32.mrf.mxu0
        %v6599 = vadd.f32 0.0, %v6598
        %v6600 = vpop.f32.mrf.mxu0
        %v6601 = vpop.f32.mrf.mxu0
        %v6602 = vadd.f32 0.0, %v6601
        %v6603 = vpop.f32.mrf.mxu0
        %6604 = vmatprep.mubr.bf16.mxu0 %v6449
        %6605 = vmatmul.mubr.bf16.gmra.mxu0 %v6448
        %v6606 = vpop.f32.mrf.mxu0
        %v6607 = vadd.f32 0.0, %v6606
        %v6608 = vpop.f32.mrf.mxu0
        %v6609 = vpop.f32.mrf.mxu0
        %v6610 = vadd.f32 0.0, %v6609
        %v6611 = vpop.f32.mrf.mxu0
        %6612 = vdwg.mxu0
        %6613 = vmatprep.subr.bf16.mxu0 0
        %6614 = vmatpush1.bf16.msra.mxu0 %v3564
        %6615 = vmatprep.subr.bf16.mxu0 0
        %6616 = vmatpush1.bf16.msra.mxu0 %v3563
        %6617 = vmatprep.subr.bf16.mxu0 0
        %6618 = vmatpush1.bf16.msra.mxu0 %v3562
        %6619 = vmatprep.subr.bf16.mxu0 0
        %6620 = vmatpush1.bf16.msra.mxu0 %v3561
        %6621 = vmatprep.subr.bf16.mxu0 0
        %6622 = vmatpush1.bf16.msra.mxu0 %v3560
        %6623 = vmatprep.subr.bf16.mxu0 0
        %6624 = vmatpush1.bf16.msra.mxu0 %v3559
        %6625 = vmatprep.subr.bf16.mxu0 0
        %6626 = vmatpush1.bf16.msra.mxu0 %v3558
        %6627 = vmatprep.subr.bf16.mxu0 0
        %6628 = vmatpush1.bf16.msra.mxu0 %v3557
        %6629 = vmatprep.subr.bf16.mxu0 0
        %6630 = vmatpush2.bf16.msra.mxu0 %v3572
        %6631 = vmatprep.subr.bf16.mxu0 0
        %6632 = vmatpush2.bf16.msra.mxu0 %v3571
        %6633 = vmatprep.subr.bf16.mxu0 0
        %6634 = vmatpush2.bf16.msra.mxu0 %v3570
        %6635 = vmatprep.subr.bf16.mxu0 0
        %6636 = vmatpush2.bf16.msra.mxu0 %v3569
        %6637 = vmatprep.subr.bf16.mxu0 0
        %6638 = vmatpush2.bf16.msra.mxu0 %v3568
        %6639 = vmatprep.subr.bf16.mxu0 0
        %6640 = vmatpush2.bf16.msra.mxu0 %v3567
        %6641 = vmatprep.subr.bf16.mxu0 0
        %6642 = vmatpush2.bf16.msra.mxu0 %v3566
        %6643 = vmatprep.subr.bf16.mxu0 0
        %6644 = vmatpush2.bf16.msra.mxu0 %v3565
        %6645 = vmatprep.mubr.bf16.mxu0 %v6391
        %6646 = vmatmul.mubr.bf16.gmra.mxu0 %v6390
        %v6647 = vpop.f32.mrf.mxu0
        %v6648 = vadd.f32 %v6487, %v6647
        %v6649 = vpop.f32.mrf.mxu0
        %v6650 = vpop.f32.mrf.mxu0
        %v6651 = vadd.f32 %v6490, %v6650
        %v6652 = vpop.f32.mrf.mxu0
        %6653 = vmatprep.mubr.bf16.mxu0 %v6395
        %6654 = vmatmul.mubr.bf16.gmra.mxu0 %v6394
        %v6655 = vpop.f32.mrf.mxu0
        %v6656 = vadd.f32 %v6495, %v6655
        %v6657 = vpop.f32.mrf.mxu0
        %v6658 = vpop.f32.mrf.mxu0
        %v6659 = vadd.f32 %v6498, %v6658
        %v6660 = vpop.f32.mrf.mxu0
        %6661 = vmatprep.mubr.bf16.mxu0 %v6399
        %6662 = vmatmul.mubr.bf16.gmra.mxu0 %v6398
        %v6663 = vpop.f32.mrf.mxu0
        %v6664 = vadd.f32 %v6503, %v6663
        %v6665 = vpop.f32.mrf.mxu0
        %v6666 = vpop.f32.mrf.mxu0
        %v6667 = vadd.f32 %v6506, %v6666
        %v6668 = vpop.f32.mrf.mxu0
        %6669 = vmatprep.mubr.bf16.mxu0 %v6403
        %6670 = vmatmul.mubr.bf16.gmra.mxu0 %v6402
        %v6671 = vpop.f32.mrf.mxu0
        %v6672 = vadd.f32 %v6511, %v6671
        %v6673 = vpop.f32.mrf.mxu0
        %v6674 = vpop.f32.mrf.mxu0
        %v6675 = vadd.f32 %v6514, %v6674
        %v6676 = vpop.f32.mrf.mxu0
        %6677 = vmatprep.mubr.bf16.mxu0 %v6407
        %6678 = vmatmul.mubr.bf16.gmra.mxu0 %v6406
        %v6679 = vpop.f32.mrf.mxu0
        %v6680 = vadd.f32 %v6519, %v6679
        %v6681 = vpop.f32.mrf.mxu0
        %v6682 = vpop.f32.mrf.mxu0
        %v6683 = vadd.f32 %v6522, %v6682
        %v6684 = vpop.f32.mrf.mxu0
        %6685 = vmatprep.mubr.bf16.mxu0 %v6411
        %6686 = vmatmul.mubr.bf16.gmra.mxu0 %v6410
        %v6687 = vpop.f32.mrf.mxu0
        %v6688 = vadd.f32 %v6527, %v6687
        %v6689 = vpop.f32.mrf.mxu0
        %v6690 = vpop.f32.mrf.mxu0
        %v6691 = vadd.f32 %v6530, %v6690
        %v6692 = vpop.f32.mrf.mxu0
        %6693 = vmatprep.mubr.bf16.mxu0 %v6415
        %6694 = vmatmul.mubr.bf16.gmra.mxu0 %v6414
        %v6695 = vpop.f32.mrf.mxu0
        %v6696 = vadd.f32 %v6535, %v6695
        %v6697 = vpop.f32.mrf.mxu0
        %v6698 = vpop.f32.mrf.mxu0
        %v6699 = vadd.f32 %v6538, %v6698
        %v6700 = vpop.f32.mrf.mxu0
        %6701 = vmatprep.mubr.bf16.mxu0 %v6419
        %6702 = vmatmul.mubr.bf16.gmra.mxu0 %v6418
        %v6703 = vpop.f32.mrf.mxu0
        %v6704 = vadd.f32 %v6543, %v6703
        %v6705 = vpop.f32.mrf.mxu0
        %v6706 = vpop.f32.mrf.mxu0
        %v6707 = vadd.f32 %v6546, %v6706
        %v6708 = vpop.f32.mrf.mxu0
        %6709 = vmatprep.mubr.bf16.mxu0 %v6423
        %6710 = vmatmul.mubr.bf16.gmra.mxu0 %v6422
        %v6711 = vpop.f32.mrf.mxu0
        %v6712 = vadd.f32 %v6551, %v6711
        %v6713 = vpop.f32.mrf.mxu0
        %v6714 = vpop.f32.mrf.mxu0
        %v6715 = vadd.f32 %v6554, %v6714
        %v6716 = vpop.f32.mrf.mxu0
        %6717 = vmatprep.mubr.bf16.mxu0 %v6427
        %6718 = vmatmul.mubr.bf16.gmra.mxu0 %v6426
        %v6719 = vpop.f32.mrf.mxu0
        %v6720 = vadd.f32 %v6559, %v6719
        %v6721 = vpop.f32.mrf.mxu0
        %v6722 = vpop.f32.mrf.mxu0
        %v6723 = vadd.f32 %v6562, %v6722
        %v6724 = vpop.f32.mrf.mxu0
        %6725 = vmatprep.mubr.bf16.mxu0 %v6431
        %6726 = vmatmul.mubr.bf16.gmra.mxu0 %v6430
        %v6727 = vpop.f32.mrf.mxu0
        %v6728 = vadd.f32 %v6567, %v6727
        %v6729 = vpop.f32.mrf.mxu0
        %v6730 = vpop.f32.mrf.mxu0
        %v6731 = vadd.f32 %v6570, %v6730
        %v6732 = vpop.f32.mrf.mxu0
        %6733 = vmatprep.mubr.bf16.mxu0 %v6435
        %6734 = vmatmul.mubr.bf16.gmra.mxu0 %v6434
        %v6735 = vpop.f32.mrf.mxu0
        %v6736 = vadd.f32 %v6575, %v6735
        %v6737 = vpop.f32.mrf.mxu0
        %v6738 = vpop.f32.mrf.mxu0
        %v6739 = vadd.f32 %v6578, %v6738
        %v6740 = vpop.f32.mrf.mxu0
        %6741 = vmatprep.mubr.bf16.mxu0 %v6439
        %6742 = vmatmul.mubr.bf16.gmra.mxu0 %v6438
        %v6743 = vpop.f32.mrf.mxu0
        %v6744 = vadd.f32 %v6583, %v6743
        %v6745 = vpop.f32.mrf.mxu0
        %v6746 = vpop.f32.mrf.mxu0
        %v6747 = vadd.f32 %v6586, %v6746
        %v6748 = vpop.f32.mrf.mxu0
        %6749 = vmatprep.mubr.bf16.mxu0 %v6443
        %6750 = vmatmul.mubr.bf16.gmra.mxu0 %v6442
        %v6751 = vpop.f32.mrf.mxu0
        %v6752 = vadd.f32 %v6591, %v6751
        %v6753 = vpop.f32.mrf.mxu0
        %v6754 = vpop.f32.mrf.mxu0
        %v6755 = vadd.f32 %v6594, %v6754
        %v6756 = vpop.f32.mrf.mxu0
        %6757 = vmatprep.mubr.bf16.mxu0 %v6447
        %6758 = vmatmul.mubr.bf16.gmra.mxu0 %v6446
        %v6759 = vpop.f32.mrf.mxu0
        %v6760 = vadd.f32 %v6599, %v6759
        %v6761 = vpop.f32.mrf.mxu0
        %v6762 = vpop.f32.mrf.mxu0
        %v6763 = vadd.f32 %v6602, %v6762
        %v6764 = vpop.f32.mrf.mxu0
        %6765 = vmatprep.mubr.bf16.mxu0 %v6451
        %6766 = vmatmul.mubr.bf16.gmra.mxu0 %v6450
        %v6767 = vpop.f32.mrf.mxu0
        %v6768 = vadd.f32 %v6607, %v6767
        %v6769 = vpop.f32.mrf.mxu0
        %v6770 = vpop.f32.mrf.mxu0
        %v6771 = vadd.f32 %v6610, %v6770
        %v6772 = vpop.f32.mrf.mxu0
        %6773 = vdwg.mxu0
        %6775 = vset.pattern.permute.xlu0 1
        %6776 = vperm.xlu0 %6775, %v5332
        %v6777 = vpop.permute.xlu0 %6776
        %6780 = vset.pattern.permute.xlu0 1
        %6781 = vperm.xlu0 %6780, %v5334
        %v6782 = vpop.permute.xlu0 %6781
        %6785 = vset.pattern.permute.xlu0 1
        %6786 = vperm.xlu0 %6785, %v5336
        %v6787 = vpop.permute.xlu0 %6786
        %6790 = vset.pattern.permute.xlu0 1
        %6791 = vperm.xlu0 %6790, %v5338
        %v6792 = vpop.permute.xlu0 %6791
        %6795 = vset.pattern.permute.xlu0 1
        %6796 = vperm.xlu0 %6795, %v5340
        %v6797 = vpop.permute.xlu0 %6796
        %6800 = vset.pattern.permute.xlu0 1
        %6801 = vperm.xlu0 %6800, %v5342
        %v6802 = vpop.permute.xlu0 %6801
        %6805 = vset.pattern.permute.xlu0 1
        %6806 = vperm.xlu0 %6805, %v5344
        %v6807 = vpop.permute.xlu0 %6806
        %6810 = vset.pattern.permute.xlu0 1
        %6811 = vperm.xlu0 %6810, %v5346
        %v6812 = vpop.permute.xlu0 %6811
        %6815 = vset.pattern.permute.xlu0 1
        %6816 = vperm.xlu0 %6815, %v5348
        %v6817 = vpop.permute.xlu0 %6816
        %6820 = vset.pattern.permute.xlu0 1
        %6821 = vperm.xlu0 %6820, %v5350
        %v6822 = vpop.permute.xlu0 %6821
        %6825 = vset.pattern.permute.xlu0 1
        %6826 = vperm.xlu0 %6825, %v5352
        %v6827 = vpop.permute.xlu0 %6826
        %6830 = vset.pattern.permute.xlu0 1
        %6831 = vperm.xlu0 %6830, %v5354
        %v6832 = vpop.permute.xlu0 %6831
        %6835 = vset.pattern.permute.xlu0 1
        %6836 = vperm.xlu0 %6835, %v5356
        %v6837 = vpop.permute.xlu0 %6836
        %6840 = vset.pattern.permute.xlu0 1
        %6841 = vperm.xlu0 %6840, %v5358
        %v6842 = vpop.permute.xlu0 %6841
        %6845 = vset.pattern.permute.xlu0 1
        %6846 = vperm.xlu0 %6845, %v5360
        %v6847 = vpop.permute.xlu0 %6846
        %6850 = vset.pattern.permute.xlu0 1
        %6851 = vperm.xlu0 %6850, %v5362
        %v6852 = vpop.permute.xlu0 %6851
        %6855 = vset.pattern.permute.xlu0 1
        %6856 = vperm.xlu0 %6855, %v5364
        %v6857 = vpop.permute.xlu0 %6856
        %6860 = vset.pattern.permute.xlu0 1
        %6861 = vperm.xlu0 %6860, %v5366
        %v6862 = vpop.permute.xlu0 %6861
        %6865 = vset.pattern.permute.xlu0 1
        %6866 = vperm.xlu0 %6865, %v5368
        %v6867 = vpop.permute.xlu0 %6866
        %6870 = vset.pattern.permute.xlu0 1
        %6871 = vperm.xlu0 %6870, %v5370
        %v6872 = vpop.permute.xlu0 %6871
        %6875 = vset.pattern.permute.xlu0 1
        %6876 = vperm.xlu0 %6875, %v5372
        %v6877 = vpop.permute.xlu0 %6876
        %6880 = vset.pattern.permute.xlu0 1
        %6881 = vperm.xlu0 %6880, %v5374
        %v6882 = vpop.permute.xlu0 %6881
        %6885 = vset.pattern.permute.xlu0 1
        %6886 = vperm.xlu0 %6885, %v5376
        %v6887 = vpop.permute.xlu0 %6886
        %6890 = vset.pattern.permute.xlu0 1
        %6891 = vperm.xlu0 %6890, %v5378
        %v6892 = vpop.permute.xlu0 %6891
        %6895 = vset.pattern.permute.xlu0 1
        %6896 = vperm.xlu0 %6895, %v5380
        %v6897 = vpop.permute.xlu0 %6896
        %6900 = vset.pattern.permute.xlu0 1
        %6901 = vperm.xlu0 %6900, %v5382
        %v6902 = vpop.permute.xlu0 %6901
        %6905 = vset.pattern.permute.xlu0 1
        %6906 = vperm.xlu0 %6905, %v5384
        %v6907 = vpop.permute.xlu0 %6906
        %6910 = vset.pattern.permute.xlu0 1
        %6911 = vperm.xlu0 %6910, %v5386
        %v6912 = vpop.permute.xlu0 %6911
        %6915 = vset.pattern.permute.xlu0 1
        %6916 = vperm.xlu0 %6915, %v5388
        %v6917 = vpop.permute.xlu0 %6916
        %6920 = vset.pattern.permute.xlu0 1
        %6921 = vperm.xlu0 %6920, %v5390
        %v6922 = vpop.permute.xlu0 %6921
        %6925 = vset.pattern.permute.xlu0 1
        %6926 = vperm.xlu0 %6925, %v5392
        %v6927 = vpop.permute.xlu0 %6926
        %6930 = vset.pattern.permute.xlu0 1
        %6931 = vperm.xlu0 %6930, %v5394
        %v6932 = vpop.permute.xlu0 %6931
        %v6934 = vlaneseq
        %v6935 = vshrl.u32 %v6934, 7
        %v6936 = vsub.s32 0, %v6935
        %v6937 = vrot.slane %v4219, %v6936
        %v6938 = vmul.f32 %v6777, %v6937
        %v6939 = vmul.f32 %v6782, %v6937
        %v6940 = vmul.f32 %v6787, %v6937
        %v6941 = vmul.f32 %v6792, %v6937
        %v6942 = vmul.f32 %v6797, %v6937
        %v6943 = vmul.f32 %v6802, %v6937
        %v6944 = vmul.f32 %v6807, %v6937
        %v6945 = vmul.f32 %v6812, %v6937
        %v6946 = vmul.f32 %v6817, %v6937
        %v6947 = vmul.f32 %v6822, %v6937
        %v6948 = vmul.f32 %v6827, %v6937
        %v6949 = vmul.f32 %v6832, %v6937
        %v6950 = vmul.f32 %v6837, %v6937
        %v6951 = vmul.f32 %v6842, %v6937
        %v6952 = vmul.f32 %v6847, %v6937
        %v6953 = vmul.f32 %v6852, %v6937
        %v6954 = vmul.f32 %v6857, %v6937
        %v6955 = vmul.f32 %v6862, %v6937
        %v6956 = vmul.f32 %v6867, %v6937
        %v6957 = vmul.f32 %v6872, %v6937
        %v6958 = vmul.f32 %v6877, %v6937
        %v6959 = vmul.f32 %v6882, %v6937
        %v6960 = vmul.f32 %v6887, %v6937
        %v6961 = vmul.f32 %v6892, %v6937
        %v6962 = vmul.f32 %v6897, %v6937
        %v6963 = vmul.f32 %v6902, %v6937
        %v6964 = vmul.f32 %v6907, %v6937
        %v6965 = vmul.f32 %v6912, %v6937
        %v6966 = vmul.f32 %v6917, %v6937
        %v6967 = vmul.f32 %v6922, %v6937
        %v6968 = vmul.f32 %v6927, %v6937
        %v6969 = vmul.f32 %v6932, %v6937
        %v6970 = vadd.f32 %v4123, %v6938
        %v6971 = vadd.f32 %v4124, %v6939
        %v6972 = vadd.f32 %v4125, %v6940
        %v6973 = vadd.f32 %v4126, %v6941
        %v6974 = vadd.f32 %v4127, %v6942
        %v6975 = vadd.f32 %v4128, %v6943
        %v6976 = vadd.f32 %v4129, %v6944
        %v6977 = vadd.f32 %v4130, %v6945
        %v6978 = vadd.f32 %v4131, %v6946
        %v6979 = vadd.f32 %v4132, %v6947
        %v6980 = vadd.f32 %v4133, %v6948
        %v6981 = vadd.f32 %v4134, %v6949
        %v6982 = vadd.f32 %v4135, %v6950
        %v6983 = vadd.f32 %v4136, %v6951
        %v6984 = vadd.f32 %v4137, %v6952
        %v6985 = vadd.f32 %v4138, %v6953
        %v6986 = vadd.f32 %v4139, %v6954
        %v6987 = vadd.f32 %v4140, %v6955
        %v6988 = vadd.f32 %v4141, %v6956
        %v6989 = vadd.f32 %v4142, %v6957
        %v6990 = vadd.f32 %v4143, %v6958
        %v6991 = vadd.f32 %v4144, %v6959
        %v6992 = vadd.f32 %v4145, %v6960
        %v6993 = vadd.f32 %v4146, %v6961
        %v6994 = vadd.f32 %v4147, %v6962
        %v6995 = vadd.f32 %v4148, %v6963
        %v6996 = vadd.f32 %v4149, %v6964
        %v6997 = vadd.f32 %v4150, %v6965
        %v6998 = vadd.f32 %v4151, %v6966
        %v6999 = vadd.f32 %v4152, %v6967
        %v7000 = vadd.f32 %v4153, %v6968
        %v7001 = vadd.f32 %v4154, %v6969
        %v7002 = vmul.f32 %v6648, %v6937
        %v7003 = vmul.f32 %v6651, %v6937
        %v7004 = vmul.f32 %v6656, %v6937
        %v7005 = vmul.f32 %v6659, %v6937
        %v7006 = vmul.f32 %v6664, %v6937
        %v7007 = vmul.f32 %v6667, %v6937
        %v7008 = vmul.f32 %v6672, %v6937
        %v7009 = vmul.f32 %v6675, %v6937
        %v7010 = vmul.f32 %v6680, %v6937
        %v7011 = vmul.f32 %v6683, %v6937
        %v7012 = vmul.f32 %v6688, %v6937
        %v7013 = vmul.f32 %v6691, %v6937
        %v7014 = vmul.f32 %v6696, %v6937
        %v7015 = vmul.f32 %v6699, %v6937
        %v7016 = vmul.f32 %v6704, %v6937
        %v7017 = vmul.f32 %v6707, %v6937
        %v7018 = vmul.f32 %v6712, %v6937
        %v7019 = vmul.f32 %v6715, %v6937
        %v7020 = vmul.f32 %v6720, %v6937
        %v7021 = vmul.f32 %v6723, %v6937
        %v7022 = vmul.f32 %v6728, %v6937
        %v7023 = vmul.f32 %v6731, %v6937
        %v7024 = vmul.f32 %v6736, %v6937
        %v7025 = vmul.f32 %v6739, %v6937
        %v7026 = vmul.f32 %v6744, %v6937
        %v7027 = vmul.f32 %v6747, %v6937
        %v7028 = vmul.f32 %v6752, %v6937
        %v7029 = vmul.f32 %v6755, %v6937
        %v7030 = vmul.f32 %v6760, %v6937
        %v7031 = vmul.f32 %v6763, %v6937
        %v7032 = vmul.f32 %v6768, %v6937
        %v7033 = vmul.f32 %v6771, %v6937
        %v7034 = vadd.f32 %v4187, %v7002
        %v7035 = vadd.f32 %v4188, %v7003
        %v7036 = vadd.f32 %v4189, %v7004
        %v7037 = vadd.f32 %v4190, %v7005
        %v7038 = vadd.f32 %v4191, %v7006
        %v7039 = vadd.f32 %v4192, %v7007
        %v7040 = vadd.f32 %v4193, %v7008
        %v7041 = vadd.f32 %v4194, %v7009
        %v7042 = vadd.f32 %v4195, %v7010
        %v7043 = vadd.f32 %v4196, %v7011
        %v7044 = vadd.f32 %v4197, %v7012
        %v7045 = vadd.f32 %v4198, %v7013
        %v7046 = vadd.f32 %v4199, %v7014
        %v7047 = vadd.f32 %v4200, %v7015
        %v7048 = vadd.f32 %v4201, %v7016
        %v7049 = vadd.f32 %v4202, %v7017
        %v7050 = vadd.f32 %v4203, %v7018
        %v7051 = vadd.f32 %v4204, %v7019
        %v7052 = vadd.f32 %v4205, %v7020
        %v7053 = vadd.f32 %v4206, %v7021
        %v7054 = vadd.f32 %v4207, %v7022
        %v7055 = vadd.f32 %v4208, %v7023
        %v7056 = vadd.f32 %v4209, %v7024
        %v7057 = vadd.f32 %v4210, %v7025
        %v7058 = vadd.f32 %v4211, %v7026
        %v7059 = vadd.f32 %v4212, %v7027
        %v7060 = vadd.f32 %v4213, %v7028
        %v7061 = vadd.f32 %v4214, %v7029
        %v7062 = vadd.f32 %v4215, %v7030
        %v7063 = vadd.f32 %v4216, %v7031
        %v7064 = vadd.f32 %v4217, %v7032
        %v7065 = vadd.f32 %v4218, %v7033
        %v7066 = vld [vmem:[#allocation4] sm:$0xff]
        %v7067 = vld [vmem:[#allocation4 + $0x8] sm:$0xff]
        %v7068 = vld [vmem:[#allocation4 + $0x10] sm:$0xff]
        %v7069 = vld [vmem:[#allocation4 + $0x18] sm:$0xff]
        %v7070 = vld [vmem:[#allocation4 + $0x20] sm:$0xff]
        %v7071 = vld [vmem:[#allocation4 + $0x28] sm:$0xff]
        %v7072 = vld [vmem:[#allocation4 + $0x30] sm:$0xff]
        %v7073 = vld [vmem:[#allocation4 + $0x38] sm:$0xff]
        %v7074 = vld [vmem:[#allocation4 + $0x40] sm:$0xff]
        %v7075 = vld [vmem:[#allocation4 + $0x48] sm:$0xff]
        %v7076 = vld [vmem:[#allocation4 + $0x50] sm:$0xff]
        %v7077 = vld [vmem:[#allocation4 + $0x58] sm:$0xff]
        %v7078 = vld [vmem:[#allocation4 + $0x60] sm:$0xff]
        %v7079 = vld [vmem:[#allocation4 + $0x68] sm:$0xff]
        %v7080 = vld [vmem:[#allocation4 + $0x70] sm:$0xff]
        %v7081 = vld [vmem:[#allocation4 + $0x78] sm:$0xff]
        %v7082 = vld [vmem:[#allocation4 + $0x80] sm:$0xff]
        %v7083 = vld [vmem:[#allocation4 + $0x88] sm:$0xff]
        %v7084 = vld [vmem:[#allocation4 + $0x90] sm:$0xff]
        %v7085 = vld [vmem:[#allocation4 + $0x98] sm:$0xff]
        %v7086 = vld [vmem:[#allocation4 + $0xa0] sm:$0xff]
        %v7087 = vld [vmem:[#allocation4 + $0xa8] sm:$0xff]
        %v7088 = vld [vmem:[#allocation4 + $0xb0] sm:$0xff]
        %v7089 = vld [vmem:[#allocation4 + $0xb8] sm:$0xff]
        %v7090 = vld [vmem:[#allocation4 + $0xc0] sm:$0xff]
        %v7091 = vld [vmem:[#allocation4 + $0xc8] sm:$0xff]
        %v7092 = vld [vmem:[#allocation4 + $0xd0] sm:$0xff]
        %v7093 = vld [vmem:[#allocation4 + $0xd8] sm:$0xff]
        %v7094 = vld [vmem:[#allocation4 + $0xe0] sm:$0xff]
        %v7095 = vld [vmem:[#allocation4 + $0xe8] sm:$0xff]
        %v7096 = vld [vmem:[#allocation4 + $0xf0] sm:$0xff]
        %v7097 = vld [vmem:[#allocation4 + $0xf8] sm:$0xff]
        %v7098 = vmul.f32 %v7066, %v6970
        %v7099 = vmul.f32 %v7067, %v6971
        %v7100 = vmul.f32 %v7068, %v6972
        %v7101 = vmul.f32 %v7069, %v6973
        %v7102 = vmul.f32 %v7070, %v6974
        %v7103 = vmul.f32 %v7071, %v6975
        %v7104 = vmul.f32 %v7072, %v6976
        %v7105 = vmul.f32 %v7073, %v6977
        %v7106 = vmul.f32 %v7074, %v6978
        %v7107 = vmul.f32 %v7075, %v6979
        %v7108 = vmul.f32 %v7076, %v6980
        %v7109 = vmul.f32 %v7077, %v6981
        %v7110 = vmul.f32 %v7078, %v6982
        %v7111 = vmul.f32 %v7079, %v6983
        %v7112 = vmul.f32 %v7080, %v6984
        %v7113 = vmul.f32 %v7081, %v6985
        %v7114 = vmul.f32 %v7082, %v6986
        %v7115 = vmul.f32 %v7083, %v6987
        %v7116 = vmul.f32 %v7084, %v6988
        %v7117 = vmul.f32 %v7085, %v6989
        %v7118 = vmul.f32 %v7086, %v6990
        %v7119 = vmul.f32 %v7087, %v6991
        %v7120 = vmul.f32 %v7088, %v6992
        %v7121 = vmul.f32 %v7089, %v6993
        %v7122 = vmul.f32 %v7090, %v6994
        %v7123 = vmul.f32 %v7091, %v6995
        %v7124 = vmul.f32 %v7092, %v6996
        %v7125 = vmul.f32 %v7093, %v6997
        %v7126 = vmul.f32 %v7094, %v6998
        %v7127 = vmul.f32 %v7095, %v6999
        %v7128 = vmul.f32 %v7096, %v7000
        %v7129 = vmul.f32 %v7097, %v7001
        %v7130 = vadd.f32 %v7098, %v7034
        %v7131 = vadd.f32 %v7099, %v7035
        %v7132 = vadd.f32 %v7100, %v7036
        %v7133 = vadd.f32 %v7101, %v7037
        %v7134 = vadd.f32 %v7102, %v7038
        %v7135 = vadd.f32 %v7103, %v7039
        %v7136 = vadd.f32 %v7104, %v7040
        %v7137 = vadd.f32 %v7105, %v7041
        %v7138 = vadd.f32 %v7106, %v7042
        %v7139 = vadd.f32 %v7107, %v7043
        %v7140 = vadd.f32 %v7108, %v7044
        %v7141 = vadd.f32 %v7109, %v7045
        %v7142 = vadd.f32 %v7110, %v7046
        %v7143 = vadd.f32 %v7111, %v7047
        %v7144 = vadd.f32 %v7112, %v7048
        %v7145 = vadd.f32 %v7113, %v7049
        %v7146 = vadd.f32 %v7114, %v7050
        %v7147 = vadd.f32 %v7115, %v7051
        %v7148 = vadd.f32 %v7116, %v7052
        %v7149 = vadd.f32 %v7117, %v7053
        %v7150 = vadd.f32 %v7118, %v7054
        %v7151 = vadd.f32 %v7119, %v7055
        %v7152 = vadd.f32 %v7120, %v7056
        %v7153 = vadd.f32 %v7121, %v7057
        %v7154 = vadd.f32 %v7122, %v7058
        %v7155 = vadd.f32 %v7123, %v7059
        %v7156 = vadd.f32 %v7124, %v7060
        %v7157 = vadd.f32 %v7125, %v7061
        %v7158 = vadd.f32 %v7126, %v7062
        %v7159 = vadd.f32 %v7127, %v7063
        %v7160 = vadd.f32 %v7128, %v7064
        %v7161 = vadd.f32 %v7129, %v7065
        %7162 = vst [vmem:[#allocation4] sm:$0xff] %v7130
        %7163 = vst [vmem:[#allocation4 + $0x8] sm:$0xff] %v7131
        %7164 = vst [vmem:[#allocation4 + $0x10] sm:$0xff] %v7132
        %7165 = vst [vmem:[#allocation4 + $0x18] sm:$0xff] %v7133
        %7166 = vst [vmem:[#allocation4 + $0x20] sm:$0xff] %v7134
        %7167 = vst [vmem:[#allocation4 + $0x28] sm:$0xff] %v7135
        %7168 = vst [vmem:[#allocation4 + $0x30] sm:$0xff] %v7136
        %7169 = vst [vmem:[#allocation4 + $0x38] sm:$0xff] %v7137
        %7170 = vst [vmem:[#allocation4 + $0x40] sm:$0xff] %v7138
        %7171 = vst [vmem:[#allocation4 + $0x48] sm:$0xff] %v7139
        %7172 = vst [vmem:[#allocation4 + $0x50] sm:$0xff] %v7140
        %7173 = vst [vmem:[#allocation4 + $0x58] sm:$0xff] %v7141
        %7174 = vst [vmem:[#allocation4 + $0x60] sm:$0xff] %v7142
        %7175 = vst [vmem:[#allocation4 + $0x68] sm:$0xff] %v7143
        %7176 = vst [vmem:[#allocation4 + $0x70] sm:$0xff] %v7144
        %7177 = vst [vmem:[#allocation4 + $0x78] sm:$0xff] %v7145
        %7178 = vst [vmem:[#allocation4 + $0x80] sm:$0xff] %v7146
        %7179 = vst [vmem:[#allocation4 + $0x88] sm:$0xff] %v7147
        %7180 = vst [vmem:[#allocation4 + $0x90] sm:$0xff] %v7148
        %7181 = vst [vmem:[#allocation4 + $0x98] sm:$0xff] %v7149
        %7182 = vst [vmem:[#allocation4 + $0xa0] sm:$0xff] %v7150
        %7183 = vst [vmem:[#allocation4 + $0xa8] sm:$0xff] %v7151
        %7184 = vst [vmem:[#allocation4 + $0xb0] sm:$0xff] %v7152
        %7185 = vst [vmem:[#allocation4 + $0xb8] sm:$0xff] %v7153
        %7186 = vst [vmem:[#allocation4 + $0xc0] sm:$0xff] %v7154
        %7187 = vst [vmem:[#allocation4 + $0xc8] sm:$0xff] %v7155
        %7188 = vst [vmem:[#allocation4 + $0xd0] sm:$0xff] %v7156
        %7189 = vst [vmem:[#allocation4 + $0xd8] sm:$0xff] %v7157
        %7190 = vst [vmem:[#allocation4 + $0xe0] sm:$0xff] %v7158
        %7191 = vst [vmem:[#allocation4 + $0xe8] sm:$0xff] %v7159
        %7192 = vst [vmem:[#allocation4 + $0xf0] sm:$0xff] %v7160
        %7193 = vst [vmem:[#allocation4 + $0xf8] sm:$0xff] %v7161
        %p7194 = scmp.eq.s32.totalorder %s31, 1
        // Predicated region
        $region57: #{tpu_custom_call.1} parent=43 // pred_check
          %p7195 = pneg %p7194
        $region58: #{tpu_custom_call.1} parent=43 // pred_check_branch
          %7197 = sbr.rel (%p7195) target = $region60
        $region59: #{tpu_custom_call.1} parent=43 // pred_region
          %v7198 = vld [vmem:[#allocation3] sm:$0xff]
          %v7199 = vld [vmem:[#allocation3 + $0x8] sm:$0xff]
          %v7200 = vld [vmem:[#allocation3 + $0x10] sm:$0xff]
          %v7201 = vld [vmem:[#allocation3 + $0x18] sm:$0xff]
          %v7202 = vld [vmem:[#allocation3 + $0x20] sm:$0xff]
          %v7203 = vld [vmem:[#allocation3 + $0x28] sm:$0xff]
          %v7204 = vld [vmem:[#allocation3 + $0x30] sm:$0xff]
          %v7205 = vld [vmem:[#allocation3 + $0x38] sm:$0xff]
          %v7206 = vld [vmem:[#allocation3 + $0x40] sm:$0xff]
          %v7207 = vld [vmem:[#allocation3 + $0x48] sm:$0xff]
          %v7208 = vld [vmem:[#allocation3 + $0x50] sm:$0xff]
          %v7209 = vld [vmem:[#allocation3 + $0x58] sm:$0xff]
          %v7210 = vld [vmem:[#allocation3 + $0x60] sm:$0xff]
          %v7211 = vld [vmem:[#allocation3 + $0x68] sm:$0xff]
          %v7212 = vld [vmem:[#allocation3 + $0x70] sm:$0xff]
          %v7213 = vld [vmem:[#allocation3 + $0x78] sm:$0xff]
          %v7214 = vld [vmem:[#allocation3 + $0x80] sm:$0xff]
          %v7215 = vld [vmem:[#allocation3 + $0x88] sm:$0xff]
          %v7216 = vld [vmem:[#allocation3 + $0x90] sm:$0xff]
          %v7217 = vld [vmem:[#allocation3 + $0x98] sm:$0xff]
          %v7218 = vld [vmem:[#allocation3 + $0xa0] sm:$0xff]
          %v7219 = vld [vmem:[#allocation3 + $0xa8] sm:$0xff]
          %v7220 = vld [vmem:[#allocation3 + $0xb0] sm:$0xff]
          %v7221 = vld [vmem:[#allocation3 + $0xb8] sm:$0xff]
          %v7222 = vld [vmem:[#allocation3 + $0xc0] sm:$0xff]
          %v7223 = vld [vmem:[#allocation3 + $0xc8] sm:$0xff]
          %v7224 = vld [vmem:[#allocation3 + $0xd0] sm:$0xff]
          %v7225 = vld [vmem:[#allocation3 + $0xd8] sm:$0xff]
          %v7226 = vld [vmem:[#allocation3 + $0xe0] sm:$0xff]
          %v7227 = vld [vmem:[#allocation3 + $0xe8] sm:$0xff]
          %v7228 = vld [vmem:[#allocation3 + $0xf0] sm:$0xff]
          %v7229 = vld [vmem:[#allocation3 + $0xf8] sm:$0xff]
          %vm7230 = vcmp.gt.f32.partialorder %v7198, 0.0
          %vm7231 = vcmp.gt.f32.partialorder %v7199, 0.0
          %vm7232 = vcmp.gt.f32.partialorder %v7200, 0.0
          %vm7233 = vcmp.gt.f32.partialorder %v7201, 0.0
          %vm7234 = vcmp.gt.f32.partialorder %v7202, 0.0
          %vm7235 = vcmp.gt.f32.partialorder %v7203, 0.0
          %vm7236 = vcmp.gt.f32.partialorder %v7204, 0.0
          %vm7237 = vcmp.gt.f32.partialorder %v7205, 0.0
          %vm7238 = vcmp.gt.f32.partialorder %v7206, 0.0
          %vm7239 = vcmp.gt.f32.partialorder %v7207, 0.0
          %vm7240 = vcmp.gt.f32.partialorder %v7208, 0.0
          %vm7241 = vcmp.gt.f32.partialorder %v7209, 0.0
          %vm7242 = vcmp.gt.f32.partialorder %v7210, 0.0
          %vm7243 = vcmp.gt.f32.partialorder %v7211, 0.0
          %vm7244 = vcmp.gt.f32.partialorder %v7212, 0.0
          %vm7245 = vcmp.gt.f32.partialorder %v7213, 0.0
          %vm7246 = vcmp.gt.f32.partialorder %v7214, 0.0
          %vm7247 = vcmp.gt.f32.partialorder %v7215, 0.0
          %vm7248 = vcmp.gt.f32.partialorder %v7216, 0.0
          %vm7249 = vcmp.gt.f32.partialorder %v7217, 0.0
          %vm7250 = vcmp.gt.f32.partialorder %v7218, 0.0
          %vm7251 = vcmp.gt.f32.partialorder %v7219, 0.0
          %vm7252 = vcmp.gt.f32.partialorder %v7220, 0.0
          %vm7253 = vcmp.gt.f32.partialorder %v7221, 0.0
          %vm7254 = vcmp.gt.f32.partialorder %v7222, 0.0
          %vm7255 = vcmp.gt.f32.partialorder %v7223, 0.0
          %vm7256 = vcmp.gt.f32.partialorder %v7224, 0.0
          %vm7257 = vcmp.gt.f32.partialorder %v7225, 0.0
          %vm7258 = vcmp.gt.f32.partialorder %v7226, 0.0
          %vm7259 = vcmp.gt.f32.partialorder %v7227, 0.0
          %vm7260 = vcmp.gt.f32.partialorder %v7228, 0.0
          %vm7261 = vcmp.gt.f32.partialorder %v7229, 0.0
          %v7262 = vrcp.pop %v7198
          %v7263 = vmul.f32 1.0, %v7262
          %v7264 = vrcp.pop %v7199
          %v7265 = vmul.f32 1.0, %v7264
          %v7266 = vrcp.pop %v7200
          %v7267 = vmul.f32 1.0, %v7266
          %v7268 = vrcp.pop %v7201
          %v7269 = vmul.f32 1.0, %v7268
          %v7270 = vrcp.pop %v7202
          %v7271 = vmul.f32 1.0, %v7270
          %v7272 = vrcp.pop %v7203
          %v7273 = vmul.f32 1.0, %v7272
          %v7274 = vrcp.pop %v7204
          %v7275 = vmul.f32 1.0, %v7274
          %v7276 = vrcp.pop %v7205
          %v7277 = vmul.f32 1.0, %v7276
          %v7278 = vrcp.pop %v7206
          %v7279 = vmul.f32 1.0, %v7278
          %v7280 = vrcp.pop %v7207
          %v7281 = vmul.f32 1.0, %v7280
          %v7282 = vrcp.pop %v7208
          %v7283 = vmul.f32 1.0, %v7282
          %v7284 = vrcp.pop %v7209
          %v7285 = vmul.f32 1.0, %v7284
          %v7286 = vrcp.pop %v7210
          %v7287 = vmul.f32 1.0, %v7286
          %v7288 = vrcp.pop %v7211
          %v7289 = vmul.f32 1.0, %v7288
          %v7290 = vrcp.pop %v7212
          %v7291 = vmul.f32 1.0, %v7290
          %v7292 = vrcp.pop %v7213
          %v7293 = vmul.f32 1.0, %v7292
          %v7294 = vrcp.pop %v7214
          %v7295 = vmul.f32 1.0, %v7294
          %v7296 = vrcp.pop %v7215
          %v7297 = vmul.f32 1.0, %v7296
          %v7298 = vrcp.pop %v7216
          %v7299 = vmul.f32 1.0, %v7298
          %v7300 = vrcp.pop %v7217
          %v7301 = vmul.f32 1.0, %v7300
          %v7302 = vrcp.pop %v7218
          %v7303 = vmul.f32 1.0, %v7302
          %v7304 = vrcp.pop %v7219
          %v7305 = vmul.f32 1.0, %v7304
          %v7306 = vrcp.pop %v7220
          %v7307 = vmul.f32 1.0, %v7306
          %v7308 = vrcp.pop %v7221
          %v7309 = vmul.f32 1.0, %v7308
          %v7310 = vrcp.pop %v7222
          %v7311 = vmul.f32 1.0, %v7310
          %v7312 = vrcp.pop %v7223
          %v7313 = vmul.f32 1.0, %v7312
          %v7314 = vrcp.pop %v7224
          %v7315 = vmul.f32 1.0, %v7314
          %v7316 = vrcp.pop %v7225
          %v7317 = vmul.f32 1.0, %v7316
          %v7318 = vrcp.pop %v7226
          %v7319 = vmul.f32 1.0, %v7318
          %v7320 = vrcp.pop %v7227
          %v7321 = vmul.f32 1.0, %v7320
          %v7322 = vrcp.pop %v7228
          %v7323 = vmul.f32 1.0, %v7322
          %v7324 = vrcp.pop %v7229
          %v7325 = vmul.f32 1.0, %v7324
          %v7326 = vsel %vm7230, %v7263, 0.0
          %v7327 = vsel %vm7231, %v7265, 0.0
          %v7328 = vsel %vm7232, %v7267, 0.0
          %v7329 = vsel %vm7233, %v7269, 0.0
          %v7330 = vsel %vm7234, %v7271, 0.0
          %v7331 = vsel %vm7235, %v7273, 0.0
          %v7332 = vsel %vm7236, %v7275, 0.0
          %v7333 = vsel %vm7237, %v7277, 0.0
          %v7334 = vsel %vm7238, %v7279, 0.0
          %v7335 = vsel %vm7239, %v7281, 0.0
          %v7336 = vsel %vm7240, %v7283, 0.0
          %v7337 = vsel %vm7241, %v7285, 0.0
          %v7338 = vsel %vm7242, %v7287, 0.0
          %v7339 = vsel %vm7243, %v7289, 0.0
          %v7340 = vsel %vm7244, %v7291, 0.0
          %v7341 = vsel %vm7245, %v7293, 0.0
          %v7342 = vsel %vm7246, %v7295, 0.0
          %v7343 = vsel %vm7247, %v7297, 0.0
          %v7344 = vsel %vm7248, %v7299, 0.0
          %v7345 = vsel %vm7249, %v7301, 0.0
          %v7346 = vsel %vm7250, %v7303, 0.0
          %v7347 = vsel %vm7251, %v7305, 0.0
          %v7348 = vsel %vm7252, %v7307, 0.0
          %v7349 = vsel %vm7253, %v7309, 0.0
          %v7350 = vsel %vm7254, %v7311, 0.0
          %v7351 = vsel %vm7255, %v7313, 0.0
          %v7352 = vsel %vm7256, %v7315, 0.0
          %v7353 = vsel %vm7257, %v7317, 0.0
          %v7354 = vsel %vm7258, %v7319, 0.0
          %v7355 = vsel %vm7259, %v7321, 0.0
          %v7356 = vsel %vm7260, %v7323, 0.0
          %v7357 = vsel %vm7261, %v7325, 0.0
          %v7358 = vld [vmem:[%s4] sm:$0x1]
          %7360 = vset.pattern.permute.xlu0 0
          %7361 = vperm.xlu0 %7360, %v7326
          %v7362 = vpop.permute.xlu0 %7361
          %7365 = vset.pattern.permute.xlu0 0
          %7366 = vperm.xlu0 %7365, %v7327
          %v7367 = vpop.permute.xlu0 %7366
          %7370 = vset.pattern.permute.xlu0 0
          %7371 = vperm.xlu0 %7370, %v7328
          %v7372 = vpop.permute.xlu0 %7371
          %7375 = vset.pattern.permute.xlu0 0
          %7376 = vperm.xlu0 %7375, %v7329
          %v7377 = vpop.permute.xlu0 %7376
          %7380 = vset.pattern.permute.xlu0 0
          %7381 = vperm.xlu0 %7380, %v7330
          %v7382 = vpop.permute.xlu0 %7381
          %7385 = vset.pattern.permute.xlu0 0
          %7386 = vperm.xlu0 %7385, %v7331
          %v7387 = vpop.permute.xlu0 %7386
          %7390 = vset.pattern.permute.xlu0 0
          %7391 = vperm.xlu0 %7390, %v7332
          %v7392 = vpop.permute.xlu0 %7391
          %7395 = vset.pattern.permute.xlu0 0
          %7396 = vperm.xlu0 %7395, %v7333
          %v7397 = vpop.permute.xlu0 %7396
          %7400 = vset.pattern.permute.xlu0 0
          %7401 = vperm.xlu0 %7400, %v7334
          %v7402 = vpop.permute.xlu0 %7401
          %7405 = vset.pattern.permute.xlu0 0
          %7406 = vperm.xlu0 %7405, %v7335
          %v7407 = vpop.permute.xlu0 %7406
          %7410 = vset.pattern.permute.xlu0 0
          %7411 = vperm.xlu0 %7410, %v7336
          %v7412 = vpop.permute.xlu0 %7411
          %7415 = vset.pattern.permute.xlu0 0
          %7416 = vperm.xlu0 %7415, %v7337
          %v7417 = vpop.permute.xlu0 %7416
          %7420 = vset.pattern.permute.xlu0 0
          %7421 = vperm.xlu0 %7420, %v7338
          %v7422 = vpop.permute.xlu0 %7421
          %7425 = vset.pattern.permute.xlu0 0
          %7426 = vperm.xlu0 %7425, %v7339
          %v7427 = vpop.permute.xlu0 %7426
          %7430 = vset.pattern.permute.xlu0 0
          %7431 = vperm.xlu0 %7430, %v7340
          %v7432 = vpop.permute.xlu0 %7431
          %7435 = vset.pattern.permute.xlu0 0
          %7436 = vperm.xlu0 %7435, %v7341
          %v7437 = vpop.permute.xlu0 %7436
          %7440 = vset.pattern.permute.xlu0 0
          %7441 = vperm.xlu0 %7440, %v7342
          %v7442 = vpop.permute.xlu0 %7441
          %7445 = vset.pattern.permute.xlu0 0
          %7446 = vperm.xlu0 %7445, %v7343
          %v7447 = vpop.permute.xlu0 %7446
          %7450 = vset.pattern.permute.xlu0 0
          %7451 = vperm.xlu0 %7450, %v7344
          %v7452 = vpop.permute.xlu0 %7451
          %7455 = vset.pattern.permute.xlu0 0
          %7456 = vperm.xlu0 %7455, %v7345
          %v7457 = vpop.permute.xlu0 %7456
          %7460 = vset.pattern.permute.xlu0 0
          %7461 = vperm.xlu0 %7460, %v7346
          %v7462 = vpop.permute.xlu0 %7461
          %7465 = vset.pattern.permute.xlu0 0
          %7466 = vperm.xlu0 %7465, %v7347
          %v7467 = vpop.permute.xlu0 %7466
          %7470 = vset.pattern.permute.xlu0 0
          %7471 = vperm.xlu0 %7470, %v7348
          %v7472 = vpop.permute.xlu0 %7471
          %7475 = vset.pattern.permute.xlu0 0
          %7476 = vperm.xlu0 %7475, %v7349
          %v7477 = vpop.permute.xlu0 %7476
          %7480 = vset.pattern.permute.xlu0 0
          %7481 = vperm.xlu0 %7480, %v7350
          %v7482 = vpop.permute.xlu0 %7481
          %7485 = vset.pattern.permute.xlu0 0
          %7486 = vperm.xlu0 %7485, %v7351
          %v7487 = vpop.permute.xlu0 %7486
          %7490 = vset.pattern.permute.xlu0 0
          %7491 = vperm.xlu0 %7490, %v7352
          %v7492 = vpop.permute.xlu0 %7491
          %7495 = vset.pattern.permute.xlu0 0
          %7496 = vperm.xlu0 %7495, %v7353
          %v7497 = vpop.permute.xlu0 %7496
          %7500 = vset.pattern.permute.xlu0 0
          %7501 = vperm.xlu0 %7500, %v7354
          %v7502 = vpop.permute.xlu0 %7501
          %7505 = vset.pattern.permute.xlu0 0
          %7506 = vperm.xlu0 %7505, %v7355
          %v7507 = vpop.permute.xlu0 %7506
          %7510 = vset.pattern.permute.xlu0 0
          %7511 = vperm.xlu0 %7510, %v7356
          %v7512 = vpop.permute.xlu0 %7511
          %7515 = vset.pattern.permute.xlu0 0
          %7516 = vperm.xlu0 %7515, %v7357
          %v7517 = vpop.permute.xlu0 %7516
          %v7519 = vlaneseq
          %v7520 = vshrl.u32 %v7519, 7
          %v7521 = vsub.s32 0, %v7520
          %v7522 = vrot.slane %v7358, %v7521
          %v7523 = vmul.f32 %v7362, %v7522
          %v7524 = vmul.f32 %v7367, %v7522
          %v7525 = vmul.f32 %v7372, %v7522
          %v7526 = vmul.f32 %v7377, %v7522
          %v7527 = vmul.f32 %v7382, %v7522
          %v7528 = vmul.f32 %v7387, %v7522
          %v7529 = vmul.f32 %v7392, %v7522
          %v7530 = vmul.f32 %v7397, %v7522
          %v7531 = vmul.f32 %v7402, %v7522
          %v7532 = vmul.f32 %v7407, %v7522
          %v7533 = vmul.f32 %v7412, %v7522
          %v7534 = vmul.f32 %v7417, %v7522
          %v7535 = vmul.f32 %v7422, %v7522
          %v7536 = vmul.f32 %v7427, %v7522
          %v7537 = vmul.f32 %v7432, %v7522
          %v7538 = vmul.f32 %v7437, %v7522
          %v7539 = vmul.f32 %v7442, %v7522
          %v7540 = vmul.f32 %v7447, %v7522
          %v7541 = vmul.f32 %v7452, %v7522
          %v7542 = vmul.f32 %v7457, %v7522
          %v7543 = vmul.f32 %v7462, %v7522
          %v7544 = vmul.f32 %v7467, %v7522
          %v7545 = vmul.f32 %v7472, %v7522
          %v7546 = vmul.f32 %v7477, %v7522
          %v7547 = vmul.f32 %v7482, %v7522
          %v7548 = vmul.f32 %v7487, %v7522
          %v7549 = vmul.f32 %v7492, %v7522
          %v7550 = vmul.f32 %v7497, %v7522
          %v7551 = vmul.f32 %v7502, %v7522
          %v7552 = vmul.f32 %v7507, %v7522
          %v7553 = vmul.f32 %v7512, %v7522
          %v7554 = vmul.f32 %v7517, %v7522
          %v7555 = vadd.f32 %v7523, 0.0
          %v7556 = vadd.f32 %v7524, 0.0
          %v7557 = vadd.f32 %v7525, 0.0
          %v7558 = vadd.f32 %v7526, 0.0
          %v7559 = vadd.f32 %v7527, 0.0
          %v7560 = vadd.f32 %v7528, 0.0
          %v7561 = vadd.f32 %v7529, 0.0
          %v7562 = vadd.f32 %v7530, 0.0
          %v7563 = vadd.f32 %v7531, 0.0
          %v7564 = vadd.f32 %v7532, 0.0
          %v7565 = vadd.f32 %v7533, 0.0
          %v7566 = vadd.f32 %v7534, 0.0
          %v7567 = vadd.f32 %v7535, 0.0
          %v7568 = vadd.f32 %v7536, 0.0
          %v7569 = vadd.f32 %v7537, 0.0
          %v7570 = vadd.f32 %v7538, 0.0
          %v7571 = vadd.f32 %v7539, 0.0
          %v7572 = vadd.f32 %v7540, 0.0
          %v7573 = vadd.f32 %v7541, 0.0
          %v7574 = vadd.f32 %v7542, 0.0
          %v7575 = vadd.f32 %v7543, 0.0
          %v7576 = vadd.f32 %v7544, 0.0
          %v7577 = vadd.f32 %v7545, 0.0
          %v7578 = vadd.f32 %v7546, 0.0
          %v7579 = vadd.f32 %v7547, 0.0
          %v7580 = vadd.f32 %v7548, 0.0
          %v7581 = vadd.f32 %v7549, 0.0
          %v7582 = vadd.f32 %v7550, 0.0
          %v7583 = vadd.f32 %v7551, 0.0
          %v7584 = vadd.f32 %v7552, 0.0
          %v7585 = vadd.f32 %v7553, 0.0
          %v7586 = vadd.f32 %v7554, 0.0
          %v7587 = vld [vmem:[%s4 + $0x1] sm:$0x1]
          %7588 = vset.pattern.permute.xlu0 1
          %7589 = vperm.xlu0 %7588, %v7326
          %v7590 = vpop.permute.xlu0 %7589
          %7592 = vset.pattern.permute.xlu0 1
          %7593 = vperm.xlu0 %7592, %v7327
          %v7594 = vpop.permute.xlu0 %7593
          %7596 = vset.pattern.permute.xlu0 1
          %7597 = vperm.xlu0 %7596, %v7328
          %v7598 = vpop.permute.xlu0 %7597
          %7600 = vset.pattern.permute.xlu0 1
          %7601 = vperm.xlu0 %7600, %v7329
          %v7602 = vpop.permute.xlu0 %7601
          %7604 = vset.pattern.permute.xlu0 1
          %7605 = vperm.xlu0 %7604, %v7330
          %v7606 = vpop.permute.xlu0 %7605
          %7608 = vset.pattern.permute.xlu0 1
          %7609 = vperm.xlu0 %7608, %v7331
          %v7610 = vpop.permute.xlu0 %7609
          %7612 = vset.pattern.permute.xlu0 1
          %7613 = vperm.xlu0 %7612, %v7332
          %v7614 = vpop.permute.xlu0 %7613
          %7616 = vset.pattern.permute.xlu0 1
          %7617 = vperm.xlu0 %7616, %v7333
          %v7618 = vpop.permute.xlu0 %7617
          %7620 = vset.pattern.permute.xlu0 1
          %7621 = vperm.xlu0 %7620, %v7334
          %v7622 = vpop.permute.xlu0 %7621
          %7624 = vset.pattern.permute.xlu0 1
          %7625 = vperm.xlu0 %7624, %v7335
          %v7626 = vpop.permute.xlu0 %7625
          %7628 = vset.pattern.permute.xlu0 1
          %7629 = vperm.xlu0 %7628, %v7336
          %v7630 = vpop.permute.xlu0 %7629
          %7632 = vset.pattern.permute.xlu0 1
          %7633 = vperm.xlu0 %7632, %v7337
          %v7634 = vpop.permute.xlu0 %7633
          %7636 = vset.pattern.permute.xlu0 1
          %7637 = vperm.xlu0 %7636, %v7338
          %v7638 = vpop.permute.xlu0 %7637
          %7640 = vset.pattern.permute.xlu0 1
          %7641 = vperm.xlu0 %7640, %v7339
          %v7642 = vpop.permute.xlu0 %7641
          %7644 = vset.pattern.permute.xlu0 1
          %7645 = vperm.xlu0 %7644, %v7340
          %v7646 = vpop.permute.xlu0 %7645
          %7648 = vset.pattern.permute.xlu0 1
          %7649 = vperm.xlu0 %7648, %v7341
          %v7650 = vpop.permute.xlu0 %7649
          %7652 = vset.pattern.permute.xlu0 1
          %7653 = vperm.xlu0 %7652, %v7342
          %v7654 = vpop.permute.xlu0 %7653
          %7656 = vset.pattern.permute.xlu0 1
          %7657 = vperm.xlu0 %7656, %v7343
          %v7658 = vpop.permute.xlu0 %7657
          %7660 = vset.pattern.permute.xlu0 1
          %7661 = vperm.xlu0 %7660, %v7344
          %v7662 = vpop.permute.xlu0 %7661
          %7664 = vset.pattern.permute.xlu0 1
          %7665 = vperm.xlu0 %7664, %v7345
          %v7666 = vpop.permute.xlu0 %7665
          %7668 = vset.pattern.permute.xlu0 1
          %7669 = vperm.xlu0 %7668, %v7346
          %v7670 = vpop.permute.xlu0 %7669
          %7672 = vset.pattern.permute.xlu0 1
          %7673 = vperm.xlu0 %7672, %v7347
          %v7674 = vpop.permute.xlu0 %7673
          %7676 = vset.pattern.permute.xlu0 1
          %7677 = vperm.xlu0 %7676, %v7348
          %v7678 = vpop.permute.xlu0 %7677
          %7680 = vset.pattern.permute.xlu0 1
          %7681 = vperm.xlu0 %7680, %v7349
          %v7682 = vpop.permute.xlu0 %7681
          %7684 = vset.pattern.permute.xlu0 1
          %7685 = vperm.xlu0 %7684, %v7350
          %v7686 = vpop.permute.xlu0 %7685
          %7688 = vset.pattern.permute.xlu0 1
          %7689 = vperm.xlu0 %7688, %v7351
          %v7690 = vpop.permute.xlu0 %7689
          %7692 = vset.pattern.permute.xlu0 1
          %7693 = vperm.xlu0 %7692, %v7352
          %v7694 = vpop.permute.xlu0 %7693
          %7696 = vset.pattern.permute.xlu0 1
          %7697 = vperm.xlu0 %7696, %v7353
          %v7698 = vpop.permute.xlu0 %7697
          %7700 = vset.pattern.permute.xlu0 1
          %7701 = vperm.xlu0 %7700, %v7354
          %v7702 = vpop.permute.xlu0 %7701
          %7704 = vset.pattern.permute.xlu0 1
          %7705 = vperm.xlu0 %7704, %v7355
          %v7706 = vpop.permute.xlu0 %7705
          %7708 = vset.pattern.permute.xlu0 1
          %7709 = vperm.xlu0 %7708, %v7356
          %v7710 = vpop.permute.xlu0 %7709
          %7712 = vset.pattern.permute.xlu0 1
          %7713 = vperm.xlu0 %7712, %v7357
          %v7714 = vpop.permute.xlu0 %7713
          %v7716 = vlaneseq
          %v7717 = vshrl.u32 %v7716, 7
          %v7718 = vsub.s32 0, %v7717
          %v7719 = vrot.slane %v7587, %v7718
          %v7720 = vmul.f32 %v7590, %v7719
          %v7721 = vmul.f32 %v7594, %v7719
          %v7722 = vmul.f32 %v7598, %v7719
          %v7723 = vmul.f32 %v7602, %v7719
          %v7724 = vmul.f32 %v7606, %v7719
          %v7725 = vmul.f32 %v7610, %v7719
          %v7726 = vmul.f32 %v7614, %v7719
          %v7727 = vmul.f32 %v7618, %v7719
          %v7728 = vmul.f32 %v7622, %v7719
          %v7729 = vmul.f32 %v7626, %v7719
          %v7730 = vmul.f32 %v7630, %v7719
          %v7731 = vmul.f32 %v7634, %v7719
          %v7732 = vmul.f32 %v7638, %v7719
          %v7733 = vmul.f32 %v7642, %v7719
          %v7734 = vmul.f32 %v7646, %v7719
          %v7735 = vmul.f32 %v7650, %v7719
          %v7736 = vmul.f32 %v7654, %v7719
          %v7737 = vmul.f32 %v7658, %v7719
          %v7738 = vmul.f32 %v7662, %v7719
          %v7739 = vmul.f32 %v7666, %v7719
          %v7740 = vmul.f32 %v7670, %v7719
          %v7741 = vmul.f32 %v7674, %v7719
          %v7742 = vmul.f32 %v7678, %v7719
          %v7743 = vmul.f32 %v7682, %v7719
          %v7744 = vmul.f32 %v7686, %v7719
          %v7745 = vmul.f32 %v7690, %v7719
          %v7746 = vmul.f32 %v7694, %v7719
          %v7747 = vmul.f32 %v7698, %v7719
          %v7748 = vmul.f32 %v7702, %v7719
          %v7749 = vmul.f32 %v7706, %v7719
          %v7750 = vmul.f32 %v7710, %v7719
          %v7751 = vmul.f32 %v7714, %v7719
          %v7752 = vadd.f32 %v7555, %v7720
          %v7753 = vadd.f32 %v7556, %v7721
          %v7754 = vadd.f32 %v7557, %v7722
          %v7755 = vadd.f32 %v7558, %v7723
          %v7756 = vadd.f32 %v7559, %v7724
          %v7757 = vadd.f32 %v7560, %v7725
          %v7758 = vadd.f32 %v7561, %v7726
          %v7759 = vadd.f32 %v7562, %v7727
          %v7760 = vadd.f32 %v7563, %v7728
          %v7761 = vadd.f32 %v7564, %v7729
          %v7762 = vadd.f32 %v7565, %v7730
          %v7763 = vadd.f32 %v7566, %v7731
          %v7764 = vadd.f32 %v7567, %v7732
          %v7765 = vadd.f32 %v7568, %v7733
          %v7766 = vadd.f32 %v7569, %v7734
          %v7767 = vadd.f32 %v7570, %v7735
          %v7768 = vadd.f32 %v7571, %v7736
          %v7769 = vadd.f32 %v7572, %v7737
          %v7770 = vadd.f32 %v7573, %v7738
          %v7771 = vadd.f32 %v7574, %v7739
          %v7772 = vadd.f32 %v7575, %v7740
          %v7773 = vadd.f32 %v7576, %v7741
          %v7774 = vadd.f32 %v7577, %v7742
          %v7775 = vadd.f32 %v7578, %v7743
          %v7776 = vadd.f32 %v7579, %v7744
          %v7777 = vadd.f32 %v7580, %v7745
          %v7778 = vadd.f32 %v7581, %v7746
          %v7779 = vadd.f32 %v7582, %v7747
          %v7780 = vadd.f32 %v7583, %v7748
          %v7781 = vadd.f32 %v7584, %v7749
          %v7782 = vadd.f32 %v7585, %v7750
          %v7783 = vadd.f32 %v7586, %v7751
          %v7784 = vld [vmem:[#allocation4] sm:$0xff]
          %v7785 = vld [vmem:[#allocation4 + $0x8] sm:$0xff]
          %v7786 = vld [vmem:[#allocation4 + $0x10] sm:$0xff]
          %v7787 = vld [vmem:[#allocation4 + $0x18] sm:$0xff]
          %v7788 = vld [vmem:[#allocation4 + $0x20] sm:$0xff]
          %v7789 = vld [vmem:[#allocation4 + $0x28] sm:$0xff]
          %v7790 = vld [vmem:[#allocation4 + $0x30] sm:$0xff]
          %v7791 = vld [vmem:[#allocation4 + $0x38] sm:$0xff]
          %v7792 = vld [vmem:[#allocation4 + $0x40] sm:$0xff]
          %v7793 = vld [vmem:[#allocation4 + $0x48] sm:$0xff]
          %v7794 = vld [vmem:[#allocation4 + $0x50] sm:$0xff]
          %v7795 = vld [vmem:[#allocation4 + $0x58] sm:$0xff]
          %v7796 = vld [vmem:[#allocation4 + $0x60] sm:$0xff]
          %v7797 = vld [vmem:[#allocation4 + $0x68] sm:$0xff]
          %v7798 = vld [vmem:[#allocation4 + $0x70] sm:$0xff]
          %v7799 = vld [vmem:[#allocation4 + $0x78] sm:$0xff]
          %v7800 = vld [vmem:[#allocation4 + $0x80] sm:$0xff]
          %v7801 = vld [vmem:[#allocation4 + $0x88] sm:$0xff]
          %v7802 = vld [vmem:[#allocation4 + $0x90] sm:$0xff]
          %v7803 = vld [vmem:[#allocation4 + $0x98] sm:$0xff]
          %v7804 = vld [vmem:[#allocation4 + $0xa0] sm:$0xff]
          %v7805 = vld [vmem:[#allocation4 + $0xa8] sm:$0xff]
          %v7806 = vld [vmem:[#allocation4 + $0xb0] sm:$0xff]
          %v7807 = vld [vmem:[#allocation4 + $0xb8] sm:$0xff]
          %v7808 = vld [vmem:[#allocation4 + $0xc0] sm:$0xff]
          %v7809 = vld [vmem:[#allocation4 + $0xc8] sm:$0xff]
          %v7810 = vld [vmem:[#allocation4 + $0xd0] sm:$0xff]
          %v7811 = vld [vmem:[#allocation4 + $0xd8] sm:$0xff]
          %v7812 = vld [vmem:[#allocation4 + $0xe0] sm:$0xff]
          %v7813 = vld [vmem:[#allocation4 + $0xe8] sm:$0xff]
          %v7814 = vld [vmem:[#allocation4 + $0xf0] sm:$0xff]
          %v7815 = vld [vmem:[#allocation4 + $0xf8] sm:$0xff]
          %v7816 = vmul.f32 %v7784, %v7752
          %v7817 = vmul.f32 %v7785, %v7753
          %v7818 = vmul.f32 %v7786, %v7754
          %v7819 = vmul.f32 %v7787, %v7755
          %v7820 = vmul.f32 %v7788, %v7756
          %v7821 = vmul.f32 %v7789, %v7757
          %v7822 = vmul.f32 %v7790, %v7758
          %v7823 = vmul.f32 %v7791, %v7759
          %v7824 = vmul.f32 %v7792, %v7760
          %v7825 = vmul.f32 %v7793, %v7761
          %v7826 = vmul.f32 %v7794, %v7762
          %v7827 = vmul.f32 %v7795, %v7763
          %v7828 = vmul.f32 %v7796, %v7764
          %v7829 = vmul.f32 %v7797, %v7765
          %v7830 = vmul.f32 %v7798, %v7766
          %v7831 = vmul.f32 %v7799, %v7767
          %v7832 = vmul.f32 %v7800, %v7768
          %v7833 = vmul.f32 %v7801, %v7769
          %v7834 = vmul.f32 %v7802, %v7770
          %v7835 = vmul.f32 %v7803, %v7771
          %v7836 = vmul.f32 %v7804, %v7772
          %v7837 = vmul.f32 %v7805, %v7773
          %v7838 = vmul.f32 %v7806, %v7774
          %v7839 = vmul.f32 %v7807, %v7775
          %v7840 = vmul.f32 %v7808, %v7776
          %v7841 = vmul.f32 %v7809, %v7777
          %v7842 = vmul.f32 %v7810, %v7778
          %v7843 = vmul.f32 %v7811, %v7779
          %v7844 = vmul.f32 %v7812, %v7780
          %v7845 = vmul.f32 %v7813, %v7781
          %v7846 = vmul.f32 %v7814, %v7782
          %v7847 = vmul.f32 %v7815, %v7783
          %v7848 = vld [vmem:[%s5] sm:$0x1]
          %v7850 = vlaneseq
          %v7851 = vshrl.u32 %v7850, 7
          %v7852 = vsub.s32 0, %v7851
          %v7853 = vrot.slane %v7848, %v7852
          %v7855 = vadd.f32 %v7816, %v7853
          %v7856 = vadd.f32 %v7817, %v7853
          %v7857 = vadd.f32 %v7818, %v7853
          %v7858 = vadd.f32 %v7819, %v7853
          %v7859 = vadd.f32 %v7820, %v7853
          %v7860 = vadd.f32 %v7821, %v7853
          %v7861 = vadd.f32 %v7822, %v7853
          %v7862 = vadd.f32 %v7823, %v7853
          %v7863 = vadd.f32 %v7824, %v7853
          %v7864 = vadd.f32 %v7825, %v7853
          %v7865 = vadd.f32 %v7826, %v7853
          %v7866 = vadd.f32 %v7827, %v7853
          %v7867 = vadd.f32 %v7828, %v7853
          %v7868 = vadd.f32 %v7829, %v7853
          %v7869 = vadd.f32 %v7830, %v7853
          %v7870 = vadd.f32 %v7831, %v7853
          %v7871 = vadd.f32 %v7832, %v7853
          %v7872 = vadd.f32 %v7833, %v7853
          %v7873 = vadd.f32 %v7834, %v7853
          %v7874 = vadd.f32 %v7835, %v7853
          %v7875 = vadd.f32 %v7836, %v7853
          %v7876 = vadd.f32 %v7837, %v7853
          %v7877 = vadd.f32 %v7838, %v7853
          %v7878 = vadd.f32 %v7839, %v7853
          %v7879 = vadd.f32 %v7840, %v7853
          %v7880 = vadd.f32 %v7841, %v7853
          %v7881 = vadd.f32 %v7842, %v7853
          %v7882 = vadd.f32 %v7843, %v7853
          %v7883 = vadd.f32 %v7844, %v7853
          %v7884 = vadd.f32 %v7845, %v7853
          %v7885 = vadd.f32 %v7846, %v7853
          %v7886 = vadd.f32 %v7847, %v7853
          %7887 = vst [vmem:[%s356] sm:$0xff] %v7855
          %7888 = vst [vmem:[%s356 + $0x8] sm:$0xff] %v7856
          %7889 = vst [vmem:[%s356 + $0x10] sm:$0xff] %v7857
          %7890 = vst [vmem:[%s356 + $0x18] sm:$0xff] %v7858
          %7891 = vst [vmem:[%s356 + $0x20] sm:$0xff] %v7859
          %7892 = vst [vmem:[%s356 + $0x28] sm:$0xff] %v7860
          %7893 = vst [vmem:[%s356 + $0x30] sm:$0xff] %v7861
          %7894 = vst [vmem:[%s356 + $0x38] sm:$0xff] %v7862
          %7895 = vst [vmem:[%s356 + $0x40] sm:$0xff] %v7863
          %7896 = vst [vmem:[%s356 + $0x48] sm:$0xff] %v7864
          %7897 = vst [vmem:[%s356 + $0x50] sm:$0xff] %v7865
          %7898 = vst [vmem:[%s356 + $0x58] sm:$0xff] %v7866
          %7899 = vst [vmem:[%s356 + $0x60] sm:$0xff] %v7867
          %7900 = vst [vmem:[%s356 + $0x68] sm:$0xff] %v7868
          %7901 = vst [vmem:[%s356 + $0x70] sm:$0xff] %v7869
          %7902 = vst [vmem:[%s356 + $0x78] sm:$0xff] %v7870
          %7903 = vst [vmem:[%s356 + $0x80] sm:$0xff] %v7871
          %7904 = vst [vmem:[%s356 + $0x88] sm:$0xff] %v7872
          %7905 = vst [vmem:[%s356 + $0x90] sm:$0xff] %v7873
          %7906 = vst [vmem:[%s356 + $0x98] sm:$0xff] %v7874
          %7907 = vst [vmem:[%s356 + $0xa0] sm:$0xff] %v7875
          %7908 = vst [vmem:[%s356 + $0xa8] sm:$0xff] %v7876
          %7909 = vst [vmem:[%s356 + $0xb0] sm:$0xff] %v7877
          %7910 = vst [vmem:[%s356 + $0xb8] sm:$0xff] %v7878
          %7911 = vst [vmem:[%s356 + $0xc0] sm:$0xff] %v7879
          %7912 = vst [vmem:[%s356 + $0xc8] sm:$0xff] %v7880
          %7913 = vst [vmem:[%s356 + $0xd0] sm:$0xff] %v7881
          %7914 = vst [vmem:[%s356 + $0xd8] sm:$0xff] %v7882
          %7915 = vst [vmem:[%s356 + $0xe0] sm:$0xff] %v7883
          %7916 = vst [vmem:[%s356 + $0xe8] sm:$0xff] %v7884
          %7917 = vst [vmem:[%s356 + $0xf0] sm:$0xff] %v7885
          %7918 = vst [vmem:[%s356 + $0xf8] sm:$0xff] %v7886
        $region60: #{tpu_custom_call.1} parent=43 // pred_fallthru
          _
        %s7919 = sand.u32 %s194, 1
        %s7920 = scalar_lea.sflag [#allocation7], %s7919
        %s7921 = sand.u32 %s194, 1
        %s7922 = smul.addr %s7921, 256
        %s7923 = scalar_lea.vmem [#allocation10], %s7922
        // Predicated region
        $region61: #{tpu_custom_call.1} parent=43 // pred_check
          %p7924 = pneg %p204
        $region62: #{tpu_custom_call.1} parent=43 // pred_check_branch
          %7926 = sbr.rel (%p7924) target = $region64
        $region63: #{tpu_custom_call.1} parent=43 // pred_region
          %s7927 = smul.u32 32, %s30
          %s7929 = ssub.s32 4096, 4096
          %7930 = vsyncadd %s7920, %s7929
          %s7931 = smul.addr %s7927, 128
          %s7932 = scalar_lea.hbm %s6, %s7931
          %s7933 = sshll.u32 %s7923, 4
          %s7934 = int_to_ptr.vmem [resolvable:$true] %s7933
          %7939 = dma.vmem_to_hbm [thread:$0]  %s7934, 4096, %s7932, %s7920, 128, 128, 8
        $region64: #{tpu_custom_call.1} parent=43 // pred_fallthru
          _
      $region44: #{tpu_custom_call.1} parent=5 // pred_fallthru
        _
      %p7940 = scmp.le.s32.totalorder 2, %s21
      // Predicated region
      $region65: #{tpu_custom_call.1} parent=5 // pred_check
        %p7941 = pneg %p7940
      $region66: #{tpu_custom_call.1} parent=5 // pred_check_branch
        %7943 = sbr.rel (%p7941) target = $region68
      $region67: #{tpu_custom_call.1} parent=5 // pred_region
        %s7944 = ssub.s32 %s21, 2
        // Predicated region
        $region69: #{tpu_custom_call.1} parent=67 // pred_check
          %p7945 = pneg %p210
        $region70: #{tpu_custom_call.1} parent=67 // pred_check_branch
          %7947 = sbr.rel (%p7945) target = $region72
        $region71: #{tpu_custom_call.1} parent=67 // pred_region
          %s7948 = sand.u32 %s195, 1
          %s7949 = scalar_lea.sflag [#allocation7], %s7948
          %s7950 = sand.u32 %s195, 1
          %s7951 = smul.addr %s7950, 256
          %s7952 = scalar_lea.vmem [#allocation10], %s7951
          %7953 = dma.done %s7949, 4096
        $region72: #{tpu_custom_call.1} parent=67 // pred_fallthru
          _
      $region68: #{tpu_custom_call.1} parent=5 // pred_fallthru
        _
    $region6: #{tpu_custom_call.1} parent=1 // loop_footer
      %s25 = sadd.s32 1, %s21
    $region7: #{tpu_custom_call.1} parent=1 // loop_footer_branch
      %20 = sbr.rel target = $region3
    $region8: #{tpu_custom_call.1} parent=1 // loop_exit
      _
    %7954 = vsyncpa [#allocation6], 1
    %s7955 = scalar_lea.sflag [#allocation6], 1
    %7956 = vsyncpa %s7955, 1
    %7957 = vsyncpa [#allocation9], 1
    %s7958 = scalar_lea.sflag [#allocation9], 1
    %7959 = vsyncpa %s7958, 1
    %7960 = vsyncpa [#allocation7], 1
    %s7961 = scalar_lea.sflag [#allocation7], 1
    %7962 = vsyncpa %s7961, 1

</llo_original>
